<compile_context>
chip_gen: v7x
topology: tpu7x:2x2x1
jax: 0.10.0
libtpu: 0.0.40
codegen_flags: <defaults>
</compile_context>

<pallas_src>
from functools import partial

import jax
import jax.numpy as jnp
from jax import lax
from jax.experimental import pallas as pl
from jax.experimental.pallas import tpu as pltpu


def _round_up(x, m):
    return ((x + m - 1) // m) * m


# ----------------------------- kernels ---------------------------------------------


def _conv1_stats_kernel(x_ref, w1_ref, vm_ref, h_ref, s1_ref, ss1_ref, *,
                        offsets, guard, ts, expc):
    """In-kernel im2col conv1: 27 shifted taps x small dots (bf16 -> f32 accum),
    masked to SAME-padding validity, bf16 store, per-batch BN1 sum / sumsq."""
    t = pl.program_id(1)

    @pl.when(t == 0)                                    # zero this batch's accumulators
    def _():
        s1_ref[...] = jnp.zeros_like(s1_ref)
        ss1_ref[...] = jnp.zeros_like(ss1_ref)

    # Aligned dynamic window over the resident guarded x slab: covers the tile + halo.
    start = pl.multiple_of(t * ts, 128)
    win = x_ref[:, pl.ds(start, ts + 2 * guard)]        # [Cin, ts + 2*guard] bf16

    acc = jnp.zeros((expc, ts), jnp.float32)
    for k, off in enumerate(offsets):                   # statically unrolled taps
        xs = win[:, guard + off: guard + off + ts]      # [Cin, ts], static lane shift
        acc = acc + jnp.dot(w1_ref[k], xs, preferred_element_type=jnp.float32)

    hm = acc * vm_ref[...]                              # zero SAME-pad / lane-pad columns
    h_ref[...] = hm.astype(h_ref.dtype)                 # bf16 store (halved round trip)
    # BN1 statistics from the f32 values, *before* the bf16 cast.
    s1_ref[...] += jnp.sum(hm, axis=1, keepdims=True)
    ss1_ref[...] += jnp.sum(hm * hm, axis=1, keepdims=True)


def _bn1_relu_conv2_kernel(h_ref, sc1_ref, sh1_ref, vm_ref, w2_ref,
                           y_ref, s2_ref, ss2_ref):
    """BN1 (single FMA) + ReLU + validity mask + 1x1x1 conv (bf16 operands, f32 accum);
    bf16 store of y_pre; per-batch BN2 sum / sumsq from the f32 result."""
    t = pl.program_id(1)

    @pl.when(t == 0)
    def _():
        s2_ref[...] = jnp.zeros_like(s2_ref)
        ss2_ref[...] = jnp.zeros_like(ss2_ref)

    r = jnp.maximum(h_ref[...].astype(jnp.float32) * sc1_ref[...] + sh1_ref[...], 0.0)
    r = r * vm_ref[...]                                 # keep pad columns out of BN2 stats
    y = jnp.dot(w2_ref[...], r.astype(jnp.bfloat16),
                preferred_element_type=jnp.float32)     # [ouc, ts] f32
    y_ref[...] = y.astype(y_ref.dtype)                  # bf16 store
    s2_ref[...] += jnp.sum(y, axis=1, keepdims=True)    # stats from f32, pre-cast
    ss2_ref[...] += jnp.sum(y * y, axis=1, keepdims=True)


def _bn2_residual_kernel(*refs, add_residual):
    """BN2 (single FMA) + optional residual; lane-dense f32 store."""
    if add_residual:
        y_ref, sc2_ref, sh2_ref, res_ref, o_ref = refs
    else:
        y_ref, sc2_ref, sh2_ref, o_ref = refs
    o = y_ref[...].astype(jnp.float32) * sc2_ref[...] + sh2_ref[...]
    if add_residual:
        o = o + res_ref[...]
    o_ref[...] = o.astype(o_ref.dtype)


# ----------------------------- wrapper ----------------------------------------------


def _tpu_budget():
    """(vmem_limit_bytes, spatial tile cap), generation gated with a safe fallback."""
    try:
        info = pltpu.get_tpu_info()
        cap = int(getattr(info, "vmem_capacity_bytes", 0) or 0)
    except Exception:
        cap = 0
    if cap <= 0:
        cap = 64 * 1024 * 1024                       # assume v7x-like (most conservative)
    if cap >= 100 * 1024 * 1024:                     # v5e / v6e: 128 MiB physical
        return 96 * 1024 * 1024, 8192
    return min(cap * 3 // 4, 48 * 1024 * 1024), 4096  # v7x: 64 MiB per TensorCore


def _pick_spatial_tile(spad, cap):
    """Largest multiple of 128 dividing spad (spad itself a multiple of 128), <= cap."""
    best = 128
    t = 128
    while t <= min(spad, cap):
        if spad % t == 0:
            best = t
        t += 128
    return best


def fused_transform3d(x, w1, gamma1, beta1, w2, gamma2, beta2, *, stride=1, eps=1e-3):
    """x: [N, Cin, D, H, W] f32.  w1: [expc, Cin, kd, kh, kw].  w2: [ouc, expc, 1, 1, 1]."""
    N, Cin, D, H, W = x.shape
    expc, _, kd, kh, kw = w1.shape
    ouc = w2.shape[0]
    assert stride == 1, "wrapper implements the stride=1 SAME-padding configuration"

    S = D * H * W                                     # true voxel count (BN denominator)
    Mtot = N * S

    # --- host glue: SAME padding, flatten padded volume, lane pad + DMA guard ----------
    pd_, ph_, pw_ = (kd - 1) // 2, (kh - 1) // 2, (kw - 1) // 2
    Dp, Hp, Wp = D + 2 * pd_, H + 2 * ph_, W + 2 * pw_
    Sp = Dp * Hp * Wp
    Sp_pad = _round_up(Sp, 128)                       # lane-dense working spatial size
    max_off = pd_ * Hp * Wp + ph_ * Wp + pw_
    guard = _round_up(max_off, 128) if max_off > 0 else 0
    Sg = Sp_pad + 2 * guard

    xb = x.astype(jnp.bfloat16)
    xpad = jnp.pad(xb, ((0, 0), (0, 0), (pd_, pd_), (ph_, ph_), (pw_, pw_)))
    x_g = jnp.pad(xpad.reshape(N, Cin, Sp),
                  ((0, 0), (0, 0), (guard, guard + Sp_pad - Sp)))        # [N, Cin, Sg] bf16

    # tap offsets (flat index deltas in the padded volume) + matching per-tap weights
    offsets = []
    for a in range(kd):
        for b in range(kh):
            for c in range(kw):
                offsets.append((a - pd_) * Hp * Wp + (b - ph_) * Wp + (c - pw_))
    offsets = tuple(offsets)
    Koff = kd * kh * kw
    w1s = jnp.transpose(w1, (2, 3, 4, 0, 1)).reshape(Koff, expc, Cin).astype(jnp.bfloat16)
    w2m = w2.reshape(ouc, expc).astype(jnp.bfloat16)

    # validity mask: 1 at interior (real) voxels, 0 at SAME-pad border / lane-pad tail
    vm = jnp.zeros((Dp, Hp, Wp), jnp.float32)
    vm = vm.at[pd_:pd_ + D, ph_:ph_ + H, pw_:pw_ + W].set(1.0)
    vm = jnp.pad(vm.reshape(1, Sp), ((0, 0), (0, Sp_pad - Sp)))          # [1, Sp_pad]

    vmem_limit, tile_cap = _tpu_budget()
    TS = _pick_spatial_tile(Sp_pad, tile_cap)
    T = Sp_pad // TS
    grid = (N, T)

    cp_acc = pltpu.CompilerParams(                    # batch axis parallel (megacore),
        dimension_semantics=("parallel", "arbitrary"),  # spatial axis carries accumulators
        vmem_limit_bytes=vmem_limit)
    cp_par = pltpu.CompilerParams(
        dimension_semantics=("parallel", "parallel"),
        vmem_limit_bytes=vmem_limit)

    # ---- pass 1: in-kernel im2col conv1 + per-batch BN1 statistics --------------------
    h, s1n, ss1n = pl.pallas_call(
        partial(_conv1_stats_kernel, offsets=offsets, guard=guard, ts=TS, expc=expc),
        out_shape=(jax.ShapeDtypeStruct((N, expc, Sp_pad), jnp.bfloat16),
                   jax.ShapeDtypeStruct((N, expc, 1), jnp.float32),
                   jax.ShapeDtypeStruct((N, expc, 1), jnp.float32)),
        grid=grid,
        in_specs=[
            pl.BlockSpec((None, Cin, Sg), lambda n, t: (n, 0, 0)),   # resident per batch
            pl.BlockSpec((Koff, expc, Cin), lambda n, t: (0, 0, 0)),
            pl.BlockSpec((1, TS), lambda n, t: (0, t)),
        ],
        out_specs=(
            pl.BlockSpec((None, expc, TS), lambda n, t: (n, 0, t)),
            pl.BlockSpec((None, expc, 1), lambda n, t: (n, 0, 0)),
            pl.BlockSpec((None, expc, 1), lambda n, t: (n, 0, 0)),
        ),
        compiler_params=cp_acc,
    )(x_g, w1s, vm)

    # fold BN1 batch stats -> per-channel scale/shift (single FMA in pass 2)
    s1 = jnp.sum(s1n, axis=0)
    ss1 = jnp.sum(ss1n, axis=0)
    mu1 = s1 / Mtot
    var1 = jnp.maximum(ss1 / Mtot - mu1 * mu1, 0.0)   # biased variance (training-mode BN)
    scale1 = gamma1.reshape(expc, 1) * lax.rsqrt(var1 + eps)
    shift1 = beta1.reshape(expc, 1) - mu1 * scale1

    # ---- pass 2: BN1 + ReLU + 1x1x1 conv2 + per-batch BN2 statistics ------------------
    y_pre, s2n, ss2n = pl.pallas_call(
        _bn1_relu_conv2_kernel,
        out_shape=(jax.ShapeDtypeStruct((N, ouc, Sp_pad), jnp.bfloat16),
                   jax.ShapeDtypeStruct((N, ouc, 1), jnp.float32),
                   jax.ShapeDtypeStruct((N, ouc, 1), jnp.float32)),
        grid=grid,
        in_specs=[
            pl.BlockSpec((None, expc, TS), lambda n, t: (n, 0, t)),
            pl.BlockSpec((expc, 1), lambda n, t: (0, 0)),
            pl.BlockSpec((expc, 1), lambda n, t: (0, 0)),
            pl.BlockSpec((1, TS), lambda n, t: (0, t)),
            pl.BlockSpec((ouc, expc), lambda n, t: (0, 0)),
        ],
        out_specs=(
            pl.BlockSpec((None, ouc, TS), lambda n, t: (n, 0, t)),
            pl.BlockSpec((None, ouc, 1), lambda n, t: (n, 0, 0)),
            pl.BlockSpec((None, ouc, 1), lambda n, t: (n, 0, 0)),
        ),
        compiler_params=cp_acc,
    )(h, scale1, shift1, vm, w2m)

    s2 = jnp.sum(s2n, axis=0)
    ss2 = jnp.sum(ss2n, axis=0)
    mu2 = s2 / Mtot
    var2 = jnp.maximum(ss2 / Mtot - mu2 * mu2, 0.0)
    scale2 = gamma2.reshape(ouc, 1) * lax.rsqrt(var2 + eps)
    shift2 = beta2.reshape(ouc, 1) - mu2 * scale2

    # ---- pass 3: BN2 + optional residual (fully parallel grid) ------------------------
    add_residual = (Cin == ouc) and (stride == 1)
    ins = [y_pre, scale2, shift2]
    in_specs = [
        pl.BlockSpec((None, ouc, TS), lambda n, t: (n, 0, t)),
        pl.BlockSpec((ouc, 1), lambda n, t: (0, 0)),
        pl.BlockSpec((ouc, 1), lambda n, t: (0, 0)),
    ]
    if add_residual:
        xres = jnp.pad(x, ((0, 0), (0, 0), (pd_, pd_), (ph_, ph_), (pw_, pw_)))
        xres = jnp.pad(xres.reshape(N, Cin, Sp), ((0, 0), (0, 0), (0, Sp_pad - Sp)))
        ins.append(xres)                                                 # f32 residual
        in_specs.append(pl.BlockSpec((None, Cin, TS), lambda n, t: (n, 0, t)))

    out_flat = pl.pallas_call(
        partial(_bn2_residual_kernel, add_residual=add_residual),
        out_shape=jax.ShapeDtypeStruct((N, ouc, Sp_pad), jnp.float32),
        grid=grid,
        in_specs=in_specs,
        out_specs=pl.BlockSpec((None, ouc, TS), lambda n, t: (n, 0, t)),
        compiler_params=cp_par,
    )(*ins)

    # strip lane pad + SAME-pad border (cheap host-side slice, no transpose)
    out = out_flat[:, :, :Sp].reshape(N, ouc, Dp, Hp, Wp)
    return out[:, :, pd_:pd_ + D, ph_:ph_ + H, pw_:pw_ + W]


# ----------------------------- reference & demo -------------------------------------


def _reference(x, w1, gamma1, beta1, w2, gamma2, beta2, eps=1e-3):
    # Mirrors the kernel's sanctioned precision schedule (bf16 conv operands, bf16 storage
    # of h / y_pre, BN statistics taken from the f32 values) so the comparison verifies
    # structure / indexing / BN / residual correctness.  BN is PyTorch training-mode.
    dn = ("NCDHW", "OIDHW", "NCDHW")
    f32 = jnp.float32
    xr = x.astype(jnp.bfloat16).astype(f32)
    w1r = w1.astype(jnp.bfloat16).astype(f32)
    h = lax.conv_general_dilated(xr, w1r, (1, 1, 1), "SAME", dimension_numbers=dn,
                                 precision=lax.Precision.HIGHEST)
    mu = jnp.mean(h, axis=(0, 2, 3, 4), keepdims=True)
    var = jnp.mean(jnp.square(h - mu), axis=(0, 2, 3, 4), keepdims=True)
    scale1 = gamma1[None, :, None, None, None] * lax.rsqrt(var + eps)
    shift1 = beta1[None, :, None, None, None] - mu * scale1
    h_rt = h.astype(jnp.bfloat16).astype(f32)            # bf16 h round trip
    r = jnp.maximum(h_rt * scale1 + shift1, 0.0)
    r_b = r.astype(jnp.bfloat16).astype(f32)             # bf16 matmul operand
    w2r = w2.astype(jnp.bfloat16).astype(f32)
    y = lax.conv_general_dilated(r_b, w2r, (1, 1, 1), "SAME", dimension_numbers=dn,
                                 precision=lax.Precision.HIGHEST)
    mu2 = jnp.mean(y, axis=(0, 2, 3, 4), keepdims=True)
    var2 = jnp.mean(jnp.square(y - mu2), axis=(0, 2, 3, 4), keepdims=True)
    scale2 = gamma2[None, :, None, None, None] * lax.rsqrt(var2 + eps)
    shift2 = beta2[None, :, None, None, None] - mu2 * scale2
    y_rt = y.astype(jnp.bfloat16).astype(f32)             # bf16 y_pre round trip
    out = y_rt * scale2 + shift2
    if x.shape[1] == y.shape[1]:
        out = out + x
    return out


if __name__ == "__main__":
    # Module config: inc=4, ouc=4, kernel_size=3, stride=1, expand_ratio=1, se=False
    N, Cin, D, H, W = 2, 4, 8, 8, 8
    ouc, ksz, stride, expand_ratio = 4, 3, 1, 1
    expc = round(ouc * expand_ratio)
    eps = 1e-3

    key = jax.random.PRNGKey(0)
    kx, kw1, kw2 = jax.random.split(key, 3)
    x = jax.random.normal(kx, (N, Cin, D, H, W), jnp.float32)
    w1 = 0.1 * jax.random.normal(kw1, (expc, Cin, ksz, ksz, ksz), jnp.float32)
    w2 = 0.1 * jax.random.normal(kw2, (ouc, expc, 1, 1, 1), jnp.float32)
    # BatchNorm default affine init (gamma=1, beta=0)
    gamma1 = jnp.ones((expc,), jnp.float32)
    beta1 = jnp.zeros((expc,), jnp.float32)
    gamma2 = jnp.ones((ouc,), jnp.float32)
    beta2 = jnp.zeros((ouc,), jnp.float32)

    out = fused_transform3d(x, w1, gamma1, beta1, w2, gamma2, beta2, stride=stride, eps=eps)
    out = jax.block_until_ready(out)

    ref = _reference(x, w1, gamma1, beta1, w2, gamma2, beta2, eps=eps)
    assert out.shape == (N, ouc, D, H, W)
    max_err = float(jnp.max(jnp.abs(out - ref)))
    # Tolerance guards rare 1-ulp bf16 double-rounding divergences of h / y_pre (amplified by
    # the BN2 rescale); typical agreement is far tighter since the reference mirrors the casts.
    assert jnp.allclose(out, ref, atol=2e-2, rtol=2e-2), max_err

    print("KERNEL_OK")
</pallas_src>

<mosaic_0001>
module attributes {stable_mosaic.version = 11 : i64} {
  func.func @_conv1_stats_kernel(%arg0: i32, %arg1: i32, %arg2: memref<1x4x1280xbf16, #tpu.memory_space<vmem>>, %arg3: memref<27x4x4xbf16, #tpu.memory_space<vmem>>, %arg4: memref<1x1024xf32, #tpu.memory_space<vmem>>, %arg5: memref<1x4x1024xbf16, #tpu.memory_space<vmem>>, %arg6: memref<1x4x1xf32, #tpu.memory_space<vmem>>, %arg7: memref<1x4x1xf32, #tpu.memory_space<vmem>>) attributes {dimension_semantics = [#tpu.dimension_semantics<parallel>, #tpu.dimension_semantics<arbitrary>], iteration_bounds = array<i64: 2, 1>, scalar_prefetch = 0 : i64, scratch_operands = 0 : i64, tpu.core_type = #tpu.core_type<tc>, window_params = [{transform_indices = @transform_0, window_bounds = array<i64: 1, 4, 1280>}, {pipeline_mode = #tpu.pipeline_mode<synchronous>, transform_indices = @transform_1, window_bounds = array<i64: 27, 4, 4>}, {transform_indices = @transform_2, window_bounds = array<i64: 1, 1024>}, {transform_indices = @transform_3, window_bounds = array<i64: 1, 4, 1024>}, {transform_indices = @transform_4, window_bounds = array<i64: 1, 4, 1>}, {transform_indices = @transform_5, window_bounds = array<i64: 1, 4, 1>}]} {
    %c0_i32 = arith.constant 0 : i32
    %0 = arith.cmpi eq, %arg1, %c0_i32 : i32
    %1 = arith.extui %0 : i1 to i32
    %c0_i32_0 = arith.constant 0 : i32
    %2 = arith.cmpi ne, %1, %c0_i32_0 : i32
    scf.if %2 {
      %cst_103 = arith.constant 0.000000e+00 : f32
      %168 = vector.broadcast %cst_103 : f32 to vector<4x1xf32>
      %c0_104 = arith.constant 0 : index
      %c0_105 = arith.constant 0 : index
      %c0_106 = arith.constant 0 : index
      %169 = vector.load %arg6[%c0_104, %c0_105, %c0_106] : memref<1x4x1xf32, #tpu.memory_space<vmem>>, vector<1x4x1xf32>
      %170 = vector.shape_cast %169 : vector<1x4x1xf32> to vector<4x1xf32>
      %171 = vector.shape_cast %168 : vector<4x1xf32> to vector<1x4x1xf32>
      tpu.vector_store %arg6[%c0_104, %c0_105, %c0_106], %171 {strides = array<i32>} : memref<1x4x1xf32, #tpu.memory_space<vmem>>, vector<1x4x1xf32>,
      %cst_107 = arith.constant 0.000000e+00 : f32
      %172 = vector.broadcast %cst_107 : f32 to vector<4x1xf32>
      %c0_108 = arith.constant 0 : index
      %c0_109 = arith.constant 0 : index
      %c0_110 = arith.constant 0 : index
      %173 = vector.load %arg7[%c0_108, %c0_109, %c0_110] : memref<1x4x1xf32, #tpu.memory_space<vmem>>, vector<1x4x1xf32>
      %174 = vector.shape_cast %173 : vector<1x4x1xf32> to vector<4x1xf32>
      %175 = vector.shape_cast %172 : vector<4x1xf32> to vector<1x4x1xf32>
      tpu.vector_store %arg7[%c0_108, %c0_109, %c0_110], %175 {strides = array<i32>} : memref<1x4x1xf32, #tpu.memory_space<vmem>>, vector<1x4x1xf32>,
    } else {
    }
    %c1024_i32 = arith.constant 1024 : i32
    %3 = arith.muli %arg1, %c1024_i32 : i32
    %4 = tpu.assume_multiple %3, 128 : i32
    %c0 = arith.constant 0 : index
    %c0_1 = arith.constant 0 : index
    %5 = arith.index_cast %4 : i32 to index
    %6 = vector.load %arg2[%c0, %c0_1, %5] : memref<1x4x1280xbf16, #tpu.memory_space<vmem>>, vector<1x4x1280xbf16>
    %7 = vector.shape_cast %6 : vector<1x4x1280xbf16> to vector<4x1280xbf16>
    %cst = arith.constant 0.000000e+00 : f32
    %8 = vector.broadcast %cst : f32 to vector<4x1024xf32>
    %9 = vector.extract_strided_slice %7 {offsets = [0, 17], sizes = [4, 1024], strides = [1, 1]} : vector<4x1280xbf16> to vector<4x1024xbf16>
    %c0_2 = arith.constant 0 : index
    %c0_3 = arith.constant 0 : index
    %c0_4 = arith.constant 0 : index
    %10 = vector.load %arg3[%c0_2, %c0_3, %c0_4] : memref<27x4x4xbf16, #tpu.memory_space<vmem>>, vector<1x4x4xbf16>
    %11 = vector.shape_cast %10 : vector<1x4x4xbf16> to vector<4x4xbf16>
    %cst_5 = arith.constant dense<0.000000e+00> : vector<4x1024xf32>
    %12 = tpu.matmul %11, %9, %cst_5 {dimension_numbers = #tpu.dot_dimension_numbers<[1], [0], [0], [1], [0, 0, 1, 1], [], []>} : vector<4x4xbf16>, vector<4x1024xbf16>, vector<4x1024xf32> -> vector<4x1024xf32>
    %13 = arith.addf %8, %12 : vector<4x1024xf32>
    %14 = vector.extract_strided_slice %7 {offsets = [0, 18], sizes = [4, 1024], strides = [1, 1]} : vector<4x1280xbf16> to vector<4x1024xbf16>
    %c1 = arith.constant 1 : index
    %c0_6 = arith.constant 0 : index
    %c0_7 = arith.constant 0 : index
    %15 = vector.load %arg3[%c1, %c0_6, %c0_7] : memref<27x4x4xbf16, #tpu.memory_space<vmem>>, vector<1x4x4xbf16>
    %16 = vector.shape_cast %15 : vector<1x4x4xbf16> to vector<4x4xbf16>
    %cst_8 = arith.constant dense<0.000000e+00> : vector<4x1024xf32>
    %17 = tpu.matmul %16, %14, %cst_8 {dimension_numbers = #tpu.dot_dimension_numbers<[1], [0], [0], [1], [0, 0, 1, 1], [], []>} : vector<4x4xbf16>, vector<4x1024xbf16>, vector<4x1024xf32> -> vector<4x1024xf32>
    %18 = arith.addf %13, %17 : vector<4x1024xf32>
    %19 = vector.extract_strided_slice %7 {offsets = [0, 19], sizes = [4, 1024], strides = [1, 1]} : vector<4x1280xbf16> to vector<4x1024xbf16>
    %c2 = arith.constant 2 : index
    %c0_9 = arith.constant 0 : index
    %c0_10 = arith.constant 0 : index
    %20 = vector.load %arg3[%c2, %c0_9, %c0_10] : memref<27x4x4xbf16, #tpu.memory_space<vmem>>, vector<1x4x4xbf16>
    %21 = vector.shape_cast %20 : vector<1x4x4xbf16> to vector<4x4xbf16>
    %cst_11 = arith.constant dense<0.000000e+00> : vector<4x1024xf32>
    %22 = tpu.matmul %21, %19, %cst_11 {dimension_numbers = #tpu.dot_dimension_numbers<[1], [0], [0], [1], [0, 0, 1, 1], [], []>} : vector<4x4xbf16>, vector<4x1024xbf16>, vector<4x1024xf32> -> vector<4x1024xf32>
    %23 = arith.addf %18, %22 : vector<4x1024xf32>
    %24 = vector.extract_strided_slice %7 {offsets = [0, 27], sizes = [4, 1024], strides = [1, 1]} : vector<4x1280xbf16> to vector<4x1024xbf16>
    %c3 = arith.constant 3 : index
    %c0_12 = arith.constant 0 : index
    %c0_13 = arith.constant 0 : index
    %25 = vector.load %arg3[%c3, %c0_12, %c0_13] : memref<27x4x4xbf16, #tpu.memory_space<vmem>>, vector<1x4x4xbf16>
    %26 = vector.shape_cast %25 : vector<1x4x4xbf16> to vector<4x4xbf16>
    %cst_14 = arith.constant dense<0.000000e+00> : vector<4x1024xf32>
    %27 = tpu.matmul %26, %24, %cst_14 {dimension_numbers = #tpu.dot_dimension_numbers<[1], [0], [0], [1], [0, 0, 1, 1], [], []>} : vector<4x4xbf16>, vector<4x1024xbf16>, vector<4x1024xf32> -> vector<4x1024xf32>
    %28 = arith.addf %23, %27 : vector<4x1024xf32>
    %29 = vector.extract_strided_slice %7 {offsets = [0, 28], sizes = [4, 1024], strides = [1, 1]} : vector<4x1280xbf16> to vector<4x1024xbf16>
    %c4 = arith.constant 4 : index
    %c0_15 = arith.constant 0 : index
    %c0_16 = arith.constant 0 : index
    %30 = vector.load %arg3[%c4, %c0_15, %c0_16] : memref<27x4x4xbf16, #tpu.memory_space<vmem>>, vector<1x4x4xbf16>
    %31 = vector.shape_cast %30 : vector<1x4x4xbf16> to vector<4x4xbf16>
    %cst_17 = arith.constant dense<0.000000e+00> : vector<4x1024xf32>
    %32 = tpu.matmul %31, %29, %cst_17 {dimension_numbers = #tpu.dot_dimension_numbers<[1], [0], [0], [1], [0, 0, 1, 1], [], []>} : vector<4x4xbf16>, vector<4x1024xbf16>, vector<4x1024xf32> -> vector<4x1024xf32>
    %33 = arith.addf %28, %32 : vector<4x1024xf32>
    %34 = vector.extract_strided_slice %7 {offsets = [0, 29], sizes = [4, 1024], strides = [1, 1]} : vector<4x1280xbf16> to vector<4x1024xbf16>
    %c5 = arith.constant 5 : index
    %c0_18 = arith.constant 0 : index
    %c0_19 = arith.constant 0 : index
    %35 = vector.load %arg3[%c5, %c0_18, %c0_19] : memref<27x4x4xbf16, #tpu.memory_space<vmem>>, vector<1x4x4xbf16>
    %36 = vector.shape_cast %35 : vector<1x4x4xbf16> to vector<4x4xbf16>
    %cst_20 = arith.constant dense<0.000000e+00> : vector<4x1024xf32>
    %37 = tpu.matmul %36, %34, %cst_20 {dimension_numbers = #tpu.dot_dimension_numbers<[1], [0], [0], [1], [0, 0, 1, 1], [], []>} : vector<4x4xbf16>, vector<4x1024xbf16>, vector<4x1024xf32> -> vector<4x1024xf32>
    %38 = arith.addf %33, %37 : vector<4x1024xf32>
    %39 = vector.extract_strided_slice %7 {offsets = [0, 37], sizes = [4, 1024], strides = [1, 1]} : vector<4x1280xbf16> to vector<4x1024xbf16>
    %c6 = arith.constant 6 : index
    %c0_21 = arith.constant 0 : index
    %c0_22 = arith.constant 0 : index
    %40 = vector.load %arg3[%c6, %c0_21, %c0_22] : memref<27x4x4xbf16, #tpu.memory_space<vmem>>, vector<1x4x4xbf16>
    %41 = vector.shape_cast %40 : vector<1x4x4xbf16> to vector<4x4xbf16>
    %cst_23 = arith.constant dense<0.000000e+00> : vector<4x1024xf32>
    %42 = tpu.matmul %41, %39, %cst_23 {dimension_numbers = #tpu.dot_dimension_numbers<[1], [0], [0], [1], [0, 0, 1, 1], [], []>} : vector<4x4xbf16>, vector<4x1024xbf16>, vector<4x1024xf32> -> vector<4x1024xf32>
    %43 = arith.addf %38, %42 : vector<4x1024xf32>
    %44 = vector.extract_strided_slice %7 {offsets = [0, 38], sizes = [4, 1024], strides = [1, 1]} : vector<4x1280xbf16> to vector<4x1024xbf16>
    %c7 = arith.constant 7 : index
    %c0_24 = arith.constant 0 : index
    %c0_25 = arith.constant 0 : index
    %45 = vector.load %arg3[%c7, %c0_24, %c0_25] : memref<27x4x4xbf16, #tpu.memory_space<vmem>>, vector<1x4x4xbf16>
    %46 = vector.shape_cast %45 : vector<1x4x4xbf16> to vector<4x4xbf16>
    %cst_26 = arith.constant dense<0.000000e+00> : vector<4x1024xf32>
    %47 = tpu.matmul %46, %44, %cst_26 {dimension_numbers = #tpu.dot_dimension_numbers<[1], [0], [0], [1], [0, 0, 1, 1], [], []>} : vector<4x4xbf16>, vector<4x1024xbf16>, vector<4x1024xf32> -> vector<4x1024xf32>
    %48 = arith.addf %43, %47 : vector<4x1024xf32>
    %49 = vector.extract_strided_slice %7 {offsets = [0, 39], sizes = [4, 1024], strides = [1, 1]} : vector<4x1280xbf16> to vector<4x1024xbf16>
    %c8 = arith.constant 8 : index
    %c0_27 = arith.constant 0 : index
    %c0_28 = arith.constant 0 : index
    %50 = vector.load %arg3[%c8, %c0_27, %c0_28] : memref<27x4x4xbf16, #tpu.memory_space<vmem>>, vector<1x4x4xbf16>
    %51 = vector.shape_cast %50 : vector<1x4x4xbf16> to vector<4x4xbf16>
    %cst_29 = arith.constant dense<0.000000e+00> : vector<4x1024xf32>
    %52 = tpu.matmul %51, %49, %cst_29 {dimension_numbers = #tpu.dot_dimension_numbers<[1], [0], [0], [1], [0, 0, 1, 1], [], []>} : vector<4x4xbf16>, vector<4x1024xbf16>, vector<4x1024xf32> -> vector<4x1024xf32>
    %53 = arith.addf %48, %52 : vector<4x1024xf32>
    %54 = vector.extract_strided_slice %7 {offsets = [0, 117], sizes = [4, 1024], strides = [1, 1]} : vector<4x1280xbf16> to vector<4x1024xbf16>
    %c9 = arith.constant 9 : index
    %c0_30 = arith.constant 0 : index
    %c0_31 = arith.constant 0 : index
    %55 = vector.load %arg3[%c9, %c0_30, %c0_31] : memref<27x4x4xbf16, #tpu.memory_space<vmem>>, vector<1x4x4xbf16>
    %56 = vector.shape_cast %55 : vector<1x4x4xbf16> to vector<4x4xbf16>
    %cst_32 = arith.constant dense<0.000000e+00> : vector<4x1024xf32>
    %57 = tpu.matmul %56, %54, %cst_32 {dimension_numbers = #tpu.dot_dimension_numbers<[1], [0], [0], [1], [0, 0, 1, 1], [], []>} : vector<4x4xbf16>, vector<4x1024xbf16>, vector<4x1024xf32> -> vector<4x1024xf32>
    %58 = arith.addf %53, %57 : vector<4x1024xf32>
    %59 = vector.extract_strided_slice %7 {offsets = [0, 118], sizes = [4, 1024], strides = [1, 1]} : vector<4x1280xbf16> to vector<4x1024xbf16>
    %c10 = arith.constant 10 : index
    %c0_33 = arith.constant 0 : index
    %c0_34 = arith.constant 0 : index
    %60 = vector.load %arg3[%c10, %c0_33, %c0_34] : memref<27x4x4xbf16, #tpu.memory_space<vmem>>, vector<1x4x4xbf16>
    %61 = vector.shape_cast %60 : vector<1x4x4xbf16> to vector<4x4xbf16>
    %cst_35 = arith.constant dense<0.000000e+00> : vector<4x1024xf32>
    %62 = tpu.matmul %61, %59, %cst_35 {dimension_numbers = #tpu.dot_dimension_numbers<[1], [0], [0], [1], [0, 0, 1, 1], [], []>} : vector<4x4xbf16>, vector<4x1024xbf16>, vector<4x1024xf32> -> vector<4x1024xf32>
    %63 = arith.addf %58, %62 : vector<4x1024xf32>
    %64 = vector.extract_strided_slice %7 {offsets = [0, 119], sizes = [4, 1024], strides = [1, 1]} : vector<4x1280xbf16> to vector<4x1024xbf16>
    %c11 = arith.constant 11 : index
    %c0_36 = arith.constant 0 : index
    %c0_37 = arith.constant 0 : index
    %65 = vector.load %arg3[%c11, %c0_36, %c0_37] : memref<27x4x4xbf16, #tpu.memory_space<vmem>>, vector<1x4x4xbf16>
    %66 = vector.shape_cast %65 : vector<1x4x4xbf16> to vector<4x4xbf16>
    %cst_38 = arith.constant dense<0.000000e+00> : vector<4x1024xf32>
    %67 = tpu.matmul %66, %64, %cst_38 {dimension_numbers = #tpu.dot_dimension_numbers<[1], [0], [0], [1], [0, 0, 1, 1], [], []>} : vector<4x4xbf16>, vector<4x1024xbf16>, vector<4x1024xf32> -> vector<4x1024xf32>
    %68 = arith.addf %63, %67 : vector<4x1024xf32>
    %69 = vector.extract_strided_slice %7 {offsets = [0, 127], sizes = [4, 1024], strides = [1, 1]} : vector<4x1280xbf16> to vector<4x1024xbf16>
    %c12 = arith.constant 12 : index
    %c0_39 = arith.constant 0 : index
    %c0_40 = arith.constant 0 : index
    %70 = vector.load %arg3[%c12, %c0_39, %c0_40] : memref<27x4x4xbf16, #tpu.memory_space<vmem>>, vector<1x4x4xbf16>
    %71 = vector.shape_cast %70 : vector<1x4x4xbf16> to vector<4x4xbf16>
    %cst_41 = arith.constant dense<0.000000e+00> : vector<4x1024xf32>
    %72 = tpu.matmul %71, %69, %cst_41 {dimension_numbers = #tpu.dot_dimension_numbers<[1], [0], [0], [1], [0, 0, 1, 1], [], []>} : vector<4x4xbf16>, vector<4x1024xbf16>, vector<4x1024xf32> -> vector<4x1024xf32>
    %73 = arith.addf %68, %72 : vector<4x1024xf32>
    %74 = vector.extract_strided_slice %7 {offsets = [0, 128], sizes = [4, 1024], strides = [1, 1]} : vector<4x1280xbf16> to vector<4x1024xbf16>
    %c13 = arith.constant 13 : index
    %c0_42 = arith.constant 0 : index
    %c0_43 = arith.constant 0 : index
    %75 = vector.load %arg3[%c13, %c0_42, %c0_43] : memref<27x4x4xbf16, #tpu.memory_space<vmem>>, vector<1x4x4xbf16>
    %76 = vector.shape_cast %75 : vector<1x4x4xbf16> to vector<4x4xbf16>
    %cst_44 = arith.constant dense<0.000000e+00> : vector<4x1024xf32>
    %77 = tpu.matmul %76, %74, %cst_44 {dimension_numbers = #tpu.dot_dimension_numbers<[1], [0], [0], [1], [0, 0, 1, 1], [], []>} : vector<4x4xbf16>, vector<4x1024xbf16>, vector<4x1024xf32> -> vector<4x1024xf32>
    %78 = arith.addf %73, %77 : vector<4x1024xf32>
    %79 = vector.extract_strided_slice %7 {offsets = [0, 129], sizes = [4, 1024], strides = [1, 1]} : vector<4x1280xbf16> to vector<4x1024xbf16>
    %c14 = arith.constant 14 : index
    %c0_45 = arith.constant 0 : index
    %c0_46 = arith.constant 0 : index
    %80 = vector.load %arg3[%c14, %c0_45, %c0_46] : memref<27x4x4xbf16, #tpu.memory_space<vmem>>, vector<1x4x4xbf16>
    %81 = vector.shape_cast %80 : vector<1x4x4xbf16> to vector<4x4xbf16>
    %cst_47 = arith.constant dense<0.000000e+00> : vector<4x1024xf32>
    %82 = tpu.matmul %81, %79, %cst_47 {dimension_numbers = #tpu.dot_dimension_numbers<[1], [0], [0], [1], [0, 0, 1, 1], [], []>} : vector<4x4xbf16>, vector<4x1024xbf16>, vector<4x1024xf32> -> vector<4x1024xf32>
    %83 = arith.addf %78, %82 : vector<4x1024xf32>
    %84 = vector.extract_strided_slice %7 {offsets = [0, 137], sizes = [4, 1024], strides = [1, 1]} : vector<4x1280xbf16> to vector<4x1024xbf16>
    %c15 = arith.constant 15 : index
    %c0_48 = arith.constant 0 : index
    %c0_49 = arith.constant 0 : index
    %85 = vector.load %arg3[%c15, %c0_48, %c0_49] : memref<27x4x4xbf16, #tpu.memory_space<vmem>>, vector<1x4x4xbf16>
    %86 = vector.shape_cast %85 : vector<1x4x4xbf16> to vector<4x4xbf16>
    %cst_50 = arith.constant dense<0.000000e+00> : vector<4x1024xf32>
    %87 = tpu.matmul %86, %84, %cst_50 {dimension_numbers = #tpu.dot_dimension_numbers<[1], [0], [0], [1], [0, 0, 1, 1], [], []>} : vector<4x4xbf16>, vector<4x1024xbf16>, vector<4x1024xf32> -> vector<4x1024xf32>
    %88 = arith.addf %83, %87 : vector<4x1024xf32>
    %89 = vector.extract_strided_slice %7 {offsets = [0, 138], sizes = [4, 1024], strides = [1, 1]} : vector<4x1280xbf16> to vector<4x1024xbf16>
    %c16 = arith.constant 16 : index
    %c0_51 = arith.constant 0 : index
    %c0_52 = arith.constant 0 : index
    %90 = vector.load %arg3[%c16, %c0_51, %c0_52] : memref<27x4x4xbf16, #tpu.memory_space<vmem>>, vector<1x4x4xbf16>
    %91 = vector.shape_cast %90 : vector<1x4x4xbf16> to vector<4x4xbf16>
    %cst_53 = arith.constant dense<0.000000e+00> : vector<4x1024xf32>
    %92 = tpu.matmul %91, %89, %cst_53 {dimension_numbers = #tpu.dot_dimension_numbers<[1], [0], [0], [1], [0, 0, 1, 1], [], []>} : vector<4x4xbf16>, vector<4x1024xbf16>, vector<4x1024xf32> -> vector<4x1024xf32>
    %93 = arith.addf %88, %92 : vector<4x1024xf32>
    %94 = vector.extract_strided_slice %7 {offsets = [0, 139], sizes = [4, 1024], strides = [1, 1]} : vector<4x1280xbf16> to vector<4x1024xbf16>
    %c17 = arith.constant 17 : index
    %c0_54 = arith.constant 0 : index
    %c0_55 = arith.constant 0 : index
    %95 = vector.load %arg3[%c17, %c0_54, %c0_55] : memref<27x4x4xbf16, #tpu.memory_space<vmem>>, vector<1x4x4xbf16>
    %96 = vector.shape_cast %95 : vector<1x4x4xbf16> to vector<4x4xbf16>
    %cst_56 = arith.constant dense<0.000000e+00> : vector<4x1024xf32>
    %97 = tpu.matmul %96, %94, %cst_56 {dimension_numbers = #tpu.dot_dimension_numbers<[1], [0], [0], [1], [0, 0, 1, 1], [], []>} : vector<4x4xbf16>, vector<4x1024xbf16>, vector<4x1024xf32> -> vector<4x1024xf32>
    %98 = arith.addf %93, %97 : vector<4x1024xf32>
    %99 = vector.extract_strided_slice %7 {offsets = [0, 217], sizes = [4, 1024], strides = [1, 1]} : vector<4x1280xbf16> to vector<4x1024xbf16>
    %c18 = arith.constant 18 : index
    %c0_57 = arith.constant 0 : index
    %c0_58 = arith.constant 0 : index
    %100 = vector.load %arg3[%c18, %c0_57, %c0_58] : memref<27x4x4xbf16, #tpu.memory_space<vmem>>, vector<1x4x4xbf16>
    %101 = vector.shape_cast %100 : vector<1x4x4xbf16> to vector<4x4xbf16>
    %cst_59 = arith.constant dense<0.000000e+00> : vector<4x1024xf32>
    %102 = tpu.matmul %101, %99, %cst_59 {dimension_numbers = #tpu.dot_dimension_numbers<[1], [0], [0], [1], [0, 0, 1, 1], [], []>} : vector<4x4xbf16>, vector<4x1024xbf16>, vector<4x1024xf32> -> vector<4x1024xf32>
    %103 = arith.addf %98, %102 : vector<4x1024xf32>
    %104 = vector.extract_strided_slice %7 {offsets = [0, 218], sizes = [4, 1024], strides = [1, 1]} : vector<4x1280xbf16> to vector<4x1024xbf16>
    %c19 = arith.constant 19 : index
    %c0_60 = arith.constant 0 : index
    %c0_61 = arith.constant 0 : index
    %105 = vector.load %arg3[%c19, %c0_60, %c0_61] : memref<27x4x4xbf16, #tpu.memory_space<vmem>>, vector<1x4x4xbf16>
    %106 = vector.shape_cast %105 : vector<1x4x4xbf16> to vector<4x4xbf16>
    %cst_62 = arith.constant dense<0.000000e+00> : vector<4x1024xf32>
    %107 = tpu.matmul %106, %104, %cst_62 {dimension_numbers = #tpu.dot_dimension_numbers<[1], [0], [0], [1], [0, 0, 1, 1], [], []>} : vector<4x4xbf16>, vector<4x1024xbf16>, vector<4x1024xf32> -> vector<4x1024xf32>
    %108 = arith.addf %103, %107 : vector<4x1024xf32>
    %109 = vector.extract_strided_slice %7 {offsets = [0, 219], sizes = [4, 1024], strides = [1, 1]} : vector<4x1280xbf16> to vector<4x1024xbf16>
    %c20 = arith.constant 20 : index
    %c0_63 = arith.constant 0 : index
    %c0_64 = arith.constant 0 : index
    %110 = vector.load %arg3[%c20, %c0_63, %c0_64] : memref<27x4x4xbf16, #tpu.memory_space<vmem>>, vector<1x4x4xbf16>
    %111 = vector.shape_cast %110 : vector<1x4x4xbf16> to vector<4x4xbf16>
    %cst_65 = arith.constant dense<0.000000e+00> : vector<4x1024xf32>
    %112 = tpu.matmul %111, %109, %cst_65 {dimension_numbers = #tpu.dot_dimension_numbers<[1], [0], [0], [1], [0, 0, 1, 1], [], []>} : vector<4x4xbf16>, vector<4x1024xbf16>, vector<4x1024xf32> -> vector<4x1024xf32>
    %113 = arith.addf %108, %112 : vector<4x1024xf32>
    %114 = vector.extract_strided_slice %7 {offsets = [0, 227], sizes = [4, 1024], strides = [1, 1]} : vector<4x1280xbf16> to vector<4x1024xbf16>
    %c21 = arith.constant 21 : index
    %c0_66 = arith.constant 0 : index
    %c0_67 = arith.constant 0 : index
    %115 = vector.load %arg3[%c21, %c0_66, %c0_67] : memref<27x4x4xbf16, #tpu.memory_space<vmem>>, vector<1x4x4xbf16>
    %116 = vector.shape_cast %115 : vector<1x4x4xbf16> to vector<4x4xbf16>
    %cst_68 = arith.constant dense<0.000000e+00> : vector<4x1024xf32>
    %117 = tpu.matmul %116, %114, %cst_68 {dimension_numbers = #tpu.dot_dimension_numbers<[1], [0], [0], [1], [0, 0, 1, 1], [], []>} : vector<4x4xbf16>, vector<4x1024xbf16>, vector<4x1024xf32> -> vector<4x1024xf32>
    %118 = arith.addf %113, %117 : vector<4x1024xf32>
    %119 = vector.extract_strided_slice %7 {offsets = [0, 228], sizes = [4, 1024], strides = [1, 1]} : vector<4x1280xbf16> to vector<4x1024xbf16>
    %c22 = arith.constant 22 : index
    %c0_69 = arith.constant 0 : index
    %c0_70 = arith.constant 0 : index
    %120 = vector.load %arg3[%c22, %c0_69, %c0_70] : memref<27x4x4xbf16, #tpu.memory_space<vmem>>, vector<1x4x4xbf16>
    %121 = vector.shape_cast %120 : vector<1x4x4xbf16> to vector<4x4xbf16>
    %cst_71 = arith.constant dense<0.000000e+00> : vector<4x1024xf32>
    %122 = tpu.matmul %121, %119, %cst_71 {dimension_numbers = #tpu.dot_dimension_numbers<[1], [0], [0], [1], [0, 0, 1, 1], [], []>} : vector<4x4xbf16>, vector<4x1024xbf16>, vector<4x1024xf32> -> vector<4x1024xf32>
    %123 = arith.addf %118, %122 : vector<4x1024xf32>
    %124 = vector.extract_strided_slice %7 {offsets = [0, 229], sizes = [4, 1024], strides = [1, 1]} : vector<4x1280xbf16> to vector<4x1024xbf16>
    %c23 = arith.constant 23 : index
    %c0_72 = arith.constant 0 : index
    %c0_73 = arith.constant 0 : index
    %125 = vector.load %arg3[%c23, %c0_72, %c0_73] : memref<27x4x4xbf16, #tpu.memory_space<vmem>>, vector<1x4x4xbf16>
    %126 = vector.shape_cast %125 : vector<1x4x4xbf16> to vector<4x4xbf16>
    %cst_74 = arith.constant dense<0.000000e+00> : vector<4x1024xf32>
    %127 = tpu.matmul %126, %124, %cst_74 {dimension_numbers = #tpu.dot_dimension_numbers<[1], [0], [0], [1], [0, 0, 1, 1], [], []>} : vector<4x4xbf16>, vector<4x1024xbf16>, vector<4x1024xf32> -> vector<4x1024xf32>
    %128 = arith.addf %123, %127 : vector<4x1024xf32>
    %129 = vector.extract_strided_slice %7 {offsets = [0, 237], sizes = [4, 1024], strides = [1, 1]} : vector<4x1280xbf16> to vector<4x1024xbf16>
    %c24 = arith.constant 24 : index
    %c0_75 = arith.constant 0 : index
    %c0_76 = arith.constant 0 : index
    %130 = vector.load %arg3[%c24, %c0_75, %c0_76] : memref<27x4x4xbf16, #tpu.memory_space<vmem>>, vector<1x4x4xbf16>
    %131 = vector.shape_cast %130 : vector<1x4x4xbf16> to vector<4x4xbf16>
    %cst_77 = arith.constant dense<0.000000e+00> : vector<4x1024xf32>
    %132 = tpu.matmul %131, %129, %cst_77 {dimension_numbers = #tpu.dot_dimension_numbers<[1], [0], [0], [1], [0, 0, 1, 1], [], []>} : vector<4x4xbf16>, vector<4x1024xbf16>, vector<4x1024xf32> -> vector<4x1024xf32>
    %133 = arith.addf %128, %132 : vector<4x1024xf32>
    %134 = vector.extract_strided_slice %7 {offsets = [0, 238], sizes = [4, 1024], strides = [1, 1]} : vector<4x1280xbf16> to vector<4x1024xbf16>
    %c25 = arith.constant 25 : index
    %c0_78 = arith.constant 0 : index
    %c0_79 = arith.constant 0 : index
    %135 = vector.load %arg3[%c25, %c0_78, %c0_79] : memref<27x4x4xbf16, #tpu.memory_space<vmem>>, vector<1x4x4xbf16>
    %136 = vector.shape_cast %135 : vector<1x4x4xbf16> to vector<4x4xbf16>
    %cst_80 = arith.constant dense<0.000000e+00> : vector<4x1024xf32>
    %137 = tpu.matmul %136, %134, %cst_80 {dimension_numbers = #tpu.dot_dimension_numbers<[1], [0], [0], [1], [0, 0, 1, 1], [], []>} : vector<4x4xbf16>, vector<4x1024xbf16>, vector<4x1024xf32> -> vector<4x1024xf32>
    %138 = arith.addf %133, %137 : vector<4x1024xf32>
    %139 = vector.extract_strided_slice %7 {offsets = [0, 239], sizes = [4, 1024], strides = [1, 1]} : vector<4x1280xbf16> to vector<4x1024xbf16>
    %c26 = arith.constant 26 : index
    %c0_81 = arith.constant 0 : index
    %c0_82 = arith.constant 0 : index
    %140 = vector.load %arg3[%c26, %c0_81, %c0_82] : memref<27x4x4xbf16, #tpu.memory_space<vmem>>, vector<1x4x4xbf16>
    %141 = vector.shape_cast %140 : vector<1x4x4xbf16> to vector<4x4xbf16>
    %cst_83 = arith.constant dense<0.000000e+00> : vector<4x1024xf32>
    %142 = tpu.matmul %141, %139, %cst_83 {dimension_numbers = #tpu.dot_dimension_numbers<[1], [0], [0], [1], [0, 0, 1, 1], [], []>} : vector<4x4xbf16>, vector<4x1024xbf16>, vector<4x1024xf32> -> vector<4x1024xf32>
    %143 = arith.addf %138, %142 : vector<4x1024xf32>
    %c0_84 = arith.constant 0 : index
    %c0_85 = arith.constant 0 : index
    %144 = vector.load %arg4[%c0_84, %c0_85] : memref<1x1024xf32, #tpu.memory_space<vmem>>, vector<1x1024xf32>
    %145 = vector.broadcast %144 : vector<1x1024xf32> to vector<4x1024xf32>
    %146 = arith.mulf %143, %145 : vector<4x1024xf32>
    %147 = arith.truncf %146 : vector<4x1024xf32> to vector<4x1024xbf16>
    %c0_86 = arith.constant 0 : index
    %c0_87 = arith.constant 0 : index
    %c0_88 = arith.constant 0 : index
    %148 = vector.load %arg5[%c0_86, %c0_87, %c0_88] : memref<1x4x1024xbf16, #tpu.memory_space<vmem>>, vector<1x4x1024xbf16>
    %149 = vector.shape_cast %148 : vector<1x4x1024xbf16> to vector<4x1024xbf16>
    %150 = vector.shape_cast %147 : vector<4x1024xbf16> to vector<1x4x1024xbf16>
    tpu.vector_store %arg5[%c0_86, %c0_87, %c0_88], %150 {strides = array<i32>} : memref<1x4x1024xbf16, #tpu.memory_space<vmem>>, vector<1x4x1024xbf16>,
    %c0_89 = arith.constant 0 : index
    %c0_90 = arith.constant 0 : index
    %c0_91 = arith.constant 0 : index
    %151 = vector.load %arg6[%c0_89, %c0_90, %c0_91] : memref<1x4x1xf32, #tpu.memory_space<vmem>>, vector<1x4x1xf32>
    %152 = vector.shape_cast %151 : vector<1x4x1xf32> to vector<4x1xf32>
    %cst_92 = arith.constant dense<0.000000e+00> : vector<4xf32>
    %153 = vector.multi_reduction <add>, %146, %cst_92 [1] : vector<4x1024xf32> to vector<4xf32>
    %154 = vector.shape_cast %153 : vector<4xf32> to vector<4x1xf32>
    %155 = arith.addf %152, %154 : vector<4x1xf32>
    %c0_93 = arith.constant 0 : index
    %c0_94 = arith.constant 0 : index
    %c0_95 = arith.constant 0 : index
    %156 = vector.load %arg6[%c0_93, %c0_94, %c0_95] : memref<1x4x1xf32, #tpu.memory_space<vmem>>, vector<1x4x1xf32>
    %157 = vector.shape_cast %156 : vector<1x4x1xf32> to vector<4x1xf32>
    %158 = vector.shape_cast %155 : vector<4x1xf32> to vector<1x4x1xf32>
    tpu.vector_store %arg6[%c0_93, %c0_94, %c0_95], %158 {strides = array<i32>} : memref<1x4x1xf32, #tpu.memory_space<vmem>>, vector<1x4x1xf32>,
    %c0_96 = arith.constant 0 : index
    %c0_97 = arith.constant 0 : index
    %c0_98 = arith.constant 0 : index
    %159 = vector.load %arg7[%c0_96, %c0_97, %c0_98] : memref<1x4x1xf32, #tpu.memory_space<vmem>>, vector<1x4x1xf32>
    %160 = vector.shape_cast %159 : vector<1x4x1xf32> to vector<4x1xf32>
    %161 = arith.mulf %146, %146 : vector<4x1024xf32>
    %cst_99 = arith.constant dense<0.000000e+00> : vector<4xf32>
    %162 = vector.multi_reduction <add>, %161, %cst_99 [1] : vector<4x1024xf32> to vector<4xf32>
    %163 = vector.shape_cast %162 : vector<4xf32> to vector<4x1xf32>
    %164 = arith.addf %160, %163 : vector<4x1xf32>
    %c0_100 = arith.constant 0 : index
    %c0_101 = arith.constant 0 : index
    %c0_102 = arith.constant 0 : index
    %165 = vector.load %arg7[%c0_100, %c0_101, %c0_102] : memref<1x4x1xf32, #tpu.memory_space<vmem>>, vector<1x4x1xf32>
    %166 = vector.shape_cast %165 : vector<1x4x1xf32> to vector<4x1xf32>
    %167 = vector.shape_cast %164 : vector<4x1xf32> to vector<1x4x1xf32>
    tpu.vector_store %arg7[%c0_100, %c0_101, %c0_102], %167 {strides = array<i32>} : memref<1x4x1xf32, #tpu.memory_space<vmem>>, vector<1x4x1xf32>,
    return
  }
  func.func @transform_0(%arg0: i32, %arg1: i32) -> (i32, i32, i32) {
    %c0_i32 = arith.constant 0 : i32
    %c0_i32_0 = arith.constant 0 : i32
    %c0_i32_1 = arith.constant 0 : i32
    return %arg0, %c0_i32, %c0_i32_0 : i32, i32, i32
  }
  func.func @transform_1(%arg0: i32, %arg1: i32) -> (i32, i32, i32) {
    %c0_i32 = arith.constant 0 : i32
    %c0_i32_0 = arith.constant 0 : i32
    %c0_i32_1 = arith.constant 0 : i32
    %c0_i32_2 = arith.constant 0 : i32
    return %c0_i32, %c0_i32_0, %c0_i32_1 : i32, i32, i32
  }
  func.func @transform_2(%arg0: i32, %arg1: i32) -> (i32, i32) {
    %c0_i32 = arith.constant 0 : i32
    %c0_i32_0 = arith.constant 0 : i32
    return %c0_i32, %arg1 : i32, i32
  }
  func.func @transform_3(%arg0: i32, %arg1: i32) -> (i32, i32, i32) {
    %c0_i32 = arith.constant 0 : i32
    %c0_i32_0 = arith.constant 0 : i32
    return %arg0, %c0_i32, %arg1 : i32, i32, i32
  }
  func.func @transform_4(%arg0: i32, %arg1: i32) -> (i32, i32, i32) {
    %c0_i32 = arith.constant 0 : i32
    %c0_i32_0 = arith.constant 0 : i32
    %c0_i32_1 = arith.constant 0 : i32
    return %arg0, %c0_i32, %c0_i32_0 : i32, i32, i32
  }
  func.func @transform_5(%arg0: i32, %arg1: i32) -> (i32, i32, i32) {
    %c0_i32 = arith.constant 0 : i32
    %c0_i32_0 = arith.constant 0 : i32
    %c0_i32_1 = arith.constant 0 : i32
    return %arg0, %c0_i32, %c0_i32_0 : i32, i32, i32
  }
}

</mosaic_0001>

<llo_original>
// kernel: tpu_custom_call.1
$region0: #{tpu_custom_call.1}
  #allocation0 [shape = 'u32[]', space=smem, size = 0x4, offset = 0x4, fixed_abs, tag = 'smem constant byte address 0x4 - core index']
  #allocation1 [shape = 'u32[144,128]{1,0:T(1,128)}', space=vmem, size = 0x12000, scoped, tag = 'internal scratch']
  %s0 = inlined_call_operand.vmem [shape: bf16[2,4,1280], index: 0, kind: input, shape index: {}]
  %s1 = inlined_call_operand.vmem [shape: bf16[27,4,4], index: 1, kind: input, shape index: {}]
  %s2 = inlined_call_operand.vmem [shape: f32[1,1024], index: 2, kind: input, shape index: {}]
  %s3 = inlined_call_operand.hbm [shape: bf16[2,4,1024], index: 3, kind: output, shape index: {0}]
  %s4 = inlined_call_operand.vmem [shape: f32[2,4,1], index: 4, kind: output, shape index: {1}]
  %s5 = inlined_call_operand.vmem [shape: f32[2,4,1], index: 5, kind: output, shape index: {2}]
  %6 = xla_tuple %s3, %s4, %s5
  %s7 = sld [smem:[#allocation0]]
  $region65: #{tpu_custom_call.1} parent=0
    _
  %s9 = ssub.s32 1, %s7
  %s10 = scalar_select 0, %s9, %s7
  $region1: #{tpu_custom_call.1} parent=0
    #allocation2 [shape = 'u8[16384]{0}', space=vmem, size = 0x4000, scoped, tag = 'output window, operand 0']
    #allocation3 [shape = 's32[2]{0}', space=sflag, size = 0x8, scoped, tag = 'scoped memory for tpu_custom_call.1']
    %11 = vsyncpa [#allocation3], 0
    %s12 = scalar_lea.sflag [#allocation3], 1
    %13 = vsyncpa %s12, 0
    loop: start=0, step=1, limit=4
    $region2: #{tpu_custom_call.1} parent=1 // loop_pre_header
      _
    $region3: #{tpu_custom_call.1} parent=1 // loop_header
      %s15 = sphi 0, %s19
      %p16 = scmp.ge.s32.totalorder %s15, 4
      %s22 = sphi 0, %s34
      %s23 = sphi 0, %s30
      %s24 = sphi 0, %s22
      %s25 = sphi 0, %s23
      %s26 = sphi 0, %s24
      %s27 = sphi 0, %s25
      %s37 = sphi 0, %s39
      %s40 = sphi 0, %s37
      %s41 = sphi 0, %s40
      %s57 = sphi 0, %s41
      %s61 = sphi 0, %s61
      %s63 = sphi 0, %s61
      %s64 = sphi 0, %s63
      %s78 = sphi 0, %s64
      %s84 = sphi 0, %s86
      %s87 = sphi 0, %s84
      %s88 = sphi 0, %s87
      %s104 = sphi 0, %s88
      %s112 = sphi 0, %s114
      %s115 = sphi 0, %s112
      %s116 = sphi 0, %s115
      %s132 = sphi 0, %s116
      %s138 = sphi 0, %s140
      %s141 = sphi 0, %s138
      %s142 = sphi 0, %s141
      %s158 = sphi 0, %s142
      %s164 = sphi 0, %s166
      %s167 = sphi 0, %s164
      %s168 = sphi 0, %s167
      %s184 = sphi 0, %s168
    $region4: #{tpu_custom_call.1} parent=1 // loop_header_branch
      %18 = sbr.rel (%p16) target = $region8
    $region5: #{tpu_custom_call.1} parent=1 // loop_body
      %s20 = ssub.s32 %s15, 1
      %s21 = ssub.s32 %s15, 2
      %s28 = sadd.s32 1, %s23
      %p29 = scmp.ge.s32.totalorder %s28, 1
      %s30 = scalar_select %p29, 0, %s28
      %s31 = sadd.s32 1, %s22
      %s32 = scalar_select %p29, %s31, %s22
      %p33 = scmp.ge.s32.totalorder %s32, 2
      %s34 = scalar_select %p33, 0, %s32
      %s35 = ssub.s32 %s22, %s34
      %p36 = scmp.eq.s32.totalorder %s35, 0
      %s38 = sadd.s32 %s37, 1
      %s39 = scalar_select %p36, %s37, %s38
      %p42 = pneg %p36
      %p43 = scmp.eq.s32.totalorder %s15, 1
      %p44 = por %p42, %p43
      %p45 = scmp.ne.s32.totalorder %s37, %s40
      %p46 = scmp.eq.s32.totalorder %s15, 0
      %p47 = por %p45, %p46
      %p48 = scmp.ne.s32.totalorder %s37, %s40
      %p49 = scmp.eq.s32.totalorder %s20, 1
      %p50 = por %p48, %p49
      %p51 = scmp.ne.s32.totalorder %s40, %s41
      %p52 = scmp.eq.s32.totalorder %s20, 0
      %p53 = por %p51, %p52
      %p54 = scmp.ne.s32.totalorder %s40, %s41
      %p55 = scmp.eq.s32.totalorder %s21, 1
      %p56 = por %p54, %p55
      %p58 = scmp.ne.s32.totalorder %s41, %s57
      %p59 = scmp.eq.s32.totalorder %s21, 0
      %p60 = por %p58, %p59
      %s62 = sadd.s32 %s61, 1
      %p65 = scmp.eq.s32.totalorder %s15, 1
      %p66 = scmp.ne.s32.totalorder %s61, %s63
      %p67 = scmp.eq.s32.totalorder %s15, 0
      %p68 = por %p66, %p67
      %p69 = scmp.ne.s32.totalorder %s61, %s63
      %p70 = scmp.eq.s32.totalorder %s20, 1
      %p71 = por %p69, %p70
      %p72 = scmp.ne.s32.totalorder %s63, %s64
      %p73 = scmp.eq.s32.totalorder %s20, 0
      %p74 = por %p72, %p73
      %p75 = scmp.ne.s32.totalorder %s63, %s64
      %p76 = scmp.eq.s32.totalorder %s21, 1
      %p77 = por %p75, %p76
      %p79 = scmp.ne.s32.totalorder %s64, %s78
      %p80 = scmp.eq.s32.totalorder %s21, 0
      %p81 = por %p79, %p80
      %s82 = ssub.s32 %s23, %s30
      %p83 = scmp.eq.s32.totalorder %s82, 0
      %s85 = sadd.s32 %s84, 1
      %s86 = scalar_select %p83, %s84, %s85
      %p89 = pneg %p83
      %p90 = scmp.eq.s32.totalorder %s15, 1
      %p91 = por %p89, %p90
      %p92 = scmp.ne.s32.totalorder %s84, %s87
      %p93 = scmp.eq.s32.totalorder %s15, 0
      %p94 = por %p92, %p93
      %p95 = scmp.ne.s32.totalorder %s84, %s87
      %p96 = scmp.eq.s32.totalorder %s20, 1
      %p97 = por %p95, %p96
      %p98 = scmp.ne.s32.totalorder %s87, %s88
      %p99 = scmp.eq.s32.totalorder %s20, 0
      %p100 = por %p98, %p99
      %p101 = scmp.ne.s32.totalorder %s87, %s88
      %p102 = scmp.eq.s32.totalorder %s21, 1
      %p103 = por %p101, %p102
      %p105 = scmp.ne.s32.totalorder %s88, %s104
      %p106 = scmp.eq.s32.totalorder %s21, 0
      %p107 = por %p105, %p106
      %s108 = ssub.s32 %s22, %s34
      %s109 = ssub.s32 %s23, %s30
      %s110 = sor.u32 %s108, %s109
      %p111 = scmp.eq.s32.totalorder %s110, 0
      %s113 = sadd.s32 %s112, 1
      %s114 = scalar_select %p111, %s112, %s113
      %p117 = pneg %p111
      %p118 = scmp.eq.s32.totalorder %s15, 1
      %p119 = por %p117, %p118
      %p120 = scmp.ne.s32.totalorder %s112, %s115
      %p121 = scmp.eq.s32.totalorder %s15, 0
      %p122 = por %p120, %p121
      %p123 = scmp.ne.s32.totalorder %s112, %s115
      %p124 = scmp.eq.s32.totalorder %s20, 1
      %p125 = por %p123, %p124
      %p126 = scmp.ne.s32.totalorder %s115, %s116
      %p127 = scmp.eq.s32.totalorder %s20, 0
      %p128 = por %p126, %p127
      %p129 = scmp.ne.s32.totalorder %s115, %s116
      %p130 = scmp.eq.s32.totalorder %s21, 1
      %p131 = por %p129, %p130
      %p133 = scmp.ne.s32.totalorder %s116, %s132
      %p134 = scmp.eq.s32.totalorder %s21, 0
      %p135 = por %p133, %p134
      %s136 = ssub.s32 %s22, %s34
      %p137 = scmp.eq.s32.totalorder %s136, 0
      %s139 = sadd.s32 %s138, 1
      %s140 = scalar_select %p137, %s138, %s139
      %p143 = pneg %p137
      %p144 = scmp.eq.s32.totalorder %s15, 1
      %p145 = por %p143, %p144
      %p146 = scmp.ne.s32.totalorder %s138, %s141
      %p147 = scmp.eq.s32.totalorder %s15, 0
      %p148 = por %p146, %p147
      %p149 = scmp.ne.s32.totalorder %s138, %s141
      %p150 = scmp.eq.s32.totalorder %s20, 1
      %p151 = por %p149, %p150
      %p152 = scmp.ne.s32.totalorder %s141, %s142
      %p153 = scmp.eq.s32.totalorder %s20, 0
      %p154 = por %p152, %p153
      %p155 = scmp.ne.s32.totalorder %s141, %s142
      %p156 = scmp.eq.s32.totalorder %s21, 1
      %p157 = por %p155, %p156
      %p159 = scmp.ne.s32.totalorder %s142, %s158
      %p160 = scmp.eq.s32.totalorder %s21, 0
      %p161 = por %p159, %p160
      %s162 = ssub.s32 %s22, %s34
      %p163 = scmp.eq.s32.totalorder %s162, 0
      %s165 = sadd.s32 %s164, 1
      %s166 = scalar_select %p163, %s164, %s165
      %p169 = pneg %p163
      %p170 = scmp.eq.s32.totalorder %s15, 1
      %p171 = por %p169, %p170
      %p172 = scmp.ne.s32.totalorder %s164, %s167
      %p173 = scmp.eq.s32.totalorder %s15, 0
      %p174 = por %p172, %p173
      %p175 = scmp.ne.s32.totalorder %s164, %s167
      %p176 = scmp.eq.s32.totalorder %s20, 1
      %p177 = por %p175, %p176
      %p178 = scmp.ne.s32.totalorder %s167, %s168
      %p179 = scmp.eq.s32.totalorder %s20, 0
      %p180 = por %p178, %p179
      %p181 = scmp.ne.s32.totalorder %s167, %s168
      %p182 = scmp.eq.s32.totalorder %s21, 1
      %p183 = por %p181, %p182
      %p185 = scmp.ne.s32.totalorder %s168, %s184
      %p186 = scmp.eq.s32.totalorder %s21, 0
      %p187 = por %p185, %p186
      %p188 = scmp.le.s32.totalorder 1, %s15
      %p189 = scmp.lt.s32.totalorder %s15, 3
      %p190 = pnand %p188, %p189
      %p191 = pneg %p190
      // Predicated region
      $region9: #{tpu_custom_call.1} parent=5 // pred_check
        _
      $region10: #{tpu_custom_call.1} parent=5 // pred_check_branch
        %193 = sbr.rel (%p190) target = $region12
      $region11: #{tpu_custom_call.1} parent=5 // pred_region
        %s194 = ssub.s32 %s15, 1
        // Predicated region
        $region13: #{tpu_custom_call.1} parent=11 // pred_check
          %p195 = pneg %p74
        $region14: #{tpu_custom_call.1} parent=11 // pred_check_branch
          %197 = sbr.rel (%p195) target = $region16
        $region15: #{tpu_custom_call.1} parent=11 // pred_region
          _
        $region16: #{tpu_custom_call.1} parent=11 // pred_fallthru
          _
        // Predicated region
        $region17: #{tpu_custom_call.1} parent=11 // pred_check
          %p198 = pneg %p100
        $region18: #{tpu_custom_call.1} parent=11 // pred_check_branch
          %200 = sbr.rel (%p198) target = $region20
        $region19: #{tpu_custom_call.1} parent=11 // pred_region
          %s201 = smul.u32 8, %s25
          %p202 = scmp.lt.s32.totalorder %s201, 7
          %s203 = scalar_select %p202, %s201, 7
          %s204 = scalar_lea.vmem %s2, %s203
          %s205 = smul.u32 8, %s25
        $region20: #{tpu_custom_call.1} parent=11 // pred_fallthru
          _
      $region12: #{tpu_custom_call.1} parent=5 // pred_fallthru
        _
      %p206 = scmp.lt.s32.totalorder %s15, 2
      // Predicated region
      $region21: #{tpu_custom_call.1} parent=5 // pred_check
        %p207 = pneg %p206
      $region22: #{tpu_custom_call.1} parent=5 // pred_check_branch
        %209 = sbr.rel (%p207) target = $region24
      $region23: #{tpu_custom_call.1} parent=5 // pred_region
        // Predicated region
        $region25: #{tpu_custom_call.1} parent=23 // pred_check
          %p210 = pneg %p47
        $region26: #{tpu_custom_call.1} parent=23 // pred_check_branch
          %212 = sbr.rel (%p210) target = $region28
        $region27: #{tpu_custom_call.1} parent=23 // pred_region
          %p213 = scmp.lt.s32.totalorder %s22, 1
          %s214 = scalar_select %p213, %s22, 1
          %s215 = smul.addr %s214, 10
          %s216 = smul.addr %s215, 2
          %s217 = scalar_lea.vmem %s0, %s216
        $region28: #{tpu_custom_call.1} parent=23 // pred_fallthru
          _
      $region24: #{tpu_custom_call.1} parent=5 // pred_fallthru
        _
      %p218 = scmp.le.s32.totalorder 1, %s15
      %p219 = scmp.lt.s32.totalorder %s15, 3
      %p220 = pnand %p218, %p219
      %p221 = pneg %p220
      // Predicated region
      $region29: #{tpu_custom_call.1} parent=5 // pred_check
        _
      $region30: #{tpu_custom_call.1} parent=5 // pred_check_branch
        %223 = sbr.rel (%p220) target = $region32
      $region31: #{tpu_custom_call.1} parent=5 // pred_region
        %s224 = ssub.s32 %s15, 1
        %p225 = scmp.lt.s32.totalorder %s24, 1
        %s226 = scalar_select %p225, %s24, 1
        %s227 = smul.addr %s226, 10
        %s228 = smul.addr %s227, 2
        %s229 = scalar_lea.vmem %s0, %s228
        %p230 = pneg %p53
        %p231 = pneg %p50
        %p232 = pneg %p74
        %p233 = pneg %p71
        %s234 = smul.u32 8, %s25
        %p235 = scmp.lt.s32.totalorder %s234, 7
        %s236 = scalar_select %p235, %s234, 7
        %s237 = scalar_lea.vmem %s2, %s236
        %p238 = pneg %p100
        %p239 = pneg %p97
        %p240 = pneg %p128
        %p241 = pneg %p125
        %s242 = sand.u32 %s115, 1
        %s243 = scalar_lea.sflag [#allocation3], %s242
        %s244 = sand.u32 %s115, 1
        %s245 = smul.addr %s244, 16
        %s246 = scalar_lea.vmem [#allocation2], %s245
        %p247 = pneg %p154
        %p248 = pneg %p151
        %p249 = scmp.lt.s32.totalorder %s24, 1
        %s250 = scalar_select %p249, %s24, 1
        %s251 = smul.addr %s250, 4
        %s252 = scalar_lea.vmem %s4, %s251
        %p253 = pneg %p180
        %p254 = pneg %p177
        %p255 = scmp.lt.s32.totalorder %s24, 1
        %s256 = scalar_select %p255, %s24, 1
        %s257 = smul.addr %s256, 4
        %s258 = scalar_lea.vmem %s5, %s257
        %p259 = scmp.lt.s32.totalorder %s24, 1
        %s260 = scalar_select %p259, %s24, 1
        %s261 = smul.addr %s260, 10
        %s262 = smul.addr %s261, 2
        %s263 = scalar_lea.vmem %s0, %s262
        %s264 = smul.u32 8, %s25
        %p265 = scmp.lt.s32.totalorder %s264, 7
        %s266 = scalar_select %p265, %s264, 7
        %s267 = scalar_lea.vmem %s2, %s266
        %s268 = smul.u32 8, %s25
        %s269 = smul.u32 8, %s25
        %p270 = scmp.lt.s32.totalorder %s24, 1
        %s271 = scalar_select %p270, %s24, 1
        %s272 = smul.addr %s271, 4
        %s273 = scalar_lea.vmem %s4, %s272
        %p274 = scmp.lt.s32.totalorder %s24, 1
        %s275 = scalar_select %p274, %s24, 1
        %s276 = smul.addr %s275, 4
        %s277 = scalar_lea.vmem %s5, %s276
        %p279 = scmp.eq.s32.totalorder %s25, 0
        // Predicated region
        $region33: #{tpu_custom_call.1} parent=31 // pred_check
          %p280 = pneg %p279
        $region34: #{tpu_custom_call.1} parent=31 // pred_check_branch
          %282 = sbr.rel (%p280) target = $region36
        $region35: #{tpu_custom_call.1} parent=31 // pred_region
          %vm283 = vcmask 3072
          %284 = vst.msk [vmem:[%s273] sm:$0xf] %vm283, 0.0
          %285 = vst.msk [vmem:[%s277] sm:$0xf] %vm283, 0.0
        $region36: #{tpu_custom_call.1} parent=31 // pred_fallthru
          _
        %s286 = smul.u32 %s25, 1024
        %s287 = sshra.s32 %s286, 7
        %s288 = sand.u32 %s286, 127
        %s289 = smul.addr %s287, 2
        %s290 = scalar_lea.vmem %s263, %s289
        %v291 = vld [vmem:[%s290] sm:$0xff]
        %v292 = vld [vmem:[%s290 + $0x8] sm:$0xff]
        %v293 = vld [vmem:[%s290 + $0x10] sm:$0xf]
        %v294 = vld [vmem:[%s1] sm:$0x3]
        %s295 = scalar_lea.vmem %s1, 2
        %v296 = vld [vmem:[%s295] sm:$0x3]
        %v300 = vcombine.high %v291, %v291
        %v302 = vunpack.c.l.s4 1983009808
        %v303 = vunpack.c.0.s8 %v302
        %v304 = vlaneseq
        %v305 = vshrl.u32 %v304, 7
        %v306 = vsub.s32 %v303, %v305
        %v307 = vrot.slane %v291, %v306
        %v309 = vunpack.c.l.s4 1983009808
        %v310 = vunpack.c.0.s8 %v309
        %v311 = vlaneseq
        %v312 = vshrl.u32 %v311, 7
        %v313 = vsub.s32 %v310, %v312
        %v314 = vrot.slane %v300, %v313
        %v315 = vcombine.high %v307, %v307
        %v316 = vcombine.high %v314, %v314
        %v317 = vcombine.high %v292, %v292
        %v319 = vunpack.c.l.s4 1983009808
        %v320 = vunpack.c.0.s8 %v319
        %v321 = vlaneseq
        %v322 = vshrl.u32 %v321, 7
        %v323 = vsub.s32 %v320, %v322
        %v324 = vrot.slane %v292, %v323
        %v326 = vunpack.c.l.s4 1983009808
        %v327 = vunpack.c.0.s8 %v326
        %v328 = vlaneseq
        %v329 = vshrl.u32 %v328, 7
        %v330 = vsub.s32 %v327, %v329
        %v331 = vrot.slane %v317, %v330
        %v332 = vcombine.high %v324, %v324
        %v333 = vcombine.high %v331, %v331
        %v335 = vunpack.c.l.s4 1983009808
        %v336 = vunpack.c.0.s8 %v335
        %v337 = vlaneseq
        %v338 = vshrl.u32 %v337, 7
        %v339 = vsub.s32 %v336, %v338
        %v340 = vrot.slane %v293, %v339
        %341 = vrot.lane.b32.xlu0 %v307, 110
        %v342 = vpop.permute.xlu0 %341
        %343 = vrot.lane.b32.xlu0 %v315, 110
        %v344 = vpop.permute.xlu0 %343
        %345 = vrot.lane.b32.xlu0 %v314, 110
        %v346 = vpop.permute.xlu0 %345
        %347 = vrot.lane.b32.xlu0 %v316, 110
        %v348 = vpop.permute.xlu0 %347
        %349 = vrot.lane.b32.xlu0 %v324, 110
        %v350 = vpop.permute.xlu0 %349
        %351 = vrot.lane.b32.xlu0 %v332, 110
        %v352 = vpop.permute.xlu0 %351
        %353 = vrot.lane.b32.xlu0 %v331, 110
        %v354 = vpop.permute.xlu0 %353
        %355 = vrot.lane.b32.xlu0 %v333, 110
        %v356 = vpop.permute.xlu0 %355
        %357 = vrot.lane.b32.xlu0 %v340, 110
        %v358 = vpop.permute.xlu0 %357
        %vm359 = vcmask 900096
        %v360 = vsel %vm359, %v342, %v344
        %v361 = vsel %vm359, %v344, %v346
        %v362 = vsel %vm359, %v346, %v348
        %v363 = vsel %vm359, %v348, %v350
        %v364 = vsel %vm359, %v350, %v352
        %v365 = vsel %vm359, %v352, %v354
        %v366 = vsel %vm359, %v354, %v356
        %v367 = vsel %vm359, %v356, %v358
        %vm368 = vcmask 31744
        %v370 = vsel %vm368, %v296, 0
        %vm372 = vcmask 1041408
        %v374 = vsel %vm372, %v360, 0
        %v377 = vsel %vm372, %v361, 0
        %v380 = vsel %vm372, %v362, 0
        %v383 = vsel %vm372, %v363, 0
        %v386 = vsel %vm372, %v364, 0
        %v389 = vsel %vm372, %v365, 0
        %v392 = vsel %vm372, %v366, 0
        %v395 = vsel %vm372, %v367, 0
        %397 = vmatprep.subr.bf16.mxu0 %v377
        %398 = vmatpush1.bf16.msra.mxu0 %v374
        %399 = vmatprep.subr.bf16.mxu0 0
        %400 = vmatpush1.bf16.msra.mxu0 0
        %401 = vmatprep.subr.bf16.mxu0 0
        %402 = vmatpush1.bf16.msra.mxu0 0
        %403 = vmatprep.subr.bf16.mxu0 0
        %404 = vmatpush1.bf16.msra.mxu0 0
        %405 = vmatprep.subr.bf16.mxu0 0
        %406 = vmatpush1.bf16.msra.mxu0 0
        %407 = vmatprep.subr.bf16.mxu0 0
        %408 = vmatpush1.bf16.msra.mxu0 0
        %409 = vmatprep.subr.bf16.mxu0 0
        %410 = vmatpush1.bf16.msra.mxu0 0
        %411 = vmatprep.subr.bf16.mxu0 0
        %412 = vmatpush1.bf16.msra.mxu0 0
        %413 = vmatprep.subr.bf16.mxu0 0
        %414 = vmatpush1.bf16.msra.mxu0 0
        %415 = vmatprep.subr.bf16.mxu0 0
        %416 = vmatpush1.bf16.msra.mxu0 0
        %417 = vmatprep.subr.bf16.mxu0 0
        %418 = vmatpush1.bf16.msra.mxu0 0
        %419 = vmatprep.subr.bf16.mxu0 0
        %420 = vmatpush1.bf16.msra.mxu0 0
        %421 = vmatprep.subr.bf16.mxu0 0
        %422 = vmatpush1.bf16.msra.mxu0 0
        %423 = vmatprep.subr.bf16.mxu0 0
        %424 = vmatpush1.bf16.msra.mxu0 0
        %425 = vmatprep.subr.bf16.mxu0 0
        %426 = vmatpush1.bf16.msra.mxu0 0
        %427 = vmatprep.subr.bf16.mxu0 0
        %428 = vmatpush1.bf16.msra.mxu0 0
        %429 = vmatprep.mubr.bf16.mxu0 0
        %430 = vmatmul.mubr.bf16.gmra.mrb[0].mxu0 %v370
        %v431 = vpop.f32.mrb[0].mxu0
        %v432 = vadd.f32 0.0, %v431
        %v433 = vpop.f32.mrb[0].mxu0
        %v434 = vadd.f32 0.0, %v433
        %v435 = vpop.f32.mrb[0].mxu0
        %v436 = vpop.f32.mrb[0].mxu0
        %437 = vdwg.mxu0
        %438 = vmatprep.subr.bf16.mxu0 %v383
        %439 = vmatpush1.bf16.msra.mxu0 %v380
        %440 = vmatprep.subr.bf16.mxu0 0
        %441 = vmatpush1.bf16.msra.mxu0 0
        %442 = vmatprep.subr.bf16.mxu0 0
        %443 = vmatpush1.bf16.msra.mxu0 0
        %444 = vmatprep.subr.bf16.mxu0 0
        %445 = vmatpush1.bf16.msra.mxu0 0
        %446 = vmatprep.subr.bf16.mxu0 0
        %447 = vmatpush1.bf16.msra.mxu0 0
        %448 = vmatprep.subr.bf16.mxu0 0
        %449 = vmatpush1.bf16.msra.mxu0 0
        %450 = vmatprep.subr.bf16.mxu0 0
        %451 = vmatpush1.bf16.msra.mxu0 0
        %452 = vmatprep.subr.bf16.mxu0 0
        %453 = vmatpush1.bf16.msra.mxu0 0
        %454 = vmatprep.subr.bf16.mxu0 0
        %455 = vmatpush1.bf16.msra.mxu0 0
        %456 = vmatprep.subr.bf16.mxu0 0
        %457 = vmatpush1.bf16.msra.mxu0 0
        %458 = vmatprep.subr.bf16.mxu0 0
        %459 = vmatpush1.bf16.msra.mxu0 0
        %460 = vmatprep.subr.bf16.mxu0 0
        %461 = vmatpush1.bf16.msra.mxu0 0
        %462 = vmatprep.subr.bf16.mxu0 0
        %463 = vmatpush1.bf16.msra.mxu0 0
        %464 = vmatprep.subr.bf16.mxu0 0
        %465 = vmatpush1.bf16.msra.mxu0 0
        %466 = vmatprep.subr.bf16.mxu0 0
        %467 = vmatpush1.bf16.msra.mxu0 0
        %468 = vmatprep.subr.bf16.mxu0 0
        %469 = vmatpush1.bf16.msra.mxu0 0
        %470 = vmatprep.mubr.bf16.mxu0 0
        %471 = vmatmul.mubr.bf16.gmra.mrb[0].mxu0 %v370
        %v472 = vpop.f32.mrb[0].mxu0
        %v473 = vadd.f32 0.0, %v472
        %v474 = vpop.f32.mrb[0].mxu0
        %v475 = vadd.f32 0.0, %v474
        %v476 = vpop.f32.mrb[0].mxu0
        %v477 = vpop.f32.mrb[0].mxu0
        %478 = vdwg.mxu0
        %479 = vmatprep.subr.bf16.mxu0 %v389
        %480 = vmatpush1.bf16.msra.mxu0 %v386
        %481 = vmatprep.subr.bf16.mxu0 0
        %482 = vmatpush1.bf16.msra.mxu0 0
        %483 = vmatprep.subr.bf16.mxu0 0
        %484 = vmatpush1.bf16.msra.mxu0 0
        %485 = vmatprep.subr.bf16.mxu0 0
        %486 = vmatpush1.bf16.msra.mxu0 0
        %487 = vmatprep.subr.bf16.mxu0 0
        %488 = vmatpush1.bf16.msra.mxu0 0
        %489 = vmatprep.subr.bf16.mxu0 0
        %490 = vmatpush1.bf16.msra.mxu0 0
        %491 = vmatprep.subr.bf16.mxu0 0
        %492 = vmatpush1.bf16.msra.mxu0 0
        %493 = vmatprep.subr.bf16.mxu0 0
        %494 = vmatpush1.bf16.msra.mxu0 0
        %495 = vmatprep.subr.bf16.mxu0 0
        %496 = vmatpush1.bf16.msra.mxu0 0
        %497 = vmatprep.subr.bf16.mxu0 0
        %498 = vmatpush1.bf16.msra.mxu0 0
        %499 = vmatprep.subr.bf16.mxu0 0
        %500 = vmatpush1.bf16.msra.mxu0 0
        %501 = vmatprep.subr.bf16.mxu0 0
        %502 = vmatpush1.bf16.msra.mxu0 0
        %503 = vmatprep.subr.bf16.mxu0 0
        %504 = vmatpush1.bf16.msra.mxu0 0
        %505 = vmatprep.subr.bf16.mxu0 0
        %506 = vmatpush1.bf16.msra.mxu0 0
        %507 = vmatprep.subr.bf16.mxu0 0
        %508 = vmatpush1.bf16.msra.mxu0 0
        %509 = vmatprep.subr.bf16.mxu0 0
        %510 = vmatpush1.bf16.msra.mxu0 0
        %511 = vmatprep.mubr.bf16.mxu0 0
        %512 = vmatmul.mubr.bf16.gmra.mrb[0].mxu0 %v370
        %v513 = vpop.f32.mrb[0].mxu0
        %v514 = vadd.f32 0.0, %v513
        %v515 = vpop.f32.mrb[0].mxu0
        %v516 = vadd.f32 0.0, %v515
        %v517 = vpop.f32.mrb[0].mxu0
        %v518 = vpop.f32.mrb[0].mxu0
        %519 = vdwg.mxu0
        %520 = vmatprep.subr.bf16.mxu0 %v395
        %521 = vmatpush1.bf16.msra.mxu0 %v392
        %522 = vmatprep.subr.bf16.mxu0 0
        %523 = vmatpush1.bf16.msra.mxu0 0
        %524 = vmatprep.subr.bf16.mxu0 0
        %525 = vmatpush1.bf16.msra.mxu0 0
        %526 = vmatprep.subr.bf16.mxu0 0
        %527 = vmatpush1.bf16.msra.mxu0 0
        %528 = vmatprep.subr.bf16.mxu0 0
        %529 = vmatpush1.bf16.msra.mxu0 0
        %530 = vmatprep.subr.bf16.mxu0 0
        %531 = vmatpush1.bf16.msra.mxu0 0
        %532 = vmatprep.subr.bf16.mxu0 0
        %533 = vmatpush1.bf16.msra.mxu0 0
        %534 = vmatprep.subr.bf16.mxu0 0
        %535 = vmatpush1.bf16.msra.mxu0 0
        %536 = vmatprep.subr.bf16.mxu0 0
        %537 = vmatpush1.bf16.msra.mxu0 0
        %538 = vmatprep.subr.bf16.mxu0 0
        %539 = vmatpush1.bf16.msra.mxu0 0
        %540 = vmatprep.subr.bf16.mxu0 0
        %541 = vmatpush1.bf16.msra.mxu0 0
        %542 = vmatprep.subr.bf16.mxu0 0
        %543 = vmatpush1.bf16.msra.mxu0 0
        %544 = vmatprep.subr.bf16.mxu0 0
        %545 = vmatpush1.bf16.msra.mxu0 0
        %546 = vmatprep.subr.bf16.mxu0 0
        %547 = vmatpush1.bf16.msra.mxu0 0
        %548 = vmatprep.subr.bf16.mxu0 0
        %549 = vmatpush1.bf16.msra.mxu0 0
        %550 = vmatprep.subr.bf16.mxu0 0
        %551 = vmatpush1.bf16.msra.mxu0 0
        %552 = vmatprep.mubr.bf16.mxu0 0
        %553 = vmatmul.mubr.bf16.gmra.mrb[0].mxu0 %v370
        %v554 = vpop.f32.mrb[0].mxu0
        %v555 = vadd.f32 0.0, %v554
        %v556 = vpop.f32.mrb[0].mxu0
        %v557 = vadd.f32 0.0, %v556
        %v558 = vpop.f32.mrb[0].mxu0
        %v559 = vpop.f32.mrb[0].mxu0
        %560 = vdwg.mxu0
        %561 = vrot.lane.b32.xlu0 %v307, 111
        %v562 = vpop.permute.xlu0 %561
        %563 = vrot.lane.b32.xlu0 %v315, 111
        %v564 = vpop.permute.xlu0 %563
        %565 = vrot.lane.b32.xlu0 %v314, 111
        %v566 = vpop.permute.xlu0 %565
        %567 = vrot.lane.b32.xlu0 %v316, 111
        %v568 = vpop.permute.xlu0 %567
        %569 = vrot.lane.b32.xlu0 %v324, 111
        %v570 = vpop.permute.xlu0 %569
        %571 = vrot.lane.b32.xlu0 %v332, 111
        %v572 = vpop.permute.xlu0 %571
        %573 = vrot.lane.b32.xlu0 %v331, 111
        %v574 = vpop.permute.xlu0 %573
        %575 = vrot.lane.b32.xlu0 %v333, 111
        %v576 = vpop.permute.xlu0 %575
        %577 = vrot.lane.b32.xlu0 %v340, 111
        %v578 = vpop.permute.xlu0 %577
        %vm579 = vcmask 908288
        %v580 = vsel %vm579, %v562, %v564
        %v581 = vsel %vm579, %v564, %v566
        %v582 = vsel %vm579, %v566, %v568
        %v583 = vsel %vm579, %v568, %v570
        %v584 = vsel %vm579, %v570, %v572
        %v585 = vsel %vm579, %v572, %v574
        %v586 = vsel %vm579, %v574, %v576
        %v587 = vsel %vm579, %v576, %v578
        %v589 = vsel %vm368, %v294, 0
        %v592 = vsel %vm372, %v580, 0
        %v595 = vsel %vm372, %v581, 0
        %v598 = vsel %vm372, %v582, 0
        %v601 = vsel %vm372, %v583, 0
        %v604 = vsel %vm372, %v584, 0
        %v607 = vsel %vm372, %v585, 0
        %v610 = vsel %vm372, %v586, 0
        %v613 = vsel %vm372, %v587, 0
        %615 = vmatprep.subr.bf16.mxu0 %v595
        %616 = vmatpush1.bf16.msra.mxu0 %v592
        %617 = vmatprep.subr.bf16.mxu0 0
        %618 = vmatpush1.bf16.msra.mxu0 0
        %619 = vmatprep.subr.bf16.mxu0 0
        %620 = vmatpush1.bf16.msra.mxu0 0
        %621 = vmatprep.subr.bf16.mxu0 0
        %622 = vmatpush1.bf16.msra.mxu0 0
        %623 = vmatprep.subr.bf16.mxu0 0
        %624 = vmatpush1.bf16.msra.mxu0 0
        %625 = vmatprep.subr.bf16.mxu0 0
        %626 = vmatpush1.bf16.msra.mxu0 0
        %627 = vmatprep.subr.bf16.mxu0 0
        %628 = vmatpush1.bf16.msra.mxu0 0
        %629 = vmatprep.subr.bf16.mxu0 0
        %630 = vmatpush1.bf16.msra.mxu0 0
        %631 = vmatprep.subr.bf16.mxu0 0
        %632 = vmatpush1.bf16.msra.mxu0 0
        %633 = vmatprep.subr.bf16.mxu0 0
        %634 = vmatpush1.bf16.msra.mxu0 0
        %635 = vmatprep.subr.bf16.mxu0 0
        %636 = vmatpush1.bf16.msra.mxu0 0
        %637 = vmatprep.subr.bf16.mxu0 0
        %638 = vmatpush1.bf16.msra.mxu0 0
        %639 = vmatprep.subr.bf16.mxu0 0
        %640 = vmatpush1.bf16.msra.mxu0 0
        %641 = vmatprep.subr.bf16.mxu0 0
        %642 = vmatpush1.bf16.msra.mxu0 0
        %643 = vmatprep.subr.bf16.mxu0 0
        %644 = vmatpush1.bf16.msra.mxu0 0
        %645 = vmatprep.subr.bf16.mxu0 0
        %646 = vmatpush1.bf16.msra.mxu0 0
        %647 = vmatprep.mubr.bf16.mxu0 0
        %648 = vmatmul.mubr.bf16.gmra.mrb[0].mxu0 %v589
        %v649 = vpop.f32.mrb[0].mxu0
        %v650 = vadd.f32 %v432, %v649
        %v651 = vpop.f32.mrb[0].mxu0
        %v652 = vadd.f32 %v434, %v651
        %v653 = vpop.f32.mrb[0].mxu0
        %v654 = vpop.f32.mrb[0].mxu0
        %655 = vdwg.mxu0
        %656 = vmatprep.subr.bf16.mxu0 %v601
        %657 = vmatpush1.bf16.msra.mxu0 %v598
        %658 = vmatprep.subr.bf16.mxu0 0
        %659 = vmatpush1.bf16.msra.mxu0 0
        %660 = vmatprep.subr.bf16.mxu0 0
        %661 = vmatpush1.bf16.msra.mxu0 0
        %662 = vmatprep.subr.bf16.mxu0 0
        %663 = vmatpush1.bf16.msra.mxu0 0
        %664 = vmatprep.subr.bf16.mxu0 0
        %665 = vmatpush1.bf16.msra.mxu0 0
        %666 = vmatprep.subr.bf16.mxu0 0
        %667 = vmatpush1.bf16.msra.mxu0 0
        %668 = vmatprep.subr.bf16.mxu0 0
        %669 = vmatpush1.bf16.msra.mxu0 0
        %670 = vmatprep.subr.bf16.mxu0 0
        %671 = vmatpush1.bf16.msra.mxu0 0
        %672 = vmatprep.subr.bf16.mxu0 0
        %673 = vmatpush1.bf16.msra.mxu0 0
        %674 = vmatprep.subr.bf16.mxu0 0
        %675 = vmatpush1.bf16.msra.mxu0 0
        %676 = vmatprep.subr.bf16.mxu0 0
        %677 = vmatpush1.bf16.msra.mxu0 0
        %678 = vmatprep.subr.bf16.mxu0 0
        %679 = vmatpush1.bf16.msra.mxu0 0
        %680 = vmatprep.subr.bf16.mxu0 0
        %681 = vmatpush1.bf16.msra.mxu0 0
        %682 = vmatprep.subr.bf16.mxu0 0
        %683 = vmatpush1.bf16.msra.mxu0 0
        %684 = vmatprep.subr.bf16.mxu0 0
        %685 = vmatpush1.bf16.msra.mxu0 0
        %686 = vmatprep.subr.bf16.mxu0 0
        %687 = vmatpush1.bf16.msra.mxu0 0
        %688 = vmatprep.mubr.bf16.mxu0 0
        %689 = vmatmul.mubr.bf16.gmra.mrb[0].mxu0 %v589
        %v690 = vpop.f32.mrb[0].mxu0
        %v691 = vadd.f32 %v473, %v690
        %v692 = vpop.f32.mrb[0].mxu0
        %v693 = vadd.f32 %v475, %v692
        %v694 = vpop.f32.mrb[0].mxu0
        %v695 = vpop.f32.mrb[0].mxu0
        %696 = vdwg.mxu0
        %697 = vmatprep.subr.bf16.mxu0 %v607
        %698 = vmatpush1.bf16.msra.mxu0 %v604
        %699 = vmatprep.subr.bf16.mxu0 0
        %700 = vmatpush1.bf16.msra.mxu0 0
        %701 = vmatprep.subr.bf16.mxu0 0
        %702 = vmatpush1.bf16.msra.mxu0 0
        %703 = vmatprep.subr.bf16.mxu0 0
        %704 = vmatpush1.bf16.msra.mxu0 0
        %705 = vmatprep.subr.bf16.mxu0 0
        %706 = vmatpush1.bf16.msra.mxu0 0
        %707 = vmatprep.subr.bf16.mxu0 0
        %708 = vmatpush1.bf16.msra.mxu0 0
        %709 = vmatprep.subr.bf16.mxu0 0
        %710 = vmatpush1.bf16.msra.mxu0 0
        %711 = vmatprep.subr.bf16.mxu0 0
        %712 = vmatpush1.bf16.msra.mxu0 0
        %713 = vmatprep.subr.bf16.mxu0 0
        %714 = vmatpush1.bf16.msra.mxu0 0
        %715 = vmatprep.subr.bf16.mxu0 0
        %716 = vmatpush1.bf16.msra.mxu0 0
        %717 = vmatprep.subr.bf16.mxu0 0
        %718 = vmatpush1.bf16.msra.mxu0 0
        %719 = vmatprep.subr.bf16.mxu0 0
        %720 = vmatpush1.bf16.msra.mxu0 0
        %721 = vmatprep.subr.bf16.mxu0 0
        %722 = vmatpush1.bf16.msra.mxu0 0
        %723 = vmatprep.subr.bf16.mxu0 0
        %724 = vmatpush1.bf16.msra.mxu0 0
        %725 = vmatprep.subr.bf16.mxu0 0
        %726 = vmatpush1.bf16.msra.mxu0 0
        %727 = vmatprep.subr.bf16.mxu0 0
        %728 = vmatpush1.bf16.msra.mxu0 0
        %729 = vmatprep.mubr.bf16.mxu0 0
        %730 = vmatmul.mubr.bf16.gmra.mrb[0].mxu0 %v589
        %v731 = vpop.f32.mrb[0].mxu0
        %v732 = vadd.f32 %v514, %v731
        %v733 = vpop.f32.mrb[0].mxu0
        %v734 = vadd.f32 %v516, %v733
        %v735 = vpop.f32.mrb[0].mxu0
        %v736 = vpop.f32.mrb[0].mxu0
        %737 = vdwg.mxu0
        %738 = vmatprep.subr.bf16.mxu0 %v613
        %739 = vmatpush1.bf16.msra.mxu0 %v610
        %740 = vmatprep.subr.bf16.mxu0 0
        %741 = vmatpush1.bf16.msra.mxu0 0
        %742 = vmatprep.subr.bf16.mxu0 0
        %743 = vmatpush1.bf16.msra.mxu0 0
        %744 = vmatprep.subr.bf16.mxu0 0
        %745 = vmatpush1.bf16.msra.mxu0 0
        %746 = vmatprep.subr.bf16.mxu0 0
        %747 = vmatpush1.bf16.msra.mxu0 0
        %748 = vmatprep.subr.bf16.mxu0 0
        %749 = vmatpush1.bf16.msra.mxu0 0
        %750 = vmatprep.subr.bf16.mxu0 0
        %751 = vmatpush1.bf16.msra.mxu0 0
        %752 = vmatprep.subr.bf16.mxu0 0
        %753 = vmatpush1.bf16.msra.mxu0 0
        %754 = vmatprep.subr.bf16.mxu0 0
        %755 = vmatpush1.bf16.msra.mxu0 0
        %756 = vmatprep.subr.bf16.mxu0 0
        %757 = vmatpush1.bf16.msra.mxu0 0
        %758 = vmatprep.subr.bf16.mxu0 0
        %759 = vmatpush1.bf16.msra.mxu0 0
        %760 = vmatprep.subr.bf16.mxu0 0
        %761 = vmatpush1.bf16.msra.mxu0 0
        %762 = vmatprep.subr.bf16.mxu0 0
        %763 = vmatpush1.bf16.msra.mxu0 0
        %764 = vmatprep.subr.bf16.mxu0 0
        %765 = vmatpush1.bf16.msra.mxu0 0
        %766 = vmatprep.subr.bf16.mxu0 0
        %767 = vmatpush1.bf16.msra.mxu0 0
        %768 = vmatprep.subr.bf16.mxu0 0
        %769 = vmatpush1.bf16.msra.mxu0 0
        %770 = vmatprep.mubr.bf16.mxu0 0
        %771 = vmatmul.mubr.bf16.gmra.mrb[0].mxu0 %v589
        %v772 = vpop.f32.mrb[0].mxu0
        %v773 = vadd.f32 %v555, %v772
        %v774 = vpop.f32.mrb[0].mxu0
        %v775 = vadd.f32 %v557, %v774
        %v776 = vpop.f32.mrb[0].mxu0
        %v777 = vpop.f32.mrb[0].mxu0
        %778 = vdwg.mxu0
        %s779 = scalar_lea.vmem %s1, 4
        %v780 = vld [vmem:[%s779] sm:$0x3]
        %781 = vrot.lane.b32.xlu0 %v307, 109
        %v782 = vpop.permute.xlu0 %781
        %783 = vrot.lane.b32.xlu0 %v315, 109
        %v784 = vpop.permute.xlu0 %783
        %785 = vrot.lane.b32.xlu0 %v314, 109
        %v786 = vpop.permute.xlu0 %785
        %787 = vrot.lane.b32.xlu0 %v316, 109
        %v788 = vpop.permute.xlu0 %787
        %789 = vrot.lane.b32.xlu0 %v324, 109
        %v790 = vpop.permute.xlu0 %789
        %791 = vrot.lane.b32.xlu0 %v332, 109
        %v792 = vpop.permute.xlu0 %791
        %793 = vrot.lane.b32.xlu0 %v331, 109
        %v794 = vpop.permute.xlu0 %793
        %795 = vrot.lane.b32.xlu0 %v333, 109
        %v796 = vpop.permute.xlu0 %795
        %797 = vrot.lane.b32.xlu0 %v340, 109
        %v798 = vpop.permute.xlu0 %797
        %vm799 = vcmask 891904
        %v800 = vsel %vm799, %v782, %v784
        %v801 = vsel %vm799, %v784, %v786
        %v802 = vsel %vm799, %v786, %v788
        %v803 = vsel %vm799, %v788, %v790
        %v804 = vsel %vm799, %v790, %v792
        %v805 = vsel %vm799, %v792, %v794
        %v806 = vsel %vm799, %v794, %v796
        %v807 = vsel %vm799, %v796, %v798
        %v809 = vsel %vm368, %v780, 0
        %v812 = vsel %vm372, %v800, 0
        %v815 = vsel %vm372, %v801, 0
        %v818 = vsel %vm372, %v802, 0
        %v821 = vsel %vm372, %v803, 0
        %v824 = vsel %vm372, %v804, 0
        %v827 = vsel %vm372, %v805, 0
        %v830 = vsel %vm372, %v806, 0
        %v833 = vsel %vm372, %v807, 0
        %835 = vmatprep.subr.bf16.mxu0 %v815
        %836 = vmatpush1.bf16.msra.mxu0 %v812
        %837 = vmatprep.subr.bf16.mxu0 0
        %838 = vmatpush1.bf16.msra.mxu0 0
        %839 = vmatprep.subr.bf16.mxu0 0
        %840 = vmatpush1.bf16.msra.mxu0 0
        %841 = vmatprep.subr.bf16.mxu0 0
        %842 = vmatpush1.bf16.msra.mxu0 0
        %843 = vmatprep.subr.bf16.mxu0 0
        %844 = vmatpush1.bf16.msra.mxu0 0
        %845 = vmatprep.subr.bf16.mxu0 0
        %846 = vmatpush1.bf16.msra.mxu0 0
        %847 = vmatprep.subr.bf16.mxu0 0
        %848 = vmatpush1.bf16.msra.mxu0 0
        %849 = vmatprep.subr.bf16.mxu0 0
        %850 = vmatpush1.bf16.msra.mxu0 0
        %851 = vmatprep.subr.bf16.mxu0 0
        %852 = vmatpush1.bf16.msra.mxu0 0
        %853 = vmatprep.subr.bf16.mxu0 0
        %854 = vmatpush1.bf16.msra.mxu0 0
        %855 = vmatprep.subr.bf16.mxu0 0
        %856 = vmatpush1.bf16.msra.mxu0 0
        %857 = vmatprep.subr.bf16.mxu0 0
        %858 = vmatpush1.bf16.msra.mxu0 0
        %859 = vmatprep.subr.bf16.mxu0 0
        %860 = vmatpush1.bf16.msra.mxu0 0
        %861 = vmatprep.subr.bf16.mxu0 0
        %862 = vmatpush1.bf16.msra.mxu0 0
        %863 = vmatprep.subr.bf16.mxu0 0
        %864 = vmatpush1.bf16.msra.mxu0 0
        %865 = vmatprep.subr.bf16.mxu0 0
        %866 = vmatpush1.bf16.msra.mxu0 0
        %867 = vmatprep.mubr.bf16.mxu0 0
        %868 = vmatmul.mubr.bf16.gmra.mrb[0].mxu0 %v809
        %v869 = vpop.f32.mrb[0].mxu0
        %v870 = vadd.f32 0.0, %v869
        %v871 = vpop.f32.mrb[0].mxu0
        %v872 = vadd.f32 0.0, %v871
        %v873 = vpop.f32.mrb[0].mxu0
        %v874 = vpop.f32.mrb[0].mxu0
        %875 = vdwg.mxu0
        %876 = vmatprep.subr.bf16.mxu0 %v821
        %877 = vmatpush1.bf16.msra.mxu0 %v818
        %878 = vmatprep.subr.bf16.mxu0 0
        %879 = vmatpush1.bf16.msra.mxu0 0
        %880 = vmatprep.subr.bf16.mxu0 0
        %881 = vmatpush1.bf16.msra.mxu0 0
        %882 = vmatprep.subr.bf16.mxu0 0
        %883 = vmatpush1.bf16.msra.mxu0 0
        %884 = vmatprep.subr.bf16.mxu0 0
        %885 = vmatpush1.bf16.msra.mxu0 0
        %886 = vmatprep.subr.bf16.mxu0 0
        %887 = vmatpush1.bf16.msra.mxu0 0
        %888 = vmatprep.subr.bf16.mxu0 0
        %889 = vmatpush1.bf16.msra.mxu0 0
        %890 = vmatprep.subr.bf16.mxu0 0
        %891 = vmatpush1.bf16.msra.mxu0 0
        %892 = vmatprep.subr.bf16.mxu0 0
        %893 = vmatpush1.bf16.msra.mxu0 0
        %894 = vmatprep.subr.bf16.mxu0 0
        %895 = vmatpush1.bf16.msra.mxu0 0
        %896 = vmatprep.subr.bf16.mxu0 0
        %897 = vmatpush1.bf16.msra.mxu0 0
        %898 = vmatprep.subr.bf16.mxu0 0
        %899 = vmatpush1.bf16.msra.mxu0 0
        %900 = vmatprep.subr.bf16.mxu0 0
        %901 = vmatpush1.bf16.msra.mxu0 0
        %902 = vmatprep.subr.bf16.mxu0 0
        %903 = vmatpush1.bf16.msra.mxu0 0
        %904 = vmatprep.subr.bf16.mxu0 0
        %905 = vmatpush1.bf16.msra.mxu0 0
        %906 = vmatprep.subr.bf16.mxu0 0
        %907 = vmatpush1.bf16.msra.mxu0 0
        %908 = vmatprep.mubr.bf16.mxu0 0
        %909 = vmatmul.mubr.bf16.gmra.mrb[0].mxu0 %v809
        %v910 = vpop.f32.mrb[0].mxu0
        %v911 = vadd.f32 0.0, %v910
        %v912 = vpop.f32.mrb[0].mxu0
        %v913 = vadd.f32 0.0, %v912
        %v914 = vpop.f32.mrb[0].mxu0
        %v915 = vpop.f32.mrb[0].mxu0
        %916 = vdwg.mxu0
        %917 = vmatprep.subr.bf16.mxu0 %v827
        %918 = vmatpush1.bf16.msra.mxu0 %v824
        %919 = vmatprep.subr.bf16.mxu0 0
        %920 = vmatpush1.bf16.msra.mxu0 0
        %921 = vmatprep.subr.bf16.mxu0 0
        %922 = vmatpush1.bf16.msra.mxu0 0
        %923 = vmatprep.subr.bf16.mxu0 0
        %924 = vmatpush1.bf16.msra.mxu0 0
        %925 = vmatprep.subr.bf16.mxu0 0
        %926 = vmatpush1.bf16.msra.mxu0 0
        %927 = vmatprep.subr.bf16.mxu0 0
        %928 = vmatpush1.bf16.msra.mxu0 0
        %929 = vmatprep.subr.bf16.mxu0 0
        %930 = vmatpush1.bf16.msra.mxu0 0
        %931 = vmatprep.subr.bf16.mxu0 0
        %932 = vmatpush1.bf16.msra.mxu0 0
        %933 = vmatprep.subr.bf16.mxu0 0
        %934 = vmatpush1.bf16.msra.mxu0 0
        %935 = vmatprep.subr.bf16.mxu0 0
        %936 = vmatpush1.bf16.msra.mxu0 0
        %937 = vmatprep.subr.bf16.mxu0 0
        %938 = vmatpush1.bf16.msra.mxu0 0
        %939 = vmatprep.subr.bf16.mxu0 0
        %940 = vmatpush1.bf16.msra.mxu0 0
        %941 = vmatprep.subr.bf16.mxu0 0
        %942 = vmatpush1.bf16.msra.mxu0 0
        %943 = vmatprep.subr.bf16.mxu0 0
        %944 = vmatpush1.bf16.msra.mxu0 0
        %945 = vmatprep.subr.bf16.mxu0 0
        %946 = vmatpush1.bf16.msra.mxu0 0
        %947 = vmatprep.subr.bf16.mxu0 0
        %948 = vmatpush1.bf16.msra.mxu0 0
        %949 = vmatprep.mubr.bf16.mxu0 0
        %950 = vmatmul.mubr.bf16.gmra.mrb[0].mxu0 %v809
        %v951 = vpop.f32.mrb[0].mxu0
        %v952 = vadd.f32 0.0, %v951
        %v953 = vpop.f32.mrb[0].mxu0
        %v954 = vadd.f32 0.0, %v953
        %v955 = vpop.f32.mrb[0].mxu0
        %v956 = vpop.f32.mrb[0].mxu0
        %957 = vdwg.mxu0
        %958 = vmatprep.subr.bf16.mxu0 %v833
        %959 = vmatpush1.bf16.msra.mxu0 %v830
        %960 = vmatprep.subr.bf16.mxu0 0
        %961 = vmatpush1.bf16.msra.mxu0 0
        %962 = vmatprep.subr.bf16.mxu0 0
        %963 = vmatpush1.bf16.msra.mxu0 0
        %964 = vmatprep.subr.bf16.mxu0 0
        %965 = vmatpush1.bf16.msra.mxu0 0
        %966 = vmatprep.subr.bf16.mxu0 0
        %967 = vmatpush1.bf16.msra.mxu0 0
        %968 = vmatprep.subr.bf16.mxu0 0
        %969 = vmatpush1.bf16.msra.mxu0 0
        %970 = vmatprep.subr.bf16.mxu0 0
        %971 = vmatpush1.bf16.msra.mxu0 0
        %972 = vmatprep.subr.bf16.mxu0 0
        %973 = vmatpush1.bf16.msra.mxu0 0
        %974 = vmatprep.subr.bf16.mxu0 0
        %975 = vmatpush1.bf16.msra.mxu0 0
        %976 = vmatprep.subr.bf16.mxu0 0
        %977 = vmatpush1.bf16.msra.mxu0 0
        %978 = vmatprep.subr.bf16.mxu0 0
        %979 = vmatpush1.bf16.msra.mxu0 0
        %980 = vmatprep.subr.bf16.mxu0 0
        %981 = vmatpush1.bf16.msra.mxu0 0
        %982 = vmatprep.subr.bf16.mxu0 0
        %983 = vmatpush1.bf16.msra.mxu0 0
        %984 = vmatprep.subr.bf16.mxu0 0
        %985 = vmatpush1.bf16.msra.mxu0 0
        %986 = vmatprep.subr.bf16.mxu0 0
        %987 = vmatpush1.bf16.msra.mxu0 0
        %988 = vmatprep.subr.bf16.mxu0 0
        %989 = vmatpush1.bf16.msra.mxu0 0
        %990 = vmatprep.mubr.bf16.mxu0 0
        %991 = vmatmul.mubr.bf16.gmra.mrb[0].mxu0 %v809
        %v992 = vpop.f32.mrb[0].mxu0
        %v993 = vadd.f32 0.0, %v992
        %v994 = vpop.f32.mrb[0].mxu0
        %v995 = vadd.f32 0.0, %v994
        %v996 = vpop.f32.mrb[0].mxu0
        %v997 = vpop.f32.mrb[0].mxu0
        %998 = vdwg.mxu0
        %v999 = vadd.f32 %v650, %v870
        %v1000 = vadd.f32 %v652, %v872
        %v1001 = vadd.f32 %v691, %v911
        %v1002 = vadd.f32 %v693, %v913
        %v1003 = vadd.f32 %v732, %v952
        %v1004 = vadd.f32 %v734, %v954
        %v1005 = vadd.f32 %v773, %v993
        %v1006 = vadd.f32 %v775, %v995
        %s1007 = scalar_lea.vmem %s1, 6
        %v1008 = vld [vmem:[%s1007] sm:$0x3]
        %1009 = vrot.lane.b32.xlu0 %v307, 101
        %v1010 = vpop.permute.xlu0 %1009
        %1011 = vrot.lane.b32.xlu0 %v315, 101
        %v1012 = vpop.permute.xlu0 %1011
        %1013 = vrot.lane.b32.xlu0 %v314, 101
        %v1014 = vpop.permute.xlu0 %1013
        %1015 = vrot.lane.b32.xlu0 %v316, 101
        %v1016 = vpop.permute.xlu0 %1015
        %1017 = vrot.lane.b32.xlu0 %v324, 101
        %v1018 = vpop.permute.xlu0 %1017
        %1019 = vrot.lane.b32.xlu0 %v332, 101
        %v1020 = vpop.permute.xlu0 %1019
        %1021 = vrot.lane.b32.xlu0 %v331, 101
        %v1022 = vpop.permute.xlu0 %1021
        %1023 = vrot.lane.b32.xlu0 %v333, 101
        %v1024 = vpop.permute.xlu0 %1023
        %1025 = vrot.lane.b32.xlu0 %v340, 101
        %v1026 = vpop.permute.xlu0 %1025
        %vm1027 = vcmask 826368
        %v1028 = vsel %vm1027, %v1010, %v1012
        %v1029 = vsel %vm1027, %v1012, %v1014
        %v1030 = vsel %vm1027, %v1014, %v1016
        %v1031 = vsel %vm1027, %v1016, %v1018
        %v1032 = vsel %vm1027, %v1018, %v1020
        %v1033 = vsel %vm1027, %v1020, %v1022
        %v1034 = vsel %vm1027, %v1022, %v1024
        %v1035 = vsel %vm1027, %v1024, %v1026
        %v1037 = vsel %vm368, %v1008, 0
        %v1040 = vsel %vm372, %v1028, 0
        %v1043 = vsel %vm372, %v1029, 0
        %v1046 = vsel %vm372, %v1030, 0
        %v1049 = vsel %vm372, %v1031, 0
        %v1052 = vsel %vm372, %v1032, 0
        %v1055 = vsel %vm372, %v1033, 0
        %v1058 = vsel %vm372, %v1034, 0
        %v1061 = vsel %vm372, %v1035, 0
        %1063 = vmatprep.subr.bf16.mxu0 %v1043
        %1064 = vmatpush1.bf16.msra.mxu0 %v1040
        %1065 = vmatprep.subr.bf16.mxu0 0
        %1066 = vmatpush1.bf16.msra.mxu0 0
        %1067 = vmatprep.subr.bf16.mxu0 0
        %1068 = vmatpush1.bf16.msra.mxu0 0
        %1069 = vmatprep.subr.bf16.mxu0 0
        %1070 = vmatpush1.bf16.msra.mxu0 0
        %1071 = vmatprep.subr.bf16.mxu0 0
        %1072 = vmatpush1.bf16.msra.mxu0 0
        %1073 = vmatprep.subr.bf16.mxu0 0
        %1074 = vmatpush1.bf16.msra.mxu0 0
        %1075 = vmatprep.subr.bf16.mxu0 0
        %1076 = vmatpush1.bf16.msra.mxu0 0
        %1077 = vmatprep.subr.bf16.mxu0 0
        %1078 = vmatpush1.bf16.msra.mxu0 0
        %1079 = vmatprep.subr.bf16.mxu0 0
        %1080 = vmatpush1.bf16.msra.mxu0 0
        %1081 = vmatprep.subr.bf16.mxu0 0
        %1082 = vmatpush1.bf16.msra.mxu0 0
        %1083 = vmatprep.subr.bf16.mxu0 0
        %1084 = vmatpush1.bf16.msra.mxu0 0
        %1085 = vmatprep.subr.bf16.mxu0 0
        %1086 = vmatpush1.bf16.msra.mxu0 0
        %1087 = vmatprep.subr.bf16.mxu0 0
        %1088 = vmatpush1.bf16.msra.mxu0 0
        %1089 = vmatprep.subr.bf16.mxu0 0
        %1090 = vmatpush1.bf16.msra.mxu0 0
        %1091 = vmatprep.subr.bf16.mxu0 0
        %1092 = vmatpush1.bf16.msra.mxu0 0
        %1093 = vmatprep.subr.bf16.mxu0 0
        %1094 = vmatpush1.bf16.msra.mxu0 0
        %1095 = vmatprep.mubr.bf16.mxu0 0
        %1096 = vmatmul.mubr.bf16.gmra.mrb[0].mxu0 %v1037
        %v1097 = vpop.f32.mrb[0].mxu0
        %v1098 = vadd.f32 0.0, %v1097
        %v1099 = vpop.f32.mrb[0].mxu0
        %v1100 = vadd.f32 0.0, %v1099
        %v1101 = vpop.f32.mrb[0].mxu0
        %v1102 = vpop.f32.mrb[0].mxu0
        %1103 = vdwg.mxu0
        %1104 = vmatprep.subr.bf16.mxu0 %v1049
        %1105 = vmatpush1.bf16.msra.mxu0 %v1046
        %1106 = vmatprep.subr.bf16.mxu0 0
        %1107 = vmatpush1.bf16.msra.mxu0 0
        %1108 = vmatprep.subr.bf16.mxu0 0
        %1109 = vmatpush1.bf16.msra.mxu0 0
        %1110 = vmatprep.subr.bf16.mxu0 0
        %1111 = vmatpush1.bf16.msra.mxu0 0
        %1112 = vmatprep.subr.bf16.mxu0 0
        %1113 = vmatpush1.bf16.msra.mxu0 0
        %1114 = vmatprep.subr.bf16.mxu0 0
        %1115 = vmatpush1.bf16.msra.mxu0 0
        %1116 = vmatprep.subr.bf16.mxu0 0
        %1117 = vmatpush1.bf16.msra.mxu0 0
        %1118 = vmatprep.subr.bf16.mxu0 0
        %1119 = vmatpush1.bf16.msra.mxu0 0
        %1120 = vmatprep.subr.bf16.mxu0 0
        %1121 = vmatpush1.bf16.msra.mxu0 0
        %1122 = vmatprep.subr.bf16.mxu0 0
        %1123 = vmatpush1.bf16.msra.mxu0 0
        %1124 = vmatprep.subr.bf16.mxu0 0
        %1125 = vmatpush1.bf16.msra.mxu0 0
        %1126 = vmatprep.subr.bf16.mxu0 0
        %1127 = vmatpush1.bf16.msra.mxu0 0
        %1128 = vmatprep.subr.bf16.mxu0 0
        %1129 = vmatpush1.bf16.msra.mxu0 0
        %1130 = vmatprep.subr.bf16.mxu0 0
        %1131 = vmatpush1.bf16.msra.mxu0 0
        %1132 = vmatprep.subr.bf16.mxu0 0
        %1133 = vmatpush1.bf16.msra.mxu0 0
        %1134 = vmatprep.subr.bf16.mxu0 0
        %1135 = vmatpush1.bf16.msra.mxu0 0
        %1136 = vmatprep.mubr.bf16.mxu0 0
        %1137 = vmatmul.mubr.bf16.gmra.mrb[0].mxu0 %v1037
        %v1138 = vpop.f32.mrb[0].mxu0
        %v1139 = vadd.f32 0.0, %v1138
        %v1140 = vpop.f32.mrb[0].mxu0
        %v1141 = vadd.f32 0.0, %v1140
        %v1142 = vpop.f32.mrb[0].mxu0
        %v1143 = vpop.f32.mrb[0].mxu0
        %1144 = vdwg.mxu0
        %1145 = vmatprep.subr.bf16.mxu0 %v1055
        %1146 = vmatpush1.bf16.msra.mxu0 %v1052
        %1147 = vmatprep.subr.bf16.mxu0 0
        %1148 = vmatpush1.bf16.msra.mxu0 0
        %1149 = vmatprep.subr.bf16.mxu0 0
        %1150 = vmatpush1.bf16.msra.mxu0 0
        %1151 = vmatprep.subr.bf16.mxu0 0
        %1152 = vmatpush1.bf16.msra.mxu0 0
        %1153 = vmatprep.subr.bf16.mxu0 0
        %1154 = vmatpush1.bf16.msra.mxu0 0
        %1155 = vmatprep.subr.bf16.mxu0 0
        %1156 = vmatpush1.bf16.msra.mxu0 0
        %1157 = vmatprep.subr.bf16.mxu0 0
        %1158 = vmatpush1.bf16.msra.mxu0 0
        %1159 = vmatprep.subr.bf16.mxu0 0
        %1160 = vmatpush1.bf16.msra.mxu0 0
        %1161 = vmatprep.subr.bf16.mxu0 0
        %1162 = vmatpush1.bf16.msra.mxu0 0
        %1163 = vmatprep.subr.bf16.mxu0 0
        %1164 = vmatpush1.bf16.msra.mxu0 0
        %1165 = vmatprep.subr.bf16.mxu0 0
        %1166 = vmatpush1.bf16.msra.mxu0 0
        %1167 = vmatprep.subr.bf16.mxu0 0
        %1168 = vmatpush1.bf16.msra.mxu0 0
        %1169 = vmatprep.subr.bf16.mxu0 0
        %1170 = vmatpush1.bf16.msra.mxu0 0
        %1171 = vmatprep.subr.bf16.mxu0 0
        %1172 = vmatpush1.bf16.msra.mxu0 0
        %1173 = vmatprep.subr.bf16.mxu0 0
        %1174 = vmatpush1.bf16.msra.mxu0 0
        %1175 = vmatprep.subr.bf16.mxu0 0
        %1176 = vmatpush1.bf16.msra.mxu0 0
        %1177 = vmatprep.mubr.bf16.mxu0 0
        %1178 = vmatmul.mubr.bf16.gmra.mrb[0].mxu0 %v1037
        %v1179 = vpop.f32.mrb[0].mxu0
        %v1180 = vadd.f32 0.0, %v1179
        %v1181 = vpop.f32.mrb[0].mxu0
        %v1182 = vadd.f32 0.0, %v1181
        %v1183 = vpop.f32.mrb[0].mxu0
        %v1184 = vpop.f32.mrb[0].mxu0
        %1185 = vdwg.mxu0
        %1186 = vmatprep.subr.bf16.mxu0 %v1061
        %1187 = vmatpush1.bf16.msra.mxu0 %v1058
        %1188 = vmatprep.subr.bf16.mxu0 0
        %1189 = vmatpush1.bf16.msra.mxu0 0
        %1190 = vmatprep.subr.bf16.mxu0 0
        %1191 = vmatpush1.bf16.msra.mxu0 0
        %1192 = vmatprep.subr.bf16.mxu0 0
        %1193 = vmatpush1.bf16.msra.mxu0 0
        %1194 = vmatprep.subr.bf16.mxu0 0
        %1195 = vmatpush1.bf16.msra.mxu0 0
        %1196 = vmatprep.subr.bf16.mxu0 0
        %1197 = vmatpush1.bf16.msra.mxu0 0
        %1198 = vmatprep.subr.bf16.mxu0 0
        %1199 = vmatpush1.bf16.msra.mxu0 0
        %1200 = vmatprep.subr.bf16.mxu0 0
        %1201 = vmatpush1.bf16.msra.mxu0 0
        %1202 = vmatprep.subr.bf16.mxu0 0
        %1203 = vmatpush1.bf16.msra.mxu0 0
        %1204 = vmatprep.subr.bf16.mxu0 0
        %1205 = vmatpush1.bf16.msra.mxu0 0
        %1206 = vmatprep.subr.bf16.mxu0 0
        %1207 = vmatpush1.bf16.msra.mxu0 0
        %1208 = vmatprep.subr.bf16.mxu0 0
        %1209 = vmatpush1.bf16.msra.mxu0 0
        %1210 = vmatprep.subr.bf16.mxu0 0
        %1211 = vmatpush1.bf16.msra.mxu0 0
        %1212 = vmatprep.subr.bf16.mxu0 0
        %1213 = vmatpush1.bf16.msra.mxu0 0
        %1214 = vmatprep.subr.bf16.mxu0 0
        %1215 = vmatpush1.bf16.msra.mxu0 0
        %1216 = vmatprep.subr.bf16.mxu0 0
        %1217 = vmatpush1.bf16.msra.mxu0 0
        %1218 = vmatprep.mubr.bf16.mxu0 0
        %1219 = vmatmul.mubr.bf16.gmra.mrb[0].mxu0 %v1037
        %v1220 = vpop.f32.mrb[0].mxu0
        %v1221 = vadd.f32 0.0, %v1220
        %v1222 = vpop.f32.mrb[0].mxu0
        %v1223 = vadd.f32 0.0, %v1222
        %v1224 = vpop.f32.mrb[0].mxu0
        %v1225 = vpop.f32.mrb[0].mxu0
        %1226 = vdwg.mxu0
        %v1227 = vadd.f32 %v999, %v1098
        %v1228 = vadd.f32 %v1000, %v1100
        %v1229 = vadd.f32 %v1001, %v1139
        %v1230 = vadd.f32 %v1002, %v1141
        %v1231 = vadd.f32 %v1003, %v1180
        %v1232 = vadd.f32 %v1004, %v1182
        %v1233 = vadd.f32 %v1005, %v1221
        %v1234 = vadd.f32 %v1006, %v1223
        %s1235 = scalar_lea.vmem %s1, 8
        %v1236 = vld [vmem:[%s1235] sm:$0x3]
        %1237 = vrot.lane.b32.xlu0 %v307, 100
        %v1238 = vpop.permute.xlu0 %1237
        %1239 = vrot.lane.b32.xlu0 %v315, 100
        %v1240 = vpop.permute.xlu0 %1239
        %1241 = vrot.lane.b32.xlu0 %v314, 100
        %v1242 = vpop.permute.xlu0 %1241
        %1243 = vrot.lane.b32.xlu0 %v316, 100
        %v1244 = vpop.permute.xlu0 %1243
        %1245 = vrot.lane.b32.xlu0 %v324, 100
        %v1246 = vpop.permute.xlu0 %1245
        %1247 = vrot.lane.b32.xlu0 %v332, 100
        %v1248 = vpop.permute.xlu0 %1247
        %1249 = vrot.lane.b32.xlu0 %v331, 100
        %v1250 = vpop.permute.xlu0 %1249
        %1251 = vrot.lane.b32.xlu0 %v333, 100
        %v1252 = vpop.permute.xlu0 %1251
        %1253 = vrot.lane.b32.xlu0 %v340, 100
        %v1254 = vpop.permute.xlu0 %1253
        %vm1255 = vcmask 818176
        %v1256 = vsel %vm1255, %v1238, %v1240
        %v1257 = vsel %vm1255, %v1240, %v1242
        %v1258 = vsel %vm1255, %v1242, %v1244
        %v1259 = vsel %vm1255, %v1244, %v1246
        %v1260 = vsel %vm1255, %v1246, %v1248
        %v1261 = vsel %vm1255, %v1248, %v1250
        %v1262 = vsel %vm1255, %v1250, %v1252
        %v1263 = vsel %vm1255, %v1252, %v1254
        %v1265 = vsel %vm368, %v1236, 0
        %v1268 = vsel %vm372, %v1256, 0
        %v1271 = vsel %vm372, %v1257, 0
        %v1274 = vsel %vm372, %v1258, 0
        %v1277 = vsel %vm372, %v1259, 0
        %v1280 = vsel %vm372, %v1260, 0
        %v1283 = vsel %vm372, %v1261, 0
        %v1286 = vsel %vm372, %v1262, 0
        %v1289 = vsel %vm372, %v1263, 0
        %1291 = vmatprep.subr.bf16.mxu0 %v1271
        %1292 = vmatpush1.bf16.msra.mxu0 %v1268
        %1293 = vmatprep.subr.bf16.mxu0 0
        %1294 = vmatpush1.bf16.msra.mxu0 0
        %1295 = vmatprep.subr.bf16.mxu0 0
        %1296 = vmatpush1.bf16.msra.mxu0 0
        %1297 = vmatprep.subr.bf16.mxu0 0
        %1298 = vmatpush1.bf16.msra.mxu0 0
        %1299 = vmatprep.subr.bf16.mxu0 0
        %1300 = vmatpush1.bf16.msra.mxu0 0
        %1301 = vmatprep.subr.bf16.mxu0 0
        %1302 = vmatpush1.bf16.msra.mxu0 0
        %1303 = vmatprep.subr.bf16.mxu0 0
        %1304 = vmatpush1.bf16.msra.mxu0 0
        %1305 = vmatprep.subr.bf16.mxu0 0
        %1306 = vmatpush1.bf16.msra.mxu0 0
        %1307 = vmatprep.subr.bf16.mxu0 0
        %1308 = vmatpush1.bf16.msra.mxu0 0
        %1309 = vmatprep.subr.bf16.mxu0 0
        %1310 = vmatpush1.bf16.msra.mxu0 0
        %1311 = vmatprep.subr.bf16.mxu0 0
        %1312 = vmatpush1.bf16.msra.mxu0 0
        %1313 = vmatprep.subr.bf16.mxu0 0
        %1314 = vmatpush1.bf16.msra.mxu0 0
        %1315 = vmatprep.subr.bf16.mxu0 0
        %1316 = vmatpush1.bf16.msra.mxu0 0
        %1317 = vmatprep.subr.bf16.mxu0 0
        %1318 = vmatpush1.bf16.msra.mxu0 0
        %1319 = vmatprep.subr.bf16.mxu0 0
        %1320 = vmatpush1.bf16.msra.mxu0 0
        %1321 = vmatprep.subr.bf16.mxu0 0
        %1322 = vmatpush1.bf16.msra.mxu0 0
        %1323 = vmatprep.mubr.bf16.mxu0 0
        %1324 = vmatmul.mubr.bf16.gmra.mrb[0].mxu0 %v1265
        %v1325 = vpop.f32.mrb[0].mxu0
        %v1326 = vadd.f32 0.0, %v1325
        %v1327 = vpop.f32.mrb[0].mxu0
        %v1328 = vadd.f32 0.0, %v1327
        %v1329 = vpop.f32.mrb[0].mxu0
        %v1330 = vpop.f32.mrb[0].mxu0
        %1331 = vdwg.mxu0
        %1332 = vmatprep.subr.bf16.mxu0 %v1277
        %1333 = vmatpush1.bf16.msra.mxu0 %v1274
        %1334 = vmatprep.subr.bf16.mxu0 0
        %1335 = vmatpush1.bf16.msra.mxu0 0
        %1336 = vmatprep.subr.bf16.mxu0 0
        %1337 = vmatpush1.bf16.msra.mxu0 0
        %1338 = vmatprep.subr.bf16.mxu0 0
        %1339 = vmatpush1.bf16.msra.mxu0 0
        %1340 = vmatprep.subr.bf16.mxu0 0
        %1341 = vmatpush1.bf16.msra.mxu0 0
        %1342 = vmatprep.subr.bf16.mxu0 0
        %1343 = vmatpush1.bf16.msra.mxu0 0
        %1344 = vmatprep.subr.bf16.mxu0 0
        %1345 = vmatpush1.bf16.msra.mxu0 0
        %1346 = vmatprep.subr.bf16.mxu0 0
        %1347 = vmatpush1.bf16.msra.mxu0 0
        %1348 = vmatprep.subr.bf16.mxu0 0
        %1349 = vmatpush1.bf16.msra.mxu0 0
        %1350 = vmatprep.subr.bf16.mxu0 0
        %1351 = vmatpush1.bf16.msra.mxu0 0
        %1352 = vmatprep.subr.bf16.mxu0 0
        %1353 = vmatpush1.bf16.msra.mxu0 0
        %1354 = vmatprep.subr.bf16.mxu0 0
        %1355 = vmatpush1.bf16.msra.mxu0 0
        %1356 = vmatprep.subr.bf16.mxu0 0
        %1357 = vmatpush1.bf16.msra.mxu0 0
        %1358 = vmatprep.subr.bf16.mxu0 0
        %1359 = vmatpush1.bf16.msra.mxu0 0
        %1360 = vmatprep.subr.bf16.mxu0 0
        %1361 = vmatpush1.bf16.msra.mxu0 0
        %1362 = vmatprep.subr.bf16.mxu0 0
        %1363 = vmatpush1.bf16.msra.mxu0 0
        %1364 = vmatprep.mubr.bf16.mxu0 0
        %1365 = vmatmul.mubr.bf16.gmra.mrb[0].mxu0 %v1265
        %v1366 = vpop.f32.mrb[0].mxu0
        %v1367 = vadd.f32 0.0, %v1366
        %v1368 = vpop.f32.mrb[0].mxu0
        %v1369 = vadd.f32 0.0, %v1368
        %v1370 = vpop.f32.mrb[0].mxu0
        %v1371 = vpop.f32.mrb[0].mxu0
        %1372 = vdwg.mxu0
        %1373 = vmatprep.subr.bf16.mxu0 %v1283
        %1374 = vmatpush1.bf16.msra.mxu0 %v1280
        %1375 = vmatprep.subr.bf16.mxu0 0
        %1376 = vmatpush1.bf16.msra.mxu0 0
        %1377 = vmatprep.subr.bf16.mxu0 0
        %1378 = vmatpush1.bf16.msra.mxu0 0
        %1379 = vmatprep.subr.bf16.mxu0 0
        %1380 = vmatpush1.bf16.msra.mxu0 0
        %1381 = vmatprep.subr.bf16.mxu0 0
        %1382 = vmatpush1.bf16.msra.mxu0 0
        %1383 = vmatprep.subr.bf16.mxu0 0
        %1384 = vmatpush1.bf16.msra.mxu0 0
        %1385 = vmatprep.subr.bf16.mxu0 0
        %1386 = vmatpush1.bf16.msra.mxu0 0
        %1387 = vmatprep.subr.bf16.mxu0 0
        %1388 = vmatpush1.bf16.msra.mxu0 0
        %1389 = vmatprep.subr.bf16.mxu0 0
        %1390 = vmatpush1.bf16.msra.mxu0 0
        %1391 = vmatprep.subr.bf16.mxu0 0
        %1392 = vmatpush1.bf16.msra.mxu0 0
        %1393 = vmatprep.subr.bf16.mxu0 0
        %1394 = vmatpush1.bf16.msra.mxu0 0
        %1395 = vmatprep.subr.bf16.mxu0 0
        %1396 = vmatpush1.bf16.msra.mxu0 0
        %1397 = vmatprep.subr.bf16.mxu0 0
        %1398 = vmatpush1.bf16.msra.mxu0 0
        %1399 = vmatprep.subr.bf16.mxu0 0
        %1400 = vmatpush1.bf16.msra.mxu0 0
        %1401 = vmatprep.subr.bf16.mxu0 0
        %1402 = vmatpush1.bf16.msra.mxu0 0
        %1403 = vmatprep.subr.bf16.mxu0 0
        %1404 = vmatpush1.bf16.msra.mxu0 0
        %1405 = vmatprep.mubr.bf16.mxu0 0
        %1406 = vmatmul.mubr.bf16.gmra.mrb[0].mxu0 %v1265
        %v1407 = vpop.f32.mrb[0].mxu0
        %v1408 = vadd.f32 0.0, %v1407
        %v1409 = vpop.f32.mrb[0].mxu0
        %v1410 = vadd.f32 0.0, %v1409
        %v1411 = vpop.f32.mrb[0].mxu0
        %v1412 = vpop.f32.mrb[0].mxu0
        %1413 = vdwg.mxu0
        %1414 = vmatprep.subr.bf16.mxu0 %v1289
        %1415 = vmatpush1.bf16.msra.mxu0 %v1286
        %1416 = vmatprep.subr.bf16.mxu0 0
        %1417 = vmatpush1.bf16.msra.mxu0 0
        %1418 = vmatprep.subr.bf16.mxu0 0
        %1419 = vmatpush1.bf16.msra.mxu0 0
        %1420 = vmatprep.subr.bf16.mxu0 0
        %1421 = vmatpush1.bf16.msra.mxu0 0
        %1422 = vmatprep.subr.bf16.mxu0 0
        %1423 = vmatpush1.bf16.msra.mxu0 0
        %1424 = vmatprep.subr.bf16.mxu0 0
        %1425 = vmatpush1.bf16.msra.mxu0 0
        %1426 = vmatprep.subr.bf16.mxu0 0
        %1427 = vmatpush1.bf16.msra.mxu0 0
        %1428 = vmatprep.subr.bf16.mxu0 0
        %1429 = vmatpush1.bf16.msra.mxu0 0
        %1430 = vmatprep.subr.bf16.mxu0 0
        %1431 = vmatpush1.bf16.msra.mxu0 0
        %1432 = vmatprep.subr.bf16.mxu0 0
        %1433 = vmatpush1.bf16.msra.mxu0 0
        %1434 = vmatprep.subr.bf16.mxu0 0
        %1435 = vmatpush1.bf16.msra.mxu0 0
        %1436 = vmatprep.subr.bf16.mxu0 0
        %1437 = vmatpush1.bf16.msra.mxu0 0
        %1438 = vmatprep.subr.bf16.mxu0 0
        %1439 = vmatpush1.bf16.msra.mxu0 0
        %1440 = vmatprep.subr.bf16.mxu0 0
        %1441 = vmatpush1.bf16.msra.mxu0 0
        %1442 = vmatprep.subr.bf16.mxu0 0
        %1443 = vmatpush1.bf16.msra.mxu0 0
        %1444 = vmatprep.subr.bf16.mxu0 0
        %1445 = vmatpush1.bf16.msra.mxu0 0
        %1446 = vmatprep.mubr.bf16.mxu0 0
        %1447 = vmatmul.mubr.bf16.gmra.mrb[0].mxu0 %v1265
        %v1448 = vpop.f32.mrb[0].mxu0
        %v1449 = vadd.f32 0.0, %v1448
        %v1450 = vpop.f32.mrb[0].mxu0
        %v1451 = vadd.f32 0.0, %v1450
        %v1452 = vpop.f32.mrb[0].mxu0
        %v1453 = vpop.f32.mrb[0].mxu0
        %1454 = vdwg.mxu0
        %v1455 = vadd.f32 %v1227, %v1326
        %v1456 = vadd.f32 %v1228, %v1328
        %v1457 = vadd.f32 %v1229, %v1367
        %v1458 = vadd.f32 %v1230, %v1369
        %v1459 = vadd.f32 %v1231, %v1408
        %v1460 = vadd.f32 %v1232, %v1410
        %v1461 = vadd.f32 %v1233, %v1449
        %v1462 = vadd.f32 %v1234, %v1451
        %s1463 = scalar_lea.vmem %s1, 10
        %v1464 = vld [vmem:[%s1463] sm:$0x3]
        %1465 = vrot.lane.b32.xlu0 %v307, 99
        %v1466 = vpop.permute.xlu0 %1465
        %1467 = vrot.lane.b32.xlu0 %v315, 99
        %v1468 = vpop.permute.xlu0 %1467
        %1469 = vrot.lane.b32.xlu0 %v314, 99
        %v1470 = vpop.permute.xlu0 %1469
        %1471 = vrot.lane.b32.xlu0 %v316, 99
        %v1472 = vpop.permute.xlu0 %1471
        %1473 = vrot.lane.b32.xlu0 %v324, 99
        %v1474 = vpop.permute.xlu0 %1473
        %1475 = vrot.lane.b32.xlu0 %v332, 99
        %v1476 = vpop.permute.xlu0 %1475
        %1477 = vrot.lane.b32.xlu0 %v331, 99
        %v1478 = vpop.permute.xlu0 %1477
        %1479 = vrot.lane.b32.xlu0 %v333, 99
        %v1480 = vpop.permute.xlu0 %1479
        %1481 = vrot.lane.b32.xlu0 %v340, 99
        %v1482 = vpop.permute.xlu0 %1481
        %vm1483 = vcmask 809984
        %v1484 = vsel %vm1483, %v1466, %v1468
        %v1485 = vsel %vm1483, %v1468, %v1470
        %v1486 = vsel %vm1483, %v1470, %v1472
        %v1487 = vsel %vm1483, %v1472, %v1474
        %v1488 = vsel %vm1483, %v1474, %v1476
        %v1489 = vsel %vm1483, %v1476, %v1478
        %v1490 = vsel %vm1483, %v1478, %v1480
        %v1491 = vsel %vm1483, %v1480, %v1482
        %v1493 = vsel %vm368, %v1464, 0
        %v1496 = vsel %vm372, %v1484, 0
        %v1499 = vsel %vm372, %v1485, 0
        %v1502 = vsel %vm372, %v1486, 0
        %v1505 = vsel %vm372, %v1487, 0
        %v1508 = vsel %vm372, %v1488, 0
        %v1511 = vsel %vm372, %v1489, 0
        %v1514 = vsel %vm372, %v1490, 0
        %v1517 = vsel %vm372, %v1491, 0
        %1519 = vmatprep.subr.bf16.mxu0 %v1499
        %1520 = vmatpush1.bf16.msra.mxu0 %v1496
        %1521 = vmatprep.subr.bf16.mxu0 0
        %1522 = vmatpush1.bf16.msra.mxu0 0
        %1523 = vmatprep.subr.bf16.mxu0 0
        %1524 = vmatpush1.bf16.msra.mxu0 0
        %1525 = vmatprep.subr.bf16.mxu0 0
        %1526 = vmatpush1.bf16.msra.mxu0 0
        %1527 = vmatprep.subr.bf16.mxu0 0
        %1528 = vmatpush1.bf16.msra.mxu0 0
        %1529 = vmatprep.subr.bf16.mxu0 0
        %1530 = vmatpush1.bf16.msra.mxu0 0
        %1531 = vmatprep.subr.bf16.mxu0 0
        %1532 = vmatpush1.bf16.msra.mxu0 0
        %1533 = vmatprep.subr.bf16.mxu0 0
        %1534 = vmatpush1.bf16.msra.mxu0 0
        %1535 = vmatprep.subr.bf16.mxu0 0
        %1536 = vmatpush1.bf16.msra.mxu0 0
        %1537 = vmatprep.subr.bf16.mxu0 0
        %1538 = vmatpush1.bf16.msra.mxu0 0
        %1539 = vmatprep.subr.bf16.mxu0 0
        %1540 = vmatpush1.bf16.msra.mxu0 0
        %1541 = vmatprep.subr.bf16.mxu0 0
        %1542 = vmatpush1.bf16.msra.mxu0 0
        %1543 = vmatprep.subr.bf16.mxu0 0
        %1544 = vmatpush1.bf16.msra.mxu0 0
        %1545 = vmatprep.subr.bf16.mxu0 0
        %1546 = vmatpush1.bf16.msra.mxu0 0
        %1547 = vmatprep.subr.bf16.mxu0 0
        %1548 = vmatpush1.bf16.msra.mxu0 0
        %1549 = vmatprep.subr.bf16.mxu0 0
        %1550 = vmatpush1.bf16.msra.mxu0 0
        %1551 = vmatprep.mubr.bf16.mxu0 0
        %1552 = vmatmul.mubr.bf16.gmra.mrb[0].mxu0 %v1493
        %v1553 = vpop.f32.mrb[0].mxu0
        %v1554 = vadd.f32 0.0, %v1553
        %v1555 = vpop.f32.mrb[0].mxu0
        %v1556 = vadd.f32 0.0, %v1555
        %v1557 = vpop.f32.mrb[0].mxu0
        %v1558 = vpop.f32.mrb[0].mxu0
        %1559 = vdwg.mxu0
        %1560 = vmatprep.subr.bf16.mxu0 %v1505
        %1561 = vmatpush1.bf16.msra.mxu0 %v1502
        %1562 = vmatprep.subr.bf16.mxu0 0
        %1563 = vmatpush1.bf16.msra.mxu0 0
        %1564 = vmatprep.subr.bf16.mxu0 0
        %1565 = vmatpush1.bf16.msra.mxu0 0
        %1566 = vmatprep.subr.bf16.mxu0 0
        %1567 = vmatpush1.bf16.msra.mxu0 0
        %1568 = vmatprep.subr.bf16.mxu0 0
        %1569 = vmatpush1.bf16.msra.mxu0 0
        %1570 = vmatprep.subr.bf16.mxu0 0
        %1571 = vmatpush1.bf16.msra.mxu0 0
        %1572 = vmatprep.subr.bf16.mxu0 0
        %1573 = vmatpush1.bf16.msra.mxu0 0
        %1574 = vmatprep.subr.bf16.mxu0 0
        %1575 = vmatpush1.bf16.msra.mxu0 0
        %1576 = vmatprep.subr.bf16.mxu0 0
        %1577 = vmatpush1.bf16.msra.mxu0 0
        %1578 = vmatprep.subr.bf16.mxu0 0
        %1579 = vmatpush1.bf16.msra.mxu0 0
        %1580 = vmatprep.subr.bf16.mxu0 0
        %1581 = vmatpush1.bf16.msra.mxu0 0
        %1582 = vmatprep.subr.bf16.mxu0 0
        %1583 = vmatpush1.bf16.msra.mxu0 0
        %1584 = vmatprep.subr.bf16.mxu0 0
        %1585 = vmatpush1.bf16.msra.mxu0 0
        %1586 = vmatprep.subr.bf16.mxu0 0
        %1587 = vmatpush1.bf16.msra.mxu0 0
        %1588 = vmatprep.subr.bf16.mxu0 0
        %1589 = vmatpush1.bf16.msra.mxu0 0
        %1590 = vmatprep.subr.bf16.mxu0 0
        %1591 = vmatpush1.bf16.msra.mxu0 0
        %1592 = vmatprep.mubr.bf16.mxu0 0
        %1593 = vmatmul.mubr.bf16.gmra.mrb[0].mxu0 %v1493
        %v1594 = vpop.f32.mrb[0].mxu0
        %v1595 = vadd.f32 0.0, %v1594
        %v1596 = vpop.f32.mrb[0].mxu0
        %v1597 = vadd.f32 0.0, %v1596
        %v1598 = vpop.f32.mrb[0].mxu0
        %v1599 = vpop.f32.mrb[0].mxu0
        %1600 = vdwg.mxu0
        %1601 = vmatprep.subr.bf16.mxu0 %v1511
        %1602 = vmatpush1.bf16.msra.mxu0 %v1508
        %1603 = vmatprep.subr.bf16.mxu0 0
        %1604 = vmatpush1.bf16.msra.mxu0 0
        %1605 = vmatprep.subr.bf16.mxu0 0
        %1606 = vmatpush1.bf16.msra.mxu0 0
        %1607 = vmatprep.subr.bf16.mxu0 0
        %1608 = vmatpush1.bf16.msra.mxu0 0
        %1609 = vmatprep.subr.bf16.mxu0 0
        %1610 = vmatpush1.bf16.msra.mxu0 0
        %1611 = vmatprep.subr.bf16.mxu0 0
        %1612 = vmatpush1.bf16.msra.mxu0 0
        %1613 = vmatprep.subr.bf16.mxu0 0
        %1614 = vmatpush1.bf16.msra.mxu0 0
        %1615 = vmatprep.subr.bf16.mxu0 0
        %1616 = vmatpush1.bf16.msra.mxu0 0
        %1617 = vmatprep.subr.bf16.mxu0 0
        %1618 = vmatpush1.bf16.msra.mxu0 0
        %1619 = vmatprep.subr.bf16.mxu0 0
        %1620 = vmatpush1.bf16.msra.mxu0 0
        %1621 = vmatprep.subr.bf16.mxu0 0
        %1622 = vmatpush1.bf16.msra.mxu0 0
        %1623 = vmatprep.subr.bf16.mxu0 0
        %1624 = vmatpush1.bf16.msra.mxu0 0
        %1625 = vmatprep.subr.bf16.mxu0 0
        %1626 = vmatpush1.bf16.msra.mxu0 0
        %1627 = vmatprep.subr.bf16.mxu0 0
        %1628 = vmatpush1.bf16.msra.mxu0 0
        %1629 = vmatprep.subr.bf16.mxu0 0
        %1630 = vmatpush1.bf16.msra.mxu0 0
        %1631 = vmatprep.subr.bf16.mxu0 0
        %1632 = vmatpush1.bf16.msra.mxu0 0
        %1633 = vmatprep.mubr.bf16.mxu0 0
        %1634 = vmatmul.mubr.bf16.gmra.mrb[0].mxu0 %v1493
        %v1635 = vpop.f32.mrb[0].mxu0
        %v1636 = vadd.f32 0.0, %v1635
        %v1637 = vpop.f32.mrb[0].mxu0
        %v1638 = vadd.f32 0.0, %v1637
        %v1639 = vpop.f32.mrb[0].mxu0
        %v1640 = vpop.f32.mrb[0].mxu0
        %1641 = vdwg.mxu0
        %1642 = vmatprep.subr.bf16.mxu0 %v1517
        %1643 = vmatpush1.bf16.msra.mxu0 %v1514
        %1644 = vmatprep.subr.bf16.mxu0 0
        %1645 = vmatpush1.bf16.msra.mxu0 0
        %1646 = vmatprep.subr.bf16.mxu0 0
        %1647 = vmatpush1.bf16.msra.mxu0 0
        %1648 = vmatprep.subr.bf16.mxu0 0
        %1649 = vmatpush1.bf16.msra.mxu0 0
        %1650 = vmatprep.subr.bf16.mxu0 0
        %1651 = vmatpush1.bf16.msra.mxu0 0
        %1652 = vmatprep.subr.bf16.mxu0 0
        %1653 = vmatpush1.bf16.msra.mxu0 0
        %1654 = vmatprep.subr.bf16.mxu0 0
        %1655 = vmatpush1.bf16.msra.mxu0 0
        %1656 = vmatprep.subr.bf16.mxu0 0
        %1657 = vmatpush1.bf16.msra.mxu0 0
        %1658 = vmatprep.subr.bf16.mxu0 0
        %1659 = vmatpush1.bf16.msra.mxu0 0
        %1660 = vmatprep.subr.bf16.mxu0 0
        %1661 = vmatpush1.bf16.msra.mxu0 0
        %1662 = vmatprep.subr.bf16.mxu0 0
        %1663 = vmatpush1.bf16.msra.mxu0 0
        %1664 = vmatprep.subr.bf16.mxu0 0
        %1665 = vmatpush1.bf16.msra.mxu0 0
        %1666 = vmatprep.subr.bf16.mxu0 0
        %1667 = vmatpush1.bf16.msra.mxu0 0
        %1668 = vmatprep.subr.bf16.mxu0 0
        %1669 = vmatpush1.bf16.msra.mxu0 0
        %1670 = vmatprep.subr.bf16.mxu0 0
        %1671 = vmatpush1.bf16.msra.mxu0 0
        %1672 = vmatprep.subr.bf16.mxu0 0
        %1673 = vmatpush1.bf16.msra.mxu0 0
        %1674 = vmatprep.mubr.bf16.mxu0 0
        %1675 = vmatmul.mubr.bf16.gmra.mrb[0].mxu0 %v1493
        %v1676 = vpop.f32.mrb[0].mxu0
        %v1677 = vadd.f32 0.0, %v1676
        %v1678 = vpop.f32.mrb[0].mxu0
        %v1679 = vadd.f32 0.0, %v1678
        %v1680 = vpop.f32.mrb[0].mxu0
        %v1681 = vpop.f32.mrb[0].mxu0
        %1682 = vdwg.mxu0
        %v1683 = vadd.f32 %v1455, %v1554
        %v1684 = vadd.f32 %v1456, %v1556
        %v1685 = vadd.f32 %v1457, %v1595
        %v1686 = vadd.f32 %v1458, %v1597
        %v1687 = vadd.f32 %v1459, %v1636
        %v1688 = vadd.f32 %v1460, %v1638
        %v1689 = vadd.f32 %v1461, %v1677
        %v1690 = vadd.f32 %v1462, %v1679
        %s1691 = scalar_lea.vmem %s1, 12
        %v1692 = vld [vmem:[%s1691] sm:$0x3]
        %1693 = vrot.lane.b32.xlu0 %v307, 91
        %v1694 = vpop.permute.xlu0 %1693
        %1695 = vrot.lane.b32.xlu0 %v315, 91
        %v1696 = vpop.permute.xlu0 %1695
        %1697 = vrot.lane.b32.xlu0 %v314, 91
        %v1698 = vpop.permute.xlu0 %1697
        %1699 = vrot.lane.b32.xlu0 %v316, 91
        %v1700 = vpop.permute.xlu0 %1699
        %1701 = vrot.lane.b32.xlu0 %v324, 91
        %v1702 = vpop.permute.xlu0 %1701
        %1703 = vrot.lane.b32.xlu0 %v332, 91
        %v1704 = vpop.permute.xlu0 %1703
        %1705 = vrot.lane.b32.xlu0 %v331, 91
        %v1706 = vpop.permute.xlu0 %1705
        %1707 = vrot.lane.b32.xlu0 %v333, 91
        %v1708 = vpop.permute.xlu0 %1707
        %1709 = vrot.lane.b32.xlu0 %v340, 91
        %v1710 = vpop.permute.xlu0 %1709
        %vm1711 = vcmask 744448
        %v1712 = vsel %vm1711, %v1694, %v1696
        %v1713 = vsel %vm1711, %v1696, %v1698
        %v1714 = vsel %vm1711, %v1698, %v1700
        %v1715 = vsel %vm1711, %v1700, %v1702
        %v1716 = vsel %vm1711, %v1702, %v1704
        %v1717 = vsel %vm1711, %v1704, %v1706
        %v1718 = vsel %vm1711, %v1706, %v1708
        %v1719 = vsel %vm1711, %v1708, %v1710
        %v1721 = vsel %vm368, %v1692, 0
        %v1724 = vsel %vm372, %v1712, 0
        %v1727 = vsel %vm372, %v1713, 0
        %v1730 = vsel %vm372, %v1714, 0
        %v1733 = vsel %vm372, %v1715, 0
        %v1736 = vsel %vm372, %v1716, 0
        %v1739 = vsel %vm372, %v1717, 0
        %v1742 = vsel %vm372, %v1718, 0
        %v1745 = vsel %vm372, %v1719, 0
        %1747 = vmatprep.subr.bf16.mxu0 %v1727
        %1748 = vmatpush1.bf16.msra.mxu0 %v1724
        %1749 = vmatprep.subr.bf16.mxu0 0
        %1750 = vmatpush1.bf16.msra.mxu0 0
        %1751 = vmatprep.subr.bf16.mxu0 0
        %1752 = vmatpush1.bf16.msra.mxu0 0
        %1753 = vmatprep.subr.bf16.mxu0 0
        %1754 = vmatpush1.bf16.msra.mxu0 0
        %1755 = vmatprep.subr.bf16.mxu0 0
        %1756 = vmatpush1.bf16.msra.mxu0 0
        %1757 = vmatprep.subr.bf16.mxu0 0
        %1758 = vmatpush1.bf16.msra.mxu0 0
        %1759 = vmatprep.subr.bf16.mxu0 0
        %1760 = vmatpush1.bf16.msra.mxu0 0
        %1761 = vmatprep.subr.bf16.mxu0 0
        %1762 = vmatpush1.bf16.msra.mxu0 0
        %1763 = vmatprep.subr.bf16.mxu0 0
        %1764 = vmatpush1.bf16.msra.mxu0 0
        %1765 = vmatprep.subr.bf16.mxu0 0
        %1766 = vmatpush1.bf16.msra.mxu0 0
        %1767 = vmatprep.subr.bf16.mxu0 0
        %1768 = vmatpush1.bf16.msra.mxu0 0
        %1769 = vmatprep.subr.bf16.mxu0 0
        %1770 = vmatpush1.bf16.msra.mxu0 0
        %1771 = vmatprep.subr.bf16.mxu0 0
        %1772 = vmatpush1.bf16.msra.mxu0 0
        %1773 = vmatprep.subr.bf16.mxu0 0
        %1774 = vmatpush1.bf16.msra.mxu0 0
        %1775 = vmatprep.subr.bf16.mxu0 0
        %1776 = vmatpush1.bf16.msra.mxu0 0
        %1777 = vmatprep.subr.bf16.mxu0 0
        %1778 = vmatpush1.bf16.msra.mxu0 0
        %1779 = vmatprep.mubr.bf16.mxu0 0
        %1780 = vmatmul.mubr.bf16.gmra.mrb[0].mxu0 %v1721
        %v1781 = vpop.f32.mrb[0].mxu0
        %v1782 = vadd.f32 0.0, %v1781
        %v1783 = vpop.f32.mrb[0].mxu0
        %v1784 = vadd.f32 0.0, %v1783
        %v1785 = vpop.f32.mrb[0].mxu0
        %v1786 = vpop.f32.mrb[0].mxu0
        %1787 = vdwg.mxu0
        %1788 = vmatprep.subr.bf16.mxu0 %v1733
        %1789 = vmatpush1.bf16.msra.mxu0 %v1730
        %1790 = vmatprep.subr.bf16.mxu0 0
        %1791 = vmatpush1.bf16.msra.mxu0 0
        %1792 = vmatprep.subr.bf16.mxu0 0
        %1793 = vmatpush1.bf16.msra.mxu0 0
        %1794 = vmatprep.subr.bf16.mxu0 0
        %1795 = vmatpush1.bf16.msra.mxu0 0
        %1796 = vmatprep.subr.bf16.mxu0 0
        %1797 = vmatpush1.bf16.msra.mxu0 0
        %1798 = vmatprep.subr.bf16.mxu0 0
        %1799 = vmatpush1.bf16.msra.mxu0 0
        %1800 = vmatprep.subr.bf16.mxu0 0
        %1801 = vmatpush1.bf16.msra.mxu0 0
        %1802 = vmatprep.subr.bf16.mxu0 0
        %1803 = vmatpush1.bf16.msra.mxu0 0
        %1804 = vmatprep.subr.bf16.mxu0 0
        %1805 = vmatpush1.bf16.msra.mxu0 0
        %1806 = vmatprep.subr.bf16.mxu0 0
        %1807 = vmatpush1.bf16.msra.mxu0 0
        %1808 = vmatprep.subr.bf16.mxu0 0
        %1809 = vmatpush1.bf16.msra.mxu0 0
        %1810 = vmatprep.subr.bf16.mxu0 0
        %1811 = vmatpush1.bf16.msra.mxu0 0
        %1812 = vmatprep.subr.bf16.mxu0 0
        %1813 = vmatpush1.bf16.msra.mxu0 0
        %1814 = vmatprep.subr.bf16.mxu0 0
        %1815 = vmatpush1.bf16.msra.mxu0 0
        %1816 = vmatprep.subr.bf16.mxu0 0
        %1817 = vmatpush1.bf16.msra.mxu0 0
        %1818 = vmatprep.subr.bf16.mxu0 0
        %1819 = vmatpush1.bf16.msra.mxu0 0
        %1820 = vmatprep.mubr.bf16.mxu0 0
        %1821 = vmatmul.mubr.bf16.gmra.mrb[0].mxu0 %v1721
        %v1822 = vpop.f32.mrb[0].mxu0
        %v1823 = vadd.f32 0.0, %v1822
        %v1824 = vpop.f32.mrb[0].mxu0
        %v1825 = vadd.f32 0.0, %v1824
        %v1826 = vpop.f32.mrb[0].mxu0
        %v1827 = vpop.f32.mrb[0].mxu0
        %1828 = vdwg.mxu0
        %1829 = vmatprep.subr.bf16.mxu0 %v1739
        %1830 = vmatpush1.bf16.msra.mxu0 %v1736
        %1831 = vmatprep.subr.bf16.mxu0 0
        %1832 = vmatpush1.bf16.msra.mxu0 0
        %1833 = vmatprep.subr.bf16.mxu0 0
        %1834 = vmatpush1.bf16.msra.mxu0 0
        %1835 = vmatprep.subr.bf16.mxu0 0
        %1836 = vmatpush1.bf16.msra.mxu0 0
        %1837 = vmatprep.subr.bf16.mxu0 0
        %1838 = vmatpush1.bf16.msra.mxu0 0
        %1839 = vmatprep.subr.bf16.mxu0 0
        %1840 = vmatpush1.bf16.msra.mxu0 0
        %1841 = vmatprep.subr.bf16.mxu0 0
        %1842 = vmatpush1.bf16.msra.mxu0 0
        %1843 = vmatprep.subr.bf16.mxu0 0
        %1844 = vmatpush1.bf16.msra.mxu0 0
        %1845 = vmatprep.subr.bf16.mxu0 0
        %1846 = vmatpush1.bf16.msra.mxu0 0
        %1847 = vmatprep.subr.bf16.mxu0 0
        %1848 = vmatpush1.bf16.msra.mxu0 0
        %1849 = vmatprep.subr.bf16.mxu0 0
        %1850 = vmatpush1.bf16.msra.mxu0 0
        %1851 = vmatprep.subr.bf16.mxu0 0
        %1852 = vmatpush1.bf16.msra.mxu0 0
        %1853 = vmatprep.subr.bf16.mxu0 0
        %1854 = vmatpush1.bf16.msra.mxu0 0
        %1855 = vmatprep.subr.bf16.mxu0 0
        %1856 = vmatpush1.bf16.msra.mxu0 0
        %1857 = vmatprep.subr.bf16.mxu0 0
        %1858 = vmatpush1.bf16.msra.mxu0 0
        %1859 = vmatprep.subr.bf16.mxu0 0
        %1860 = vmatpush1.bf16.msra.mxu0 0
        %1861 = vmatprep.mubr.bf16.mxu0 0
        %1862 = vmatmul.mubr.bf16.gmra.mrb[0].mxu0 %v1721
        %v1863 = vpop.f32.mrb[0].mxu0
        %v1864 = vadd.f32 0.0, %v1863
        %v1865 = vpop.f32.mrb[0].mxu0
        %v1866 = vadd.f32 0.0, %v1865
        %v1867 = vpop.f32.mrb[0].mxu0
        %v1868 = vpop.f32.mrb[0].mxu0
        %1869 = vdwg.mxu0
        %1870 = vmatprep.subr.bf16.mxu0 %v1745
        %1871 = vmatpush1.bf16.msra.mxu0 %v1742
        %1872 = vmatprep.subr.bf16.mxu0 0
        %1873 = vmatpush1.bf16.msra.mxu0 0
        %1874 = vmatprep.subr.bf16.mxu0 0
        %1875 = vmatpush1.bf16.msra.mxu0 0
        %1876 = vmatprep.subr.bf16.mxu0 0
        %1877 = vmatpush1.bf16.msra.mxu0 0
        %1878 = vmatprep.subr.bf16.mxu0 0
        %1879 = vmatpush1.bf16.msra.mxu0 0
        %1880 = vmatprep.subr.bf16.mxu0 0
        %1881 = vmatpush1.bf16.msra.mxu0 0
        %1882 = vmatprep.subr.bf16.mxu0 0
        %1883 = vmatpush1.bf16.msra.mxu0 0
        %1884 = vmatprep.subr.bf16.mxu0 0
        %1885 = vmatpush1.bf16.msra.mxu0 0
        %1886 = vmatprep.subr.bf16.mxu0 0
        %1887 = vmatpush1.bf16.msra.mxu0 0
        %1888 = vmatprep.subr.bf16.mxu0 0
        %1889 = vmatpush1.bf16.msra.mxu0 0
        %1890 = vmatprep.subr.bf16.mxu0 0
        %1891 = vmatpush1.bf16.msra.mxu0 0
        %1892 = vmatprep.subr.bf16.mxu0 0
        %1893 = vmatpush1.bf16.msra.mxu0 0
        %1894 = vmatprep.subr.bf16.mxu0 0
        %1895 = vmatpush1.bf16.msra.mxu0 0
        %1896 = vmatprep.subr.bf16.mxu0 0
        %1897 = vmatpush1.bf16.msra.mxu0 0
        %1898 = vmatprep.subr.bf16.mxu0 0
        %1899 = vmatpush1.bf16.msra.mxu0 0
        %1900 = vmatprep.subr.bf16.mxu0 0
        %1901 = vmatpush1.bf16.msra.mxu0 0
        %1902 = vmatprep.mubr.bf16.mxu0 0
        %1903 = vmatmul.mubr.bf16.gmra.mrb[0].mxu0 %v1721
        %v1904 = vpop.f32.mrb[0].mxu0
        %v1905 = vadd.f32 0.0, %v1904
        %v1906 = vpop.f32.mrb[0].mxu0
        %v1907 = vadd.f32 0.0, %v1906
        %v1908 = vpop.f32.mrb[0].mxu0
        %v1909 = vpop.f32.mrb[0].mxu0
        %1910 = vdwg.mxu0
        %v1911 = vadd.f32 %v1683, %v1782
        %v1912 = vadd.f32 %v1684, %v1784
        %v1913 = vadd.f32 %v1685, %v1823
        %v1914 = vadd.f32 %v1686, %v1825
        %v1915 = vadd.f32 %v1687, %v1864
        %v1916 = vadd.f32 %v1688, %v1866
        %v1917 = vadd.f32 %v1689, %v1905
        %v1918 = vadd.f32 %v1690, %v1907
        %s1919 = scalar_lea.vmem %s1, 14
        %v1920 = vld [vmem:[%s1919] sm:$0x3]
        %1921 = vrot.lane.b32.xlu0 %v307, 90
        %v1922 = vpop.permute.xlu0 %1921
        %1923 = vrot.lane.b32.xlu0 %v315, 90
        %v1924 = vpop.permute.xlu0 %1923
        %1925 = vrot.lane.b32.xlu0 %v314, 90
        %v1926 = vpop.permute.xlu0 %1925
        %1927 = vrot.lane.b32.xlu0 %v316, 90
        %v1928 = vpop.permute.xlu0 %1927
        %1929 = vrot.lane.b32.xlu0 %v324, 90
        %v1930 = vpop.permute.xlu0 %1929
        %1931 = vrot.lane.b32.xlu0 %v332, 90
        %v1932 = vpop.permute.xlu0 %1931
        %1933 = vrot.lane.b32.xlu0 %v331, 90
        %v1934 = vpop.permute.xlu0 %1933
        %1935 = vrot.lane.b32.xlu0 %v333, 90
        %v1936 = vpop.permute.xlu0 %1935
        %1937 = vrot.lane.b32.xlu0 %v340, 90
        %v1938 = vpop.permute.xlu0 %1937
        %vm1939 = vcmask 736256
        %v1940 = vsel %vm1939, %v1922, %v1924
        %v1941 = vsel %vm1939, %v1924, %v1926
        %v1942 = vsel %vm1939, %v1926, %v1928
        %v1943 = vsel %vm1939, %v1928, %v1930
        %v1944 = vsel %vm1939, %v1930, %v1932
        %v1945 = vsel %vm1939, %v1932, %v1934
        %v1946 = vsel %vm1939, %v1934, %v1936
        %v1947 = vsel %vm1939, %v1936, %v1938
        %v1949 = vsel %vm368, %v1920, 0
        %v1952 = vsel %vm372, %v1940, 0
        %v1955 = vsel %vm372, %v1941, 0
        %v1958 = vsel %vm372, %v1942, 0
        %v1961 = vsel %vm372, %v1943, 0
        %v1964 = vsel %vm372, %v1944, 0
        %v1967 = vsel %vm372, %v1945, 0
        %v1970 = vsel %vm372, %v1946, 0
        %v1973 = vsel %vm372, %v1947, 0
        %1975 = vmatprep.subr.bf16.mxu0 %v1955
        %1976 = vmatpush1.bf16.msra.mxu0 %v1952
        %1977 = vmatprep.subr.bf16.mxu0 0
        %1978 = vmatpush1.bf16.msra.mxu0 0
        %1979 = vmatprep.subr.bf16.mxu0 0
        %1980 = vmatpush1.bf16.msra.mxu0 0
        %1981 = vmatprep.subr.bf16.mxu0 0
        %1982 = vmatpush1.bf16.msra.mxu0 0
        %1983 = vmatprep.subr.bf16.mxu0 0
        %1984 = vmatpush1.bf16.msra.mxu0 0
        %1985 = vmatprep.subr.bf16.mxu0 0
        %1986 = vmatpush1.bf16.msra.mxu0 0
        %1987 = vmatprep.subr.bf16.mxu0 0
        %1988 = vmatpush1.bf16.msra.mxu0 0
        %1989 = vmatprep.subr.bf16.mxu0 0
        %1990 = vmatpush1.bf16.msra.mxu0 0
        %1991 = vmatprep.subr.bf16.mxu0 0
        %1992 = vmatpush1.bf16.msra.mxu0 0
        %1993 = vmatprep.subr.bf16.mxu0 0
        %1994 = vmatpush1.bf16.msra.mxu0 0
        %1995 = vmatprep.subr.bf16.mxu0 0
        %1996 = vmatpush1.bf16.msra.mxu0 0
        %1997 = vmatprep.subr.bf16.mxu0 0
        %1998 = vmatpush1.bf16.msra.mxu0 0
        %1999 = vmatprep.subr.bf16.mxu0 0
        %2000 = vmatpush1.bf16.msra.mxu0 0
        %2001 = vmatprep.subr.bf16.mxu0 0
        %2002 = vmatpush1.bf16.msra.mxu0 0
        %2003 = vmatprep.subr.bf16.mxu0 0
        %2004 = vmatpush1.bf16.msra.mxu0 0
        %2005 = vmatprep.subr.bf16.mxu0 0
        %2006 = vmatpush1.bf16.msra.mxu0 0
        %2007 = vmatprep.mubr.bf16.mxu0 0
        %2008 = vmatmul.mubr.bf16.gmra.mrb[0].mxu0 %v1949
        %v2009 = vpop.f32.mrb[0].mxu0
        %v2010 = vadd.f32 0.0, %v2009
        %v2011 = vpop.f32.mrb[0].mxu0
        %v2012 = vadd.f32 0.0, %v2011
        %v2013 = vpop.f32.mrb[0].mxu0
        %v2014 = vpop.f32.mrb[0].mxu0
        %2015 = vdwg.mxu0
        %2016 = vmatprep.subr.bf16.mxu0 %v1961
        %2017 = vmatpush1.bf16.msra.mxu0 %v1958
        %2018 = vmatprep.subr.bf16.mxu0 0
        %2019 = vmatpush1.bf16.msra.mxu0 0
        %2020 = vmatprep.subr.bf16.mxu0 0
        %2021 = vmatpush1.bf16.msra.mxu0 0
        %2022 = vmatprep.subr.bf16.mxu0 0
        %2023 = vmatpush1.bf16.msra.mxu0 0
        %2024 = vmatprep.subr.bf16.mxu0 0
        %2025 = vmatpush1.bf16.msra.mxu0 0
        %2026 = vmatprep.subr.bf16.mxu0 0
        %2027 = vmatpush1.bf16.msra.mxu0 0
        %2028 = vmatprep.subr.bf16.mxu0 0
        %2029 = vmatpush1.bf16.msra.mxu0 0
        %2030 = vmatprep.subr.bf16.mxu0 0
        %2031 = vmatpush1.bf16.msra.mxu0 0
        %2032 = vmatprep.subr.bf16.mxu0 0
        %2033 = vmatpush1.bf16.msra.mxu0 0
        %2034 = vmatprep.subr.bf16.mxu0 0
        %2035 = vmatpush1.bf16.msra.mxu0 0
        %2036 = vmatprep.subr.bf16.mxu0 0
        %2037 = vmatpush1.bf16.msra.mxu0 0
        %2038 = vmatprep.subr.bf16.mxu0 0
        %2039 = vmatpush1.bf16.msra.mxu0 0
        %2040 = vmatprep.subr.bf16.mxu0 0
        %2041 = vmatpush1.bf16.msra.mxu0 0
        %2042 = vmatprep.subr.bf16.mxu0 0
        %2043 = vmatpush1.bf16.msra.mxu0 0
        %2044 = vmatprep.subr.bf16.mxu0 0
        %2045 = vmatpush1.bf16.msra.mxu0 0
        %2046 = vmatprep.subr.bf16.mxu0 0
        %2047 = vmatpush1.bf16.msra.mxu0 0
        %2048 = vmatprep.mubr.bf16.mxu0 0
        %2049 = vmatmul.mubr.bf16.gmra.mrb[0].mxu0 %v1949
        %v2050 = vpop.f32.mrb[0].mxu0
        %v2051 = vadd.f32 0.0, %v2050
        %v2052 = vpop.f32.mrb[0].mxu0
        %v2053 = vadd.f32 0.0, %v2052
        %v2054 = vpop.f32.mrb[0].mxu0
        %v2055 = vpop.f32.mrb[0].mxu0
        %2056 = vdwg.mxu0
        %2057 = vmatprep.subr.bf16.mxu0 %v1967
        %2058 = vmatpush1.bf16.msra.mxu0 %v1964
        %2059 = vmatprep.subr.bf16.mxu0 0
        %2060 = vmatpush1.bf16.msra.mxu0 0
        %2061 = vmatprep.subr.bf16.mxu0 0
        %2062 = vmatpush1.bf16.msra.mxu0 0
        %2063 = vmatprep.subr.bf16.mxu0 0
        %2064 = vmatpush1.bf16.msra.mxu0 0
        %2065 = vmatprep.subr.bf16.mxu0 0
        %2066 = vmatpush1.bf16.msra.mxu0 0
        %2067 = vmatprep.subr.bf16.mxu0 0
        %2068 = vmatpush1.bf16.msra.mxu0 0
        %2069 = vmatprep.subr.bf16.mxu0 0
        %2070 = vmatpush1.bf16.msra.mxu0 0
        %2071 = vmatprep.subr.bf16.mxu0 0
        %2072 = vmatpush1.bf16.msra.mxu0 0
        %2073 = vmatprep.subr.bf16.mxu0 0
        %2074 = vmatpush1.bf16.msra.mxu0 0
        %2075 = vmatprep.subr.bf16.mxu0 0
        %2076 = vmatpush1.bf16.msra.mxu0 0
        %2077 = vmatprep.subr.bf16.mxu0 0
        %2078 = vmatpush1.bf16.msra.mxu0 0
        %2079 = vmatprep.subr.bf16.mxu0 0
        %2080 = vmatpush1.bf16.msra.mxu0 0
        %2081 = vmatprep.subr.bf16.mxu0 0
        %2082 = vmatpush1.bf16.msra.mxu0 0
        %2083 = vmatprep.subr.bf16.mxu0 0
        %2084 = vmatpush1.bf16.msra.mxu0 0
        %2085 = vmatprep.subr.bf16.mxu0 0
        %2086 = vmatpush1.bf16.msra.mxu0 0
        %2087 = vmatprep.subr.bf16.mxu0 0
        %2088 = vmatpush1.bf16.msra.mxu0 0
        %2089 = vmatprep.mubr.bf16.mxu0 0
        %2090 = vmatmul.mubr.bf16.gmra.mrb[0].mxu0 %v1949
        %v2091 = vpop.f32.mrb[0].mxu0
        %v2092 = vadd.f32 0.0, %v2091
        %v2093 = vpop.f32.mrb[0].mxu0
        %v2094 = vadd.f32 0.0, %v2093
        %v2095 = vpop.f32.mrb[0].mxu0
        %v2096 = vpop.f32.mrb[0].mxu0
        %2097 = vdwg.mxu0
        %2098 = vmatprep.subr.bf16.mxu0 %v1973
        %2099 = vmatpush1.bf16.msra.mxu0 %v1970
        %2100 = vmatprep.subr.bf16.mxu0 0
        %2101 = vmatpush1.bf16.msra.mxu0 0
        %2102 = vmatprep.subr.bf16.mxu0 0
        %2103 = vmatpush1.bf16.msra.mxu0 0
        %2104 = vmatprep.subr.bf16.mxu0 0
        %2105 = vmatpush1.bf16.msra.mxu0 0
        %2106 = vmatprep.subr.bf16.mxu0 0
        %2107 = vmatpush1.bf16.msra.mxu0 0
        %2108 = vmatprep.subr.bf16.mxu0 0
        %2109 = vmatpush1.bf16.msra.mxu0 0
        %2110 = vmatprep.subr.bf16.mxu0 0
        %2111 = vmatpush1.bf16.msra.mxu0 0
        %2112 = vmatprep.subr.bf16.mxu0 0
        %2113 = vmatpush1.bf16.msra.mxu0 0
        %2114 = vmatprep.subr.bf16.mxu0 0
        %2115 = vmatpush1.bf16.msra.mxu0 0
        %2116 = vmatprep.subr.bf16.mxu0 0
        %2117 = vmatpush1.bf16.msra.mxu0 0
        %2118 = vmatprep.subr.bf16.mxu0 0
        %2119 = vmatpush1.bf16.msra.mxu0 0
        %2120 = vmatprep.subr.bf16.mxu0 0
        %2121 = vmatpush1.bf16.msra.mxu0 0
        %2122 = vmatprep.subr.bf16.mxu0 0
        %2123 = vmatpush1.bf16.msra.mxu0 0
        %2124 = vmatprep.subr.bf16.mxu0 0
        %2125 = vmatpush1.bf16.msra.mxu0 0
        %2126 = vmatprep.subr.bf16.mxu0 0
        %2127 = vmatpush1.bf16.msra.mxu0 0
        %2128 = vmatprep.subr.bf16.mxu0 0
        %2129 = vmatpush1.bf16.msra.mxu0 0
        %2130 = vmatprep.mubr.bf16.mxu0 0
        %2131 = vmatmul.mubr.bf16.gmra.mrb[0].mxu0 %v1949
        %v2132 = vpop.f32.mrb[0].mxu0
        %v2133 = vadd.f32 0.0, %v2132
        %v2134 = vpop.f32.mrb[0].mxu0
        %v2135 = vadd.f32 0.0, %v2134
        %v2136 = vpop.f32.mrb[0].mxu0
        %v2137 = vpop.f32.mrb[0].mxu0
        %2138 = vdwg.mxu0
        %v2139 = vadd.f32 %v1911, %v2010
        %v2140 = vadd.f32 %v1912, %v2012
        %v2141 = vadd.f32 %v1913, %v2051
        %v2142 = vadd.f32 %v1914, %v2053
        %v2143 = vadd.f32 %v1915, %v2092
        %v2144 = vadd.f32 %v1916, %v2094
        %v2145 = vadd.f32 %v1917, %v2133
        %v2146 = vadd.f32 %v1918, %v2135
        %s2147 = scalar_lea.vmem %s1, 16
        %v2148 = vld [vmem:[%s2147] sm:$0x3]
        %2149 = vrot.lane.b32.xlu0 %v307, 89
        %v2150 = vpop.permute.xlu0 %2149
        %2151 = vrot.lane.b32.xlu0 %v315, 89
        %v2152 = vpop.permute.xlu0 %2151
        %2153 = vrot.lane.b32.xlu0 %v314, 89
        %v2154 = vpop.permute.xlu0 %2153
        %2155 = vrot.lane.b32.xlu0 %v316, 89
        %v2156 = vpop.permute.xlu0 %2155
        %2157 = vrot.lane.b32.xlu0 %v324, 89
        %v2158 = vpop.permute.xlu0 %2157
        %2159 = vrot.lane.b32.xlu0 %v332, 89
        %v2160 = vpop.permute.xlu0 %2159
        %2161 = vrot.lane.b32.xlu0 %v331, 89
        %v2162 = vpop.permute.xlu0 %2161
        %2163 = vrot.lane.b32.xlu0 %v333, 89
        %v2164 = vpop.permute.xlu0 %2163
        %2165 = vrot.lane.b32.xlu0 %v340, 89
        %v2166 = vpop.permute.xlu0 %2165
        %vm2167 = vcmask 728064
        %v2168 = vsel %vm2167, %v2150, %v2152
        %v2169 = vsel %vm2167, %v2152, %v2154
        %v2170 = vsel %vm2167, %v2154, %v2156
        %v2171 = vsel %vm2167, %v2156, %v2158
        %v2172 = vsel %vm2167, %v2158, %v2160
        %v2173 = vsel %vm2167, %v2160, %v2162
        %v2174 = vsel %vm2167, %v2162, %v2164
        %v2175 = vsel %vm2167, %v2164, %v2166
        %v2177 = vsel %vm368, %v2148, 0
        %v2180 = vsel %vm372, %v2168, 0
        %v2183 = vsel %vm372, %v2169, 0
        %v2186 = vsel %vm372, %v2170, 0
        %v2189 = vsel %vm372, %v2171, 0
        %v2192 = vsel %vm372, %v2172, 0
        %v2195 = vsel %vm372, %v2173, 0
        %v2198 = vsel %vm372, %v2174, 0
        %v2201 = vsel %vm372, %v2175, 0
        %2203 = vmatprep.subr.bf16.mxu0 %v2183
        %2204 = vmatpush1.bf16.msra.mxu0 %v2180
        %2205 = vmatprep.subr.bf16.mxu0 0
        %2206 = vmatpush1.bf16.msra.mxu0 0
        %2207 = vmatprep.subr.bf16.mxu0 0
        %2208 = vmatpush1.bf16.msra.mxu0 0
        %2209 = vmatprep.subr.bf16.mxu0 0
        %2210 = vmatpush1.bf16.msra.mxu0 0
        %2211 = vmatprep.subr.bf16.mxu0 0
        %2212 = vmatpush1.bf16.msra.mxu0 0
        %2213 = vmatprep.subr.bf16.mxu0 0
        %2214 = vmatpush1.bf16.msra.mxu0 0
        %2215 = vmatprep.subr.bf16.mxu0 0
        %2216 = vmatpush1.bf16.msra.mxu0 0
        %2217 = vmatprep.subr.bf16.mxu0 0
        %2218 = vmatpush1.bf16.msra.mxu0 0
        %2219 = vmatprep.subr.bf16.mxu0 0
        %2220 = vmatpush1.bf16.msra.mxu0 0
        %2221 = vmatprep.subr.bf16.mxu0 0
        %2222 = vmatpush1.bf16.msra.mxu0 0
        %2223 = vmatprep.subr.bf16.mxu0 0
        %2224 = vmatpush1.bf16.msra.mxu0 0
        %2225 = vmatprep.subr.bf16.mxu0 0
        %2226 = vmatpush1.bf16.msra.mxu0 0
        %2227 = vmatprep.subr.bf16.mxu0 0
        %2228 = vmatpush1.bf16.msra.mxu0 0
        %2229 = vmatprep.subr.bf16.mxu0 0
        %2230 = vmatpush1.bf16.msra.mxu0 0
        %2231 = vmatprep.subr.bf16.mxu0 0
        %2232 = vmatpush1.bf16.msra.mxu0 0
        %2233 = vmatprep.subr.bf16.mxu0 0
        %2234 = vmatpush1.bf16.msra.mxu0 0
        %2235 = vmatprep.mubr.bf16.mxu0 0
        %2236 = vmatmul.mubr.bf16.gmra.mrb[0].mxu0 %v2177
        %v2237 = vpop.f32.mrb[0].mxu0
        %v2238 = vadd.f32 0.0, %v2237
        %v2239 = vpop.f32.mrb[0].mxu0
        %v2240 = vadd.f32 0.0, %v2239
        %v2241 = vpop.f32.mrb[0].mxu0
        %v2242 = vpop.f32.mrb[0].mxu0
        %2243 = vdwg.mxu0
        %2244 = vmatprep.subr.bf16.mxu0 %v2189
        %2245 = vmatpush1.bf16.msra.mxu0 %v2186
        %2246 = vmatprep.subr.bf16.mxu0 0
        %2247 = vmatpush1.bf16.msra.mxu0 0
        %2248 = vmatprep.subr.bf16.mxu0 0
        %2249 = vmatpush1.bf16.msra.mxu0 0
        %2250 = vmatprep.subr.bf16.mxu0 0
        %2251 = vmatpush1.bf16.msra.mxu0 0
        %2252 = vmatprep.subr.bf16.mxu0 0
        %2253 = vmatpush1.bf16.msra.mxu0 0
        %2254 = vmatprep.subr.bf16.mxu0 0
        %2255 = vmatpush1.bf16.msra.mxu0 0
        %2256 = vmatprep.subr.bf16.mxu0 0
        %2257 = vmatpush1.bf16.msra.mxu0 0
        %2258 = vmatprep.subr.bf16.mxu0 0
        %2259 = vmatpush1.bf16.msra.mxu0 0
        %2260 = vmatprep.subr.bf16.mxu0 0
        %2261 = vmatpush1.bf16.msra.mxu0 0
        %2262 = vmatprep.subr.bf16.mxu0 0
        %2263 = vmatpush1.bf16.msra.mxu0 0
        %2264 = vmatprep.subr.bf16.mxu0 0
        %2265 = vmatpush1.bf16.msra.mxu0 0
        %2266 = vmatprep.subr.bf16.mxu0 0
        %2267 = vmatpush1.bf16.msra.mxu0 0
        %2268 = vmatprep.subr.bf16.mxu0 0
        %2269 = vmatpush1.bf16.msra.mxu0 0
        %2270 = vmatprep.subr.bf16.mxu0 0
        %2271 = vmatpush1.bf16.msra.mxu0 0
        %2272 = vmatprep.subr.bf16.mxu0 0
        %2273 = vmatpush1.bf16.msra.mxu0 0
        %2274 = vmatprep.subr.bf16.mxu0 0
        %2275 = vmatpush1.bf16.msra.mxu0 0
        %2276 = vmatprep.mubr.bf16.mxu0 0
        %2277 = vmatmul.mubr.bf16.gmra.mrb[0].mxu0 %v2177
        %v2278 = vpop.f32.mrb[0].mxu0
        %v2279 = vadd.f32 0.0, %v2278
        %v2280 = vpop.f32.mrb[0].mxu0
        %v2281 = vadd.f32 0.0, %v2280
        %v2282 = vpop.f32.mrb[0].mxu0
        %v2283 = vpop.f32.mrb[0].mxu0
        %2284 = vdwg.mxu0
        %2285 = vmatprep.subr.bf16.mxu0 %v2195
        %2286 = vmatpush1.bf16.msra.mxu0 %v2192
        %2287 = vmatprep.subr.bf16.mxu0 0
        %2288 = vmatpush1.bf16.msra.mxu0 0
        %2289 = vmatprep.subr.bf16.mxu0 0
        %2290 = vmatpush1.bf16.msra.mxu0 0
        %2291 = vmatprep.subr.bf16.mxu0 0
        %2292 = vmatpush1.bf16.msra.mxu0 0
        %2293 = vmatprep.subr.bf16.mxu0 0
        %2294 = vmatpush1.bf16.msra.mxu0 0
        %2295 = vmatprep.subr.bf16.mxu0 0
        %2296 = vmatpush1.bf16.msra.mxu0 0
        %2297 = vmatprep.subr.bf16.mxu0 0
        %2298 = vmatpush1.bf16.msra.mxu0 0
        %2299 = vmatprep.subr.bf16.mxu0 0
        %2300 = vmatpush1.bf16.msra.mxu0 0
        %2301 = vmatprep.subr.bf16.mxu0 0
        %2302 = vmatpush1.bf16.msra.mxu0 0
        %2303 = vmatprep.subr.bf16.mxu0 0
        %2304 = vmatpush1.bf16.msra.mxu0 0
        %2305 = vmatprep.subr.bf16.mxu0 0
        %2306 = vmatpush1.bf16.msra.mxu0 0
        %2307 = vmatprep.subr.bf16.mxu0 0
        %2308 = vmatpush1.bf16.msra.mxu0 0
        %2309 = vmatprep.subr.bf16.mxu0 0
        %2310 = vmatpush1.bf16.msra.mxu0 0
        %2311 = vmatprep.subr.bf16.mxu0 0
        %2312 = vmatpush1.bf16.msra.mxu0 0
        %2313 = vmatprep.subr.bf16.mxu0 0
        %2314 = vmatpush1.bf16.msra.mxu0 0
        %2315 = vmatprep.subr.bf16.mxu0 0
        %2316 = vmatpush1.bf16.msra.mxu0 0
        %2317 = vmatprep.mubr.bf16.mxu0 0
        %2318 = vmatmul.mubr.bf16.gmra.mrb[0].mxu0 %v2177
        %v2319 = vpop.f32.mrb[0].mxu0
        %v2320 = vadd.f32 0.0, %v2319
        %v2321 = vpop.f32.mrb[0].mxu0
        %v2322 = vadd.f32 0.0, %v2321
        %v2323 = vpop.f32.mrb[0].mxu0
        %v2324 = vpop.f32.mrb[0].mxu0
        %2325 = vdwg.mxu0
        %2326 = vmatprep.subr.bf16.mxu0 %v2201
        %2327 = vmatpush1.bf16.msra.mxu0 %v2198
        %2328 = vmatprep.subr.bf16.mxu0 0
        %2329 = vmatpush1.bf16.msra.mxu0 0
        %2330 = vmatprep.subr.bf16.mxu0 0
        %2331 = vmatpush1.bf16.msra.mxu0 0
        %2332 = vmatprep.subr.bf16.mxu0 0
        %2333 = vmatpush1.bf16.msra.mxu0 0
        %2334 = vmatprep.subr.bf16.mxu0 0
        %2335 = vmatpush1.bf16.msra.mxu0 0
        %2336 = vmatprep.subr.bf16.mxu0 0
        %2337 = vmatpush1.bf16.msra.mxu0 0
        %2338 = vmatprep.subr.bf16.mxu0 0
        %2339 = vmatpush1.bf16.msra.mxu0 0
        %2340 = vmatprep.subr.bf16.mxu0 0
        %2341 = vmatpush1.bf16.msra.mxu0 0
        %2342 = vmatprep.subr.bf16.mxu0 0
        %2343 = vmatpush1.bf16.msra.mxu0 0
        %2344 = vmatprep.subr.bf16.mxu0 0
        %2345 = vmatpush1.bf16.msra.mxu0 0
        %2346 = vmatprep.subr.bf16.mxu0 0
        %2347 = vmatpush1.bf16.msra.mxu0 0
        %2348 = vmatprep.subr.bf16.mxu0 0
        %2349 = vmatpush1.bf16.msra.mxu0 0
        %2350 = vmatprep.subr.bf16.mxu0 0
        %2351 = vmatpush1.bf16.msra.mxu0 0
        %2352 = vmatprep.subr.bf16.mxu0 0
        %2353 = vmatpush1.bf16.msra.mxu0 0
        %2354 = vmatprep.subr.bf16.mxu0 0
        %2355 = vmatpush1.bf16.msra.mxu0 0
        %2356 = vmatprep.subr.bf16.mxu0 0
        %2357 = vmatpush1.bf16.msra.mxu0 0
        %2358 = vmatprep.mubr.bf16.mxu0 0
        %2359 = vmatmul.mubr.bf16.gmra.mrb[0].mxu0 %v2177
        %v2360 = vpop.f32.mrb[0].mxu0
        %v2361 = vadd.f32 0.0, %v2360
        %v2362 = vpop.f32.mrb[0].mxu0
        %v2363 = vadd.f32 0.0, %v2362
        %v2364 = vpop.f32.mrb[0].mxu0
        %v2365 = vpop.f32.mrb[0].mxu0
        %2366 = vdwg.mxu0
        %v2367 = vadd.f32 %v2139, %v2238
        %v2368 = vadd.f32 %v2140, %v2240
        %v2369 = vadd.f32 %v2141, %v2279
        %v2370 = vadd.f32 %v2142, %v2281
        %v2371 = vadd.f32 %v2143, %v2320
        %v2372 = vadd.f32 %v2144, %v2322
        %v2373 = vadd.f32 %v2145, %v2361
        %v2374 = vadd.f32 %v2146, %v2363
        %s2375 = scalar_lea.vmem %s1, 18
        %v2376 = vld [vmem:[%s2375] sm:$0x3]
        %2377 = vrot.lane.b32.xlu0 %v307, 11
        %v2378 = vpop.permute.xlu0 %2377
        %2379 = vrot.lane.b32.xlu0 %v315, 11
        %v2380 = vpop.permute.xlu0 %2379
        %2381 = vrot.lane.b32.xlu0 %v314, 11
        %v2382 = vpop.permute.xlu0 %2381
        %2383 = vrot.lane.b32.xlu0 %v316, 11
        %v2384 = vpop.permute.xlu0 %2383
        %2385 = vrot.lane.b32.xlu0 %v324, 11
        %v2386 = vpop.permute.xlu0 %2385
        %2387 = vrot.lane.b32.xlu0 %v332, 11
        %v2388 = vpop.permute.xlu0 %2387
        %2389 = vrot.lane.b32.xlu0 %v331, 11
        %v2390 = vpop.permute.xlu0 %2389
        %2391 = vrot.lane.b32.xlu0 %v333, 11
        %v2392 = vpop.permute.xlu0 %2391
        %2393 = vrot.lane.b32.xlu0 %v340, 11
        %v2394 = vpop.permute.xlu0 %2393
        %vm2395 = vcmask 89088
        %v2396 = vsel %vm2395, %v2378, %v2380
        %v2397 = vsel %vm2395, %v2380, %v2382
        %v2398 = vsel %vm2395, %v2382, %v2384
        %v2399 = vsel %vm2395, %v2384, %v2386
        %v2400 = vsel %vm2395, %v2386, %v2388
        %v2401 = vsel %vm2395, %v2388, %v2390
        %v2402 = vsel %vm2395, %v2390, %v2392
        %v2403 = vsel %vm2395, %v2392, %v2394
        %v2405 = vsel %vm368, %v2376, 0
        %v2408 = vsel %vm372, %v2396, 0
        %v2411 = vsel %vm372, %v2397, 0
        %v2414 = vsel %vm372, %v2398, 0
        %v2417 = vsel %vm372, %v2399, 0
        %v2420 = vsel %vm372, %v2400, 0
        %v2423 = vsel %vm372, %v2401, 0
        %v2426 = vsel %vm372, %v2402, 0
        %v2429 = vsel %vm372, %v2403, 0
        %2431 = vmatprep.subr.bf16.mxu0 %v2411
        %2432 = vmatpush1.bf16.msra.mxu0 %v2408
        %2433 = vmatprep.subr.bf16.mxu0 0
        %2434 = vmatpush1.bf16.msra.mxu0 0
        %2435 = vmatprep.subr.bf16.mxu0 0
        %2436 = vmatpush1.bf16.msra.mxu0 0
        %2437 = vmatprep.subr.bf16.mxu0 0
        %2438 = vmatpush1.bf16.msra.mxu0 0
        %2439 = vmatprep.subr.bf16.mxu0 0
        %2440 = vmatpush1.bf16.msra.mxu0 0
        %2441 = vmatprep.subr.bf16.mxu0 0
        %2442 = vmatpush1.bf16.msra.mxu0 0
        %2443 = vmatprep.subr.bf16.mxu0 0
        %2444 = vmatpush1.bf16.msra.mxu0 0
        %2445 = vmatprep.subr.bf16.mxu0 0
        %2446 = vmatpush1.bf16.msra.mxu0 0
        %2447 = vmatprep.subr.bf16.mxu0 0
        %2448 = vmatpush1.bf16.msra.mxu0 0
        %2449 = vmatprep.subr.bf16.mxu0 0
        %2450 = vmatpush1.bf16.msra.mxu0 0
        %2451 = vmatprep.subr.bf16.mxu0 0
        %2452 = vmatpush1.bf16.msra.mxu0 0
        %2453 = vmatprep.subr.bf16.mxu0 0
        %2454 = vmatpush1.bf16.msra.mxu0 0
        %2455 = vmatprep.subr.bf16.mxu0 0
        %2456 = vmatpush1.bf16.msra.mxu0 0
        %2457 = vmatprep.subr.bf16.mxu0 0
        %2458 = vmatpush1.bf16.msra.mxu0 0
        %2459 = vmatprep.subr.bf16.mxu0 0
        %2460 = vmatpush1.bf16.msra.mxu0 0
        %2461 = vmatprep.subr.bf16.mxu0 0
        %2462 = vmatpush1.bf16.msra.mxu0 0
        %2463 = vmatprep.mubr.bf16.mxu0 0
        %2464 = vmatmul.mubr.bf16.gmra.mrb[0].mxu0 %v2405
        %v2465 = vpop.f32.mrb[0].mxu0
        %v2466 = vadd.f32 0.0, %v2465
        %v2467 = vpop.f32.mrb[0].mxu0
        %v2468 = vadd.f32 0.0, %v2467
        %v2469 = vpop.f32.mrb[0].mxu0
        %v2470 = vpop.f32.mrb[0].mxu0
        %2471 = vdwg.mxu0
        %2472 = vmatprep.subr.bf16.mxu0 %v2417
        %2473 = vmatpush1.bf16.msra.mxu0 %v2414
        %2474 = vmatprep.subr.bf16.mxu0 0
        %2475 = vmatpush1.bf16.msra.mxu0 0
        %2476 = vmatprep.subr.bf16.mxu0 0
        %2477 = vmatpush1.bf16.msra.mxu0 0
        %2478 = vmatprep.subr.bf16.mxu0 0
        %2479 = vmatpush1.bf16.msra.mxu0 0
        %2480 = vmatprep.subr.bf16.mxu0 0
        %2481 = vmatpush1.bf16.msra.mxu0 0
        %2482 = vmatprep.subr.bf16.mxu0 0
        %2483 = vmatpush1.bf16.msra.mxu0 0
        %2484 = vmatprep.subr.bf16.mxu0 0
        %2485 = vmatpush1.bf16.msra.mxu0 0
        %2486 = vmatprep.subr.bf16.mxu0 0
        %2487 = vmatpush1.bf16.msra.mxu0 0
        %2488 = vmatprep.subr.bf16.mxu0 0
        %2489 = vmatpush1.bf16.msra.mxu0 0
        %2490 = vmatprep.subr.bf16.mxu0 0
        %2491 = vmatpush1.bf16.msra.mxu0 0
        %2492 = vmatprep.subr.bf16.mxu0 0
        %2493 = vmatpush1.bf16.msra.mxu0 0
        %2494 = vmatprep.subr.bf16.mxu0 0
        %2495 = vmatpush1.bf16.msra.mxu0 0
        %2496 = vmatprep.subr.bf16.mxu0 0
        %2497 = vmatpush1.bf16.msra.mxu0 0
        %2498 = vmatprep.subr.bf16.mxu0 0
        %2499 = vmatpush1.bf16.msra.mxu0 0
        %2500 = vmatprep.subr.bf16.mxu0 0
        %2501 = vmatpush1.bf16.msra.mxu0 0
        %2502 = vmatprep.subr.bf16.mxu0 0
        %2503 = vmatpush1.bf16.msra.mxu0 0
        %2504 = vmatprep.mubr.bf16.mxu0 0
        %2505 = vmatmul.mubr.bf16.gmra.mrb[0].mxu0 %v2405
        %v2506 = vpop.f32.mrb[0].mxu0
        %v2507 = vadd.f32 0.0, %v2506
        %v2508 = vpop.f32.mrb[0].mxu0
        %v2509 = vadd.f32 0.0, %v2508
        %v2510 = vpop.f32.mrb[0].mxu0
        %v2511 = vpop.f32.mrb[0].mxu0
        %2512 = vdwg.mxu0
        %2513 = vmatprep.subr.bf16.mxu0 %v2423
        %2514 = vmatpush1.bf16.msra.mxu0 %v2420
        %2515 = vmatprep.subr.bf16.mxu0 0
        %2516 = vmatpush1.bf16.msra.mxu0 0
        %2517 = vmatprep.subr.bf16.mxu0 0
        %2518 = vmatpush1.bf16.msra.mxu0 0
        %2519 = vmatprep.subr.bf16.mxu0 0
        %2520 = vmatpush1.bf16.msra.mxu0 0
        %2521 = vmatprep.subr.bf16.mxu0 0
        %2522 = vmatpush1.bf16.msra.mxu0 0
        %2523 = vmatprep.subr.bf16.mxu0 0
        %2524 = vmatpush1.bf16.msra.mxu0 0
        %2525 = vmatprep.subr.bf16.mxu0 0
        %2526 = vmatpush1.bf16.msra.mxu0 0
        %2527 = vmatprep.subr.bf16.mxu0 0
        %2528 = vmatpush1.bf16.msra.mxu0 0
        %2529 = vmatprep.subr.bf16.mxu0 0
        %2530 = vmatpush1.bf16.msra.mxu0 0
        %2531 = vmatprep.subr.bf16.mxu0 0
        %2532 = vmatpush1.bf16.msra.mxu0 0
        %2533 = vmatprep.subr.bf16.mxu0 0
        %2534 = vmatpush1.bf16.msra.mxu0 0
        %2535 = vmatprep.subr.bf16.mxu0 0
        %2536 = vmatpush1.bf16.msra.mxu0 0
        %2537 = vmatprep.subr.bf16.mxu0 0
        %2538 = vmatpush1.bf16.msra.mxu0 0
        %2539 = vmatprep.subr.bf16.mxu0 0
        %2540 = vmatpush1.bf16.msra.mxu0 0
        %2541 = vmatprep.subr.bf16.mxu0 0
        %2542 = vmatpush1.bf16.msra.mxu0 0
        %2543 = vmatprep.subr.bf16.mxu0 0
        %2544 = vmatpush1.bf16.msra.mxu0 0
        %2545 = vmatprep.mubr.bf16.mxu0 0
        %2546 = vmatmul.mubr.bf16.gmra.mrb[0].mxu0 %v2405
        %v2547 = vpop.f32.mrb[0].mxu0
        %v2548 = vadd.f32 0.0, %v2547
        %v2549 = vpop.f32.mrb[0].mxu0
        %v2550 = vadd.f32 0.0, %v2549
        %v2551 = vpop.f32.mrb[0].mxu0
        %v2552 = vpop.f32.mrb[0].mxu0
        %2553 = vdwg.mxu0
        %2554 = vmatprep.subr.bf16.mxu0 %v2429
        %2555 = vmatpush1.bf16.msra.mxu0 %v2426
        %2556 = vmatprep.subr.bf16.mxu0 0
        %2557 = vmatpush1.bf16.msra.mxu0 0
        %2558 = vmatprep.subr.bf16.mxu0 0
        %2559 = vmatpush1.bf16.msra.mxu0 0
        %2560 = vmatprep.subr.bf16.mxu0 0
        %2561 = vmatpush1.bf16.msra.mxu0 0
        %2562 = vmatprep.subr.bf16.mxu0 0
        %2563 = vmatpush1.bf16.msra.mxu0 0
        %2564 = vmatprep.subr.bf16.mxu0 0
        %2565 = vmatpush1.bf16.msra.mxu0 0
        %2566 = vmatprep.subr.bf16.mxu0 0
        %2567 = vmatpush1.bf16.msra.mxu0 0
        %2568 = vmatprep.subr.bf16.mxu0 0
        %2569 = vmatpush1.bf16.msra.mxu0 0
        %2570 = vmatprep.subr.bf16.mxu0 0
        %2571 = vmatpush1.bf16.msra.mxu0 0
        %2572 = vmatprep.subr.bf16.mxu0 0
        %2573 = vmatpush1.bf16.msra.mxu0 0
        %2574 = vmatprep.subr.bf16.mxu0 0
        %2575 = vmatpush1.bf16.msra.mxu0 0
        %2576 = vmatprep.subr.bf16.mxu0 0
        %2577 = vmatpush1.bf16.msra.mxu0 0
        %2578 = vmatprep.subr.bf16.mxu0 0
        %2579 = vmatpush1.bf16.msra.mxu0 0
        %2580 = vmatprep.subr.bf16.mxu0 0
        %2581 = vmatpush1.bf16.msra.mxu0 0
        %2582 = vmatprep.subr.bf16.mxu0 0
        %2583 = vmatpush1.bf16.msra.mxu0 0
        %2584 = vmatprep.subr.bf16.mxu0 0
        %2585 = vmatpush1.bf16.msra.mxu0 0
        %2586 = vmatprep.mubr.bf16.mxu0 0
        %2587 = vmatmul.mubr.bf16.gmra.mrb[0].mxu0 %v2405
        %v2588 = vpop.f32.mrb[0].mxu0
        %v2589 = vadd.f32 0.0, %v2588
        %v2590 = vpop.f32.mrb[0].mxu0
        %v2591 = vadd.f32 0.0, %v2590
        %v2592 = vpop.f32.mrb[0].mxu0
        %v2593 = vpop.f32.mrb[0].mxu0
        %2594 = vdwg.mxu0
        %v2595 = vadd.f32 %v2367, %v2466
        %v2596 = vadd.f32 %v2368, %v2468
        %v2597 = vadd.f32 %v2369, %v2507
        %v2598 = vadd.f32 %v2370, %v2509
        %v2599 = vadd.f32 %v2371, %v2548
        %v2600 = vadd.f32 %v2372, %v2550
        %v2601 = vadd.f32 %v2373, %v2589
        %v2602 = vadd.f32 %v2374, %v2591
        %s2603 = scalar_lea.vmem %s1, 20
        %v2604 = vld [vmem:[%s2603] sm:$0x3]
        %2605 = vrot.lane.b32.xlu0 %v307, 10
        %v2606 = vpop.permute.xlu0 %2605
        %2607 = vrot.lane.b32.xlu0 %v315, 10
        %v2608 = vpop.permute.xlu0 %2607
        %2609 = vrot.lane.b32.xlu0 %v314, 10
        %v2610 = vpop.permute.xlu0 %2609
        %2611 = vrot.lane.b32.xlu0 %v316, 10
        %v2612 = vpop.permute.xlu0 %2611
        %2613 = vrot.lane.b32.xlu0 %v324, 10
        %v2614 = vpop.permute.xlu0 %2613
        %2615 = vrot.lane.b32.xlu0 %v332, 10
        %v2616 = vpop.permute.xlu0 %2615
        %2617 = vrot.lane.b32.xlu0 %v331, 10
        %v2618 = vpop.permute.xlu0 %2617
        %2619 = vrot.lane.b32.xlu0 %v333, 10
        %v2620 = vpop.permute.xlu0 %2619
        %2621 = vrot.lane.b32.xlu0 %v340, 10
        %v2622 = vpop.permute.xlu0 %2621
        %vm2623 = vcmask 80896
        %v2624 = vsel %vm2623, %v2606, %v2608
        %v2625 = vsel %vm2623, %v2608, %v2610
        %v2626 = vsel %vm2623, %v2610, %v2612
        %v2627 = vsel %vm2623, %v2612, %v2614
        %v2628 = vsel %vm2623, %v2614, %v2616
        %v2629 = vsel %vm2623, %v2616, %v2618
        %v2630 = vsel %vm2623, %v2618, %v2620
        %v2631 = vsel %vm2623, %v2620, %v2622
        %v2633 = vsel %vm368, %v2604, 0
        %v2636 = vsel %vm372, %v2624, 0
        %v2639 = vsel %vm372, %v2625, 0
        %v2642 = vsel %vm372, %v2626, 0
        %v2645 = vsel %vm372, %v2627, 0
        %v2648 = vsel %vm372, %v2628, 0
        %v2651 = vsel %vm372, %v2629, 0
        %v2654 = vsel %vm372, %v2630, 0
        %v2657 = vsel %vm372, %v2631, 0
        %2659 = vmatprep.subr.bf16.mxu0 %v2639
        %2660 = vmatpush1.bf16.msra.mxu0 %v2636
        %2661 = vmatprep.subr.bf16.mxu0 0
        %2662 = vmatpush1.bf16.msra.mxu0 0
        %2663 = vmatprep.subr.bf16.mxu0 0
        %2664 = vmatpush1.bf16.msra.mxu0 0
        %2665 = vmatprep.subr.bf16.mxu0 0
        %2666 = vmatpush1.bf16.msra.mxu0 0
        %2667 = vmatprep.subr.bf16.mxu0 0
        %2668 = vmatpush1.bf16.msra.mxu0 0
        %2669 = vmatprep.subr.bf16.mxu0 0
        %2670 = vmatpush1.bf16.msra.mxu0 0
        %2671 = vmatprep.subr.bf16.mxu0 0
        %2672 = vmatpush1.bf16.msra.mxu0 0
        %2673 = vmatprep.subr.bf16.mxu0 0
        %2674 = vmatpush1.bf16.msra.mxu0 0
        %2675 = vmatprep.subr.bf16.mxu0 0
        %2676 = vmatpush1.bf16.msra.mxu0 0
        %2677 = vmatprep.subr.bf16.mxu0 0
        %2678 = vmatpush1.bf16.msra.mxu0 0
        %2679 = vmatprep.subr.bf16.mxu0 0
        %2680 = vmatpush1.bf16.msra.mxu0 0
        %2681 = vmatprep.subr.bf16.mxu0 0
        %2682 = vmatpush1.bf16.msra.mxu0 0
        %2683 = vmatprep.subr.bf16.mxu0 0
        %2684 = vmatpush1.bf16.msra.mxu0 0
        %2685 = vmatprep.subr.bf16.mxu0 0
        %2686 = vmatpush1.bf16.msra.mxu0 0
        %2687 = vmatprep.subr.bf16.mxu0 0
        %2688 = vmatpush1.bf16.msra.mxu0 0
        %2689 = vmatprep.subr.bf16.mxu0 0
        %2690 = vmatpush1.bf16.msra.mxu0 0
        %2691 = vmatprep.mubr.bf16.mxu0 0
        %2692 = vmatmul.mubr.bf16.gmra.mrb[0].mxu0 %v2633
        %v2693 = vpop.f32.mrb[0].mxu0
        %v2694 = vadd.f32 0.0, %v2693
        %v2695 = vpop.f32.mrb[0].mxu0
        %v2696 = vadd.f32 0.0, %v2695
        %v2697 = vpop.f32.mrb[0].mxu0
        %v2698 = vpop.f32.mrb[0].mxu0
        %2699 = vdwg.mxu0
        %2700 = vmatprep.subr.bf16.mxu0 %v2645
        %2701 = vmatpush1.bf16.msra.mxu0 %v2642
        %2702 = vmatprep.subr.bf16.mxu0 0
        %2703 = vmatpush1.bf16.msra.mxu0 0
        %2704 = vmatprep.subr.bf16.mxu0 0
        %2705 = vmatpush1.bf16.msra.mxu0 0
        %2706 = vmatprep.subr.bf16.mxu0 0
        %2707 = vmatpush1.bf16.msra.mxu0 0
        %2708 = vmatprep.subr.bf16.mxu0 0
        %2709 = vmatpush1.bf16.msra.mxu0 0
        %2710 = vmatprep.subr.bf16.mxu0 0
        %2711 = vmatpush1.bf16.msra.mxu0 0
        %2712 = vmatprep.subr.bf16.mxu0 0
        %2713 = vmatpush1.bf16.msra.mxu0 0
        %2714 = vmatprep.subr.bf16.mxu0 0
        %2715 = vmatpush1.bf16.msra.mxu0 0
        %2716 = vmatprep.subr.bf16.mxu0 0
        %2717 = vmatpush1.bf16.msra.mxu0 0
        %2718 = vmatprep.subr.bf16.mxu0 0
        %2719 = vmatpush1.bf16.msra.mxu0 0
        %2720 = vmatprep.subr.bf16.mxu0 0
        %2721 = vmatpush1.bf16.msra.mxu0 0
        %2722 = vmatprep.subr.bf16.mxu0 0
        %2723 = vmatpush1.bf16.msra.mxu0 0
        %2724 = vmatprep.subr.bf16.mxu0 0
        %2725 = vmatpush1.bf16.msra.mxu0 0
        %2726 = vmatprep.subr.bf16.mxu0 0
        %2727 = vmatpush1.bf16.msra.mxu0 0
        %2728 = vmatprep.subr.bf16.mxu0 0
        %2729 = vmatpush1.bf16.msra.mxu0 0
        %2730 = vmatprep.subr.bf16.mxu0 0
        %2731 = vmatpush1.bf16.msra.mxu0 0
        %2732 = vmatprep.mubr.bf16.mxu0 0
        %2733 = vmatmul.mubr.bf16.gmra.mrb[0].mxu0 %v2633
        %v2734 = vpop.f32.mrb[0].mxu0
        %v2735 = vadd.f32 0.0, %v2734
        %v2736 = vpop.f32.mrb[0].mxu0
        %v2737 = vadd.f32 0.0, %v2736
        %v2738 = vpop.f32.mrb[0].mxu0
        %v2739 = vpop.f32.mrb[0].mxu0
        %2740 = vdwg.mxu0
        %2741 = vmatprep.subr.bf16.mxu0 %v2651
        %2742 = vmatpush1.bf16.msra.mxu0 %v2648
        %2743 = vmatprep.subr.bf16.mxu0 0
        %2744 = vmatpush1.bf16.msra.mxu0 0
        %2745 = vmatprep.subr.bf16.mxu0 0
        %2746 = vmatpush1.bf16.msra.mxu0 0
        %2747 = vmatprep.subr.bf16.mxu0 0
        %2748 = vmatpush1.bf16.msra.mxu0 0
        %2749 = vmatprep.subr.bf16.mxu0 0
        %2750 = vmatpush1.bf16.msra.mxu0 0
        %2751 = vmatprep.subr.bf16.mxu0 0
        %2752 = vmatpush1.bf16.msra.mxu0 0
        %2753 = vmatprep.subr.bf16.mxu0 0
        %2754 = vmatpush1.bf16.msra.mxu0 0
        %2755 = vmatprep.subr.bf16.mxu0 0
        %2756 = vmatpush1.bf16.msra.mxu0 0
        %2757 = vmatprep.subr.bf16.mxu0 0
        %2758 = vmatpush1.bf16.msra.mxu0 0
        %2759 = vmatprep.subr.bf16.mxu0 0
        %2760 = vmatpush1.bf16.msra.mxu0 0
        %2761 = vmatprep.subr.bf16.mxu0 0
        %2762 = vmatpush1.bf16.msra.mxu0 0
        %2763 = vmatprep.subr.bf16.mxu0 0
        %2764 = vmatpush1.bf16.msra.mxu0 0
        %2765 = vmatprep.subr.bf16.mxu0 0
        %2766 = vmatpush1.bf16.msra.mxu0 0
        %2767 = vmatprep.subr.bf16.mxu0 0
        %2768 = vmatpush1.bf16.msra.mxu0 0
        %2769 = vmatprep.subr.bf16.mxu0 0
        %2770 = vmatpush1.bf16.msra.mxu0 0
        %2771 = vmatprep.subr.bf16.mxu0 0
        %2772 = vmatpush1.bf16.msra.mxu0 0
        %2773 = vmatprep.mubr.bf16.mxu0 0
        %2774 = vmatmul.mubr.bf16.gmra.mrb[0].mxu0 %v2633
        %v2775 = vpop.f32.mrb[0].mxu0
        %v2776 = vadd.f32 0.0, %v2775
        %v2777 = vpop.f32.mrb[0].mxu0
        %v2778 = vadd.f32 0.0, %v2777
        %v2779 = vpop.f32.mrb[0].mxu0
        %v2780 = vpop.f32.mrb[0].mxu0
        %2781 = vdwg.mxu0
        %2782 = vmatprep.subr.bf16.mxu0 %v2657
        %2783 = vmatpush1.bf16.msra.mxu0 %v2654
        %2784 = vmatprep.subr.bf16.mxu0 0
        %2785 = vmatpush1.bf16.msra.mxu0 0
        %2786 = vmatprep.subr.bf16.mxu0 0
        %2787 = vmatpush1.bf16.msra.mxu0 0
        %2788 = vmatprep.subr.bf16.mxu0 0
        %2789 = vmatpush1.bf16.msra.mxu0 0
        %2790 = vmatprep.subr.bf16.mxu0 0
        %2791 = vmatpush1.bf16.msra.mxu0 0
        %2792 = vmatprep.subr.bf16.mxu0 0
        %2793 = vmatpush1.bf16.msra.mxu0 0
        %2794 = vmatprep.subr.bf16.mxu0 0
        %2795 = vmatpush1.bf16.msra.mxu0 0
        %2796 = vmatprep.subr.bf16.mxu0 0
        %2797 = vmatpush1.bf16.msra.mxu0 0
        %2798 = vmatprep.subr.bf16.mxu0 0
        %2799 = vmatpush1.bf16.msra.mxu0 0
        %2800 = vmatprep.subr.bf16.mxu0 0
        %2801 = vmatpush1.bf16.msra.mxu0 0
        %2802 = vmatprep.subr.bf16.mxu0 0
        %2803 = vmatpush1.bf16.msra.mxu0 0
        %2804 = vmatprep.subr.bf16.mxu0 0
        %2805 = vmatpush1.bf16.msra.mxu0 0
        %2806 = vmatprep.subr.bf16.mxu0 0
        %2807 = vmatpush1.bf16.msra.mxu0 0
        %2808 = vmatprep.subr.bf16.mxu0 0
        %2809 = vmatpush1.bf16.msra.mxu0 0
        %2810 = vmatprep.subr.bf16.mxu0 0
        %2811 = vmatpush1.bf16.msra.mxu0 0
        %2812 = vmatprep.subr.bf16.mxu0 0
        %2813 = vmatpush1.bf16.msra.mxu0 0
        %2814 = vmatprep.mubr.bf16.mxu0 0
        %2815 = vmatmul.mubr.bf16.gmra.mrb[0].mxu0 %v2633
        %v2816 = vpop.f32.mrb[0].mxu0
        %v2817 = vadd.f32 0.0, %v2816
        %v2818 = vpop.f32.mrb[0].mxu0
        %v2819 = vadd.f32 0.0, %v2818
        %v2820 = vpop.f32.mrb[0].mxu0
        %v2821 = vpop.f32.mrb[0].mxu0
        %2822 = vdwg.mxu0
        %v2823 = vadd.f32 %v2595, %v2694
        %v2824 = vadd.f32 %v2596, %v2696
        %v2825 = vadd.f32 %v2597, %v2735
        %v2826 = vadd.f32 %v2598, %v2737
        %v2827 = vadd.f32 %v2599, %v2776
        %v2828 = vadd.f32 %v2600, %v2778
        %v2829 = vadd.f32 %v2601, %v2817
        %v2830 = vadd.f32 %v2602, %v2819
        %s2831 = scalar_lea.vmem %s1, 22
        %v2832 = vld [vmem:[%s2831] sm:$0x3]
        %2833 = vrot.lane.b32.xlu0 %v307, 9
        %v2834 = vpop.permute.xlu0 %2833
        %2835 = vrot.lane.b32.xlu0 %v315, 9
        %v2836 = vpop.permute.xlu0 %2835
        %2837 = vrot.lane.b32.xlu0 %v314, 9
        %v2838 = vpop.permute.xlu0 %2837
        %2839 = vrot.lane.b32.xlu0 %v316, 9
        %v2840 = vpop.permute.xlu0 %2839
        %2841 = vrot.lane.b32.xlu0 %v324, 9
        %v2842 = vpop.permute.xlu0 %2841
        %2843 = vrot.lane.b32.xlu0 %v332, 9
        %v2844 = vpop.permute.xlu0 %2843
        %2845 = vrot.lane.b32.xlu0 %v331, 9
        %v2846 = vpop.permute.xlu0 %2845
        %2847 = vrot.lane.b32.xlu0 %v333, 9
        %v2848 = vpop.permute.xlu0 %2847
        %2849 = vrot.lane.b32.xlu0 %v340, 9
        %v2850 = vpop.permute.xlu0 %2849
        %vm2851 = vcmask 72704
        %v2852 = vsel %vm2851, %v2834, %v2836
        %v2853 = vsel %vm2851, %v2836, %v2838
        %v2854 = vsel %vm2851, %v2838, %v2840
        %v2855 = vsel %vm2851, %v2840, %v2842
        %v2856 = vsel %vm2851, %v2842, %v2844
        %v2857 = vsel %vm2851, %v2844, %v2846
        %v2858 = vsel %vm2851, %v2846, %v2848
        %v2859 = vsel %vm2851, %v2848, %v2850
        %v2861 = vsel %vm368, %v2832, 0
        %v2864 = vsel %vm372, %v2852, 0
        %v2867 = vsel %vm372, %v2853, 0
        %v2870 = vsel %vm372, %v2854, 0
        %v2873 = vsel %vm372, %v2855, 0
        %v2876 = vsel %vm372, %v2856, 0
        %v2879 = vsel %vm372, %v2857, 0
        %v2882 = vsel %vm372, %v2858, 0
        %v2885 = vsel %vm372, %v2859, 0
        %2887 = vmatprep.subr.bf16.mxu0 %v2867
        %2888 = vmatpush1.bf16.msra.mxu0 %v2864
        %2889 = vmatprep.subr.bf16.mxu0 0
        %2890 = vmatpush1.bf16.msra.mxu0 0
        %2891 = vmatprep.subr.bf16.mxu0 0
        %2892 = vmatpush1.bf16.msra.mxu0 0
        %2893 = vmatprep.subr.bf16.mxu0 0
        %2894 = vmatpush1.bf16.msra.mxu0 0
        %2895 = vmatprep.subr.bf16.mxu0 0
        %2896 = vmatpush1.bf16.msra.mxu0 0
        %2897 = vmatprep.subr.bf16.mxu0 0
        %2898 = vmatpush1.bf16.msra.mxu0 0
        %2899 = vmatprep.subr.bf16.mxu0 0
        %2900 = vmatpush1.bf16.msra.mxu0 0
        %2901 = vmatprep.subr.bf16.mxu0 0
        %2902 = vmatpush1.bf16.msra.mxu0 0
        %2903 = vmatprep.subr.bf16.mxu0 0
        %2904 = vmatpush1.bf16.msra.mxu0 0
        %2905 = vmatprep.subr.bf16.mxu0 0
        %2906 = vmatpush1.bf16.msra.mxu0 0
        %2907 = vmatprep.subr.bf16.mxu0 0
        %2908 = vmatpush1.bf16.msra.mxu0 0
        %2909 = vmatprep.subr.bf16.mxu0 0
        %2910 = vmatpush1.bf16.msra.mxu0 0
        %2911 = vmatprep.subr.bf16.mxu0 0
        %2912 = vmatpush1.bf16.msra.mxu0 0
        %2913 = vmatprep.subr.bf16.mxu0 0
        %2914 = vmatpush1.bf16.msra.mxu0 0
        %2915 = vmatprep.subr.bf16.mxu0 0
        %2916 = vmatpush1.bf16.msra.mxu0 0
        %2917 = vmatprep.subr.bf16.mxu0 0
        %2918 = vmatpush1.bf16.msra.mxu0 0
        %2919 = vmatprep.mubr.bf16.mxu0 0
        %2920 = vmatmul.mubr.bf16.gmra.mrb[0].mxu0 %v2861
        %v2921 = vpop.f32.mrb[0].mxu0
        %v2922 = vadd.f32 0.0, %v2921
        %v2923 = vpop.f32.mrb[0].mxu0
        %v2924 = vadd.f32 0.0, %v2923
        %v2925 = vpop.f32.mrb[0].mxu0
        %v2926 = vpop.f32.mrb[0].mxu0
        %2927 = vdwg.mxu0
        %2928 = vmatprep.subr.bf16.mxu0 %v2873
        %2929 = vmatpush1.bf16.msra.mxu0 %v2870
        %2930 = vmatprep.subr.bf16.mxu0 0
        %2931 = vmatpush1.bf16.msra.mxu0 0
        %2932 = vmatprep.subr.bf16.mxu0 0
        %2933 = vmatpush1.bf16.msra.mxu0 0
        %2934 = vmatprep.subr.bf16.mxu0 0
        %2935 = vmatpush1.bf16.msra.mxu0 0
        %2936 = vmatprep.subr.bf16.mxu0 0
        %2937 = vmatpush1.bf16.msra.mxu0 0
        %2938 = vmatprep.subr.bf16.mxu0 0
        %2939 = vmatpush1.bf16.msra.mxu0 0
        %2940 = vmatprep.subr.bf16.mxu0 0
        %2941 = vmatpush1.bf16.msra.mxu0 0
        %2942 = vmatprep.subr.bf16.mxu0 0
        %2943 = vmatpush1.bf16.msra.mxu0 0
        %2944 = vmatprep.subr.bf16.mxu0 0
        %2945 = vmatpush1.bf16.msra.mxu0 0
        %2946 = vmatprep.subr.bf16.mxu0 0
        %2947 = vmatpush1.bf16.msra.mxu0 0
        %2948 = vmatprep.subr.bf16.mxu0 0
        %2949 = vmatpush1.bf16.msra.mxu0 0
        %2950 = vmatprep.subr.bf16.mxu0 0
        %2951 = vmatpush1.bf16.msra.mxu0 0
        %2952 = vmatprep.subr.bf16.mxu0 0
        %2953 = vmatpush1.bf16.msra.mxu0 0
        %2954 = vmatprep.subr.bf16.mxu0 0
        %2955 = vmatpush1.bf16.msra.mxu0 0
        %2956 = vmatprep.subr.bf16.mxu0 0
        %2957 = vmatpush1.bf16.msra.mxu0 0
        %2958 = vmatprep.subr.bf16.mxu0 0
        %2959 = vmatpush1.bf16.msra.mxu0 0
        %2960 = vmatprep.mubr.bf16.mxu0 0
        %2961 = vmatmul.mubr.bf16.gmra.mrb[0].mxu0 %v2861
        %v2962 = vpop.f32.mrb[0].mxu0
        %v2963 = vadd.f32 0.0, %v2962
        %v2964 = vpop.f32.mrb[0].mxu0
        %v2965 = vadd.f32 0.0, %v2964
        %v2966 = vpop.f32.mrb[0].mxu0
        %v2967 = vpop.f32.mrb[0].mxu0
        %2968 = vdwg.mxu0
        %2969 = vmatprep.subr.bf16.mxu0 %v2879
        %2970 = vmatpush1.bf16.msra.mxu0 %v2876
        %2971 = vmatprep.subr.bf16.mxu0 0
        %2972 = vmatpush1.bf16.msra.mxu0 0
        %2973 = vmatprep.subr.bf16.mxu0 0
        %2974 = vmatpush1.bf16.msra.mxu0 0
        %2975 = vmatprep.subr.bf16.mxu0 0
        %2976 = vmatpush1.bf16.msra.mxu0 0
        %2977 = vmatprep.subr.bf16.mxu0 0
        %2978 = vmatpush1.bf16.msra.mxu0 0
        %2979 = vmatprep.subr.bf16.mxu0 0
        %2980 = vmatpush1.bf16.msra.mxu0 0
        %2981 = vmatprep.subr.bf16.mxu0 0
        %2982 = vmatpush1.bf16.msra.mxu0 0
        %2983 = vmatprep.subr.bf16.mxu0 0
        %2984 = vmatpush1.bf16.msra.mxu0 0
        %2985 = vmatprep.subr.bf16.mxu0 0
        %2986 = vmatpush1.bf16.msra.mxu0 0
        %2987 = vmatprep.subr.bf16.mxu0 0
        %2988 = vmatpush1.bf16.msra.mxu0 0
        %2989 = vmatprep.subr.bf16.mxu0 0
        %2990 = vmatpush1.bf16.msra.mxu0 0
        %2991 = vmatprep.subr.bf16.mxu0 0
        %2992 = vmatpush1.bf16.msra.mxu0 0
        %2993 = vmatprep.subr.bf16.mxu0 0
        %2994 = vmatpush1.bf16.msra.mxu0 0
        %2995 = vmatprep.subr.bf16.mxu0 0
        %2996 = vmatpush1.bf16.msra.mxu0 0
        %2997 = vmatprep.subr.bf16.mxu0 0
        %2998 = vmatpush1.bf16.msra.mxu0 0
        %2999 = vmatprep.subr.bf16.mxu0 0
        %3000 = vmatpush1.bf16.msra.mxu0 0
        %3001 = vmatprep.mubr.bf16.mxu0 0
        %3002 = vmatmul.mubr.bf16.gmra.mrb[0].mxu0 %v2861
        %v3003 = vpop.f32.mrb[0].mxu0
        %v3004 = vadd.f32 0.0, %v3003
        %v3005 = vpop.f32.mrb[0].mxu0
        %v3006 = vadd.f32 0.0, %v3005
        %v3007 = vpop.f32.mrb[0].mxu0
        %v3008 = vpop.f32.mrb[0].mxu0
        %3009 = vdwg.mxu0
        %3010 = vmatprep.subr.bf16.mxu0 %v2885
        %3011 = vmatpush1.bf16.msra.mxu0 %v2882
        %3012 = vmatprep.subr.bf16.mxu0 0
        %3013 = vmatpush1.bf16.msra.mxu0 0
        %3014 = vmatprep.subr.bf16.mxu0 0
        %3015 = vmatpush1.bf16.msra.mxu0 0
        %3016 = vmatprep.subr.bf16.mxu0 0
        %3017 = vmatpush1.bf16.msra.mxu0 0
        %3018 = vmatprep.subr.bf16.mxu0 0
        %3019 = vmatpush1.bf16.msra.mxu0 0
        %3020 = vmatprep.subr.bf16.mxu0 0
        %3021 = vmatpush1.bf16.msra.mxu0 0
        %3022 = vmatprep.subr.bf16.mxu0 0
        %3023 = vmatpush1.bf16.msra.mxu0 0
        %3024 = vmatprep.subr.bf16.mxu0 0
        %3025 = vmatpush1.bf16.msra.mxu0 0
        %3026 = vmatprep.subr.bf16.mxu0 0
        %3027 = vmatpush1.bf16.msra.mxu0 0
        %3028 = vmatprep.subr.bf16.mxu0 0
        %3029 = vmatpush1.bf16.msra.mxu0 0
        %3030 = vmatprep.subr.bf16.mxu0 0
        %3031 = vmatpush1.bf16.msra.mxu0 0
        %3032 = vmatprep.subr.bf16.mxu0 0
        %3033 = vmatpush1.bf16.msra.mxu0 0
        %3034 = vmatprep.subr.bf16.mxu0 0
        %3035 = vmatpush1.bf16.msra.mxu0 0
        %3036 = vmatprep.subr.bf16.mxu0 0
        %3037 = vmatpush1.bf16.msra.mxu0 0
        %3038 = vmatprep.subr.bf16.mxu0 0
        %3039 = vmatpush1.bf16.msra.mxu0 0
        %3040 = vmatprep.subr.bf16.mxu0 0
        %3041 = vmatpush1.bf16.msra.mxu0 0
        %3042 = vmatprep.mubr.bf16.mxu0 0
        %3043 = vmatmul.mubr.bf16.gmra.mrb[0].mxu0 %v2861
        %v3044 = vpop.f32.mrb[0].mxu0
        %v3045 = vadd.f32 0.0, %v3044
        %v3046 = vpop.f32.mrb[0].mxu0
        %v3047 = vadd.f32 0.0, %v3046
        %v3048 = vpop.f32.mrb[0].mxu0
        %v3049 = vpop.f32.mrb[0].mxu0
        %3050 = vdwg.mxu0
        %v3051 = vadd.f32 %v2823, %v2922
        %v3052 = vadd.f32 %v2824, %v2924
        %v3053 = vadd.f32 %v2825, %v2963
        %v3054 = vadd.f32 %v2826, %v2965
        %v3055 = vadd.f32 %v2827, %v3004
        %v3056 = vadd.f32 %v2828, %v3006
        %v3057 = vadd.f32 %v2829, %v3045
        %v3058 = vadd.f32 %v2830, %v3047
        %s3059 = scalar_lea.vmem %s1, 24
        %v3060 = vld [vmem:[%s3059] sm:$0x3]
        %3061 = vrot.lane.b32.xlu0 %v307, 1
        %v3062 = vpop.permute.xlu0 %3061
        %3063 = vrot.lane.b32.xlu0 %v315, 1
        %v3064 = vpop.permute.xlu0 %3063
        %3065 = vrot.lane.b32.xlu0 %v314, 1
        %v3066 = vpop.permute.xlu0 %3065
        %3067 = vrot.lane.b32.xlu0 %v316, 1
        %v3068 = vpop.permute.xlu0 %3067
        %3069 = vrot.lane.b32.xlu0 %v324, 1
        %v3070 = vpop.permute.xlu0 %3069
        %3071 = vrot.lane.b32.xlu0 %v332, 1
        %v3072 = vpop.permute.xlu0 %3071
        %3073 = vrot.lane.b32.xlu0 %v331, 1
        %v3074 = vpop.permute.xlu0 %3073
        %3075 = vrot.lane.b32.xlu0 %v333, 1
        %v3076 = vpop.permute.xlu0 %3075
        %3077 = vrot.lane.b32.xlu0 %v340, 1
        %v3078 = vpop.permute.xlu0 %3077
        %vm3079 = vcmask 7168
        %v3080 = vsel %vm3079, %v3062, %v3064
        %v3081 = vsel %vm3079, %v3064, %v3066
        %v3082 = vsel %vm3079, %v3066, %v3068
        %v3083 = vsel %vm3079, %v3068, %v3070
        %v3084 = vsel %vm3079, %v3070, %v3072
        %v3085 = vsel %vm3079, %v3072, %v3074
        %v3086 = vsel %vm3079, %v3074, %v3076
        %v3087 = vsel %vm3079, %v3076, %v3078
        %v3089 = vsel %vm368, %v3060, 0
        %v3092 = vsel %vm372, %v3080, 0
        %v3095 = vsel %vm372, %v3081, 0
        %v3098 = vsel %vm372, %v3082, 0
        %v3101 = vsel %vm372, %v3083, 0
        %v3104 = vsel %vm372, %v3084, 0
        %v3107 = vsel %vm372, %v3085, 0
        %v3110 = vsel %vm372, %v3086, 0
        %v3113 = vsel %vm372, %v3087, 0
        %3115 = vmatprep.subr.bf16.mxu0 %v3095
        %3116 = vmatpush1.bf16.msra.mxu0 %v3092
        %3117 = vmatprep.subr.bf16.mxu0 0
        %3118 = vmatpush1.bf16.msra.mxu0 0
        %3119 = vmatprep.subr.bf16.mxu0 0
        %3120 = vmatpush1.bf16.msra.mxu0 0
        %3121 = vmatprep.subr.bf16.mxu0 0
        %3122 = vmatpush1.bf16.msra.mxu0 0
        %3123 = vmatprep.subr.bf16.mxu0 0
        %3124 = vmatpush1.bf16.msra.mxu0 0
        %3125 = vmatprep.subr.bf16.mxu0 0
        %3126 = vmatpush1.bf16.msra.mxu0 0
        %3127 = vmatprep.subr.bf16.mxu0 0
        %3128 = vmatpush1.bf16.msra.mxu0 0
        %3129 = vmatprep.subr.bf16.mxu0 0
        %3130 = vmatpush1.bf16.msra.mxu0 0
        %3131 = vmatprep.subr.bf16.mxu0 0
        %3132 = vmatpush1.bf16.msra.mxu0 0
        %3133 = vmatprep.subr.bf16.mxu0 0
        %3134 = vmatpush1.bf16.msra.mxu0 0
        %3135 = vmatprep.subr.bf16.mxu0 0
        %3136 = vmatpush1.bf16.msra.mxu0 0
        %3137 = vmatprep.subr.bf16.mxu0 0
        %3138 = vmatpush1.bf16.msra.mxu0 0
        %3139 = vmatprep.subr.bf16.mxu0 0
        %3140 = vmatpush1.bf16.msra.mxu0 0
        %3141 = vmatprep.subr.bf16.mxu0 0
        %3142 = vmatpush1.bf16.msra.mxu0 0
        %3143 = vmatprep.subr.bf16.mxu0 0
        %3144 = vmatpush1.bf16.msra.mxu0 0
        %3145 = vmatprep.subr.bf16.mxu0 0
        %3146 = vmatpush1.bf16.msra.mxu0 0
        %3147 = vmatprep.mubr.bf16.mxu0 0
        %3148 = vmatmul.mubr.bf16.gmra.mrb[0].mxu0 %v3089
        %v3149 = vpop.f32.mrb[0].mxu0
        %v3150 = vadd.f32 0.0, %v3149
        %v3151 = vpop.f32.mrb[0].mxu0
        %v3152 = vadd.f32 0.0, %v3151
        %v3153 = vpop.f32.mrb[0].mxu0
        %v3154 = vpop.f32.mrb[0].mxu0
        %3155 = vdwg.mxu0
        %3156 = vmatprep.subr.bf16.mxu0 %v3101
        %3157 = vmatpush1.bf16.msra.mxu0 %v3098
        %3158 = vmatprep.subr.bf16.mxu0 0
        %3159 = vmatpush1.bf16.msra.mxu0 0
        %3160 = vmatprep.subr.bf16.mxu0 0
        %3161 = vmatpush1.bf16.msra.mxu0 0
        %3162 = vmatprep.subr.bf16.mxu0 0
        %3163 = vmatpush1.bf16.msra.mxu0 0
        %3164 = vmatprep.subr.bf16.mxu0 0
        %3165 = vmatpush1.bf16.msra.mxu0 0
        %3166 = vmatprep.subr.bf16.mxu0 0
        %3167 = vmatpush1.bf16.msra.mxu0 0
        %3168 = vmatprep.subr.bf16.mxu0 0
        %3169 = vmatpush1.bf16.msra.mxu0 0
        %3170 = vmatprep.subr.bf16.mxu0 0
        %3171 = vmatpush1.bf16.msra.mxu0 0
        %3172 = vmatprep.subr.bf16.mxu0 0
        %3173 = vmatpush1.bf16.msra.mxu0 0
        %3174 = vmatprep.subr.bf16.mxu0 0
        %3175 = vmatpush1.bf16.msra.mxu0 0
        %3176 = vmatprep.subr.bf16.mxu0 0
        %3177 = vmatpush1.bf16.msra.mxu0 0
        %3178 = vmatprep.subr.bf16.mxu0 0
        %3179 = vmatpush1.bf16.msra.mxu0 0
        %3180 = vmatprep.subr.bf16.mxu0 0
        %3181 = vmatpush1.bf16.msra.mxu0 0
        %3182 = vmatprep.subr.bf16.mxu0 0
        %3183 = vmatpush1.bf16.msra.mxu0 0
        %3184 = vmatprep.subr.bf16.mxu0 0
        %3185 = vmatpush1.bf16.msra.mxu0 0
        %3186 = vmatprep.subr.bf16.mxu0 0
        %3187 = vmatpush1.bf16.msra.mxu0 0
        %3188 = vmatprep.mubr.bf16.mxu0 0
        %3189 = vmatmul.mubr.bf16.gmra.mrb[0].mxu0 %v3089
        %v3190 = vpop.f32.mrb[0].mxu0
        %v3191 = vadd.f32 0.0, %v3190
        %v3192 = vpop.f32.mrb[0].mxu0
        %v3193 = vadd.f32 0.0, %v3192
        %v3194 = vpop.f32.mrb[0].mxu0
        %v3195 = vpop.f32.mrb[0].mxu0
        %3196 = vdwg.mxu0
        %3197 = vmatprep.subr.bf16.mxu0 %v3107
        %3198 = vmatpush1.bf16.msra.mxu0 %v3104
        %3199 = vmatprep.subr.bf16.mxu0 0
        %3200 = vmatpush1.bf16.msra.mxu0 0
        %3201 = vmatprep.subr.bf16.mxu0 0
        %3202 = vmatpush1.bf16.msra.mxu0 0
        %3203 = vmatprep.subr.bf16.mxu0 0
        %3204 = vmatpush1.bf16.msra.mxu0 0
        %3205 = vmatprep.subr.bf16.mxu0 0
        %3206 = vmatpush1.bf16.msra.mxu0 0
        %3207 = vmatprep.subr.bf16.mxu0 0
        %3208 = vmatpush1.bf16.msra.mxu0 0
        %3209 = vmatprep.subr.bf16.mxu0 0
        %3210 = vmatpush1.bf16.msra.mxu0 0
        %3211 = vmatprep.subr.bf16.mxu0 0
        %3212 = vmatpush1.bf16.msra.mxu0 0
        %3213 = vmatprep.subr.bf16.mxu0 0
        %3214 = vmatpush1.bf16.msra.mxu0 0
        %3215 = vmatprep.subr.bf16.mxu0 0
        %3216 = vmatpush1.bf16.msra.mxu0 0
        %3217 = vmatprep.subr.bf16.mxu0 0
        %3218 = vmatpush1.bf16.msra.mxu0 0
        %3219 = vmatprep.subr.bf16.mxu0 0
        %3220 = vmatpush1.bf16.msra.mxu0 0
        %3221 = vmatprep.subr.bf16.mxu0 0
        %3222 = vmatpush1.bf16.msra.mxu0 0
        %3223 = vmatprep.subr.bf16.mxu0 0
        %3224 = vmatpush1.bf16.msra.mxu0 0
        %3225 = vmatprep.subr.bf16.mxu0 0
        %3226 = vmatpush1.bf16.msra.mxu0 0
        %3227 = vmatprep.subr.bf16.mxu0 0
        %3228 = vmatpush1.bf16.msra.mxu0 0
        %3229 = vmatprep.mubr.bf16.mxu0 0
        %3230 = vmatmul.mubr.bf16.gmra.mrb[0].mxu0 %v3089
        %v3231 = vpop.f32.mrb[0].mxu0
        %v3232 = vadd.f32 0.0, %v3231
        %v3233 = vpop.f32.mrb[0].mxu0
        %v3234 = vadd.f32 0.0, %v3233
        %v3235 = vpop.f32.mrb[0].mxu0
        %v3236 = vpop.f32.mrb[0].mxu0
        %3237 = vdwg.mxu0
        %3238 = vmatprep.subr.bf16.mxu0 %v3113
        %3239 = vmatpush1.bf16.msra.mxu0 %v3110
        %3240 = vmatprep.subr.bf16.mxu0 0
        %3241 = vmatpush1.bf16.msra.mxu0 0
        %3242 = vmatprep.subr.bf16.mxu0 0
        %3243 = vmatpush1.bf16.msra.mxu0 0
        %3244 = vmatprep.subr.bf16.mxu0 0
        %3245 = vmatpush1.bf16.msra.mxu0 0
        %3246 = vmatprep.subr.bf16.mxu0 0
        %3247 = vmatpush1.bf16.msra.mxu0 0
        %3248 = vmatprep.subr.bf16.mxu0 0
        %3249 = vmatpush1.bf16.msra.mxu0 0
        %3250 = vmatprep.subr.bf16.mxu0 0
        %3251 = vmatpush1.bf16.msra.mxu0 0
        %3252 = vmatprep.subr.bf16.mxu0 0
        %3253 = vmatpush1.bf16.msra.mxu0 0
        %3254 = vmatprep.subr.bf16.mxu0 0
        %3255 = vmatpush1.bf16.msra.mxu0 0
        %3256 = vmatprep.subr.bf16.mxu0 0
        %3257 = vmatpush1.bf16.msra.mxu0 0
        %3258 = vmatprep.subr.bf16.mxu0 0
        %3259 = vmatpush1.bf16.msra.mxu0 0
        %3260 = vmatprep.subr.bf16.mxu0 0
        %3261 = vmatpush1.bf16.msra.mxu0 0
        %3262 = vmatprep.subr.bf16.mxu0 0
        %3263 = vmatpush1.bf16.msra.mxu0 0
        %3264 = vmatprep.subr.bf16.mxu0 0
        %3265 = vmatpush1.bf16.msra.mxu0 0
        %3266 = vmatprep.subr.bf16.mxu0 0
        %3267 = vmatpush1.bf16.msra.mxu0 0
        %3268 = vmatprep.subr.bf16.mxu0 0
        %3269 = vmatpush1.bf16.msra.mxu0 0
        %3270 = vmatprep.mubr.bf16.mxu0 0
        %3271 = vmatmul.mubr.bf16.gmra.mrb[0].mxu0 %v3089
        %v3272 = vpop.f32.mrb[0].mxu0
        %v3273 = vadd.f32 0.0, %v3272
        %v3274 = vpop.f32.mrb[0].mxu0
        %v3275 = vadd.f32 0.0, %v3274
        %v3276 = vpop.f32.mrb[0].mxu0
        %v3277 = vpop.f32.mrb[0].mxu0
        %3278 = vdwg.mxu0
        %v3279 = vadd.f32 %v3051, %v3150
        %v3280 = vadd.f32 %v3052, %v3152
        %v3281 = vadd.f32 %v3053, %v3191
        %v3282 = vadd.f32 %v3054, %v3193
        %v3283 = vadd.f32 %v3055, %v3232
        %v3284 = vadd.f32 %v3056, %v3234
        %v3285 = vadd.f32 %v3057, %v3273
        %v3286 = vadd.f32 %v3058, %v3275
        %s3287 = scalar_lea.vmem %s1, 26
        %v3288 = vld [vmem:[%s3287] sm:$0x3]
        %v3290 = vsel %vm368, %v3288, 0
        %v3293 = vsel %vm372, %v315, 0
        %v3296 = vsel %vm372, %v314, 0
        %v3299 = vsel %vm372, %v316, 0
        %v3302 = vsel %vm372, %v324, 0
        %v3305 = vsel %vm372, %v332, 0
        %v3308 = vsel %vm372, %v331, 0
        %v3311 = vsel %vm372, %v333, 0
        %v3314 = vsel %vm372, %v340, 0
        %3316 = vmatprep.subr.bf16.mxu0 %v3296
        %3317 = vmatpush1.bf16.msra.mxu0 %v3293
        %3318 = vmatprep.subr.bf16.mxu0 0
        %3319 = vmatpush1.bf16.msra.mxu0 0
        %3320 = vmatprep.subr.bf16.mxu0 0
        %3321 = vmatpush1.bf16.msra.mxu0 0
        %3322 = vmatprep.subr.bf16.mxu0 0
        %3323 = vmatpush1.bf16.msra.mxu0 0
        %3324 = vmatprep.subr.bf16.mxu0 0
        %3325 = vmatpush1.bf16.msra.mxu0 0
        %3326 = vmatprep.subr.bf16.mxu0 0
        %3327 = vmatpush1.bf16.msra.mxu0 0
        %3328 = vmatprep.subr.bf16.mxu0 0
        %3329 = vmatpush1.bf16.msra.mxu0 0
        %3330 = vmatprep.subr.bf16.mxu0 0
        %3331 = vmatpush1.bf16.msra.mxu0 0
        %3332 = vmatprep.subr.bf16.mxu0 0
        %3333 = vmatpush1.bf16.msra.mxu0 0
        %3334 = vmatprep.subr.bf16.mxu0 0
        %3335 = vmatpush1.bf16.msra.mxu0 0
        %3336 = vmatprep.subr.bf16.mxu0 0
        %3337 = vmatpush1.bf16.msra.mxu0 0
        %3338 = vmatprep.subr.bf16.mxu0 0
        %3339 = vmatpush1.bf16.msra.mxu0 0
        %3340 = vmatprep.subr.bf16.mxu0 0
        %3341 = vmatpush1.bf16.msra.mxu0 0
        %3342 = vmatprep.subr.bf16.mxu0 0
        %3343 = vmatpush1.bf16.msra.mxu0 0
        %3344 = vmatprep.subr.bf16.mxu0 0
        %3345 = vmatpush1.bf16.msra.mxu0 0
        %3346 = vmatprep.subr.bf16.mxu0 0
        %3347 = vmatpush1.bf16.msra.mxu0 0
        %3348 = vmatprep.mubr.bf16.mxu0 0
        %3349 = vmatmul.mubr.bf16.gmra.mrb[0].mxu0 %v3290
        %v3350 = vpop.f32.mrb[0].mxu0
        %v3351 = vadd.f32 0.0, %v3350
        %v3352 = vpop.f32.mrb[0].mxu0
        %v3353 = vadd.f32 0.0, %v3352
        %v3354 = vpop.f32.mrb[0].mxu0
        %v3355 = vpop.f32.mrb[0].mxu0
        %3356 = vdwg.mxu0
        %3357 = vmatprep.subr.bf16.mxu0 %v3302
        %3358 = vmatpush1.bf16.msra.mxu0 %v3299
        %3359 = vmatprep.subr.bf16.mxu0 0
        %3360 = vmatpush1.bf16.msra.mxu0 0
        %3361 = vmatprep.subr.bf16.mxu0 0
        %3362 = vmatpush1.bf16.msra.mxu0 0
        %3363 = vmatprep.subr.bf16.mxu0 0
        %3364 = vmatpush1.bf16.msra.mxu0 0
        %3365 = vmatprep.subr.bf16.mxu0 0
        %3366 = vmatpush1.bf16.msra.mxu0 0
        %3367 = vmatprep.subr.bf16.mxu0 0
        %3368 = vmatpush1.bf16.msra.mxu0 0
        %3369 = vmatprep.subr.bf16.mxu0 0
        %3370 = vmatpush1.bf16.msra.mxu0 0
        %3371 = vmatprep.subr.bf16.mxu0 0
        %3372 = vmatpush1.bf16.msra.mxu0 0
        %3373 = vmatprep.subr.bf16.mxu0 0
        %3374 = vmatpush1.bf16.msra.mxu0 0
        %3375 = vmatprep.subr.bf16.mxu0 0
        %3376 = vmatpush1.bf16.msra.mxu0 0
        %3377 = vmatprep.subr.bf16.mxu0 0
        %3378 = vmatpush1.bf16.msra.mxu0 0
        %3379 = vmatprep.subr.bf16.mxu0 0
        %3380 = vmatpush1.bf16.msra.mxu0 0
        %3381 = vmatprep.subr.bf16.mxu0 0
        %3382 = vmatpush1.bf16.msra.mxu0 0
        %3383 = vmatprep.subr.bf16.mxu0 0
        %3384 = vmatpush1.bf16.msra.mxu0 0
        %3385 = vmatprep.subr.bf16.mxu0 0
        %3386 = vmatpush1.bf16.msra.mxu0 0
        %3387 = vmatprep.subr.bf16.mxu0 0
        %3388 = vmatpush1.bf16.msra.mxu0 0
        %3389 = vmatprep.mubr.bf16.mxu0 0
        %3390 = vmatmul.mubr.bf16.gmra.mrb[0].mxu0 %v3290
        %v3391 = vpop.f32.mrb[0].mxu0
        %v3392 = vadd.f32 0.0, %v3391
        %v3393 = vpop.f32.mrb[0].mxu0
        %v3394 = vadd.f32 0.0, %v3393
        %v3395 = vpop.f32.mrb[0].mxu0
        %v3396 = vpop.f32.mrb[0].mxu0
        %3397 = vdwg.mxu0
        %3398 = vmatprep.subr.bf16.mxu0 %v3308
        %3399 = vmatpush1.bf16.msra.mxu0 %v3305
        %3400 = vmatprep.subr.bf16.mxu0 0
        %3401 = vmatpush1.bf16.msra.mxu0 0
        %3402 = vmatprep.subr.bf16.mxu0 0
        %3403 = vmatpush1.bf16.msra.mxu0 0
        %3404 = vmatprep.subr.bf16.mxu0 0
        %3405 = vmatpush1.bf16.msra.mxu0 0
        %3406 = vmatprep.subr.bf16.mxu0 0
        %3407 = vmatpush1.bf16.msra.mxu0 0
        %3408 = vmatprep.subr.bf16.mxu0 0
        %3409 = vmatpush1.bf16.msra.mxu0 0
        %3410 = vmatprep.subr.bf16.mxu0 0
        %3411 = vmatpush1.bf16.msra.mxu0 0
        %3412 = vmatprep.subr.bf16.mxu0 0
        %3413 = vmatpush1.bf16.msra.mxu0 0
        %3414 = vmatprep.subr.bf16.mxu0 0
        %3415 = vmatpush1.bf16.msra.mxu0 0
        %3416 = vmatprep.subr.bf16.mxu0 0
        %3417 = vmatpush1.bf16.msra.mxu0 0
        %3418 = vmatprep.subr.bf16.mxu0 0
        %3419 = vmatpush1.bf16.msra.mxu0 0
        %3420 = vmatprep.subr.bf16.mxu0 0
        %3421 = vmatpush1.bf16.msra.mxu0 0
        %3422 = vmatprep.subr.bf16.mxu0 0
        %3423 = vmatpush1.bf16.msra.mxu0 0
        %3424 = vmatprep.subr.bf16.mxu0 0
        %3425 = vmatpush1.bf16.msra.mxu0 0
        %3426 = vmatprep.subr.bf16.mxu0 0
        %3427 = vmatpush1.bf16.msra.mxu0 0
        %3428 = vmatprep.subr.bf16.mxu0 0
        %3429 = vmatpush1.bf16.msra.mxu0 0
        %3430 = vmatprep.mubr.bf16.mxu0 0
        %3431 = vmatmul.mubr.bf16.gmra.mrb[0].mxu0 %v3290
        %v3432 = vpop.f32.mrb[0].mxu0
        %v3433 = vadd.f32 0.0, %v3432
        %v3434 = vpop.f32.mrb[0].mxu0
        %v3435 = vadd.f32 0.0, %v3434
        %v3436 = vpop.f32.mrb[0].mxu0
        %v3437 = vpop.f32.mrb[0].mxu0
        %3438 = vdwg.mxu0
        %3439 = vmatprep.subr.bf16.mxu0 %v3314
        %3440 = vmatpush1.bf16.msra.mxu0 %v3311
        %3441 = vmatprep.subr.bf16.mxu0 0
        %3442 = vmatpush1.bf16.msra.mxu0 0
        %3443 = vmatprep.subr.bf16.mxu0 0
        %3444 = vmatpush1.bf16.msra.mxu0 0
        %3445 = vmatprep.subr.bf16.mxu0 0
        %3446 = vmatpush1.bf16.msra.mxu0 0
        %3447 = vmatprep.subr.bf16.mxu0 0
        %3448 = vmatpush1.bf16.msra.mxu0 0
        %3449 = vmatprep.subr.bf16.mxu0 0
        %3450 = vmatpush1.bf16.msra.mxu0 0
        %3451 = vmatprep.subr.bf16.mxu0 0
        %3452 = vmatpush1.bf16.msra.mxu0 0
        %3453 = vmatprep.subr.bf16.mxu0 0
        %3454 = vmatpush1.bf16.msra.mxu0 0
        %3455 = vmatprep.subr.bf16.mxu0 0
        %3456 = vmatpush1.bf16.msra.mxu0 0
        %3457 = vmatprep.subr.bf16.mxu0 0
        %3458 = vmatpush1.bf16.msra.mxu0 0
        %3459 = vmatprep.subr.bf16.mxu0 0
        %3460 = vmatpush1.bf16.msra.mxu0 0
        %3461 = vmatprep.subr.bf16.mxu0 0
        %3462 = vmatpush1.bf16.msra.mxu0 0
        %3463 = vmatprep.subr.bf16.mxu0 0
        %3464 = vmatpush1.bf16.msra.mxu0 0
        %3465 = vmatprep.subr.bf16.mxu0 0
        %3466 = vmatpush1.bf16.msra.mxu0 0
        %3467 = vmatprep.subr.bf16.mxu0 0
        %3468 = vmatpush1.bf16.msra.mxu0 0
        %3469 = vmatprep.subr.bf16.mxu0 0
        %3470 = vmatpush1.bf16.msra.mxu0 0
        %3471 = vmatprep.mubr.bf16.mxu0 0
        %3472 = vmatmul.mubr.bf16.gmra.mrb[0].mxu0 %v3290
        %v3473 = vpop.f32.mrb[0].mxu0
        %v3474 = vadd.f32 0.0, %v3473
        %v3475 = vpop.f32.mrb[0].mxu0
        %v3476 = vadd.f32 0.0, %v3475
        %v3477 = vpop.f32.mrb[0].mxu0
        %v3478 = vpop.f32.mrb[0].mxu0
        %3479 = vdwg.mxu0
        %v3480 = vadd.f32 %v3279, %v3351
        %v3481 = vadd.f32 %v3280, %v3353
        %v3482 = vadd.f32 %v3281, %v3392
        %v3483 = vadd.f32 %v3282, %v3394
        %v3484 = vadd.f32 %v3283, %v3433
        %v3485 = vadd.f32 %v3284, %v3435
        %v3486 = vadd.f32 %v3285, %v3474
        %v3487 = vadd.f32 %v3286, %v3476
        %s3488 = scalar_lea.vmem %s1, 28
        %v3489 = vld [vmem:[%s3488] sm:$0x3]
        %v3490 = vcombine.high %v340, %v340
        %3491 = vrot.lane.b32.xlu0 %v315, 127
        %v3492 = vpop.permute.xlu0 %3491
        %3493 = vrot.lane.b32.xlu0 %v314, 127
        %v3494 = vpop.permute.xlu0 %3493
        %3495 = vrot.lane.b32.xlu0 %v316, 127
        %v3496 = vpop.permute.xlu0 %3495
        %3497 = vrot.lane.b32.xlu0 %v324, 127
        %v3498 = vpop.permute.xlu0 %3497
        %3499 = vrot.lane.b32.xlu0 %v332, 127
        %v3500 = vpop.permute.xlu0 %3499
        %3501 = vrot.lane.b32.xlu0 %v331, 127
        %v3502 = vpop.permute.xlu0 %3501
        %3503 = vrot.lane.b32.xlu0 %v333, 127
        %v3504 = vpop.permute.xlu0 %3503
        %3505 = vrot.lane.b32.xlu0 %v340, 127
        %v3506 = vpop.permute.xlu0 %3505
        %3507 = vrot.lane.b32.xlu0 %v3490, 127
        %v3508 = vpop.permute.xlu0 %3507
        %vm3509 = vcmask 1039360
        %v3510 = vsel %vm3509, %v3492, %v3494
        %v3511 = vsel %vm3509, %v3494, %v3496
        %v3512 = vsel %vm3509, %v3496, %v3498
        %v3513 = vsel %vm3509, %v3498, %v3500
        %v3514 = vsel %vm3509, %v3500, %v3502
        %v3515 = vsel %vm3509, %v3502, %v3504
        %v3516 = vsel %vm3509, %v3504, %v3506
        %v3517 = vsel %vm3509, %v3506, %v3508
        %v3519 = vsel %vm368, %v3489, 0
        %v3522 = vsel %vm372, %v3510, 0
        %v3525 = vsel %vm372, %v3511, 0
        %v3528 = vsel %vm372, %v3512, 0
        %v3531 = vsel %vm372, %v3513, 0
        %v3534 = vsel %vm372, %v3514, 0
        %v3537 = vsel %vm372, %v3515, 0
        %v3540 = vsel %vm372, %v3516, 0
        %v3543 = vsel %vm372, %v3517, 0
        %3545 = vmatprep.subr.bf16.mxu0 %v3525
        %3546 = vmatpush1.bf16.msra.mxu0 %v3522
        %3547 = vmatprep.subr.bf16.mxu0 0
        %3548 = vmatpush1.bf16.msra.mxu0 0
        %3549 = vmatprep.subr.bf16.mxu0 0
        %3550 = vmatpush1.bf16.msra.mxu0 0
        %3551 = vmatprep.subr.bf16.mxu0 0
        %3552 = vmatpush1.bf16.msra.mxu0 0
        %3553 = vmatprep.subr.bf16.mxu0 0
        %3554 = vmatpush1.bf16.msra.mxu0 0
        %3555 = vmatprep.subr.bf16.mxu0 0
        %3556 = vmatpush1.bf16.msra.mxu0 0
        %3557 = vmatprep.subr.bf16.mxu0 0
        %3558 = vmatpush1.bf16.msra.mxu0 0
        %3559 = vmatprep.subr.bf16.mxu0 0
        %3560 = vmatpush1.bf16.msra.mxu0 0
        %3561 = vmatprep.subr.bf16.mxu0 0
        %3562 = vmatpush1.bf16.msra.mxu0 0
        %3563 = vmatprep.subr.bf16.mxu0 0
        %3564 = vmatpush1.bf16.msra.mxu0 0
        %3565 = vmatprep.subr.bf16.mxu0 0
        %3566 = vmatpush1.bf16.msra.mxu0 0
        %3567 = vmatprep.subr.bf16.mxu0 0
        %3568 = vmatpush1.bf16.msra.mxu0 0
        %3569 = vmatprep.subr.bf16.mxu0 0
        %3570 = vmatpush1.bf16.msra.mxu0 0
        %3571 = vmatprep.subr.bf16.mxu0 0
        %3572 = vmatpush1.bf16.msra.mxu0 0
        %3573 = vmatprep.subr.bf16.mxu0 0
        %3574 = vmatpush1.bf16.msra.mxu0 0
        %3575 = vmatprep.subr.bf16.mxu0 0
        %3576 = vmatpush1.bf16.msra.mxu0 0
        %3577 = vmatprep.mubr.bf16.mxu0 0
        %3578 = vmatmul.mubr.bf16.gmra.mrb[0].mxu0 %v3519
        %v3579 = vpop.f32.mrb[0].mxu0
        %v3580 = vadd.f32 0.0, %v3579
        %v3581 = vpop.f32.mrb[0].mxu0
        %v3582 = vadd.f32 0.0, %v3581
        %v3583 = vpop.f32.mrb[0].mxu0
        %v3584 = vpop.f32.mrb[0].mxu0
        %3585 = vdwg.mxu0
        %3586 = vmatprep.subr.bf16.mxu0 %v3531
        %3587 = vmatpush1.bf16.msra.mxu0 %v3528
        %3588 = vmatprep.subr.bf16.mxu0 0
        %3589 = vmatpush1.bf16.msra.mxu0 0
        %3590 = vmatprep.subr.bf16.mxu0 0
        %3591 = vmatpush1.bf16.msra.mxu0 0
        %3592 = vmatprep.subr.bf16.mxu0 0
        %3593 = vmatpush1.bf16.msra.mxu0 0
        %3594 = vmatprep.subr.bf16.mxu0 0
        %3595 = vmatpush1.bf16.msra.mxu0 0
        %3596 = vmatprep.subr.bf16.mxu0 0
        %3597 = vmatpush1.bf16.msra.mxu0 0
        %3598 = vmatprep.subr.bf16.mxu0 0
        %3599 = vmatpush1.bf16.msra.mxu0 0
        %3600 = vmatprep.subr.bf16.mxu0 0
        %3601 = vmatpush1.bf16.msra.mxu0 0
        %3602 = vmatprep.subr.bf16.mxu0 0
        %3603 = vmatpush1.bf16.msra.mxu0 0
        %3604 = vmatprep.subr.bf16.mxu0 0
        %3605 = vmatpush1.bf16.msra.mxu0 0
        %3606 = vmatprep.subr.bf16.mxu0 0
        %3607 = vmatpush1.bf16.msra.mxu0 0
        %3608 = vmatprep.subr.bf16.mxu0 0
        %3609 = vmatpush1.bf16.msra.mxu0 0
        %3610 = vmatprep.subr.bf16.mxu0 0
        %3611 = vmatpush1.bf16.msra.mxu0 0
        %3612 = vmatprep.subr.bf16.mxu0 0
        %3613 = vmatpush1.bf16.msra.mxu0 0
        %3614 = vmatprep.subr.bf16.mxu0 0
        %3615 = vmatpush1.bf16.msra.mxu0 0
        %3616 = vmatprep.subr.bf16.mxu0 0
        %3617 = vmatpush1.bf16.msra.mxu0 0
        %3618 = vmatprep.mubr.bf16.mxu0 0
        %3619 = vmatmul.mubr.bf16.gmra.mrb[0].mxu0 %v3519
        %v3620 = vpop.f32.mrb[0].mxu0
        %v3621 = vadd.f32 0.0, %v3620
        %v3622 = vpop.f32.mrb[0].mxu0
        %v3623 = vadd.f32 0.0, %v3622
        %v3624 = vpop.f32.mrb[0].mxu0
        %v3625 = vpop.f32.mrb[0].mxu0
        %3626 = vdwg.mxu0
        %3627 = vmatprep.subr.bf16.mxu0 %v3537
        %3628 = vmatpush1.bf16.msra.mxu0 %v3534
        %3629 = vmatprep.subr.bf16.mxu0 0
        %3630 = vmatpush1.bf16.msra.mxu0 0
        %3631 = vmatprep.subr.bf16.mxu0 0
        %3632 = vmatpush1.bf16.msra.mxu0 0
        %3633 = vmatprep.subr.bf16.mxu0 0
        %3634 = vmatpush1.bf16.msra.mxu0 0
        %3635 = vmatprep.subr.bf16.mxu0 0
        %3636 = vmatpush1.bf16.msra.mxu0 0
        %3637 = vmatprep.subr.bf16.mxu0 0
        %3638 = vmatpush1.bf16.msra.mxu0 0
        %3639 = vmatprep.subr.bf16.mxu0 0
        %3640 = vmatpush1.bf16.msra.mxu0 0
        %3641 = vmatprep.subr.bf16.mxu0 0
        %3642 = vmatpush1.bf16.msra.mxu0 0
        %3643 = vmatprep.subr.bf16.mxu0 0
        %3644 = vmatpush1.bf16.msra.mxu0 0
        %3645 = vmatprep.subr.bf16.mxu0 0
        %3646 = vmatpush1.bf16.msra.mxu0 0
        %3647 = vmatprep.subr.bf16.mxu0 0
        %3648 = vmatpush1.bf16.msra.mxu0 0
        %3649 = vmatprep.subr.bf16.mxu0 0
        %3650 = vmatpush1.bf16.msra.mxu0 0
        %3651 = vmatprep.subr.bf16.mxu0 0
        %3652 = vmatpush1.bf16.msra.mxu0 0
        %3653 = vmatprep.subr.bf16.mxu0 0
        %3654 = vmatpush1.bf16.msra.mxu0 0
        %3655 = vmatprep.subr.bf16.mxu0 0
        %3656 = vmatpush1.bf16.msra.mxu0 0
        %3657 = vmatprep.subr.bf16.mxu0 0
        %3658 = vmatpush1.bf16.msra.mxu0 0
        %3659 = vmatprep.mubr.bf16.mxu0 0
        %3660 = vmatmul.mubr.bf16.gmra.mrb[0].mxu0 %v3519
        %v3661 = vpop.f32.mrb[0].mxu0
        %v3662 = vadd.f32 0.0, %v3661
        %v3663 = vpop.f32.mrb[0].mxu0
        %v3664 = vadd.f32 0.0, %v3663
        %v3665 = vpop.f32.mrb[0].mxu0
        %v3666 = vpop.f32.mrb[0].mxu0
        %3667 = vdwg.mxu0
        %3668 = vmatprep.subr.bf16.mxu0 %v3543
        %3669 = vmatpush1.bf16.msra.mxu0 %v3540
        %3670 = vmatprep.subr.bf16.mxu0 0
        %3671 = vmatpush1.bf16.msra.mxu0 0
        %3672 = vmatprep.subr.bf16.mxu0 0
        %3673 = vmatpush1.bf16.msra.mxu0 0
        %3674 = vmatprep.subr.bf16.mxu0 0
        %3675 = vmatpush1.bf16.msra.mxu0 0
        %3676 = vmatprep.subr.bf16.mxu0 0
        %3677 = vmatpush1.bf16.msra.mxu0 0
        %3678 = vmatprep.subr.bf16.mxu0 0
        %3679 = vmatpush1.bf16.msra.mxu0 0
        %3680 = vmatprep.subr.bf16.mxu0 0
        %3681 = vmatpush1.bf16.msra.mxu0 0
        %3682 = vmatprep.subr.bf16.mxu0 0
        %3683 = vmatpush1.bf16.msra.mxu0 0
        %3684 = vmatprep.subr.bf16.mxu0 0
        %3685 = vmatpush1.bf16.msra.mxu0 0
        %3686 = vmatprep.subr.bf16.mxu0 0
        %3687 = vmatpush1.bf16.msra.mxu0 0
        %3688 = vmatprep.subr.bf16.mxu0 0
        %3689 = vmatpush1.bf16.msra.mxu0 0
        %3690 = vmatprep.subr.bf16.mxu0 0
        %3691 = vmatpush1.bf16.msra.mxu0 0
        %3692 = vmatprep.subr.bf16.mxu0 0
        %3693 = vmatpush1.bf16.msra.mxu0 0
        %3694 = vmatprep.subr.bf16.mxu0 0
        %3695 = vmatpush1.bf16.msra.mxu0 0
        %3696 = vmatprep.subr.bf16.mxu0 0
        %3697 = vmatpush1.bf16.msra.mxu0 0
        %3698 = vmatprep.subr.bf16.mxu0 0
        %3699 = vmatpush1.bf16.msra.mxu0 0
        %3700 = vmatprep.mubr.bf16.mxu0 0
        %3701 = vmatmul.mubr.bf16.gmra.mrb[0].mxu0 %v3519
        %v3702 = vpop.f32.mrb[0].mxu0
        %v3703 = vadd.f32 0.0, %v3702
        %v3704 = vpop.f32.mrb[0].mxu0
        %v3705 = vadd.f32 0.0, %v3704
        %v3706 = vpop.f32.mrb[0].mxu0
        %v3707 = vpop.f32.mrb[0].mxu0
        %3708 = vdwg.mxu0
        %v3709 = vadd.f32 %v3480, %v3580
        %v3710 = vadd.f32 %v3481, %v3582
        %v3711 = vadd.f32 %v3482, %v3621
        %v3712 = vadd.f32 %v3483, %v3623
        %v3713 = vadd.f32 %v3484, %v3662
        %v3714 = vadd.f32 %v3485, %v3664
        %v3715 = vadd.f32 %v3486, %v3703
        %v3716 = vadd.f32 %v3487, %v3705
        %s3717 = scalar_lea.vmem %s1, 30
        %v3718 = vld [vmem:[%s3717] sm:$0x3]
        %3719 = vrot.lane.b32.xlu0 %v315, 119
        %v3720 = vpop.permute.xlu0 %3719
        %3721 = vrot.lane.b32.xlu0 %v314, 119
        %v3722 = vpop.permute.xlu0 %3721
        %3723 = vrot.lane.b32.xlu0 %v316, 119
        %v3724 = vpop.permute.xlu0 %3723
        %3725 = vrot.lane.b32.xlu0 %v324, 119
        %v3726 = vpop.permute.xlu0 %3725
        %3727 = vrot.lane.b32.xlu0 %v332, 119
        %v3728 = vpop.permute.xlu0 %3727
        %3729 = vrot.lane.b32.xlu0 %v331, 119
        %v3730 = vpop.permute.xlu0 %3729
        %3731 = vrot.lane.b32.xlu0 %v333, 119
        %v3732 = vpop.permute.xlu0 %3731
        %3733 = vrot.lane.b32.xlu0 %v340, 119
        %v3734 = vpop.permute.xlu0 %3733
        %3735 = vrot.lane.b32.xlu0 %v3490, 119
        %v3736 = vpop.permute.xlu0 %3735
        %vm3737 = vcmask 973824
        %v3738 = vsel %vm3737, %v3720, %v3722
        %v3739 = vsel %vm3737, %v3722, %v3724
        %v3740 = vsel %vm3737, %v3724, %v3726
        %v3741 = vsel %vm3737, %v3726, %v3728
        %v3742 = vsel %vm3737, %v3728, %v3730
        %v3743 = vsel %vm3737, %v3730, %v3732
        %v3744 = vsel %vm3737, %v3732, %v3734
        %v3745 = vsel %vm3737, %v3734, %v3736
        %v3747 = vsel %vm368, %v3718, 0
        %v3750 = vsel %vm372, %v3738, 0
        %v3753 = vsel %vm372, %v3739, 0
        %v3756 = vsel %vm372, %v3740, 0
        %v3759 = vsel %vm372, %v3741, 0
        %v3762 = vsel %vm372, %v3742, 0
        %v3765 = vsel %vm372, %v3743, 0
        %v3768 = vsel %vm372, %v3744, 0
        %v3771 = vsel %vm372, %v3745, 0
        %3773 = vmatprep.subr.bf16.mxu0 %v3753
        %3774 = vmatpush1.bf16.msra.mxu0 %v3750
        %3775 = vmatprep.subr.bf16.mxu0 0
        %3776 = vmatpush1.bf16.msra.mxu0 0
        %3777 = vmatprep.subr.bf16.mxu0 0
        %3778 = vmatpush1.bf16.msra.mxu0 0
        %3779 = vmatprep.subr.bf16.mxu0 0
        %3780 = vmatpush1.bf16.msra.mxu0 0
        %3781 = vmatprep.subr.bf16.mxu0 0
        %3782 = vmatpush1.bf16.msra.mxu0 0
        %3783 = vmatprep.subr.bf16.mxu0 0
        %3784 = vmatpush1.bf16.msra.mxu0 0
        %3785 = vmatprep.subr.bf16.mxu0 0
        %3786 = vmatpush1.bf16.msra.mxu0 0
        %3787 = vmatprep.subr.bf16.mxu0 0
        %3788 = vmatpush1.bf16.msra.mxu0 0
        %3789 = vmatprep.subr.bf16.mxu0 0
        %3790 = vmatpush1.bf16.msra.mxu0 0
        %3791 = vmatprep.subr.bf16.mxu0 0
        %3792 = vmatpush1.bf16.msra.mxu0 0
        %3793 = vmatprep.subr.bf16.mxu0 0
        %3794 = vmatpush1.bf16.msra.mxu0 0
        %3795 = vmatprep.subr.bf16.mxu0 0
        %3796 = vmatpush1.bf16.msra.mxu0 0
        %3797 = vmatprep.subr.bf16.mxu0 0
        %3798 = vmatpush1.bf16.msra.mxu0 0
        %3799 = vmatprep.subr.bf16.mxu0 0
        %3800 = vmatpush1.bf16.msra.mxu0 0
        %3801 = vmatprep.subr.bf16.mxu0 0
        %3802 = vmatpush1.bf16.msra.mxu0 0
        %3803 = vmatprep.subr.bf16.mxu0 0
        %3804 = vmatpush1.bf16.msra.mxu0 0
        %3805 = vmatprep.mubr.bf16.mxu0 0
        %3806 = vmatmul.mubr.bf16.gmra.mrb[0].mxu0 %v3747
        %v3807 = vpop.f32.mrb[0].mxu0
        %v3808 = vadd.f32 0.0, %v3807
        %v3809 = vpop.f32.mrb[0].mxu0
        %v3810 = vadd.f32 0.0, %v3809
        %v3811 = vpop.f32.mrb[0].mxu0
        %v3812 = vpop.f32.mrb[0].mxu0
        %3813 = vdwg.mxu0
        %3814 = vmatprep.subr.bf16.mxu0 %v3759
        %3815 = vmatpush1.bf16.msra.mxu0 %v3756
        %3816 = vmatprep.subr.bf16.mxu0 0
        %3817 = vmatpush1.bf16.msra.mxu0 0
        %3818 = vmatprep.subr.bf16.mxu0 0
        %3819 = vmatpush1.bf16.msra.mxu0 0
        %3820 = vmatprep.subr.bf16.mxu0 0
        %3821 = vmatpush1.bf16.msra.mxu0 0
        %3822 = vmatprep.subr.bf16.mxu0 0
        %3823 = vmatpush1.bf16.msra.mxu0 0
        %3824 = vmatprep.subr.bf16.mxu0 0
        %3825 = vmatpush1.bf16.msra.mxu0 0
        %3826 = vmatprep.subr.bf16.mxu0 0
        %3827 = vmatpush1.bf16.msra.mxu0 0
        %3828 = vmatprep.subr.bf16.mxu0 0
        %3829 = vmatpush1.bf16.msra.mxu0 0
        %3830 = vmatprep.subr.bf16.mxu0 0
        %3831 = vmatpush1.bf16.msra.mxu0 0
        %3832 = vmatprep.subr.bf16.mxu0 0
        %3833 = vmatpush1.bf16.msra.mxu0 0
        %3834 = vmatprep.subr.bf16.mxu0 0
        %3835 = vmatpush1.bf16.msra.mxu0 0
        %3836 = vmatprep.subr.bf16.mxu0 0
        %3837 = vmatpush1.bf16.msra.mxu0 0
        %3838 = vmatprep.subr.bf16.mxu0 0
        %3839 = vmatpush1.bf16.msra.mxu0 0
        %3840 = vmatprep.subr.bf16.mxu0 0
        %3841 = vmatpush1.bf16.msra.mxu0 0
        %3842 = vmatprep.subr.bf16.mxu0 0
        %3843 = vmatpush1.bf16.msra.mxu0 0
        %3844 = vmatprep.subr.bf16.mxu0 0
        %3845 = vmatpush1.bf16.msra.mxu0 0
        %3846 = vmatprep.mubr.bf16.mxu0 0
        %3847 = vmatmul.mubr.bf16.gmra.mrb[0].mxu0 %v3747
        %v3848 = vpop.f32.mrb[0].mxu0
        %v3849 = vadd.f32 0.0, %v3848
        %v3850 = vpop.f32.mrb[0].mxu0
        %v3851 = vadd.f32 0.0, %v3850
        %v3852 = vpop.f32.mrb[0].mxu0
        %v3853 = vpop.f32.mrb[0].mxu0
        %3854 = vdwg.mxu0
        %3855 = vmatprep.subr.bf16.mxu0 %v3765
        %3856 = vmatpush1.bf16.msra.mxu0 %v3762
        %3857 = vmatprep.subr.bf16.mxu0 0
        %3858 = vmatpush1.bf16.msra.mxu0 0
        %3859 = vmatprep.subr.bf16.mxu0 0
        %3860 = vmatpush1.bf16.msra.mxu0 0
        %3861 = vmatprep.subr.bf16.mxu0 0
        %3862 = vmatpush1.bf16.msra.mxu0 0
        %3863 = vmatprep.subr.bf16.mxu0 0
        %3864 = vmatpush1.bf16.msra.mxu0 0
        %3865 = vmatprep.subr.bf16.mxu0 0
        %3866 = vmatpush1.bf16.msra.mxu0 0
        %3867 = vmatprep.subr.bf16.mxu0 0
        %3868 = vmatpush1.bf16.msra.mxu0 0
        %3869 = vmatprep.subr.bf16.mxu0 0
        %3870 = vmatpush1.bf16.msra.mxu0 0
        %3871 = vmatprep.subr.bf16.mxu0 0
        %3872 = vmatpush1.bf16.msra.mxu0 0
        %3873 = vmatprep.subr.bf16.mxu0 0
        %3874 = vmatpush1.bf16.msra.mxu0 0
        %3875 = vmatprep.subr.bf16.mxu0 0
        %3876 = vmatpush1.bf16.msra.mxu0 0
        %3877 = vmatprep.subr.bf16.mxu0 0
        %3878 = vmatpush1.bf16.msra.mxu0 0
        %3879 = vmatprep.subr.bf16.mxu0 0
        %3880 = vmatpush1.bf16.msra.mxu0 0
        %3881 = vmatprep.subr.bf16.mxu0 0
        %3882 = vmatpush1.bf16.msra.mxu0 0
        %3883 = vmatprep.subr.bf16.mxu0 0
        %3884 = vmatpush1.bf16.msra.mxu0 0
        %3885 = vmatprep.subr.bf16.mxu0 0
        %3886 = vmatpush1.bf16.msra.mxu0 0
        %3887 = vmatprep.mubr.bf16.mxu0 0
        %3888 = vmatmul.mubr.bf16.gmra.mrb[0].mxu0 %v3747
        %v3889 = vpop.f32.mrb[0].mxu0
        %v3890 = vadd.f32 0.0, %v3889
        %v3891 = vpop.f32.mrb[0].mxu0
        %v3892 = vadd.f32 0.0, %v3891
        %v3893 = vpop.f32.mrb[0].mxu0
        %v3894 = vpop.f32.mrb[0].mxu0
        %3895 = vdwg.mxu0
        %3896 = vmatprep.subr.bf16.mxu0 %v3771
        %3897 = vmatpush1.bf16.msra.mxu0 %v3768
        %3898 = vmatprep.subr.bf16.mxu0 0
        %3899 = vmatpush1.bf16.msra.mxu0 0
        %3900 = vmatprep.subr.bf16.mxu0 0
        %3901 = vmatpush1.bf16.msra.mxu0 0
        %3902 = vmatprep.subr.bf16.mxu0 0
        %3903 = vmatpush1.bf16.msra.mxu0 0
        %3904 = vmatprep.subr.bf16.mxu0 0
        %3905 = vmatpush1.bf16.msra.mxu0 0
        %3906 = vmatprep.subr.bf16.mxu0 0
        %3907 = vmatpush1.bf16.msra.mxu0 0
        %3908 = vmatprep.subr.bf16.mxu0 0
        %3909 = vmatpush1.bf16.msra.mxu0 0
        %3910 = vmatprep.subr.bf16.mxu0 0
        %3911 = vmatpush1.bf16.msra.mxu0 0
        %3912 = vmatprep.subr.bf16.mxu0 0
        %3913 = vmatpush1.bf16.msra.mxu0 0
        %3914 = vmatprep.subr.bf16.mxu0 0
        %3915 = vmatpush1.bf16.msra.mxu0 0
        %3916 = vmatprep.subr.bf16.mxu0 0
        %3917 = vmatpush1.bf16.msra.mxu0 0
        %3918 = vmatprep.subr.bf16.mxu0 0
        %3919 = vmatpush1.bf16.msra.mxu0 0
        %3920 = vmatprep.subr.bf16.mxu0 0
        %3921 = vmatpush1.bf16.msra.mxu0 0
        %3922 = vmatprep.subr.bf16.mxu0 0
        %3923 = vmatpush1.bf16.msra.mxu0 0
        %3924 = vmatprep.subr.bf16.mxu0 0
        %3925 = vmatpush1.bf16.msra.mxu0 0
        %3926 = vmatprep.subr.bf16.mxu0 0
        %3927 = vmatpush1.bf16.msra.mxu0 0
        %3928 = vmatprep.mubr.bf16.mxu0 0
        %3929 = vmatmul.mubr.bf16.gmra.mrb[0].mxu0 %v3747
        %v3930 = vpop.f32.mrb[0].mxu0
        %v3931 = vadd.f32 0.0, %v3930
        %v3932 = vpop.f32.mrb[0].mxu0
        %v3933 = vadd.f32 0.0, %v3932
        %v3934 = vpop.f32.mrb[0].mxu0
        %v3935 = vpop.f32.mrb[0].mxu0
        %3936 = vdwg.mxu0
        %v3937 = vadd.f32 %v3709, %v3808
        %v3938 = vadd.f32 %v3710, %v3810
        %v3939 = vadd.f32 %v3711, %v3849
        %v3940 = vadd.f32 %v3712, %v3851
        %v3941 = vadd.f32 %v3713, %v3890
        %v3942 = vadd.f32 %v3714, %v3892
        %v3943 = vadd.f32 %v3715, %v3931
        %v3944 = vadd.f32 %v3716, %v3933
        %s3945 = scalar_lea.vmem %s1, 32
        %v3946 = vld [vmem:[%s3945] sm:$0x3]
        %3947 = vrot.lane.b32.xlu0 %v315, 118
        %v3948 = vpop.permute.xlu0 %3947
        %3949 = vrot.lane.b32.xlu0 %v314, 118
        %v3950 = vpop.permute.xlu0 %3949
        %3951 = vrot.lane.b32.xlu0 %v316, 118
        %v3952 = vpop.permute.xlu0 %3951
        %3953 = vrot.lane.b32.xlu0 %v324, 118
        %v3954 = vpop.permute.xlu0 %3953
        %3955 = vrot.lane.b32.xlu0 %v332, 118
        %v3956 = vpop.permute.xlu0 %3955
        %3957 = vrot.lane.b32.xlu0 %v331, 118
        %v3958 = vpop.permute.xlu0 %3957
        %3959 = vrot.lane.b32.xlu0 %v333, 118
        %v3960 = vpop.permute.xlu0 %3959
        %3961 = vrot.lane.b32.xlu0 %v340, 118
        %v3962 = vpop.permute.xlu0 %3961
        %3963 = vrot.lane.b32.xlu0 %v3490, 118
        %v3964 = vpop.permute.xlu0 %3963
        %vm3965 = vcmask 965632
        %v3966 = vsel %vm3965, %v3948, %v3950
        %v3967 = vsel %vm3965, %v3950, %v3952
        %v3968 = vsel %vm3965, %v3952, %v3954
        %v3969 = vsel %vm3965, %v3954, %v3956
        %v3970 = vsel %vm3965, %v3956, %v3958
        %v3971 = vsel %vm3965, %v3958, %v3960
        %v3972 = vsel %vm3965, %v3960, %v3962
        %v3973 = vsel %vm3965, %v3962, %v3964
        %v3975 = vsel %vm368, %v3946, 0
        %v3978 = vsel %vm372, %v3966, 0
        %v3981 = vsel %vm372, %v3967, 0
        %v3984 = vsel %vm372, %v3968, 0
        %v3987 = vsel %vm372, %v3969, 0
        %v3990 = vsel %vm372, %v3970, 0
        %v3993 = vsel %vm372, %v3971, 0
        %v3996 = vsel %vm372, %v3972, 0
        %v3999 = vsel %vm372, %v3973, 0
        %4001 = vmatprep.subr.bf16.mxu0 %v3981
        %4002 = vmatpush1.bf16.msra.mxu0 %v3978
        %4003 = vmatprep.subr.bf16.mxu0 0
        %4004 = vmatpush1.bf16.msra.mxu0 0
        %4005 = vmatprep.subr.bf16.mxu0 0
        %4006 = vmatpush1.bf16.msra.mxu0 0
        %4007 = vmatprep.subr.bf16.mxu0 0
        %4008 = vmatpush1.bf16.msra.mxu0 0
        %4009 = vmatprep.subr.bf16.mxu0 0
        %4010 = vmatpush1.bf16.msra.mxu0 0
        %4011 = vmatprep.subr.bf16.mxu0 0
        %4012 = vmatpush1.bf16.msra.mxu0 0
        %4013 = vmatprep.subr.bf16.mxu0 0
        %4014 = vmatpush1.bf16.msra.mxu0 0
        %4015 = vmatprep.subr.bf16.mxu0 0
        %4016 = vmatpush1.bf16.msra.mxu0 0
        %4017 = vmatprep.subr.bf16.mxu0 0
        %4018 = vmatpush1.bf16.msra.mxu0 0
        %4019 = vmatprep.subr.bf16.mxu0 0
        %4020 = vmatpush1.bf16.msra.mxu0 0
        %4021 = vmatprep.subr.bf16.mxu0 0
        %4022 = vmatpush1.bf16.msra.mxu0 0
        %4023 = vmatprep.subr.bf16.mxu0 0
        %4024 = vmatpush1.bf16.msra.mxu0 0
        %4025 = vmatprep.subr.bf16.mxu0 0
        %4026 = vmatpush1.bf16.msra.mxu0 0
        %4027 = vmatprep.subr.bf16.mxu0 0
        %4028 = vmatpush1.bf16.msra.mxu0 0
        %4029 = vmatprep.subr.bf16.mxu0 0
        %4030 = vmatpush1.bf16.msra.mxu0 0
        %4031 = vmatprep.subr.bf16.mxu0 0
        %4032 = vmatpush1.bf16.msra.mxu0 0
        %4033 = vmatprep.mubr.bf16.mxu0 0
        %4034 = vmatmul.mubr.bf16.gmra.mrb[0].mxu0 %v3975
        %v4035 = vpop.f32.mrb[0].mxu0
        %v4036 = vadd.f32 0.0, %v4035
        %v4037 = vpop.f32.mrb[0].mxu0
        %v4038 = vadd.f32 0.0, %v4037
        %v4039 = vpop.f32.mrb[0].mxu0
        %v4040 = vpop.f32.mrb[0].mxu0
        %4041 = vdwg.mxu0
        %4042 = vmatprep.subr.bf16.mxu0 %v3987
        %4043 = vmatpush1.bf16.msra.mxu0 %v3984
        %4044 = vmatprep.subr.bf16.mxu0 0
        %4045 = vmatpush1.bf16.msra.mxu0 0
        %4046 = vmatprep.subr.bf16.mxu0 0
        %4047 = vmatpush1.bf16.msra.mxu0 0
        %4048 = vmatprep.subr.bf16.mxu0 0
        %4049 = vmatpush1.bf16.msra.mxu0 0
        %4050 = vmatprep.subr.bf16.mxu0 0
        %4051 = vmatpush1.bf16.msra.mxu0 0
        %4052 = vmatprep.subr.bf16.mxu0 0
        %4053 = vmatpush1.bf16.msra.mxu0 0
        %4054 = vmatprep.subr.bf16.mxu0 0
        %4055 = vmatpush1.bf16.msra.mxu0 0
        %4056 = vmatprep.subr.bf16.mxu0 0
        %4057 = vmatpush1.bf16.msra.mxu0 0
        %4058 = vmatprep.subr.bf16.mxu0 0
        %4059 = vmatpush1.bf16.msra.mxu0 0
        %4060 = vmatprep.subr.bf16.mxu0 0
        %4061 = vmatpush1.bf16.msra.mxu0 0
        %4062 = vmatprep.subr.bf16.mxu0 0
        %4063 = vmatpush1.bf16.msra.mxu0 0
        %4064 = vmatprep.subr.bf16.mxu0 0
        %4065 = vmatpush1.bf16.msra.mxu0 0
        %4066 = vmatprep.subr.bf16.mxu0 0
        %4067 = vmatpush1.bf16.msra.mxu0 0
        %4068 = vmatprep.subr.bf16.mxu0 0
        %4069 = vmatpush1.bf16.msra.mxu0 0
        %4070 = vmatprep.subr.bf16.mxu0 0
        %4071 = vmatpush1.bf16.msra.mxu0 0
        %4072 = vmatprep.subr.bf16.mxu0 0
        %4073 = vmatpush1.bf16.msra.mxu0 0
        %4074 = vmatprep.mubr.bf16.mxu0 0
        %4075 = vmatmul.mubr.bf16.gmra.mrb[0].mxu0 %v3975
        %v4076 = vpop.f32.mrb[0].mxu0
        %v4077 = vadd.f32 0.0, %v4076
        %v4078 = vpop.f32.mrb[0].mxu0
        %v4079 = vadd.f32 0.0, %v4078
        %v4080 = vpop.f32.mrb[0].mxu0
        %v4081 = vpop.f32.mrb[0].mxu0
        %4082 = vdwg.mxu0
        %4083 = vmatprep.subr.bf16.mxu0 %v3993
        %4084 = vmatpush1.bf16.msra.mxu0 %v3990
        %4085 = vmatprep.subr.bf16.mxu0 0
        %4086 = vmatpush1.bf16.msra.mxu0 0
        %4087 = vmatprep.subr.bf16.mxu0 0
        %4088 = vmatpush1.bf16.msra.mxu0 0
        %4089 = vmatprep.subr.bf16.mxu0 0
        %4090 = vmatpush1.bf16.msra.mxu0 0
        %4091 = vmatprep.subr.bf16.mxu0 0
        %4092 = vmatpush1.bf16.msra.mxu0 0
        %4093 = vmatprep.subr.bf16.mxu0 0
        %4094 = vmatpush1.bf16.msra.mxu0 0
        %4095 = vmatprep.subr.bf16.mxu0 0
        %4096 = vmatpush1.bf16.msra.mxu0 0
        %4097 = vmatprep.subr.bf16.mxu0 0
        %4098 = vmatpush1.bf16.msra.mxu0 0
        %4099 = vmatprep.subr.bf16.mxu0 0
        %4100 = vmatpush1.bf16.msra.mxu0 0
        %4101 = vmatprep.subr.bf16.mxu0 0
        %4102 = vmatpush1.bf16.msra.mxu0 0
        %4103 = vmatprep.subr.bf16.mxu0 0
        %4104 = vmatpush1.bf16.msra.mxu0 0
        %4105 = vmatprep.subr.bf16.mxu0 0
        %4106 = vmatpush1.bf16.msra.mxu0 0
        %4107 = vmatprep.subr.bf16.mxu0 0
        %4108 = vmatpush1.bf16.msra.mxu0 0
        %4109 = vmatprep.subr.bf16.mxu0 0
        %4110 = vmatpush1.bf16.msra.mxu0 0
        %4111 = vmatprep.subr.bf16.mxu0 0
        %4112 = vmatpush1.bf16.msra.mxu0 0
        %4113 = vmatprep.subr.bf16.mxu0 0
        %4114 = vmatpush1.bf16.msra.mxu0 0
        %4115 = vmatprep.mubr.bf16.mxu0 0
        %4116 = vmatmul.mubr.bf16.gmra.mrb[0].mxu0 %v3975
        %v4117 = vpop.f32.mrb[0].mxu0
        %v4118 = vadd.f32 0.0, %v4117
        %v4119 = vpop.f32.mrb[0].mxu0
        %v4120 = vadd.f32 0.0, %v4119
        %v4121 = vpop.f32.mrb[0].mxu0
        %v4122 = vpop.f32.mrb[0].mxu0
        %4123 = vdwg.mxu0
        %4124 = vmatprep.subr.bf16.mxu0 %v3999
        %4125 = vmatpush1.bf16.msra.mxu0 %v3996
        %4126 = vmatprep.subr.bf16.mxu0 0
        %4127 = vmatpush1.bf16.msra.mxu0 0
        %4128 = vmatprep.subr.bf16.mxu0 0
        %4129 = vmatpush1.bf16.msra.mxu0 0
        %4130 = vmatprep.subr.bf16.mxu0 0
        %4131 = vmatpush1.bf16.msra.mxu0 0
        %4132 = vmatprep.subr.bf16.mxu0 0
        %4133 = vmatpush1.bf16.msra.mxu0 0
        %4134 = vmatprep.subr.bf16.mxu0 0
        %4135 = vmatpush1.bf16.msra.mxu0 0
        %4136 = vmatprep.subr.bf16.mxu0 0
        %4137 = vmatpush1.bf16.msra.mxu0 0
        %4138 = vmatprep.subr.bf16.mxu0 0
        %4139 = vmatpush1.bf16.msra.mxu0 0
        %4140 = vmatprep.subr.bf16.mxu0 0
        %4141 = vmatpush1.bf16.msra.mxu0 0
        %4142 = vmatprep.subr.bf16.mxu0 0
        %4143 = vmatpush1.bf16.msra.mxu0 0
        %4144 = vmatprep.subr.bf16.mxu0 0
        %4145 = vmatpush1.bf16.msra.mxu0 0
        %4146 = vmatprep.subr.bf16.mxu0 0
        %4147 = vmatpush1.bf16.msra.mxu0 0
        %4148 = vmatprep.subr.bf16.mxu0 0
        %4149 = vmatpush1.bf16.msra.mxu0 0
        %4150 = vmatprep.subr.bf16.mxu0 0
        %4151 = vmatpush1.bf16.msra.mxu0 0
        %4152 = vmatprep.subr.bf16.mxu0 0
        %4153 = vmatpush1.bf16.msra.mxu0 0
        %4154 = vmatprep.subr.bf16.mxu0 0
        %4155 = vmatpush1.bf16.msra.mxu0 0
        %4156 = vmatprep.mubr.bf16.mxu0 0
        %4157 = vmatmul.mubr.bf16.gmra.mrb[0].mxu0 %v3975
        %v4158 = vpop.f32.mrb[0].mxu0
        %v4159 = vadd.f32 0.0, %v4158
        %v4160 = vpop.f32.mrb[0].mxu0
        %v4161 = vadd.f32 0.0, %v4160
        %v4162 = vpop.f32.mrb[0].mxu0
        %v4163 = vpop.f32.mrb[0].mxu0
        %4164 = vdwg.mxu0
        %v4165 = vadd.f32 %v3937, %v4036
        %v4166 = vadd.f32 %v3938, %v4038
        %v4167 = vadd.f32 %v3939, %v4077
        %v4168 = vadd.f32 %v3940, %v4079
        %v4169 = vadd.f32 %v3941, %v4118
        %v4170 = vadd.f32 %v3942, %v4120
        %v4171 = vadd.f32 %v3943, %v4159
        %v4172 = vadd.f32 %v3944, %v4161
        %s4173 = scalar_lea.vmem %s1, 34
        %v4174 = vld [vmem:[%s4173] sm:$0x3]
        %4175 = vrot.lane.b32.xlu0 %v315, 117
        %v4176 = vpop.permute.xlu0 %4175
        %4177 = vrot.lane.b32.xlu0 %v314, 117
        %v4178 = vpop.permute.xlu0 %4177
        %4179 = vrot.lane.b32.xlu0 %v316, 117
        %v4180 = vpop.permute.xlu0 %4179
        %4181 = vrot.lane.b32.xlu0 %v324, 117
        %v4182 = vpop.permute.xlu0 %4181
        %4183 = vrot.lane.b32.xlu0 %v332, 117
        %v4184 = vpop.permute.xlu0 %4183
        %4185 = vrot.lane.b32.xlu0 %v331, 117
        %v4186 = vpop.permute.xlu0 %4185
        %4187 = vrot.lane.b32.xlu0 %v333, 117
        %v4188 = vpop.permute.xlu0 %4187
        %4189 = vrot.lane.b32.xlu0 %v340, 117
        %v4190 = vpop.permute.xlu0 %4189
        %4191 = vrot.lane.b32.xlu0 %v3490, 117
        %v4192 = vpop.permute.xlu0 %4191
        %vm4193 = vcmask 957440
        %v4194 = vsel %vm4193, %v4176, %v4178
        %v4195 = vsel %vm4193, %v4178, %v4180
        %v4196 = vsel %vm4193, %v4180, %v4182
        %v4197 = vsel %vm4193, %v4182, %v4184
        %v4198 = vsel %vm4193, %v4184, %v4186
        %v4199 = vsel %vm4193, %v4186, %v4188
        %v4200 = vsel %vm4193, %v4188, %v4190
        %v4201 = vsel %vm4193, %v4190, %v4192
        %v4203 = vsel %vm368, %v4174, 0
        %v4206 = vsel %vm372, %v4194, 0
        %v4209 = vsel %vm372, %v4195, 0
        %v4212 = vsel %vm372, %v4196, 0
        %v4215 = vsel %vm372, %v4197, 0
        %v4218 = vsel %vm372, %v4198, 0
        %v4221 = vsel %vm372, %v4199, 0
        %v4224 = vsel %vm372, %v4200, 0
        %v4227 = vsel %vm372, %v4201, 0
        %4229 = vmatprep.subr.bf16.mxu0 %v4209
        %4230 = vmatpush1.bf16.msra.mxu0 %v4206
        %4231 = vmatprep.subr.bf16.mxu0 0
        %4232 = vmatpush1.bf16.msra.mxu0 0
        %4233 = vmatprep.subr.bf16.mxu0 0
        %4234 = vmatpush1.bf16.msra.mxu0 0
        %4235 = vmatprep.subr.bf16.mxu0 0
        %4236 = vmatpush1.bf16.msra.mxu0 0
        %4237 = vmatprep.subr.bf16.mxu0 0
        %4238 = vmatpush1.bf16.msra.mxu0 0
        %4239 = vmatprep.subr.bf16.mxu0 0
        %4240 = vmatpush1.bf16.msra.mxu0 0
        %4241 = vmatprep.subr.bf16.mxu0 0
        %4242 = vmatpush1.bf16.msra.mxu0 0
        %4243 = vmatprep.subr.bf16.mxu0 0
        %4244 = vmatpush1.bf16.msra.mxu0 0
        %4245 = vmatprep.subr.bf16.mxu0 0
        %4246 = vmatpush1.bf16.msra.mxu0 0
        %4247 = vmatprep.subr.bf16.mxu0 0
        %4248 = vmatpush1.bf16.msra.mxu0 0
        %4249 = vmatprep.subr.bf16.mxu0 0
        %4250 = vmatpush1.bf16.msra.mxu0 0
        %4251 = vmatprep.subr.bf16.mxu0 0
        %4252 = vmatpush1.bf16.msra.mxu0 0
        %4253 = vmatprep.subr.bf16.mxu0 0
        %4254 = vmatpush1.bf16.msra.mxu0 0
        %4255 = vmatprep.subr.bf16.mxu0 0
        %4256 = vmatpush1.bf16.msra.mxu0 0
        %4257 = vmatprep.subr.bf16.mxu0 0
        %4258 = vmatpush1.bf16.msra.mxu0 0
        %4259 = vmatprep.subr.bf16.mxu0 0
        %4260 = vmatpush1.bf16.msra.mxu0 0
        %4261 = vmatprep.mubr.bf16.mxu0 0
        %4262 = vmatmul.mubr.bf16.gmra.mrb[0].mxu0 %v4203
        %v4263 = vpop.f32.mrb[0].mxu0
        %v4264 = vadd.f32 0.0, %v4263
        %v4265 = vpop.f32.mrb[0].mxu0
        %v4266 = vadd.f32 0.0, %v4265
        %v4267 = vpop.f32.mrb[0].mxu0
        %v4268 = vpop.f32.mrb[0].mxu0
        %4269 = vdwg.mxu0
        %4270 = vmatprep.subr.bf16.mxu0 %v4215
        %4271 = vmatpush1.bf16.msra.mxu0 %v4212
        %4272 = vmatprep.subr.bf16.mxu0 0
        %4273 = vmatpush1.bf16.msra.mxu0 0
        %4274 = vmatprep.subr.bf16.mxu0 0
        %4275 = vmatpush1.bf16.msra.mxu0 0
        %4276 = vmatprep.subr.bf16.mxu0 0
        %4277 = vmatpush1.bf16.msra.mxu0 0
        %4278 = vmatprep.subr.bf16.mxu0 0
        %4279 = vmatpush1.bf16.msra.mxu0 0
        %4280 = vmatprep.subr.bf16.mxu0 0
        %4281 = vmatpush1.bf16.msra.mxu0 0
        %4282 = vmatprep.subr.bf16.mxu0 0
        %4283 = vmatpush1.bf16.msra.mxu0 0
        %4284 = vmatprep.subr.bf16.mxu0 0
        %4285 = vmatpush1.bf16.msra.mxu0 0
        %4286 = vmatprep.subr.bf16.mxu0 0
        %4287 = vmatpush1.bf16.msra.mxu0 0
        %4288 = vmatprep.subr.bf16.mxu0 0
        %4289 = vmatpush1.bf16.msra.mxu0 0
        %4290 = vmatprep.subr.bf16.mxu0 0
        %4291 = vmatpush1.bf16.msra.mxu0 0
        %4292 = vmatprep.subr.bf16.mxu0 0
        %4293 = vmatpush1.bf16.msra.mxu0 0
        %4294 = vmatprep.subr.bf16.mxu0 0
        %4295 = vmatpush1.bf16.msra.mxu0 0
        %4296 = vmatprep.subr.bf16.mxu0 0
        %4297 = vmatpush1.bf16.msra.mxu0 0
        %4298 = vmatprep.subr.bf16.mxu0 0
        %4299 = vmatpush1.bf16.msra.mxu0 0
        %4300 = vmatprep.subr.bf16.mxu0 0
        %4301 = vmatpush1.bf16.msra.mxu0 0
        %4302 = vmatprep.mubr.bf16.mxu0 0
        %4303 = vmatmul.mubr.bf16.gmra.mrb[0].mxu0 %v4203
        %v4304 = vpop.f32.mrb[0].mxu0
        %v4305 = vadd.f32 0.0, %v4304
        %v4306 = vpop.f32.mrb[0].mxu0
        %v4307 = vadd.f32 0.0, %v4306
        %v4308 = vpop.f32.mrb[0].mxu0
        %v4309 = vpop.f32.mrb[0].mxu0
        %4310 = vdwg.mxu0
        %4311 = vmatprep.subr.bf16.mxu0 %v4221
        %4312 = vmatpush1.bf16.msra.mxu0 %v4218
        %4313 = vmatprep.subr.bf16.mxu0 0
        %4314 = vmatpush1.bf16.msra.mxu0 0
        %4315 = vmatprep.subr.bf16.mxu0 0
        %4316 = vmatpush1.bf16.msra.mxu0 0
        %4317 = vmatprep.subr.bf16.mxu0 0
        %4318 = vmatpush1.bf16.msra.mxu0 0
        %4319 = vmatprep.subr.bf16.mxu0 0
        %4320 = vmatpush1.bf16.msra.mxu0 0
        %4321 = vmatprep.subr.bf16.mxu0 0
        %4322 = vmatpush1.bf16.msra.mxu0 0
        %4323 = vmatprep.subr.bf16.mxu0 0
        %4324 = vmatpush1.bf16.msra.mxu0 0
        %4325 = vmatprep.subr.bf16.mxu0 0
        %4326 = vmatpush1.bf16.msra.mxu0 0
        %4327 = vmatprep.subr.bf16.mxu0 0
        %4328 = vmatpush1.bf16.msra.mxu0 0
        %4329 = vmatprep.subr.bf16.mxu0 0
        %4330 = vmatpush1.bf16.msra.mxu0 0
        %4331 = vmatprep.subr.bf16.mxu0 0
        %4332 = vmatpush1.bf16.msra.mxu0 0
        %4333 = vmatprep.subr.bf16.mxu0 0
        %4334 = vmatpush1.bf16.msra.mxu0 0
        %4335 = vmatprep.subr.bf16.mxu0 0
        %4336 = vmatpush1.bf16.msra.mxu0 0
        %4337 = vmatprep.subr.bf16.mxu0 0
        %4338 = vmatpush1.bf16.msra.mxu0 0
        %4339 = vmatprep.subr.bf16.mxu0 0
        %4340 = vmatpush1.bf16.msra.mxu0 0
        %4341 = vmatprep.subr.bf16.mxu0 0
        %4342 = vmatpush1.bf16.msra.mxu0 0
        %4343 = vmatprep.mubr.bf16.mxu0 0
        %4344 = vmatmul.mubr.bf16.gmra.mrb[0].mxu0 %v4203
        %v4345 = vpop.f32.mrb[0].mxu0
        %v4346 = vadd.f32 0.0, %v4345
        %v4347 = vpop.f32.mrb[0].mxu0
        %v4348 = vadd.f32 0.0, %v4347
        %v4349 = vpop.f32.mrb[0].mxu0
        %v4350 = vpop.f32.mrb[0].mxu0
        %4351 = vdwg.mxu0
        %4352 = vmatprep.subr.bf16.mxu0 %v4227
        %4353 = vmatpush1.bf16.msra.mxu0 %v4224
        %4354 = vmatprep.subr.bf16.mxu0 0
        %4355 = vmatpush1.bf16.msra.mxu0 0
        %4356 = vmatprep.subr.bf16.mxu0 0
        %4357 = vmatpush1.bf16.msra.mxu0 0
        %4358 = vmatprep.subr.bf16.mxu0 0
        %4359 = vmatpush1.bf16.msra.mxu0 0
        %4360 = vmatprep.subr.bf16.mxu0 0
        %4361 = vmatpush1.bf16.msra.mxu0 0
        %4362 = vmatprep.subr.bf16.mxu0 0
        %4363 = vmatpush1.bf16.msra.mxu0 0
        %4364 = vmatprep.subr.bf16.mxu0 0
        %4365 = vmatpush1.bf16.msra.mxu0 0
        %4366 = vmatprep.subr.bf16.mxu0 0
        %4367 = vmatpush1.bf16.msra.mxu0 0
        %4368 = vmatprep.subr.bf16.mxu0 0
        %4369 = vmatpush1.bf16.msra.mxu0 0
        %4370 = vmatprep.subr.bf16.mxu0 0
        %4371 = vmatpush1.bf16.msra.mxu0 0
        %4372 = vmatprep.subr.bf16.mxu0 0
        %4373 = vmatpush1.bf16.msra.mxu0 0
        %4374 = vmatprep.subr.bf16.mxu0 0
        %4375 = vmatpush1.bf16.msra.mxu0 0
        %4376 = vmatprep.subr.bf16.mxu0 0
        %4377 = vmatpush1.bf16.msra.mxu0 0
        %4378 = vmatprep.subr.bf16.mxu0 0
        %4379 = vmatpush1.bf16.msra.mxu0 0
        %4380 = vmatprep.subr.bf16.mxu0 0
        %4381 = vmatpush1.bf16.msra.mxu0 0
        %4382 = vmatprep.subr.bf16.mxu0 0
        %4383 = vmatpush1.bf16.msra.mxu0 0
        %4384 = vmatprep.mubr.bf16.mxu0 0
        %4385 = vmatmul.mubr.bf16.gmra.mrb[0].mxu0 %v4203
        %v4386 = vpop.f32.mrb[0].mxu0
        %v4387 = vadd.f32 0.0, %v4386
        %v4388 = vpop.f32.mrb[0].mxu0
        %v4389 = vadd.f32 0.0, %v4388
        %v4390 = vpop.f32.mrb[0].mxu0
        %v4391 = vpop.f32.mrb[0].mxu0
        %4392 = vdwg.mxu0
        %v4393 = vadd.f32 %v4165, %v4264
        %v4394 = vadd.f32 %v4166, %v4266
        %v4395 = vadd.f32 %v4167, %v4305
        %v4396 = vadd.f32 %v4168, %v4307
        %v4397 = vadd.f32 %v4169, %v4346
        %v4398 = vadd.f32 %v4170, %v4348
        %v4399 = vadd.f32 %v4171, %v4387
        %v4400 = vadd.f32 %v4172, %v4389
        %s4401 = scalar_lea.vmem %s1, 36
        %v4402 = vld [vmem:[%s4401] sm:$0x3]
        %4403 = vrot.lane.b32.xlu0 %v315, 39
        %v4404 = vpop.permute.xlu0 %4403
        %4405 = vrot.lane.b32.xlu0 %v314, 39
        %v4406 = vpop.permute.xlu0 %4405
        %4407 = vrot.lane.b32.xlu0 %v316, 39
        %v4408 = vpop.permute.xlu0 %4407
        %4409 = vrot.lane.b32.xlu0 %v324, 39
        %v4410 = vpop.permute.xlu0 %4409
        %4411 = vrot.lane.b32.xlu0 %v332, 39
        %v4412 = vpop.permute.xlu0 %4411
        %4413 = vrot.lane.b32.xlu0 %v331, 39
        %v4414 = vpop.permute.xlu0 %4413
        %4415 = vrot.lane.b32.xlu0 %v333, 39
        %v4416 = vpop.permute.xlu0 %4415
        %4417 = vrot.lane.b32.xlu0 %v340, 39
        %v4418 = vpop.permute.xlu0 %4417
        %4419 = vrot.lane.b32.xlu0 %v3490, 39
        %v4420 = vpop.permute.xlu0 %4419
        %vm4421 = vcmask 318464
        %v4422 = vsel %vm4421, %v4404, %v4406
        %v4423 = vsel %vm4421, %v4406, %v4408
        %v4424 = vsel %vm4421, %v4408, %v4410
        %v4425 = vsel %vm4421, %v4410, %v4412
        %v4426 = vsel %vm4421, %v4412, %v4414
        %v4427 = vsel %vm4421, %v4414, %v4416
        %v4428 = vsel %vm4421, %v4416, %v4418
        %v4429 = vsel %vm4421, %v4418, %v4420
        %v4431 = vsel %vm368, %v4402, 0
        %v4434 = vsel %vm372, %v4422, 0
        %v4437 = vsel %vm372, %v4423, 0
        %v4440 = vsel %vm372, %v4424, 0
        %v4443 = vsel %vm372, %v4425, 0
        %v4446 = vsel %vm372, %v4426, 0
        %v4449 = vsel %vm372, %v4427, 0
        %v4452 = vsel %vm372, %v4428, 0
        %v4455 = vsel %vm372, %v4429, 0
        %4457 = vmatprep.subr.bf16.mxu0 %v4437
        %4458 = vmatpush1.bf16.msra.mxu0 %v4434
        %4459 = vmatprep.subr.bf16.mxu0 0
        %4460 = vmatpush1.bf16.msra.mxu0 0
        %4461 = vmatprep.subr.bf16.mxu0 0
        %4462 = vmatpush1.bf16.msra.mxu0 0
        %4463 = vmatprep.subr.bf16.mxu0 0
        %4464 = vmatpush1.bf16.msra.mxu0 0
        %4465 = vmatprep.subr.bf16.mxu0 0
        %4466 = vmatpush1.bf16.msra.mxu0 0
        %4467 = vmatprep.subr.bf16.mxu0 0
        %4468 = vmatpush1.bf16.msra.mxu0 0
        %4469 = vmatprep.subr.bf16.mxu0 0
        %4470 = vmatpush1.bf16.msra.mxu0 0
        %4471 = vmatprep.subr.bf16.mxu0 0
        %4472 = vmatpush1.bf16.msra.mxu0 0
        %4473 = vmatprep.subr.bf16.mxu0 0
        %4474 = vmatpush1.bf16.msra.mxu0 0
        %4475 = vmatprep.subr.bf16.mxu0 0
        %4476 = vmatpush1.bf16.msra.mxu0 0
        %4477 = vmatprep.subr.bf16.mxu0 0
        %4478 = vmatpush1.bf16.msra.mxu0 0
        %4479 = vmatprep.subr.bf16.mxu0 0
        %4480 = vmatpush1.bf16.msra.mxu0 0
        %4481 = vmatprep.subr.bf16.mxu0 0
        %4482 = vmatpush1.bf16.msra.mxu0 0
        %4483 = vmatprep.subr.bf16.mxu0 0
        %4484 = vmatpush1.bf16.msra.mxu0 0
        %4485 = vmatprep.subr.bf16.mxu0 0
        %4486 = vmatpush1.bf16.msra.mxu0 0
        %4487 = vmatprep.subr.bf16.mxu0 0
        %4488 = vmatpush1.bf16.msra.mxu0 0
        %4489 = vmatprep.mubr.bf16.mxu0 0
        %4490 = vmatmul.mubr.bf16.gmra.mrb[0].mxu0 %v4431
        %v4491 = vpop.f32.mrb[0].mxu0
        %v4492 = vadd.f32 0.0, %v4491
        %v4493 = vpop.f32.mrb[0].mxu0
        %v4494 = vadd.f32 0.0, %v4493
        %v4495 = vpop.f32.mrb[0].mxu0
        %v4496 = vpop.f32.mrb[0].mxu0
        %4497 = vdwg.mxu0
        %4498 = vmatprep.subr.bf16.mxu0 %v4443
        %4499 = vmatpush1.bf16.msra.mxu0 %v4440
        %4500 = vmatprep.subr.bf16.mxu0 0
        %4501 = vmatpush1.bf16.msra.mxu0 0
        %4502 = vmatprep.subr.bf16.mxu0 0
        %4503 = vmatpush1.bf16.msra.mxu0 0
        %4504 = vmatprep.subr.bf16.mxu0 0
        %4505 = vmatpush1.bf16.msra.mxu0 0
        %4506 = vmatprep.subr.bf16.mxu0 0
        %4507 = vmatpush1.bf16.msra.mxu0 0
        %4508 = vmatprep.subr.bf16.mxu0 0
        %4509 = vmatpush1.bf16.msra.mxu0 0
        %4510 = vmatprep.subr.bf16.mxu0 0
        %4511 = vmatpush1.bf16.msra.mxu0 0
        %4512 = vmatprep.subr.bf16.mxu0 0
        %4513 = vmatpush1.bf16.msra.mxu0 0
        %4514 = vmatprep.subr.bf16.mxu0 0
        %4515 = vmatpush1.bf16.msra.mxu0 0
        %4516 = vmatprep.subr.bf16.mxu0 0
        %4517 = vmatpush1.bf16.msra.mxu0 0
        %4518 = vmatprep.subr.bf16.mxu0 0
        %4519 = vmatpush1.bf16.msra.mxu0 0
        %4520 = vmatprep.subr.bf16.mxu0 0
        %4521 = vmatpush1.bf16.msra.mxu0 0
        %4522 = vmatprep.subr.bf16.mxu0 0
        %4523 = vmatpush1.bf16.msra.mxu0 0
        %4524 = vmatprep.subr.bf16.mxu0 0
        %4525 = vmatpush1.bf16.msra.mxu0 0
        %4526 = vmatprep.subr.bf16.mxu0 0
        %4527 = vmatpush1.bf16.msra.mxu0 0
        %4528 = vmatprep.subr.bf16.mxu0 0
        %4529 = vmatpush1.bf16.msra.mxu0 0
        %4530 = vmatprep.mubr.bf16.mxu0 0
        %4531 = vmatmul.mubr.bf16.gmra.mrb[0].mxu0 %v4431
        %v4532 = vpop.f32.mrb[0].mxu0
        %v4533 = vadd.f32 0.0, %v4532
        %v4534 = vpop.f32.mrb[0].mxu0
        %v4535 = vadd.f32 0.0, %v4534
        %v4536 = vpop.f32.mrb[0].mxu0
        %v4537 = vpop.f32.mrb[0].mxu0
        %4538 = vdwg.mxu0
        %4539 = vmatprep.subr.bf16.mxu0 %v4449
        %4540 = vmatpush1.bf16.msra.mxu0 %v4446
        %4541 = vmatprep.subr.bf16.mxu0 0
        %4542 = vmatpush1.bf16.msra.mxu0 0
        %4543 = vmatprep.subr.bf16.mxu0 0
        %4544 = vmatpush1.bf16.msra.mxu0 0
        %4545 = vmatprep.subr.bf16.mxu0 0
        %4546 = vmatpush1.bf16.msra.mxu0 0
        %4547 = vmatprep.subr.bf16.mxu0 0
        %4548 = vmatpush1.bf16.msra.mxu0 0
        %4549 = vmatprep.subr.bf16.mxu0 0
        %4550 = vmatpush1.bf16.msra.mxu0 0
        %4551 = vmatprep.subr.bf16.mxu0 0
        %4552 = vmatpush1.bf16.msra.mxu0 0
        %4553 = vmatprep.subr.bf16.mxu0 0
        %4554 = vmatpush1.bf16.msra.mxu0 0
        %4555 = vmatprep.subr.bf16.mxu0 0
        %4556 = vmatpush1.bf16.msra.mxu0 0
        %4557 = vmatprep.subr.bf16.mxu0 0
        %4558 = vmatpush1.bf16.msra.mxu0 0
        %4559 = vmatprep.subr.bf16.mxu0 0
        %4560 = vmatpush1.bf16.msra.mxu0 0
        %4561 = vmatprep.subr.bf16.mxu0 0
        %4562 = vmatpush1.bf16.msra.mxu0 0
        %4563 = vmatprep.subr.bf16.mxu0 0
        %4564 = vmatpush1.bf16.msra.mxu0 0
        %4565 = vmatprep.subr.bf16.mxu0 0
        %4566 = vmatpush1.bf16.msra.mxu0 0
        %4567 = vmatprep.subr.bf16.mxu0 0
        %4568 = vmatpush1.bf16.msra.mxu0 0
        %4569 = vmatprep.subr.bf16.mxu0 0
        %4570 = vmatpush1.bf16.msra.mxu0 0
        %4571 = vmatprep.mubr.bf16.mxu0 0
        %4572 = vmatmul.mubr.bf16.gmra.mrb[0].mxu0 %v4431
        %v4573 = vpop.f32.mrb[0].mxu0
        %v4574 = vadd.f32 0.0, %v4573
        %v4575 = vpop.f32.mrb[0].mxu0
        %v4576 = vadd.f32 0.0, %v4575
        %v4577 = vpop.f32.mrb[0].mxu0
        %v4578 = vpop.f32.mrb[0].mxu0
        %4579 = vdwg.mxu0
        %4580 = vmatprep.subr.bf16.mxu0 %v4455
        %4581 = vmatpush1.bf16.msra.mxu0 %v4452
        %4582 = vmatprep.subr.bf16.mxu0 0
        %4583 = vmatpush1.bf16.msra.mxu0 0
        %4584 = vmatprep.subr.bf16.mxu0 0
        %4585 = vmatpush1.bf16.msra.mxu0 0
        %4586 = vmatprep.subr.bf16.mxu0 0
        %4587 = vmatpush1.bf16.msra.mxu0 0
        %4588 = vmatprep.subr.bf16.mxu0 0
        %4589 = vmatpush1.bf16.msra.mxu0 0
        %4590 = vmatprep.subr.bf16.mxu0 0
        %4591 = vmatpush1.bf16.msra.mxu0 0
        %4592 = vmatprep.subr.bf16.mxu0 0
        %4593 = vmatpush1.bf16.msra.mxu0 0
        %4594 = vmatprep.subr.bf16.mxu0 0
        %4595 = vmatpush1.bf16.msra.mxu0 0
        %4596 = vmatprep.subr.bf16.mxu0 0
        %4597 = vmatpush1.bf16.msra.mxu0 0
        %4598 = vmatprep.subr.bf16.mxu0 0
        %4599 = vmatpush1.bf16.msra.mxu0 0
        %4600 = vmatprep.subr.bf16.mxu0 0
        %4601 = vmatpush1.bf16.msra.mxu0 0
        %4602 = vmatprep.subr.bf16.mxu0 0
        %4603 = vmatpush1.bf16.msra.mxu0 0
        %4604 = vmatprep.subr.bf16.mxu0 0
        %4605 = vmatpush1.bf16.msra.mxu0 0
        %4606 = vmatprep.subr.bf16.mxu0 0
        %4607 = vmatpush1.bf16.msra.mxu0 0
        %4608 = vmatprep.subr.bf16.mxu0 0
        %4609 = vmatpush1.bf16.msra.mxu0 0
        %4610 = vmatprep.subr.bf16.mxu0 0
        %4611 = vmatpush1.bf16.msra.mxu0 0
        %4612 = vmatprep.mubr.bf16.mxu0 0
        %4613 = vmatmul.mubr.bf16.gmra.mrb[0].mxu0 %v4431
        %v4614 = vpop.f32.mrb[0].mxu0
        %v4615 = vadd.f32 0.0, %v4614
        %v4616 = vpop.f32.mrb[0].mxu0
        %v4617 = vadd.f32 0.0, %v4616
        %v4618 = vpop.f32.mrb[0].mxu0
        %v4619 = vpop.f32.mrb[0].mxu0
        %4620 = vdwg.mxu0
        %v4621 = vadd.f32 %v4393, %v4492
        %v4622 = vadd.f32 %v4394, %v4494
        %v4623 = vadd.f32 %v4395, %v4533
        %v4624 = vadd.f32 %v4396, %v4535
        %v4625 = vadd.f32 %v4397, %v4574
        %v4626 = vadd.f32 %v4398, %v4576
        %v4627 = vadd.f32 %v4399, %v4615
        %v4628 = vadd.f32 %v4400, %v4617
        %s4629 = scalar_lea.vmem %s1, 38
        %v4630 = vld [vmem:[%s4629] sm:$0x3]
        %4631 = vrot.lane.b32.xlu0 %v315, 38
        %v4632 = vpop.permute.xlu0 %4631
        %4633 = vrot.lane.b32.xlu0 %v314, 38
        %v4634 = vpop.permute.xlu0 %4633
        %4635 = vrot.lane.b32.xlu0 %v316, 38
        %v4636 = vpop.permute.xlu0 %4635
        %4637 = vrot.lane.b32.xlu0 %v324, 38
        %v4638 = vpop.permute.xlu0 %4637
        %4639 = vrot.lane.b32.xlu0 %v332, 38
        %v4640 = vpop.permute.xlu0 %4639
        %4641 = vrot.lane.b32.xlu0 %v331, 38
        %v4642 = vpop.permute.xlu0 %4641
        %4643 = vrot.lane.b32.xlu0 %v333, 38
        %v4644 = vpop.permute.xlu0 %4643
        %4645 = vrot.lane.b32.xlu0 %v340, 38
        %v4646 = vpop.permute.xlu0 %4645
        %4647 = vrot.lane.b32.xlu0 %v3490, 38
        %v4648 = vpop.permute.xlu0 %4647
        %vm4649 = vcmask 310272
        %v4650 = vsel %vm4649, %v4632, %v4634
        %v4651 = vsel %vm4649, %v4634, %v4636
        %v4652 = vsel %vm4649, %v4636, %v4638
        %v4653 = vsel %vm4649, %v4638, %v4640
        %v4654 = vsel %vm4649, %v4640, %v4642
        %v4655 = vsel %vm4649, %v4642, %v4644
        %v4656 = vsel %vm4649, %v4644, %v4646
        %v4657 = vsel %vm4649, %v4646, %v4648
        %v4659 = vsel %vm368, %v4630, 0
        %v4662 = vsel %vm372, %v4650, 0
        %v4665 = vsel %vm372, %v4651, 0
        %v4668 = vsel %vm372, %v4652, 0
        %v4671 = vsel %vm372, %v4653, 0
        %v4674 = vsel %vm372, %v4654, 0
        %v4677 = vsel %vm372, %v4655, 0
        %v4680 = vsel %vm372, %v4656, 0
        %v4683 = vsel %vm372, %v4657, 0
        %4685 = vmatprep.subr.bf16.mxu0 %v4665
        %4686 = vmatpush1.bf16.msra.mxu0 %v4662
        %4687 = vmatprep.subr.bf16.mxu0 0
        %4688 = vmatpush1.bf16.msra.mxu0 0
        %4689 = vmatprep.subr.bf16.mxu0 0
        %4690 = vmatpush1.bf16.msra.mxu0 0
        %4691 = vmatprep.subr.bf16.mxu0 0
        %4692 = vmatpush1.bf16.msra.mxu0 0
        %4693 = vmatprep.subr.bf16.mxu0 0
        %4694 = vmatpush1.bf16.msra.mxu0 0
        %4695 = vmatprep.subr.bf16.mxu0 0
        %4696 = vmatpush1.bf16.msra.mxu0 0
        %4697 = vmatprep.subr.bf16.mxu0 0
        %4698 = vmatpush1.bf16.msra.mxu0 0
        %4699 = vmatprep.subr.bf16.mxu0 0
        %4700 = vmatpush1.bf16.msra.mxu0 0
        %4701 = vmatprep.subr.bf16.mxu0 0
        %4702 = vmatpush1.bf16.msra.mxu0 0
        %4703 = vmatprep.subr.bf16.mxu0 0
        %4704 = vmatpush1.bf16.msra.mxu0 0
        %4705 = vmatprep.subr.bf16.mxu0 0
        %4706 = vmatpush1.bf16.msra.mxu0 0
        %4707 = vmatprep.subr.bf16.mxu0 0
        %4708 = vmatpush1.bf16.msra.mxu0 0
        %4709 = vmatprep.subr.bf16.mxu0 0
        %4710 = vmatpush1.bf16.msra.mxu0 0
        %4711 = vmatprep.subr.bf16.mxu0 0
        %4712 = vmatpush1.bf16.msra.mxu0 0
        %4713 = vmatprep.subr.bf16.mxu0 0
        %4714 = vmatpush1.bf16.msra.mxu0 0
        %4715 = vmatprep.subr.bf16.mxu0 0
        %4716 = vmatpush1.bf16.msra.mxu0 0
        %4717 = vmatprep.mubr.bf16.mxu0 0
        %4718 = vmatmul.mubr.bf16.gmra.mrb[0].mxu0 %v4659
        %v4719 = vpop.f32.mrb[0].mxu0
        %v4720 = vadd.f32 0.0, %v4719
        %v4721 = vpop.f32.mrb[0].mxu0
        %v4722 = vadd.f32 0.0, %v4721
        %v4723 = vpop.f32.mrb[0].mxu0
        %v4724 = vpop.f32.mrb[0].mxu0
        %4725 = vdwg.mxu0
        %4726 = vmatprep.subr.bf16.mxu0 %v4671
        %4727 = vmatpush1.bf16.msra.mxu0 %v4668
        %4728 = vmatprep.subr.bf16.mxu0 0
        %4729 = vmatpush1.bf16.msra.mxu0 0
        %4730 = vmatprep.subr.bf16.mxu0 0
        %4731 = vmatpush1.bf16.msra.mxu0 0
        %4732 = vmatprep.subr.bf16.mxu0 0
        %4733 = vmatpush1.bf16.msra.mxu0 0
        %4734 = vmatprep.subr.bf16.mxu0 0
        %4735 = vmatpush1.bf16.msra.mxu0 0
        %4736 = vmatprep.subr.bf16.mxu0 0
        %4737 = vmatpush1.bf16.msra.mxu0 0
        %4738 = vmatprep.subr.bf16.mxu0 0
        %4739 = vmatpush1.bf16.msra.mxu0 0
        %4740 = vmatprep.subr.bf16.mxu0 0
        %4741 = vmatpush1.bf16.msra.mxu0 0
        %4742 = vmatprep.subr.bf16.mxu0 0
        %4743 = vmatpush1.bf16.msra.mxu0 0
        %4744 = vmatprep.subr.bf16.mxu0 0
        %4745 = vmatpush1.bf16.msra.mxu0 0
        %4746 = vmatprep.subr.bf16.mxu0 0
        %4747 = vmatpush1.bf16.msra.mxu0 0
        %4748 = vmatprep.subr.bf16.mxu0 0
        %4749 = vmatpush1.bf16.msra.mxu0 0
        %4750 = vmatprep.subr.bf16.mxu0 0
        %4751 = vmatpush1.bf16.msra.mxu0 0
        %4752 = vmatprep.subr.bf16.mxu0 0
        %4753 = vmatpush1.bf16.msra.mxu0 0
        %4754 = vmatprep.subr.bf16.mxu0 0
        %4755 = vmatpush1.bf16.msra.mxu0 0
        %4756 = vmatprep.subr.bf16.mxu0 0
        %4757 = vmatpush1.bf16.msra.mxu0 0
        %4758 = vmatprep.mubr.bf16.mxu0 0
        %4759 = vmatmul.mubr.bf16.gmra.mrb[0].mxu0 %v4659
        %v4760 = vpop.f32.mrb[0].mxu0
        %v4761 = vadd.f32 0.0, %v4760
        %v4762 = vpop.f32.mrb[0].mxu0
        %v4763 = vadd.f32 0.0, %v4762
        %v4764 = vpop.f32.mrb[0].mxu0
        %v4765 = vpop.f32.mrb[0].mxu0
        %4766 = vdwg.mxu0
        %4767 = vmatprep.subr.bf16.mxu0 %v4677
        %4768 = vmatpush1.bf16.msra.mxu0 %v4674
        %4769 = vmatprep.subr.bf16.mxu0 0
        %4770 = vmatpush1.bf16.msra.mxu0 0
        %4771 = vmatprep.subr.bf16.mxu0 0
        %4772 = vmatpush1.bf16.msra.mxu0 0
        %4773 = vmatprep.subr.bf16.mxu0 0
        %4774 = vmatpush1.bf16.msra.mxu0 0
        %4775 = vmatprep.subr.bf16.mxu0 0
        %4776 = vmatpush1.bf16.msra.mxu0 0
        %4777 = vmatprep.subr.bf16.mxu0 0
        %4778 = vmatpush1.bf16.msra.mxu0 0
        %4779 = vmatprep.subr.bf16.mxu0 0
        %4780 = vmatpush1.bf16.msra.mxu0 0
        %4781 = vmatprep.subr.bf16.mxu0 0
        %4782 = vmatpush1.bf16.msra.mxu0 0
        %4783 = vmatprep.subr.bf16.mxu0 0
        %4784 = vmatpush1.bf16.msra.mxu0 0
        %4785 = vmatprep.subr.bf16.mxu0 0
        %4786 = vmatpush1.bf16.msra.mxu0 0
        %4787 = vmatprep.subr.bf16.mxu0 0
        %4788 = vmatpush1.bf16.msra.mxu0 0
        %4789 = vmatprep.subr.bf16.mxu0 0
        %4790 = vmatpush1.bf16.msra.mxu0 0
        %4791 = vmatprep.subr.bf16.mxu0 0
        %4792 = vmatpush1.bf16.msra.mxu0 0
        %4793 = vmatprep.subr.bf16.mxu0 0
        %4794 = vmatpush1.bf16.msra.mxu0 0
        %4795 = vmatprep.subr.bf16.mxu0 0
        %4796 = vmatpush1.bf16.msra.mxu0 0
        %4797 = vmatprep.subr.bf16.mxu0 0
        %4798 = vmatpush1.bf16.msra.mxu0 0
        %4799 = vmatprep.mubr.bf16.mxu0 0
        %4800 = vmatmul.mubr.bf16.gmra.mrb[0].mxu0 %v4659
        %v4801 = vpop.f32.mrb[0].mxu0
        %v4802 = vadd.f32 0.0, %v4801
        %v4803 = vpop.f32.mrb[0].mxu0
        %v4804 = vadd.f32 0.0, %v4803
        %v4805 = vpop.f32.mrb[0].mxu0
        %v4806 = vpop.f32.mrb[0].mxu0
        %4807 = vdwg.mxu0
        %4808 = vmatprep.subr.bf16.mxu0 %v4683
        %4809 = vmatpush1.bf16.msra.mxu0 %v4680
        %4810 = vmatprep.subr.bf16.mxu0 0
        %4811 = vmatpush1.bf16.msra.mxu0 0
        %4812 = vmatprep.subr.bf16.mxu0 0
        %4813 = vmatpush1.bf16.msra.mxu0 0
        %4814 = vmatprep.subr.bf16.mxu0 0
        %4815 = vmatpush1.bf16.msra.mxu0 0
        %4816 = vmatprep.subr.bf16.mxu0 0
        %4817 = vmatpush1.bf16.msra.mxu0 0
        %4818 = vmatprep.subr.bf16.mxu0 0
        %4819 = vmatpush1.bf16.msra.mxu0 0
        %4820 = vmatprep.subr.bf16.mxu0 0
        %4821 = vmatpush1.bf16.msra.mxu0 0
        %4822 = vmatprep.subr.bf16.mxu0 0
        %4823 = vmatpush1.bf16.msra.mxu0 0
        %4824 = vmatprep.subr.bf16.mxu0 0
        %4825 = vmatpush1.bf16.msra.mxu0 0
        %4826 = vmatprep.subr.bf16.mxu0 0
        %4827 = vmatpush1.bf16.msra.mxu0 0
        %4828 = vmatprep.subr.bf16.mxu0 0
        %4829 = vmatpush1.bf16.msra.mxu0 0
        %4830 = vmatprep.subr.bf16.mxu0 0
        %4831 = vmatpush1.bf16.msra.mxu0 0
        %4832 = vmatprep.subr.bf16.mxu0 0
        %4833 = vmatpush1.bf16.msra.mxu0 0
        %4834 = vmatprep.subr.bf16.mxu0 0
        %4835 = vmatpush1.bf16.msra.mxu0 0
        %4836 = vmatprep.subr.bf16.mxu0 0
        %4837 = vmatpush1.bf16.msra.mxu0 0
        %4838 = vmatprep.subr.bf16.mxu0 0
        %4839 = vmatpush1.bf16.msra.mxu0 0
        %4840 = vmatprep.mubr.bf16.mxu0 0
        %4841 = vmatmul.mubr.bf16.gmra.mrb[0].mxu0 %v4659
        %v4842 = vpop.f32.mrb[0].mxu0
        %v4843 = vadd.f32 0.0, %v4842
        %v4844 = vpop.f32.mrb[0].mxu0
        %v4845 = vadd.f32 0.0, %v4844
        %v4846 = vpop.f32.mrb[0].mxu0
        %v4847 = vpop.f32.mrb[0].mxu0
        %4848 = vdwg.mxu0
        %v4849 = vadd.f32 %v4621, %v4720
        %v4850 = vadd.f32 %v4622, %v4722
        %v4851 = vadd.f32 %v4623, %v4761
        %v4852 = vadd.f32 %v4624, %v4763
        %v4853 = vadd.f32 %v4625, %v4802
        %v4854 = vadd.f32 %v4626, %v4804
        %v4855 = vadd.f32 %v4627, %v4843
        %v4856 = vadd.f32 %v4628, %v4845
        %s4857 = scalar_lea.vmem %s1, 40
        %v4858 = vld [vmem:[%s4857] sm:$0x3]
        %4859 = vrot.lane.b32.xlu0 %v315, 37
        %v4860 = vpop.permute.xlu0 %4859
        %4861 = vrot.lane.b32.xlu0 %v314, 37
        %v4862 = vpop.permute.xlu0 %4861
        %4863 = vrot.lane.b32.xlu0 %v316, 37
        %v4864 = vpop.permute.xlu0 %4863
        %4865 = vrot.lane.b32.xlu0 %v324, 37
        %v4866 = vpop.permute.xlu0 %4865
        %4867 = vrot.lane.b32.xlu0 %v332, 37
        %v4868 = vpop.permute.xlu0 %4867
        %4869 = vrot.lane.b32.xlu0 %v331, 37
        %v4870 = vpop.permute.xlu0 %4869
        %4871 = vrot.lane.b32.xlu0 %v333, 37
        %v4872 = vpop.permute.xlu0 %4871
        %4873 = vrot.lane.b32.xlu0 %v340, 37
        %v4874 = vpop.permute.xlu0 %4873
        %4875 = vrot.lane.b32.xlu0 %v3490, 37
        %v4876 = vpop.permute.xlu0 %4875
        %vm4877 = vcmask 302080
        %v4878 = vsel %vm4877, %v4860, %v4862
        %v4879 = vsel %vm4877, %v4862, %v4864
        %v4880 = vsel %vm4877, %v4864, %v4866
        %v4881 = vsel %vm4877, %v4866, %v4868
        %v4882 = vsel %vm4877, %v4868, %v4870
        %v4883 = vsel %vm4877, %v4870, %v4872
        %v4884 = vsel %vm4877, %v4872, %v4874
        %v4885 = vsel %vm4877, %v4874, %v4876
        %v4887 = vsel %vm368, %v4858, 0
        %v4890 = vsel %vm372, %v4878, 0
        %v4893 = vsel %vm372, %v4879, 0
        %v4896 = vsel %vm372, %v4880, 0
        %v4899 = vsel %vm372, %v4881, 0
        %v4902 = vsel %vm372, %v4882, 0
        %v4905 = vsel %vm372, %v4883, 0
        %v4908 = vsel %vm372, %v4884, 0
        %v4911 = vsel %vm372, %v4885, 0
        %4913 = vmatprep.subr.bf16.mxu0 %v4893
        %4914 = vmatpush1.bf16.msra.mxu0 %v4890
        %4915 = vmatprep.subr.bf16.mxu0 0
        %4916 = vmatpush1.bf16.msra.mxu0 0
        %4917 = vmatprep.subr.bf16.mxu0 0
        %4918 = vmatpush1.bf16.msra.mxu0 0
        %4919 = vmatprep.subr.bf16.mxu0 0
        %4920 = vmatpush1.bf16.msra.mxu0 0
        %4921 = vmatprep.subr.bf16.mxu0 0
        %4922 = vmatpush1.bf16.msra.mxu0 0
        %4923 = vmatprep.subr.bf16.mxu0 0
        %4924 = vmatpush1.bf16.msra.mxu0 0
        %4925 = vmatprep.subr.bf16.mxu0 0
        %4926 = vmatpush1.bf16.msra.mxu0 0
        %4927 = vmatprep.subr.bf16.mxu0 0
        %4928 = vmatpush1.bf16.msra.mxu0 0
        %4929 = vmatprep.subr.bf16.mxu0 0
        %4930 = vmatpush1.bf16.msra.mxu0 0
        %4931 = vmatprep.subr.bf16.mxu0 0
        %4932 = vmatpush1.bf16.msra.mxu0 0
        %4933 = vmatprep.subr.bf16.mxu0 0
        %4934 = vmatpush1.bf16.msra.mxu0 0
        %4935 = vmatprep.subr.bf16.mxu0 0
        %4936 = vmatpush1.bf16.msra.mxu0 0
        %4937 = vmatprep.subr.bf16.mxu0 0
        %4938 = vmatpush1.bf16.msra.mxu0 0
        %4939 = vmatprep.subr.bf16.mxu0 0
        %4940 = vmatpush1.bf16.msra.mxu0 0
        %4941 = vmatprep.subr.bf16.mxu0 0
        %4942 = vmatpush1.bf16.msra.mxu0 0
        %4943 = vmatprep.subr.bf16.mxu0 0
        %4944 = vmatpush1.bf16.msra.mxu0 0
        %4945 = vmatprep.mubr.bf16.mxu0 0
        %4946 = vmatmul.mubr.bf16.gmra.mrb[0].mxu0 %v4887
        %v4947 = vpop.f32.mrb[0].mxu0
        %v4948 = vadd.f32 0.0, %v4947
        %v4949 = vpop.f32.mrb[0].mxu0
        %v4950 = vadd.f32 0.0, %v4949
        %v4951 = vpop.f32.mrb[0].mxu0
        %v4952 = vpop.f32.mrb[0].mxu0
        %4953 = vdwg.mxu0
        %4954 = vmatprep.subr.bf16.mxu0 %v4899
        %4955 = vmatpush1.bf16.msra.mxu0 %v4896
        %4956 = vmatprep.subr.bf16.mxu0 0
        %4957 = vmatpush1.bf16.msra.mxu0 0
        %4958 = vmatprep.subr.bf16.mxu0 0
        %4959 = vmatpush1.bf16.msra.mxu0 0
        %4960 = vmatprep.subr.bf16.mxu0 0
        %4961 = vmatpush1.bf16.msra.mxu0 0
        %4962 = vmatprep.subr.bf16.mxu0 0
        %4963 = vmatpush1.bf16.msra.mxu0 0
        %4964 = vmatprep.subr.bf16.mxu0 0
        %4965 = vmatpush1.bf16.msra.mxu0 0
        %4966 = vmatprep.subr.bf16.mxu0 0
        %4967 = vmatpush1.bf16.msra.mxu0 0
        %4968 = vmatprep.subr.bf16.mxu0 0
        %4969 = vmatpush1.bf16.msra.mxu0 0
        %4970 = vmatprep.subr.bf16.mxu0 0
        %4971 = vmatpush1.bf16.msra.mxu0 0
        %4972 = vmatprep.subr.bf16.mxu0 0
        %4973 = vmatpush1.bf16.msra.mxu0 0
        %4974 = vmatprep.subr.bf16.mxu0 0
        %4975 = vmatpush1.bf16.msra.mxu0 0
        %4976 = vmatprep.subr.bf16.mxu0 0
        %4977 = vmatpush1.bf16.msra.mxu0 0
        %4978 = vmatprep.subr.bf16.mxu0 0
        %4979 = vmatpush1.bf16.msra.mxu0 0
        %4980 = vmatprep.subr.bf16.mxu0 0
        %4981 = vmatpush1.bf16.msra.mxu0 0
        %4982 = vmatprep.subr.bf16.mxu0 0
        %4983 = vmatpush1.bf16.msra.mxu0 0
        %4984 = vmatprep.subr.bf16.mxu0 0
        %4985 = vmatpush1.bf16.msra.mxu0 0
        %4986 = vmatprep.mubr.bf16.mxu0 0
        %4987 = vmatmul.mubr.bf16.gmra.mrb[0].mxu0 %v4887
        %v4988 = vpop.f32.mrb[0].mxu0
        %v4989 = vadd.f32 0.0, %v4988
        %v4990 = vpop.f32.mrb[0].mxu0
        %v4991 = vadd.f32 0.0, %v4990
        %v4992 = vpop.f32.mrb[0].mxu0
        %v4993 = vpop.f32.mrb[0].mxu0
        %4994 = vdwg.mxu0
        %4995 = vmatprep.subr.bf16.mxu0 %v4905
        %4996 = vmatpush1.bf16.msra.mxu0 %v4902
        %4997 = vmatprep.subr.bf16.mxu0 0
        %4998 = vmatpush1.bf16.msra.mxu0 0
        %4999 = vmatprep.subr.bf16.mxu0 0
        %5000 = vmatpush1.bf16.msra.mxu0 0
        %5001 = vmatprep.subr.bf16.mxu0 0
        %5002 = vmatpush1.bf16.msra.mxu0 0
        %5003 = vmatprep.subr.bf16.mxu0 0
        %5004 = vmatpush1.bf16.msra.mxu0 0
        %5005 = vmatprep.subr.bf16.mxu0 0
        %5006 = vmatpush1.bf16.msra.mxu0 0
        %5007 = vmatprep.subr.bf16.mxu0 0
        %5008 = vmatpush1.bf16.msra.mxu0 0
        %5009 = vmatprep.subr.bf16.mxu0 0
        %5010 = vmatpush1.bf16.msra.mxu0 0
        %5011 = vmatprep.subr.bf16.mxu0 0
        %5012 = vmatpush1.bf16.msra.mxu0 0
        %5013 = vmatprep.subr.bf16.mxu0 0
        %5014 = vmatpush1.bf16.msra.mxu0 0
        %5015 = vmatprep.subr.bf16.mxu0 0
        %5016 = vmatpush1.bf16.msra.mxu0 0
        %5017 = vmatprep.subr.bf16.mxu0 0
        %5018 = vmatpush1.bf16.msra.mxu0 0
        %5019 = vmatprep.subr.bf16.mxu0 0
        %5020 = vmatpush1.bf16.msra.mxu0 0
        %5021 = vmatprep.subr.bf16.mxu0 0
        %5022 = vmatpush1.bf16.msra.mxu0 0
        %5023 = vmatprep.subr.bf16.mxu0 0
        %5024 = vmatpush1.bf16.msra.mxu0 0
        %5025 = vmatprep.subr.bf16.mxu0 0
        %5026 = vmatpush1.bf16.msra.mxu0 0
        %5027 = vmatprep.mubr.bf16.mxu0 0
        %5028 = vmatmul.mubr.bf16.gmra.mrb[0].mxu0 %v4887
        %v5029 = vpop.f32.mrb[0].mxu0
        %v5030 = vadd.f32 0.0, %v5029
        %v5031 = vpop.f32.mrb[0].mxu0
        %v5032 = vadd.f32 0.0, %v5031
        %v5033 = vpop.f32.mrb[0].mxu0
        %v5034 = vpop.f32.mrb[0].mxu0
        %5035 = vdwg.mxu0
        %5036 = vmatprep.subr.bf16.mxu0 %v4911
        %5037 = vmatpush1.bf16.msra.mxu0 %v4908
        %5038 = vmatprep.subr.bf16.mxu0 0
        %5039 = vmatpush1.bf16.msra.mxu0 0
        %5040 = vmatprep.subr.bf16.mxu0 0
        %5041 = vmatpush1.bf16.msra.mxu0 0
        %5042 = vmatprep.subr.bf16.mxu0 0
        %5043 = vmatpush1.bf16.msra.mxu0 0
        %5044 = vmatprep.subr.bf16.mxu0 0
        %5045 = vmatpush1.bf16.msra.mxu0 0
        %5046 = vmatprep.subr.bf16.mxu0 0
        %5047 = vmatpush1.bf16.msra.mxu0 0
        %5048 = vmatprep.subr.bf16.mxu0 0
        %5049 = vmatpush1.bf16.msra.mxu0 0
        %5050 = vmatprep.subr.bf16.mxu0 0
        %5051 = vmatpush1.bf16.msra.mxu0 0
        %5052 = vmatprep.subr.bf16.mxu0 0
        %5053 = vmatpush1.bf16.msra.mxu0 0
        %5054 = vmatprep.subr.bf16.mxu0 0
        %5055 = vmatpush1.bf16.msra.mxu0 0
        %5056 = vmatprep.subr.bf16.mxu0 0
        %5057 = vmatpush1.bf16.msra.mxu0 0
        %5058 = vmatprep.subr.bf16.mxu0 0
        %5059 = vmatpush1.bf16.msra.mxu0 0
        %5060 = vmatprep.subr.bf16.mxu0 0
        %5061 = vmatpush1.bf16.msra.mxu0 0
        %5062 = vmatprep.subr.bf16.mxu0 0
        %5063 = vmatpush1.bf16.msra.mxu0 0
        %5064 = vmatprep.subr.bf16.mxu0 0
        %5065 = vmatpush1.bf16.msra.mxu0 0
        %5066 = vmatprep.subr.bf16.mxu0 0
        %5067 = vmatpush1.bf16.msra.mxu0 0
        %5068 = vmatprep.mubr.bf16.mxu0 0
        %5069 = vmatmul.mubr.bf16.gmra.mrb[0].mxu0 %v4887
        %v5070 = vpop.f32.mrb[0].mxu0
        %v5071 = vadd.f32 0.0, %v5070
        %v5072 = vpop.f32.mrb[0].mxu0
        %v5073 = vadd.f32 0.0, %v5072
        %v5074 = vpop.f32.mrb[0].mxu0
        %v5075 = vpop.f32.mrb[0].mxu0
        %5076 = vdwg.mxu0
        %v5077 = vadd.f32 %v4849, %v4948
        %v5078 = vadd.f32 %v4850, %v4950
        %v5079 = vadd.f32 %v4851, %v4989
        %v5080 = vadd.f32 %v4852, %v4991
        %v5081 = vadd.f32 %v4853, %v5030
        %v5082 = vadd.f32 %v4854, %v5032
        %v5083 = vadd.f32 %v4855, %v5071
        %v5084 = vadd.f32 %v4856, %v5073
        %s5085 = scalar_lea.vmem %s1, 42
        %v5086 = vld [vmem:[%s5085] sm:$0x3]
        %5087 = vrot.lane.b32.xlu0 %v315, 29
        %v5088 = vpop.permute.xlu0 %5087
        %5089 = vrot.lane.b32.xlu0 %v314, 29
        %v5090 = vpop.permute.xlu0 %5089
        %5091 = vrot.lane.b32.xlu0 %v316, 29
        %v5092 = vpop.permute.xlu0 %5091
        %5093 = vrot.lane.b32.xlu0 %v324, 29
        %v5094 = vpop.permute.xlu0 %5093
        %5095 = vrot.lane.b32.xlu0 %v332, 29
        %v5096 = vpop.permute.xlu0 %5095
        %5097 = vrot.lane.b32.xlu0 %v331, 29
        %v5098 = vpop.permute.xlu0 %5097
        %5099 = vrot.lane.b32.xlu0 %v333, 29
        %v5100 = vpop.permute.xlu0 %5099
        %5101 = vrot.lane.b32.xlu0 %v340, 29
        %v5102 = vpop.permute.xlu0 %5101
        %5103 = vrot.lane.b32.xlu0 %v3490, 29
        %v5104 = vpop.permute.xlu0 %5103
        %vm5105 = vcmask 236544
        %v5106 = vsel %vm5105, %v5088, %v5090
        %v5107 = vsel %vm5105, %v5090, %v5092
        %v5108 = vsel %vm5105, %v5092, %v5094
        %v5109 = vsel %vm5105, %v5094, %v5096
        %v5110 = vsel %vm5105, %v5096, %v5098
        %v5111 = vsel %vm5105, %v5098, %v5100
        %v5112 = vsel %vm5105, %v5100, %v5102
        %v5113 = vsel %vm5105, %v5102, %v5104
        %v5115 = vsel %vm368, %v5086, 0
        %v5118 = vsel %vm372, %v5106, 0
        %v5121 = vsel %vm372, %v5107, 0
        %v5124 = vsel %vm372, %v5108, 0
        %v5127 = vsel %vm372, %v5109, 0
        %v5130 = vsel %vm372, %v5110, 0
        %v5133 = vsel %vm372, %v5111, 0
        %v5136 = vsel %vm372, %v5112, 0
        %v5139 = vsel %vm372, %v5113, 0
        %5141 = vmatprep.subr.bf16.mxu0 %v5121
        %5142 = vmatpush1.bf16.msra.mxu0 %v5118
        %5143 = vmatprep.subr.bf16.mxu0 0
        %5144 = vmatpush1.bf16.msra.mxu0 0
        %5145 = vmatprep.subr.bf16.mxu0 0
        %5146 = vmatpush1.bf16.msra.mxu0 0
        %5147 = vmatprep.subr.bf16.mxu0 0
        %5148 = vmatpush1.bf16.msra.mxu0 0
        %5149 = vmatprep.subr.bf16.mxu0 0
        %5150 = vmatpush1.bf16.msra.mxu0 0
        %5151 = vmatprep.subr.bf16.mxu0 0
        %5152 = vmatpush1.bf16.msra.mxu0 0
        %5153 = vmatprep.subr.bf16.mxu0 0
        %5154 = vmatpush1.bf16.msra.mxu0 0
        %5155 = vmatprep.subr.bf16.mxu0 0
        %5156 = vmatpush1.bf16.msra.mxu0 0
        %5157 = vmatprep.subr.bf16.mxu0 0
        %5158 = vmatpush1.bf16.msra.mxu0 0
        %5159 = vmatprep.subr.bf16.mxu0 0
        %5160 = vmatpush1.bf16.msra.mxu0 0
        %5161 = vmatprep.subr.bf16.mxu0 0
        %5162 = vmatpush1.bf16.msra.mxu0 0
        %5163 = vmatprep.subr.bf16.mxu0 0
        %5164 = vmatpush1.bf16.msra.mxu0 0
        %5165 = vmatprep.subr.bf16.mxu0 0
        %5166 = vmatpush1.bf16.msra.mxu0 0
        %5167 = vmatprep.subr.bf16.mxu0 0
        %5168 = vmatpush1.bf16.msra.mxu0 0
        %5169 = vmatprep.subr.bf16.mxu0 0
        %5170 = vmatpush1.bf16.msra.mxu0 0
        %5171 = vmatprep.subr.bf16.mxu0 0
        %5172 = vmatpush1.bf16.msra.mxu0 0
        %5173 = vmatprep.mubr.bf16.mxu0 0
        %5174 = vmatmul.mubr.bf16.gmra.mrb[0].mxu0 %v5115
        %v5175 = vpop.f32.mrb[0].mxu0
        %v5176 = vadd.f32 0.0, %v5175
        %v5177 = vpop.f32.mrb[0].mxu0
        %v5178 = vadd.f32 0.0, %v5177
        %v5179 = vpop.f32.mrb[0].mxu0
        %v5180 = vpop.f32.mrb[0].mxu0
        %5181 = vdwg.mxu0
        %5182 = vmatprep.subr.bf16.mxu0 %v5127
        %5183 = vmatpush1.bf16.msra.mxu0 %v5124
        %5184 = vmatprep.subr.bf16.mxu0 0
        %5185 = vmatpush1.bf16.msra.mxu0 0
        %5186 = vmatprep.subr.bf16.mxu0 0
        %5187 = vmatpush1.bf16.msra.mxu0 0
        %5188 = vmatprep.subr.bf16.mxu0 0
        %5189 = vmatpush1.bf16.msra.mxu0 0
        %5190 = vmatprep.subr.bf16.mxu0 0
        %5191 = vmatpush1.bf16.msra.mxu0 0
        %5192 = vmatprep.subr.bf16.mxu0 0
        %5193 = vmatpush1.bf16.msra.mxu0 0
        %5194 = vmatprep.subr.bf16.mxu0 0
        %5195 = vmatpush1.bf16.msra.mxu0 0
        %5196 = vmatprep.subr.bf16.mxu0 0
        %5197 = vmatpush1.bf16.msra.mxu0 0
        %5198 = vmatprep.subr.bf16.mxu0 0
        %5199 = vmatpush1.bf16.msra.mxu0 0
        %5200 = vmatprep.subr.bf16.mxu0 0
        %5201 = vmatpush1.bf16.msra.mxu0 0
        %5202 = vmatprep.subr.bf16.mxu0 0
        %5203 = vmatpush1.bf16.msra.mxu0 0
        %5204 = vmatprep.subr.bf16.mxu0 0
        %5205 = vmatpush1.bf16.msra.mxu0 0
        %5206 = vmatprep.subr.bf16.mxu0 0
        %5207 = vmatpush1.bf16.msra.mxu0 0
        %5208 = vmatprep.subr.bf16.mxu0 0
        %5209 = vmatpush1.bf16.msra.mxu0 0
        %5210 = vmatprep.subr.bf16.mxu0 0
        %5211 = vmatpush1.bf16.msra.mxu0 0
        %5212 = vmatprep.subr.bf16.mxu0 0
        %5213 = vmatpush1.bf16.msra.mxu0 0
        %5214 = vmatprep.mubr.bf16.mxu0 0
        %5215 = vmatmul.mubr.bf16.gmra.mrb[0].mxu0 %v5115
        %v5216 = vpop.f32.mrb[0].mxu0
        %v5217 = vadd.f32 0.0, %v5216
        %v5218 = vpop.f32.mrb[0].mxu0
        %v5219 = vadd.f32 0.0, %v5218
        %v5220 = vpop.f32.mrb[0].mxu0
        %v5221 = vpop.f32.mrb[0].mxu0
        %5222 = vdwg.mxu0
        %5223 = vmatprep.subr.bf16.mxu0 %v5133
        %5224 = vmatpush1.bf16.msra.mxu0 %v5130
        %5225 = vmatprep.subr.bf16.mxu0 0
        %5226 = vmatpush1.bf16.msra.mxu0 0
        %5227 = vmatprep.subr.bf16.mxu0 0
        %5228 = vmatpush1.bf16.msra.mxu0 0
        %5229 = vmatprep.subr.bf16.mxu0 0
        %5230 = vmatpush1.bf16.msra.mxu0 0
        %5231 = vmatprep.subr.bf16.mxu0 0
        %5232 = vmatpush1.bf16.msra.mxu0 0
        %5233 = vmatprep.subr.bf16.mxu0 0
        %5234 = vmatpush1.bf16.msra.mxu0 0
        %5235 = vmatprep.subr.bf16.mxu0 0
        %5236 = vmatpush1.bf16.msra.mxu0 0
        %5237 = vmatprep.subr.bf16.mxu0 0
        %5238 = vmatpush1.bf16.msra.mxu0 0
        %5239 = vmatprep.subr.bf16.mxu0 0
        %5240 = vmatpush1.bf16.msra.mxu0 0
        %5241 = vmatprep.subr.bf16.mxu0 0
        %5242 = vmatpush1.bf16.msra.mxu0 0
        %5243 = vmatprep.subr.bf16.mxu0 0
        %5244 = vmatpush1.bf16.msra.mxu0 0
        %5245 = vmatprep.subr.bf16.mxu0 0
        %5246 = vmatpush1.bf16.msra.mxu0 0
        %5247 = vmatprep.subr.bf16.mxu0 0
        %5248 = vmatpush1.bf16.msra.mxu0 0
        %5249 = vmatprep.subr.bf16.mxu0 0
        %5250 = vmatpush1.bf16.msra.mxu0 0
        %5251 = vmatprep.subr.bf16.mxu0 0
        %5252 = vmatpush1.bf16.msra.mxu0 0
        %5253 = vmatprep.subr.bf16.mxu0 0
        %5254 = vmatpush1.bf16.msra.mxu0 0
        %5255 = vmatprep.mubr.bf16.mxu0 0
        %5256 = vmatmul.mubr.bf16.gmra.mrb[0].mxu0 %v5115
        %v5257 = vpop.f32.mrb[0].mxu0
        %v5258 = vadd.f32 0.0, %v5257
        %v5259 = vpop.f32.mrb[0].mxu0
        %v5260 = vadd.f32 0.0, %v5259
        %v5261 = vpop.f32.mrb[0].mxu0
        %v5262 = vpop.f32.mrb[0].mxu0
        %5263 = vdwg.mxu0
        %5264 = vmatprep.subr.bf16.mxu0 %v5139
        %5265 = vmatpush1.bf16.msra.mxu0 %v5136
        %5266 = vmatprep.subr.bf16.mxu0 0
        %5267 = vmatpush1.bf16.msra.mxu0 0
        %5268 = vmatprep.subr.bf16.mxu0 0
        %5269 = vmatpush1.bf16.msra.mxu0 0
        %5270 = vmatprep.subr.bf16.mxu0 0
        %5271 = vmatpush1.bf16.msra.mxu0 0
        %5272 = vmatprep.subr.bf16.mxu0 0
        %5273 = vmatpush1.bf16.msra.mxu0 0
        %5274 = vmatprep.subr.bf16.mxu0 0
        %5275 = vmatpush1.bf16.msra.mxu0 0
        %5276 = vmatprep.subr.bf16.mxu0 0
        %5277 = vmatpush1.bf16.msra.mxu0 0
        %5278 = vmatprep.subr.bf16.mxu0 0
        %5279 = vmatpush1.bf16.msra.mxu0 0
        %5280 = vmatprep.subr.bf16.mxu0 0
        %5281 = vmatpush1.bf16.msra.mxu0 0
        %5282 = vmatprep.subr.bf16.mxu0 0
        %5283 = vmatpush1.bf16.msra.mxu0 0
        %5284 = vmatprep.subr.bf16.mxu0 0
        %5285 = vmatpush1.bf16.msra.mxu0 0
        %5286 = vmatprep.subr.bf16.mxu0 0
        %5287 = vmatpush1.bf16.msra.mxu0 0
        %5288 = vmatprep.subr.bf16.mxu0 0
        %5289 = vmatpush1.bf16.msra.mxu0 0
        %5290 = vmatprep.subr.bf16.mxu0 0
        %5291 = vmatpush1.bf16.msra.mxu0 0
        %5292 = vmatprep.subr.bf16.mxu0 0
        %5293 = vmatpush1.bf16.msra.mxu0 0
        %5294 = vmatprep.subr.bf16.mxu0 0
        %5295 = vmatpush1.bf16.msra.mxu0 0
        %5296 = vmatprep.mubr.bf16.mxu0 0
        %5297 = vmatmul.mubr.bf16.gmra.mrb[0].mxu0 %v5115
        %v5298 = vpop.f32.mrb[0].mxu0
        %v5299 = vadd.f32 0.0, %v5298
        %v5300 = vpop.f32.mrb[0].mxu0
        %v5301 = vadd.f32 0.0, %v5300
        %v5302 = vpop.f32.mrb[0].mxu0
        %v5303 = vpop.f32.mrb[0].mxu0
        %5304 = vdwg.mxu0
        %v5305 = vadd.f32 %v5077, %v5176
        %v5306 = vadd.f32 %v5078, %v5178
        %v5307 = vadd.f32 %v5079, %v5217
        %v5308 = vadd.f32 %v5080, %v5219
        %v5309 = vadd.f32 %v5081, %v5258
        %v5310 = vadd.f32 %v5082, %v5260
        %v5311 = vadd.f32 %v5083, %v5299
        %v5312 = vadd.f32 %v5084, %v5301
        %s5313 = scalar_lea.vmem %s1, 44
        %v5314 = vld [vmem:[%s5313] sm:$0x3]
        %5315 = vrot.lane.b32.xlu0 %v315, 28
        %v5316 = vpop.permute.xlu0 %5315
        %5317 = vrot.lane.b32.xlu0 %v314, 28
        %v5318 = vpop.permute.xlu0 %5317
        %5319 = vrot.lane.b32.xlu0 %v316, 28
        %v5320 = vpop.permute.xlu0 %5319
        %5321 = vrot.lane.b32.xlu0 %v324, 28
        %v5322 = vpop.permute.xlu0 %5321
        %5323 = vrot.lane.b32.xlu0 %v332, 28
        %v5324 = vpop.permute.xlu0 %5323
        %5325 = vrot.lane.b32.xlu0 %v331, 28
        %v5326 = vpop.permute.xlu0 %5325
        %5327 = vrot.lane.b32.xlu0 %v333, 28
        %v5328 = vpop.permute.xlu0 %5327
        %5329 = vrot.lane.b32.xlu0 %v340, 28
        %v5330 = vpop.permute.xlu0 %5329
        %5331 = vrot.lane.b32.xlu0 %v3490, 28
        %v5332 = vpop.permute.xlu0 %5331
        %vm5333 = vcmask 228352
        %v5334 = vsel %vm5333, %v5316, %v5318
        %v5335 = vsel %vm5333, %v5318, %v5320
        %v5336 = vsel %vm5333, %v5320, %v5322
        %v5337 = vsel %vm5333, %v5322, %v5324
        %v5338 = vsel %vm5333, %v5324, %v5326
        %v5339 = vsel %vm5333, %v5326, %v5328
        %v5340 = vsel %vm5333, %v5328, %v5330
        %v5341 = vsel %vm5333, %v5330, %v5332
        %v5343 = vsel %vm368, %v5314, 0
        %v5346 = vsel %vm372, %v5334, 0
        %v5349 = vsel %vm372, %v5335, 0
        %v5352 = vsel %vm372, %v5336, 0
        %v5355 = vsel %vm372, %v5337, 0
        %v5358 = vsel %vm372, %v5338, 0
        %v5361 = vsel %vm372, %v5339, 0
        %v5364 = vsel %vm372, %v5340, 0
        %v5367 = vsel %vm372, %v5341, 0
        %5369 = vmatprep.subr.bf16.mxu0 %v5349
        %5370 = vmatpush1.bf16.msra.mxu0 %v5346
        %5371 = vmatprep.subr.bf16.mxu0 0
        %5372 = vmatpush1.bf16.msra.mxu0 0
        %5373 = vmatprep.subr.bf16.mxu0 0
        %5374 = vmatpush1.bf16.msra.mxu0 0
        %5375 = vmatprep.subr.bf16.mxu0 0
        %5376 = vmatpush1.bf16.msra.mxu0 0
        %5377 = vmatprep.subr.bf16.mxu0 0
        %5378 = vmatpush1.bf16.msra.mxu0 0
        %5379 = vmatprep.subr.bf16.mxu0 0
        %5380 = vmatpush1.bf16.msra.mxu0 0
        %5381 = vmatprep.subr.bf16.mxu0 0
        %5382 = vmatpush1.bf16.msra.mxu0 0
        %5383 = vmatprep.subr.bf16.mxu0 0
        %5384 = vmatpush1.bf16.msra.mxu0 0
        %5385 = vmatprep.subr.bf16.mxu0 0
        %5386 = vmatpush1.bf16.msra.mxu0 0
        %5387 = vmatprep.subr.bf16.mxu0 0
        %5388 = vmatpush1.bf16.msra.mxu0 0
        %5389 = vmatprep.subr.bf16.mxu0 0
        %5390 = vmatpush1.bf16.msra.mxu0 0
        %5391 = vmatprep.subr.bf16.mxu0 0
        %5392 = vmatpush1.bf16.msra.mxu0 0
        %5393 = vmatprep.subr.bf16.mxu0 0
        %5394 = vmatpush1.bf16.msra.mxu0 0
        %5395 = vmatprep.subr.bf16.mxu0 0
        %5396 = vmatpush1.bf16.msra.mxu0 0
        %5397 = vmatprep.subr.bf16.mxu0 0
        %5398 = vmatpush1.bf16.msra.mxu0 0
        %5399 = vmatprep.subr.bf16.mxu0 0
        %5400 = vmatpush1.bf16.msra.mxu0 0
        %5401 = vmatprep.mubr.bf16.mxu0 0
        %5402 = vmatmul.mubr.bf16.gmra.mrb[0].mxu0 %v5343
        %v5403 = vpop.f32.mrb[0].mxu0
        %v5404 = vadd.f32 0.0, %v5403
        %v5405 = vpop.f32.mrb[0].mxu0
        %v5406 = vadd.f32 0.0, %v5405
        %v5407 = vpop.f32.mrb[0].mxu0
        %v5408 = vpop.f32.mrb[0].mxu0
        %5409 = vdwg.mxu0
        %5410 = vmatprep.subr.bf16.mxu0 %v5355
        %5411 = vmatpush1.bf16.msra.mxu0 %v5352
        %5412 = vmatprep.subr.bf16.mxu0 0
        %5413 = vmatpush1.bf16.msra.mxu0 0
        %5414 = vmatprep.subr.bf16.mxu0 0
        %5415 = vmatpush1.bf16.msra.mxu0 0
        %5416 = vmatprep.subr.bf16.mxu0 0
        %5417 = vmatpush1.bf16.msra.mxu0 0
        %5418 = vmatprep.subr.bf16.mxu0 0
        %5419 = vmatpush1.bf16.msra.mxu0 0
        %5420 = vmatprep.subr.bf16.mxu0 0
        %5421 = vmatpush1.bf16.msra.mxu0 0
        %5422 = vmatprep.subr.bf16.mxu0 0
        %5423 = vmatpush1.bf16.msra.mxu0 0
        %5424 = vmatprep.subr.bf16.mxu0 0
        %5425 = vmatpush1.bf16.msra.mxu0 0
        %5426 = vmatprep.subr.bf16.mxu0 0
        %5427 = vmatpush1.bf16.msra.mxu0 0
        %5428 = vmatprep.subr.bf16.mxu0 0
        %5429 = vmatpush1.bf16.msra.mxu0 0
        %5430 = vmatprep.subr.bf16.mxu0 0
        %5431 = vmatpush1.bf16.msra.mxu0 0
        %5432 = vmatprep.subr.bf16.mxu0 0
        %5433 = vmatpush1.bf16.msra.mxu0 0
        %5434 = vmatprep.subr.bf16.mxu0 0
        %5435 = vmatpush1.bf16.msra.mxu0 0
        %5436 = vmatprep.subr.bf16.mxu0 0
        %5437 = vmatpush1.bf16.msra.mxu0 0
        %5438 = vmatprep.subr.bf16.mxu0 0
        %5439 = vmatpush1.bf16.msra.mxu0 0
        %5440 = vmatprep.subr.bf16.mxu0 0
        %5441 = vmatpush1.bf16.msra.mxu0 0
        %5442 = vmatprep.mubr.bf16.mxu0 0
        %5443 = vmatmul.mubr.bf16.gmra.mrb[0].mxu0 %v5343
        %v5444 = vpop.f32.mrb[0].mxu0
        %v5445 = vadd.f32 0.0, %v5444
        %v5446 = vpop.f32.mrb[0].mxu0
        %v5447 = vadd.f32 0.0, %v5446
        %v5448 = vpop.f32.mrb[0].mxu0
        %v5449 = vpop.f32.mrb[0].mxu0
        %5450 = vdwg.mxu0
        %5451 = vmatprep.subr.bf16.mxu0 %v5361
        %5452 = vmatpush1.bf16.msra.mxu0 %v5358
        %5453 = vmatprep.subr.bf16.mxu0 0
        %5454 = vmatpush1.bf16.msra.mxu0 0
        %5455 = vmatprep.subr.bf16.mxu0 0
        %5456 = vmatpush1.bf16.msra.mxu0 0
        %5457 = vmatprep.subr.bf16.mxu0 0
        %5458 = vmatpush1.bf16.msra.mxu0 0
        %5459 = vmatprep.subr.bf16.mxu0 0
        %5460 = vmatpush1.bf16.msra.mxu0 0
        %5461 = vmatprep.subr.bf16.mxu0 0
        %5462 = vmatpush1.bf16.msra.mxu0 0
        %5463 = vmatprep.subr.bf16.mxu0 0
        %5464 = vmatpush1.bf16.msra.mxu0 0
        %5465 = vmatprep.subr.bf16.mxu0 0
        %5466 = vmatpush1.bf16.msra.mxu0 0
        %5467 = vmatprep.subr.bf16.mxu0 0
        %5468 = vmatpush1.bf16.msra.mxu0 0
        %5469 = vmatprep.subr.bf16.mxu0 0
        %5470 = vmatpush1.bf16.msra.mxu0 0
        %5471 = vmatprep.subr.bf16.mxu0 0
        %5472 = vmatpush1.bf16.msra.mxu0 0
        %5473 = vmatprep.subr.bf16.mxu0 0
        %5474 = vmatpush1.bf16.msra.mxu0 0
        %5475 = vmatprep.subr.bf16.mxu0 0
        %5476 = vmatpush1.bf16.msra.mxu0 0
        %5477 = vmatprep.subr.bf16.mxu0 0
        %5478 = vmatpush1.bf16.msra.mxu0 0
        %5479 = vmatprep.subr.bf16.mxu0 0
        %5480 = vmatpush1.bf16.msra.mxu0 0
        %5481 = vmatprep.subr.bf16.mxu0 0
        %5482 = vmatpush1.bf16.msra.mxu0 0
        %5483 = vmatprep.mubr.bf16.mxu0 0
        %5484 = vmatmul.mubr.bf16.gmra.mrb[0].mxu0 %v5343
        %v5485 = vpop.f32.mrb[0].mxu0
        %v5486 = vadd.f32 0.0, %v5485
        %v5487 = vpop.f32.mrb[0].mxu0
        %v5488 = vadd.f32 0.0, %v5487
        %v5489 = vpop.f32.mrb[0].mxu0
        %v5490 = vpop.f32.mrb[0].mxu0
        %5491 = vdwg.mxu0
        %5492 = vmatprep.subr.bf16.mxu0 %v5367
        %5493 = vmatpush1.bf16.msra.mxu0 %v5364
        %5494 = vmatprep.subr.bf16.mxu0 0
        %5495 = vmatpush1.bf16.msra.mxu0 0
        %5496 = vmatprep.subr.bf16.mxu0 0
        %5497 = vmatpush1.bf16.msra.mxu0 0
        %5498 = vmatprep.subr.bf16.mxu0 0
        %5499 = vmatpush1.bf16.msra.mxu0 0
        %5500 = vmatprep.subr.bf16.mxu0 0
        %5501 = vmatpush1.bf16.msra.mxu0 0
        %5502 = vmatprep.subr.bf16.mxu0 0
        %5503 = vmatpush1.bf16.msra.mxu0 0
        %5504 = vmatprep.subr.bf16.mxu0 0
        %5505 = vmatpush1.bf16.msra.mxu0 0
        %5506 = vmatprep.subr.bf16.mxu0 0
        %5507 = vmatpush1.bf16.msra.mxu0 0
        %5508 = vmatprep.subr.bf16.mxu0 0
        %5509 = vmatpush1.bf16.msra.mxu0 0
        %5510 = vmatprep.subr.bf16.mxu0 0
        %5511 = vmatpush1.bf16.msra.mxu0 0
        %5512 = vmatprep.subr.bf16.mxu0 0
        %5513 = vmatpush1.bf16.msra.mxu0 0
        %5514 = vmatprep.subr.bf16.mxu0 0
        %5515 = vmatpush1.bf16.msra.mxu0 0
        %5516 = vmatprep.subr.bf16.mxu0 0
        %5517 = vmatpush1.bf16.msra.mxu0 0
        %5518 = vmatprep.subr.bf16.mxu0 0
        %5519 = vmatpush1.bf16.msra.mxu0 0
        %5520 = vmatprep.subr.bf16.mxu0 0
        %5521 = vmatpush1.bf16.msra.mxu0 0
        %5522 = vmatprep.subr.bf16.mxu0 0
        %5523 = vmatpush1.bf16.msra.mxu0 0
        %5524 = vmatprep.mubr.bf16.mxu0 0
        %5525 = vmatmul.mubr.bf16.gmra.mrb[0].mxu0 %v5343
        %v5526 = vpop.f32.mrb[0].mxu0
        %v5527 = vadd.f32 0.0, %v5526
        %v5528 = vpop.f32.mrb[0].mxu0
        %v5529 = vadd.f32 0.0, %v5528
        %v5530 = vpop.f32.mrb[0].mxu0
        %v5531 = vpop.f32.mrb[0].mxu0
        %5532 = vdwg.mxu0
        %v5533 = vadd.f32 %v5305, %v5404
        %v5534 = vadd.f32 %v5306, %v5406
        %v5535 = vadd.f32 %v5307, %v5445
        %v5536 = vadd.f32 %v5308, %v5447
        %v5537 = vadd.f32 %v5309, %v5486
        %v5538 = vadd.f32 %v5310, %v5488
        %v5539 = vadd.f32 %v5311, %v5527
        %v5540 = vadd.f32 %v5312, %v5529
        %s5541 = scalar_lea.vmem %s1, 46
        %v5542 = vld [vmem:[%s5541] sm:$0x3]
        %5543 = vrot.lane.b32.xlu0 %v315, 27
        %v5544 = vpop.permute.xlu0 %5543
        %5545 = vrot.lane.b32.xlu0 %v314, 27
        %v5546 = vpop.permute.xlu0 %5545
        %5547 = vrot.lane.b32.xlu0 %v316, 27
        %v5548 = vpop.permute.xlu0 %5547
        %5549 = vrot.lane.b32.xlu0 %v324, 27
        %v5550 = vpop.permute.xlu0 %5549
        %5551 = vrot.lane.b32.xlu0 %v332, 27
        %v5552 = vpop.permute.xlu0 %5551
        %5553 = vrot.lane.b32.xlu0 %v331, 27
        %v5554 = vpop.permute.xlu0 %5553
        %5555 = vrot.lane.b32.xlu0 %v333, 27
        %v5556 = vpop.permute.xlu0 %5555
        %5557 = vrot.lane.b32.xlu0 %v340, 27
        %v5558 = vpop.permute.xlu0 %5557
        %5559 = vrot.lane.b32.xlu0 %v3490, 27
        %v5560 = vpop.permute.xlu0 %5559
        %vm5561 = vcmask 220160
        %v5562 = vsel %vm5561, %v5544, %v5546
        %v5563 = vsel %vm5561, %v5546, %v5548
        %v5564 = vsel %vm5561, %v5548, %v5550
        %v5565 = vsel %vm5561, %v5550, %v5552
        %v5566 = vsel %vm5561, %v5552, %v5554
        %v5567 = vsel %vm5561, %v5554, %v5556
        %v5568 = vsel %vm5561, %v5556, %v5558
        %v5569 = vsel %vm5561, %v5558, %v5560
        %v5571 = vsel %vm368, %v5542, 0
        %v5574 = vsel %vm372, %v5562, 0
        %v5577 = vsel %vm372, %v5563, 0
        %v5580 = vsel %vm372, %v5564, 0
        %v5583 = vsel %vm372, %v5565, 0
        %v5586 = vsel %vm372, %v5566, 0
        %v5589 = vsel %vm372, %v5567, 0
        %v5592 = vsel %vm372, %v5568, 0
        %v5595 = vsel %vm372, %v5569, 0
        %5597 = vmatprep.subr.bf16.mxu0 %v5577
        %5598 = vmatpush1.bf16.msra.mxu0 %v5574
        %5599 = vmatprep.subr.bf16.mxu0 0
        %5600 = vmatpush1.bf16.msra.mxu0 0
        %5601 = vmatprep.subr.bf16.mxu0 0
        %5602 = vmatpush1.bf16.msra.mxu0 0
        %5603 = vmatprep.subr.bf16.mxu0 0
        %5604 = vmatpush1.bf16.msra.mxu0 0
        %5605 = vmatprep.subr.bf16.mxu0 0
        %5606 = vmatpush1.bf16.msra.mxu0 0
        %5607 = vmatprep.subr.bf16.mxu0 0
        %5608 = vmatpush1.bf16.msra.mxu0 0
        %5609 = vmatprep.subr.bf16.mxu0 0
        %5610 = vmatpush1.bf16.msra.mxu0 0
        %5611 = vmatprep.subr.bf16.mxu0 0
        %5612 = vmatpush1.bf16.msra.mxu0 0
        %5613 = vmatprep.subr.bf16.mxu0 0
        %5614 = vmatpush1.bf16.msra.mxu0 0
        %5615 = vmatprep.subr.bf16.mxu0 0
        %5616 = vmatpush1.bf16.msra.mxu0 0
        %5617 = vmatprep.subr.bf16.mxu0 0
        %5618 = vmatpush1.bf16.msra.mxu0 0
        %5619 = vmatprep.subr.bf16.mxu0 0
        %5620 = vmatpush1.bf16.msra.mxu0 0
        %5621 = vmatprep.subr.bf16.mxu0 0
        %5622 = vmatpush1.bf16.msra.mxu0 0
        %5623 = vmatprep.subr.bf16.mxu0 0
        %5624 = vmatpush1.bf16.msra.mxu0 0
        %5625 = vmatprep.subr.bf16.mxu0 0
        %5626 = vmatpush1.bf16.msra.mxu0 0
        %5627 = vmatprep.subr.bf16.mxu0 0
        %5628 = vmatpush1.bf16.msra.mxu0 0
        %5629 = vmatprep.mubr.bf16.mxu0 0
        %5630 = vmatmul.mubr.bf16.gmra.mrb[0].mxu0 %v5571
        %v5631 = vpop.f32.mrb[0].mxu0
        %v5632 = vadd.f32 0.0, %v5631
        %v5633 = vpop.f32.mrb[0].mxu0
        %v5634 = vadd.f32 0.0, %v5633
        %v5635 = vpop.f32.mrb[0].mxu0
        %v5636 = vpop.f32.mrb[0].mxu0
        %5637 = vdwg.mxu0
        %5638 = vmatprep.subr.bf16.mxu0 %v5583
        %5639 = vmatpush1.bf16.msra.mxu0 %v5580
        %5640 = vmatprep.subr.bf16.mxu0 0
        %5641 = vmatpush1.bf16.msra.mxu0 0
        %5642 = vmatprep.subr.bf16.mxu0 0
        %5643 = vmatpush1.bf16.msra.mxu0 0
        %5644 = vmatprep.subr.bf16.mxu0 0
        %5645 = vmatpush1.bf16.msra.mxu0 0
        %5646 = vmatprep.subr.bf16.mxu0 0
        %5647 = vmatpush1.bf16.msra.mxu0 0
        %5648 = vmatprep.subr.bf16.mxu0 0
        %5649 = vmatpush1.bf16.msra.mxu0 0
        %5650 = vmatprep.subr.bf16.mxu0 0
        %5651 = vmatpush1.bf16.msra.mxu0 0
        %5652 = vmatprep.subr.bf16.mxu0 0
        %5653 = vmatpush1.bf16.msra.mxu0 0
        %5654 = vmatprep.subr.bf16.mxu0 0
        %5655 = vmatpush1.bf16.msra.mxu0 0
        %5656 = vmatprep.subr.bf16.mxu0 0
        %5657 = vmatpush1.bf16.msra.mxu0 0
        %5658 = vmatprep.subr.bf16.mxu0 0
        %5659 = vmatpush1.bf16.msra.mxu0 0
        %5660 = vmatprep.subr.bf16.mxu0 0
        %5661 = vmatpush1.bf16.msra.mxu0 0
        %5662 = vmatprep.subr.bf16.mxu0 0
        %5663 = vmatpush1.bf16.msra.mxu0 0
        %5664 = vmatprep.subr.bf16.mxu0 0
        %5665 = vmatpush1.bf16.msra.mxu0 0
        %5666 = vmatprep.subr.bf16.mxu0 0
        %5667 = vmatpush1.bf16.msra.mxu0 0
        %5668 = vmatprep.subr.bf16.mxu0 0
        %5669 = vmatpush1.bf16.msra.mxu0 0
        %5670 = vmatprep.mubr.bf16.mxu0 0
        %5671 = vmatmul.mubr.bf16.gmra.mrb[0].mxu0 %v5571
        %v5672 = vpop.f32.mrb[0].mxu0
        %v5673 = vadd.f32 0.0, %v5672
        %v5674 = vpop.f32.mrb[0].mxu0
        %v5675 = vadd.f32 0.0, %v5674
        %v5676 = vpop.f32.mrb[0].mxu0
        %v5677 = vpop.f32.mrb[0].mxu0
        %5678 = vdwg.mxu0
        %5679 = vmatprep.subr.bf16.mxu0 %v5589
        %5680 = vmatpush1.bf16.msra.mxu0 %v5586
        %5681 = vmatprep.subr.bf16.mxu0 0
        %5682 = vmatpush1.bf16.msra.mxu0 0
        %5683 = vmatprep.subr.bf16.mxu0 0
        %5684 = vmatpush1.bf16.msra.mxu0 0
        %5685 = vmatprep.subr.bf16.mxu0 0
        %5686 = vmatpush1.bf16.msra.mxu0 0
        %5687 = vmatprep.subr.bf16.mxu0 0
        %5688 = vmatpush1.bf16.msra.mxu0 0
        %5689 = vmatprep.subr.bf16.mxu0 0
        %5690 = vmatpush1.bf16.msra.mxu0 0
        %5691 = vmatprep.subr.bf16.mxu0 0
        %5692 = vmatpush1.bf16.msra.mxu0 0
        %5693 = vmatprep.subr.bf16.mxu0 0
        %5694 = vmatpush1.bf16.msra.mxu0 0
        %5695 = vmatprep.subr.bf16.mxu0 0
        %5696 = vmatpush1.bf16.msra.mxu0 0
        %5697 = vmatprep.subr.bf16.mxu0 0
        %5698 = vmatpush1.bf16.msra.mxu0 0
        %5699 = vmatprep.subr.bf16.mxu0 0
        %5700 = vmatpush1.bf16.msra.mxu0 0
        %5701 = vmatprep.subr.bf16.mxu0 0
        %5702 = vmatpush1.bf16.msra.mxu0 0
        %5703 = vmatprep.subr.bf16.mxu0 0
        %5704 = vmatpush1.bf16.msra.mxu0 0
        %5705 = vmatprep.subr.bf16.mxu0 0
        %5706 = vmatpush1.bf16.msra.mxu0 0
        %5707 = vmatprep.subr.bf16.mxu0 0
        %5708 = vmatpush1.bf16.msra.mxu0 0
        %5709 = vmatprep.subr.bf16.mxu0 0
        %5710 = vmatpush1.bf16.msra.mxu0 0
        %5711 = vmatprep.mubr.bf16.mxu0 0
        %5712 = vmatmul.mubr.bf16.gmra.mrb[0].mxu0 %v5571
        %v5713 = vpop.f32.mrb[0].mxu0
        %v5714 = vadd.f32 0.0, %v5713
        %v5715 = vpop.f32.mrb[0].mxu0
        %v5716 = vadd.f32 0.0, %v5715
        %v5717 = vpop.f32.mrb[0].mxu0
        %v5718 = vpop.f32.mrb[0].mxu0
        %5719 = vdwg.mxu0
        %5720 = vmatprep.subr.bf16.mxu0 %v5595
        %5721 = vmatpush1.bf16.msra.mxu0 %v5592
        %5722 = vmatprep.subr.bf16.mxu0 0
        %5723 = vmatpush1.bf16.msra.mxu0 0
        %5724 = vmatprep.subr.bf16.mxu0 0
        %5725 = vmatpush1.bf16.msra.mxu0 0
        %5726 = vmatprep.subr.bf16.mxu0 0
        %5727 = vmatpush1.bf16.msra.mxu0 0
        %5728 = vmatprep.subr.bf16.mxu0 0
        %5729 = vmatpush1.bf16.msra.mxu0 0
        %5730 = vmatprep.subr.bf16.mxu0 0
        %5731 = vmatpush1.bf16.msra.mxu0 0
        %5732 = vmatprep.subr.bf16.mxu0 0
        %5733 = vmatpush1.bf16.msra.mxu0 0
        %5734 = vmatprep.subr.bf16.mxu0 0
        %5735 = vmatpush1.bf16.msra.mxu0 0
        %5736 = vmatprep.subr.bf16.mxu0 0
        %5737 = vmatpush1.bf16.msra.mxu0 0
        %5738 = vmatprep.subr.bf16.mxu0 0
        %5739 = vmatpush1.bf16.msra.mxu0 0
        %5740 = vmatprep.subr.bf16.mxu0 0
        %5741 = vmatpush1.bf16.msra.mxu0 0
        %5742 = vmatprep.subr.bf16.mxu0 0
        %5743 = vmatpush1.bf16.msra.mxu0 0
        %5744 = vmatprep.subr.bf16.mxu0 0
        %5745 = vmatpush1.bf16.msra.mxu0 0
        %5746 = vmatprep.subr.bf16.mxu0 0
        %5747 = vmatpush1.bf16.msra.mxu0 0
        %5748 = vmatprep.subr.bf16.mxu0 0
        %5749 = vmatpush1.bf16.msra.mxu0 0
        %5750 = vmatprep.subr.bf16.mxu0 0
        %5751 = vmatpush1.bf16.msra.mxu0 0
        %5752 = vmatprep.mubr.bf16.mxu0 0
        %5753 = vmatmul.mubr.bf16.gmra.mrb[0].mxu0 %v5571
        %v5754 = vpop.f32.mrb[0].mxu0
        %v5755 = vadd.f32 0.0, %v5754
        %v5756 = vpop.f32.mrb[0].mxu0
        %v5757 = vadd.f32 0.0, %v5756
        %v5758 = vpop.f32.mrb[0].mxu0
        %v5759 = vpop.f32.mrb[0].mxu0
        %5760 = vdwg.mxu0
        %v5761 = vadd.f32 %v5533, %v5632
        %v5762 = vadd.f32 %v5534, %v5634
        %v5763 = vadd.f32 %v5535, %v5673
        %v5764 = vadd.f32 %v5536, %v5675
        %v5765 = vadd.f32 %v5537, %v5714
        %v5766 = vadd.f32 %v5538, %v5716
        %v5767 = vadd.f32 %v5539, %v5755
        %v5768 = vadd.f32 %v5540, %v5757
        %s5769 = scalar_lea.vmem %s1, 48
        %v5770 = vld [vmem:[%s5769] sm:$0x3]
        %5771 = vrot.lane.b32.xlu0 %v315, 19
        %v5772 = vpop.permute.xlu0 %5771
        %5773 = vrot.lane.b32.xlu0 %v314, 19
        %v5774 = vpop.permute.xlu0 %5773
        %5775 = vrot.lane.b32.xlu0 %v316, 19
        %v5776 = vpop.permute.xlu0 %5775
        %5777 = vrot.lane.b32.xlu0 %v324, 19
        %v5778 = vpop.permute.xlu0 %5777
        %5779 = vrot.lane.b32.xlu0 %v332, 19
        %v5780 = vpop.permute.xlu0 %5779
        %5781 = vrot.lane.b32.xlu0 %v331, 19
        %v5782 = vpop.permute.xlu0 %5781
        %5783 = vrot.lane.b32.xlu0 %v333, 19
        %v5784 = vpop.permute.xlu0 %5783
        %5785 = vrot.lane.b32.xlu0 %v340, 19
        %v5786 = vpop.permute.xlu0 %5785
        %5787 = vrot.lane.b32.xlu0 %v3490, 19
        %v5788 = vpop.permute.xlu0 %5787
        %vm5789 = vcmask 154624
        %v5790 = vsel %vm5789, %v5772, %v5774
        %v5791 = vsel %vm5789, %v5774, %v5776
        %v5792 = vsel %vm5789, %v5776, %v5778
        %v5793 = vsel %vm5789, %v5778, %v5780
        %v5794 = vsel %vm5789, %v5780, %v5782
        %v5795 = vsel %vm5789, %v5782, %v5784
        %v5796 = vsel %vm5789, %v5784, %v5786
        %v5797 = vsel %vm5789, %v5786, %v5788
        %v5799 = vsel %vm368, %v5770, 0
        %v5802 = vsel %vm372, %v5790, 0
        %v5805 = vsel %vm372, %v5791, 0
        %v5808 = vsel %vm372, %v5792, 0
        %v5811 = vsel %vm372, %v5793, 0
        %v5814 = vsel %vm372, %v5794, 0
        %v5817 = vsel %vm372, %v5795, 0
        %v5820 = vsel %vm372, %v5796, 0
        %v5823 = vsel %vm372, %v5797, 0
        %5825 = vmatprep.subr.bf16.mxu0 %v5805
        %5826 = vmatpush1.bf16.msra.mxu0 %v5802
        %5827 = vmatprep.subr.bf16.mxu0 0
        %5828 = vmatpush1.bf16.msra.mxu0 0
        %5829 = vmatprep.subr.bf16.mxu0 0
        %5830 = vmatpush1.bf16.msra.mxu0 0
        %5831 = vmatprep.subr.bf16.mxu0 0
        %5832 = vmatpush1.bf16.msra.mxu0 0
        %5833 = vmatprep.subr.bf16.mxu0 0
        %5834 = vmatpush1.bf16.msra.mxu0 0
        %5835 = vmatprep.subr.bf16.mxu0 0
        %5836 = vmatpush1.bf16.msra.mxu0 0
        %5837 = vmatprep.subr.bf16.mxu0 0
        %5838 = vmatpush1.bf16.msra.mxu0 0
        %5839 = vmatprep.subr.bf16.mxu0 0
        %5840 = vmatpush1.bf16.msra.mxu0 0
        %5841 = vmatprep.subr.bf16.mxu0 0
        %5842 = vmatpush1.bf16.msra.mxu0 0
        %5843 = vmatprep.subr.bf16.mxu0 0
        %5844 = vmatpush1.bf16.msra.mxu0 0
        %5845 = vmatprep.subr.bf16.mxu0 0
        %5846 = vmatpush1.bf16.msra.mxu0 0
        %5847 = vmatprep.subr.bf16.mxu0 0
        %5848 = vmatpush1.bf16.msra.mxu0 0
        %5849 = vmatprep.subr.bf16.mxu0 0
        %5850 = vmatpush1.bf16.msra.mxu0 0
        %5851 = vmatprep.subr.bf16.mxu0 0
        %5852 = vmatpush1.bf16.msra.mxu0 0
        %5853 = vmatprep.subr.bf16.mxu0 0
        %5854 = vmatpush1.bf16.msra.mxu0 0
        %5855 = vmatprep.subr.bf16.mxu0 0
        %5856 = vmatpush1.bf16.msra.mxu0 0
        %5857 = vmatprep.mubr.bf16.mxu0 0
        %5858 = vmatmul.mubr.bf16.gmra.mrb[0].mxu0 %v5799
        %v5859 = vpop.f32.mrb[0].mxu0
        %v5860 = vadd.f32 0.0, %v5859
        %v5861 = vpop.f32.mrb[0].mxu0
        %v5862 = vadd.f32 0.0, %v5861
        %v5863 = vpop.f32.mrb[0].mxu0
        %v5864 = vpop.f32.mrb[0].mxu0
        %5865 = vdwg.mxu0
        %5866 = vmatprep.subr.bf16.mxu0 %v5811
        %5867 = vmatpush1.bf16.msra.mxu0 %v5808
        %5868 = vmatprep.subr.bf16.mxu0 0
        %5869 = vmatpush1.bf16.msra.mxu0 0
        %5870 = vmatprep.subr.bf16.mxu0 0
        %5871 = vmatpush1.bf16.msra.mxu0 0
        %5872 = vmatprep.subr.bf16.mxu0 0
        %5873 = vmatpush1.bf16.msra.mxu0 0
        %5874 = vmatprep.subr.bf16.mxu0 0
        %5875 = vmatpush1.bf16.msra.mxu0 0
        %5876 = vmatprep.subr.bf16.mxu0 0
        %5877 = vmatpush1.bf16.msra.mxu0 0
        %5878 = vmatprep.subr.bf16.mxu0 0
        %5879 = vmatpush1.bf16.msra.mxu0 0
        %5880 = vmatprep.subr.bf16.mxu0 0
        %5881 = vmatpush1.bf16.msra.mxu0 0
        %5882 = vmatprep.subr.bf16.mxu0 0
        %5883 = vmatpush1.bf16.msra.mxu0 0
        %5884 = vmatprep.subr.bf16.mxu0 0
        %5885 = vmatpush1.bf16.msra.mxu0 0
        %5886 = vmatprep.subr.bf16.mxu0 0
        %5887 = vmatpush1.bf16.msra.mxu0 0
        %5888 = vmatprep.subr.bf16.mxu0 0
        %5889 = vmatpush1.bf16.msra.mxu0 0
        %5890 = vmatprep.subr.bf16.mxu0 0
        %5891 = vmatpush1.bf16.msra.mxu0 0
        %5892 = vmatprep.subr.bf16.mxu0 0
        %5893 = vmatpush1.bf16.msra.mxu0 0
        %5894 = vmatprep.subr.bf16.mxu0 0
        %5895 = vmatpush1.bf16.msra.mxu0 0
        %5896 = vmatprep.subr.bf16.mxu0 0
        %5897 = vmatpush1.bf16.msra.mxu0 0
        %5898 = vmatprep.mubr.bf16.mxu0 0
        %5899 = vmatmul.mubr.bf16.gmra.mrb[0].mxu0 %v5799
        %v5900 = vpop.f32.mrb[0].mxu0
        %v5901 = vadd.f32 0.0, %v5900
        %v5902 = vpop.f32.mrb[0].mxu0
        %v5903 = vadd.f32 0.0, %v5902
        %v5904 = vpop.f32.mrb[0].mxu0
        %v5905 = vpop.f32.mrb[0].mxu0
        %5906 = vdwg.mxu0
        %5907 = vmatprep.subr.bf16.mxu0 %v5817
        %5908 = vmatpush1.bf16.msra.mxu0 %v5814
        %5909 = vmatprep.subr.bf16.mxu0 0
        %5910 = vmatpush1.bf16.msra.mxu0 0
        %5911 = vmatprep.subr.bf16.mxu0 0
        %5912 = vmatpush1.bf16.msra.mxu0 0
        %5913 = vmatprep.subr.bf16.mxu0 0
        %5914 = vmatpush1.bf16.msra.mxu0 0
        %5915 = vmatprep.subr.bf16.mxu0 0
        %5916 = vmatpush1.bf16.msra.mxu0 0
        %5917 = vmatprep.subr.bf16.mxu0 0
        %5918 = vmatpush1.bf16.msra.mxu0 0
        %5919 = vmatprep.subr.bf16.mxu0 0
        %5920 = vmatpush1.bf16.msra.mxu0 0
        %5921 = vmatprep.subr.bf16.mxu0 0
        %5922 = vmatpush1.bf16.msra.mxu0 0
        %5923 = vmatprep.subr.bf16.mxu0 0
        %5924 = vmatpush1.bf16.msra.mxu0 0
        %5925 = vmatprep.subr.bf16.mxu0 0
        %5926 = vmatpush1.bf16.msra.mxu0 0
        %5927 = vmatprep.subr.bf16.mxu0 0
        %5928 = vmatpush1.bf16.msra.mxu0 0
        %5929 = vmatprep.subr.bf16.mxu0 0
        %5930 = vmatpush1.bf16.msra.mxu0 0
        %5931 = vmatprep.subr.bf16.mxu0 0
        %5932 = vmatpush1.bf16.msra.mxu0 0
        %5933 = vmatprep.subr.bf16.mxu0 0
        %5934 = vmatpush1.bf16.msra.mxu0 0
        %5935 = vmatprep.subr.bf16.mxu0 0
        %5936 = vmatpush1.bf16.msra.mxu0 0
        %5937 = vmatprep.subr.bf16.mxu0 0
        %5938 = vmatpush1.bf16.msra.mxu0 0
        %5939 = vmatprep.mubr.bf16.mxu0 0
        %5940 = vmatmul.mubr.bf16.gmra.mrb[0].mxu0 %v5799
        %v5941 = vpop.f32.mrb[0].mxu0
        %v5942 = vadd.f32 0.0, %v5941
        %v5943 = vpop.f32.mrb[0].mxu0
        %v5944 = vadd.f32 0.0, %v5943
        %v5945 = vpop.f32.mrb[0].mxu0
        %v5946 = vpop.f32.mrb[0].mxu0
        %5947 = vdwg.mxu0
        %5948 = vmatprep.subr.bf16.mxu0 %v5823
        %5949 = vmatpush1.bf16.msra.mxu0 %v5820
        %5950 = vmatprep.subr.bf16.mxu0 0
        %5951 = vmatpush1.bf16.msra.mxu0 0
        %5952 = vmatprep.subr.bf16.mxu0 0
        %5953 = vmatpush1.bf16.msra.mxu0 0
        %5954 = vmatprep.subr.bf16.mxu0 0
        %5955 = vmatpush1.bf16.msra.mxu0 0
        %5956 = vmatprep.subr.bf16.mxu0 0
        %5957 = vmatpush1.bf16.msra.mxu0 0
        %5958 = vmatprep.subr.bf16.mxu0 0
        %5959 = vmatpush1.bf16.msra.mxu0 0
        %5960 = vmatprep.subr.bf16.mxu0 0
        %5961 = vmatpush1.bf16.msra.mxu0 0
        %5962 = vmatprep.subr.bf16.mxu0 0
        %5963 = vmatpush1.bf16.msra.mxu0 0
        %5964 = vmatprep.subr.bf16.mxu0 0
        %5965 = vmatpush1.bf16.msra.mxu0 0
        %5966 = vmatprep.subr.bf16.mxu0 0
        %5967 = vmatpush1.bf16.msra.mxu0 0
        %5968 = vmatprep.subr.bf16.mxu0 0
        %5969 = vmatpush1.bf16.msra.mxu0 0
        %5970 = vmatprep.subr.bf16.mxu0 0
        %5971 = vmatpush1.bf16.msra.mxu0 0
        %5972 = vmatprep.subr.bf16.mxu0 0
        %5973 = vmatpush1.bf16.msra.mxu0 0
        %5974 = vmatprep.subr.bf16.mxu0 0
        %5975 = vmatpush1.bf16.msra.mxu0 0
        %5976 = vmatprep.subr.bf16.mxu0 0
        %5977 = vmatpush1.bf16.msra.mxu0 0
        %5978 = vmatprep.subr.bf16.mxu0 0
        %5979 = vmatpush1.bf16.msra.mxu0 0
        %5980 = vmatprep.mubr.bf16.mxu0 0
        %5981 = vmatmul.mubr.bf16.gmra.mrb[0].mxu0 %v5799
        %v5982 = vpop.f32.mrb[0].mxu0
        %v5983 = vadd.f32 0.0, %v5982
        %v5984 = vpop.f32.mrb[0].mxu0
        %v5985 = vadd.f32 0.0, %v5984
        %v5986 = vpop.f32.mrb[0].mxu0
        %v5987 = vpop.f32.mrb[0].mxu0
        %5988 = vdwg.mxu0
        %v5989 = vadd.f32 %v5761, %v5860
        %v5990 = vadd.f32 %v5762, %v5862
        %v5991 = vadd.f32 %v5763, %v5901
        %v5992 = vadd.f32 %v5764, %v5903
        %v5993 = vadd.f32 %v5765, %v5942
        %v5994 = vadd.f32 %v5766, %v5944
        %v5995 = vadd.f32 %v5767, %v5983
        %v5996 = vadd.f32 %v5768, %v5985
        %s5997 = scalar_lea.vmem %s1, 50
        %v5998 = vld [vmem:[%s5997] sm:$0x3]
        %5999 = vrot.lane.b32.xlu0 %v315, 18
        %v6000 = vpop.permute.xlu0 %5999
        %6001 = vrot.lane.b32.xlu0 %v314, 18
        %v6002 = vpop.permute.xlu0 %6001
        %6003 = vrot.lane.b32.xlu0 %v316, 18
        %v6004 = vpop.permute.xlu0 %6003
        %6005 = vrot.lane.b32.xlu0 %v324, 18
        %v6006 = vpop.permute.xlu0 %6005
        %6007 = vrot.lane.b32.xlu0 %v332, 18
        %v6008 = vpop.permute.xlu0 %6007
        %6009 = vrot.lane.b32.xlu0 %v331, 18
        %v6010 = vpop.permute.xlu0 %6009
        %6011 = vrot.lane.b32.xlu0 %v333, 18
        %v6012 = vpop.permute.xlu0 %6011
        %6013 = vrot.lane.b32.xlu0 %v340, 18
        %v6014 = vpop.permute.xlu0 %6013
        %6015 = vrot.lane.b32.xlu0 %v3490, 18
        %v6016 = vpop.permute.xlu0 %6015
        %vm6017 = vcmask 146432
        %v6018 = vsel %vm6017, %v6000, %v6002
        %v6019 = vsel %vm6017, %v6002, %v6004
        %v6020 = vsel %vm6017, %v6004, %v6006
        %v6021 = vsel %vm6017, %v6006, %v6008
        %v6022 = vsel %vm6017, %v6008, %v6010
        %v6023 = vsel %vm6017, %v6010, %v6012
        %v6024 = vsel %vm6017, %v6012, %v6014
        %v6025 = vsel %vm6017, %v6014, %v6016
        %v6027 = vsel %vm368, %v5998, 0
        %v6030 = vsel %vm372, %v6018, 0
        %v6033 = vsel %vm372, %v6019, 0
        %v6036 = vsel %vm372, %v6020, 0
        %v6039 = vsel %vm372, %v6021, 0
        %v6042 = vsel %vm372, %v6022, 0
        %v6045 = vsel %vm372, %v6023, 0
        %v6048 = vsel %vm372, %v6024, 0
        %v6051 = vsel %vm372, %v6025, 0
        %6053 = vmatprep.subr.bf16.mxu0 %v6033
        %6054 = vmatpush1.bf16.msra.mxu0 %v6030
        %6055 = vmatprep.subr.bf16.mxu0 0
        %6056 = vmatpush1.bf16.msra.mxu0 0
        %6057 = vmatprep.subr.bf16.mxu0 0
        %6058 = vmatpush1.bf16.msra.mxu0 0
        %6059 = vmatprep.subr.bf16.mxu0 0
        %6060 = vmatpush1.bf16.msra.mxu0 0
        %6061 = vmatprep.subr.bf16.mxu0 0
        %6062 = vmatpush1.bf16.msra.mxu0 0
        %6063 = vmatprep.subr.bf16.mxu0 0
        %6064 = vmatpush1.bf16.msra.mxu0 0
        %6065 = vmatprep.subr.bf16.mxu0 0
        %6066 = vmatpush1.bf16.msra.mxu0 0
        %6067 = vmatprep.subr.bf16.mxu0 0
        %6068 = vmatpush1.bf16.msra.mxu0 0
        %6069 = vmatprep.subr.bf16.mxu0 0
        %6070 = vmatpush1.bf16.msra.mxu0 0
        %6071 = vmatprep.subr.bf16.mxu0 0
        %6072 = vmatpush1.bf16.msra.mxu0 0
        %6073 = vmatprep.subr.bf16.mxu0 0
        %6074 = vmatpush1.bf16.msra.mxu0 0
        %6075 = vmatprep.subr.bf16.mxu0 0
        %6076 = vmatpush1.bf16.msra.mxu0 0
        %6077 = vmatprep.subr.bf16.mxu0 0
        %6078 = vmatpush1.bf16.msra.mxu0 0
        %6079 = vmatprep.subr.bf16.mxu0 0
        %6080 = vmatpush1.bf16.msra.mxu0 0
        %6081 = vmatprep.subr.bf16.mxu0 0
        %6082 = vmatpush1.bf16.msra.mxu0 0
        %6083 = vmatprep.subr.bf16.mxu0 0
        %6084 = vmatpush1.bf16.msra.mxu0 0
        %6085 = vmatprep.mubr.bf16.mxu0 0
        %6086 = vmatmul.mubr.bf16.gmra.mrb[0].mxu0 %v6027
        %v6087 = vpop.f32.mrb[0].mxu0
        %v6088 = vadd.f32 0.0, %v6087
        %v6089 = vpop.f32.mrb[0].mxu0
        %v6090 = vadd.f32 0.0, %v6089
        %v6091 = vpop.f32.mrb[0].mxu0
        %v6092 = vpop.f32.mrb[0].mxu0
        %6093 = vdwg.mxu0
        %6094 = vmatprep.subr.bf16.mxu0 %v6039
        %6095 = vmatpush1.bf16.msra.mxu0 %v6036
        %6096 = vmatprep.subr.bf16.mxu0 0
        %6097 = vmatpush1.bf16.msra.mxu0 0
        %6098 = vmatprep.subr.bf16.mxu0 0
        %6099 = vmatpush1.bf16.msra.mxu0 0
        %6100 = vmatprep.subr.bf16.mxu0 0
        %6101 = vmatpush1.bf16.msra.mxu0 0
        %6102 = vmatprep.subr.bf16.mxu0 0
        %6103 = vmatpush1.bf16.msra.mxu0 0
        %6104 = vmatprep.subr.bf16.mxu0 0
        %6105 = vmatpush1.bf16.msra.mxu0 0
        %6106 = vmatprep.subr.bf16.mxu0 0
        %6107 = vmatpush1.bf16.msra.mxu0 0
        %6108 = vmatprep.subr.bf16.mxu0 0
        %6109 = vmatpush1.bf16.msra.mxu0 0
        %6110 = vmatprep.subr.bf16.mxu0 0
        %6111 = vmatpush1.bf16.msra.mxu0 0
        %6112 = vmatprep.subr.bf16.mxu0 0
        %6113 = vmatpush1.bf16.msra.mxu0 0
        %6114 = vmatprep.subr.bf16.mxu0 0
        %6115 = vmatpush1.bf16.msra.mxu0 0
        %6116 = vmatprep.subr.bf16.mxu0 0
        %6117 = vmatpush1.bf16.msra.mxu0 0
        %6118 = vmatprep.subr.bf16.mxu0 0
        %6119 = vmatpush1.bf16.msra.mxu0 0
        %6120 = vmatprep.subr.bf16.mxu0 0
        %6121 = vmatpush1.bf16.msra.mxu0 0
        %6122 = vmatprep.subr.bf16.mxu0 0
        %6123 = vmatpush1.bf16.msra.mxu0 0
        %6124 = vmatprep.subr.bf16.mxu0 0
        %6125 = vmatpush1.bf16.msra.mxu0 0
        %6126 = vmatprep.mubr.bf16.mxu0 0
        %6127 = vmatmul.mubr.bf16.gmra.mrb[0].mxu0 %v6027
        %v6128 = vpop.f32.mrb[0].mxu0
        %v6129 = vadd.f32 0.0, %v6128
        %v6130 = vpop.f32.mrb[0].mxu0
        %v6131 = vadd.f32 0.0, %v6130
        %v6132 = vpop.f32.mrb[0].mxu0
        %v6133 = vpop.f32.mrb[0].mxu0
        %6134 = vdwg.mxu0
        %6135 = vmatprep.subr.bf16.mxu0 %v6045
        %6136 = vmatpush1.bf16.msra.mxu0 %v6042
        %6137 = vmatprep.subr.bf16.mxu0 0
        %6138 = vmatpush1.bf16.msra.mxu0 0
        %6139 = vmatprep.subr.bf16.mxu0 0
        %6140 = vmatpush1.bf16.msra.mxu0 0
        %6141 = vmatprep.subr.bf16.mxu0 0
        %6142 = vmatpush1.bf16.msra.mxu0 0
        %6143 = vmatprep.subr.bf16.mxu0 0
        %6144 = vmatpush1.bf16.msra.mxu0 0
        %6145 = vmatprep.subr.bf16.mxu0 0
        %6146 = vmatpush1.bf16.msra.mxu0 0
        %6147 = vmatprep.subr.bf16.mxu0 0
        %6148 = vmatpush1.bf16.msra.mxu0 0
        %6149 = vmatprep.subr.bf16.mxu0 0
        %6150 = vmatpush1.bf16.msra.mxu0 0
        %6151 = vmatprep.subr.bf16.mxu0 0
        %6152 = vmatpush1.bf16.msra.mxu0 0
        %6153 = vmatprep.subr.bf16.mxu0 0
        %6154 = vmatpush1.bf16.msra.mxu0 0
        %6155 = vmatprep.subr.bf16.mxu0 0
        %6156 = vmatpush1.bf16.msra.mxu0 0
        %6157 = vmatprep.subr.bf16.mxu0 0
        %6158 = vmatpush1.bf16.msra.mxu0 0
        %6159 = vmatprep.subr.bf16.mxu0 0
        %6160 = vmatpush1.bf16.msra.mxu0 0
        %6161 = vmatprep.subr.bf16.mxu0 0
        %6162 = vmatpush1.bf16.msra.mxu0 0
        %6163 = vmatprep.subr.bf16.mxu0 0
        %6164 = vmatpush1.bf16.msra.mxu0 0
        %6165 = vmatprep.subr.bf16.mxu0 0
        %6166 = vmatpush1.bf16.msra.mxu0 0
        %6167 = vmatprep.mubr.bf16.mxu0 0
        %6168 = vmatmul.mubr.bf16.gmra.mrb[0].mxu0 %v6027
        %v6169 = vpop.f32.mrb[0].mxu0
        %v6170 = vadd.f32 0.0, %v6169
        %v6171 = vpop.f32.mrb[0].mxu0
        %v6172 = vadd.f32 0.0, %v6171
        %v6173 = vpop.f32.mrb[0].mxu0
        %v6174 = vpop.f32.mrb[0].mxu0
        %6175 = vdwg.mxu0
        %6176 = vmatprep.subr.bf16.mxu0 %v6051
        %6177 = vmatpush1.bf16.msra.mxu0 %v6048
        %6178 = vmatprep.subr.bf16.mxu0 0
        %6179 = vmatpush1.bf16.msra.mxu0 0
        %6180 = vmatprep.subr.bf16.mxu0 0
        %6181 = vmatpush1.bf16.msra.mxu0 0
        %6182 = vmatprep.subr.bf16.mxu0 0
        %6183 = vmatpush1.bf16.msra.mxu0 0
        %6184 = vmatprep.subr.bf16.mxu0 0
        %6185 = vmatpush1.bf16.msra.mxu0 0
        %6186 = vmatprep.subr.bf16.mxu0 0
        %6187 = vmatpush1.bf16.msra.mxu0 0
        %6188 = vmatprep.subr.bf16.mxu0 0
        %6189 = vmatpush1.bf16.msra.mxu0 0
        %6190 = vmatprep.subr.bf16.mxu0 0
        %6191 = vmatpush1.bf16.msra.mxu0 0
        %6192 = vmatprep.subr.bf16.mxu0 0
        %6193 = vmatpush1.bf16.msra.mxu0 0
        %6194 = vmatprep.subr.bf16.mxu0 0
        %6195 = vmatpush1.bf16.msra.mxu0 0
        %6196 = vmatprep.subr.bf16.mxu0 0
        %6197 = vmatpush1.bf16.msra.mxu0 0
        %6198 = vmatprep.subr.bf16.mxu0 0
        %6199 = vmatpush1.bf16.msra.mxu0 0
        %6200 = vmatprep.subr.bf16.mxu0 0
        %6201 = vmatpush1.bf16.msra.mxu0 0
        %6202 = vmatprep.subr.bf16.mxu0 0
        %6203 = vmatpush1.bf16.msra.mxu0 0
        %6204 = vmatprep.subr.bf16.mxu0 0
        %6205 = vmatpush1.bf16.msra.mxu0 0
        %6206 = vmatprep.subr.bf16.mxu0 0
        %6207 = vmatpush1.bf16.msra.mxu0 0
        %6208 = vmatprep.mubr.bf16.mxu0 0
        %6209 = vmatmul.mubr.bf16.gmra.mrb[0].mxu0 %v6027
        %v6210 = vpop.f32.mrb[0].mxu0
        %v6211 = vadd.f32 0.0, %v6210
        %v6212 = vpop.f32.mrb[0].mxu0
        %v6213 = vadd.f32 0.0, %v6212
        %v6214 = vpop.f32.mrb[0].mxu0
        %v6215 = vpop.f32.mrb[0].mxu0
        %6216 = vdwg.mxu0
        %v6217 = vadd.f32 %v5989, %v6088
        %v6218 = vadd.f32 %v5990, %v6090
        %v6219 = vadd.f32 %v5991, %v6129
        %v6220 = vadd.f32 %v5992, %v6131
        %v6221 = vadd.f32 %v5993, %v6170
        %v6222 = vadd.f32 %v5994, %v6172
        %v6223 = vadd.f32 %v5995, %v6211
        %v6224 = vadd.f32 %v5996, %v6213
        %s6225 = scalar_lea.vmem %s1, 52
        %v6226 = vld [vmem:[%s6225] sm:$0x3]
        %6227 = vrot.lane.b32.xlu0 %v315, 17
        %v6228 = vpop.permute.xlu0 %6227
        %6229 = vrot.lane.b32.xlu0 %v314, 17
        %v6230 = vpop.permute.xlu0 %6229
        %6231 = vrot.lane.b32.xlu0 %v316, 17
        %v6232 = vpop.permute.xlu0 %6231
        %6233 = vrot.lane.b32.xlu0 %v324, 17
        %v6234 = vpop.permute.xlu0 %6233
        %6235 = vrot.lane.b32.xlu0 %v332, 17
        %v6236 = vpop.permute.xlu0 %6235
        %6237 = vrot.lane.b32.xlu0 %v331, 17
        %v6238 = vpop.permute.xlu0 %6237
        %6239 = vrot.lane.b32.xlu0 %v333, 17
        %v6240 = vpop.permute.xlu0 %6239
        %6241 = vrot.lane.b32.xlu0 %v340, 17
        %v6242 = vpop.permute.xlu0 %6241
        %6243 = vrot.lane.b32.xlu0 %v3490, 17
        %v6244 = vpop.permute.xlu0 %6243
        %vm6245 = vcmask 138240
        %v6246 = vsel %vm6245, %v6228, %v6230
        %v6247 = vsel %vm6245, %v6230, %v6232
        %v6248 = vsel %vm6245, %v6232, %v6234
        %v6249 = vsel %vm6245, %v6234, %v6236
        %v6250 = vsel %vm6245, %v6236, %v6238
        %v6251 = vsel %vm6245, %v6238, %v6240
        %v6252 = vsel %vm6245, %v6240, %v6242
        %v6253 = vsel %vm6245, %v6242, %v6244
        %v6255 = vsel %vm368, %v6226, 0
        %v6258 = vsel %vm372, %v6246, 0
        %v6261 = vsel %vm372, %v6247, 0
        %v6264 = vsel %vm372, %v6248, 0
        %v6267 = vsel %vm372, %v6249, 0
        %v6270 = vsel %vm372, %v6250, 0
        %v6273 = vsel %vm372, %v6251, 0
        %v6276 = vsel %vm372, %v6252, 0
        %v6279 = vsel %vm372, %v6253, 0
        %6281 = vmatprep.subr.bf16.mxu0 %v6261
        %6282 = vmatpush1.bf16.msra.mxu0 %v6258
        %6283 = vmatprep.subr.bf16.mxu0 0
        %6284 = vmatpush1.bf16.msra.mxu0 0
        %6285 = vmatprep.subr.bf16.mxu0 0
        %6286 = vmatpush1.bf16.msra.mxu0 0
        %6287 = vmatprep.subr.bf16.mxu0 0
        %6288 = vmatpush1.bf16.msra.mxu0 0
        %6289 = vmatprep.subr.bf16.mxu0 0
        %6290 = vmatpush1.bf16.msra.mxu0 0
        %6291 = vmatprep.subr.bf16.mxu0 0
        %6292 = vmatpush1.bf16.msra.mxu0 0
        %6293 = vmatprep.subr.bf16.mxu0 0
        %6294 = vmatpush1.bf16.msra.mxu0 0
        %6295 = vmatprep.subr.bf16.mxu0 0
        %6296 = vmatpush1.bf16.msra.mxu0 0
        %6297 = vmatprep.subr.bf16.mxu0 0
        %6298 = vmatpush1.bf16.msra.mxu0 0
        %6299 = vmatprep.subr.bf16.mxu0 0
        %6300 = vmatpush1.bf16.msra.mxu0 0
        %6301 = vmatprep.subr.bf16.mxu0 0
        %6302 = vmatpush1.bf16.msra.mxu0 0
        %6303 = vmatprep.subr.bf16.mxu0 0
        %6304 = vmatpush1.bf16.msra.mxu0 0
        %6305 = vmatprep.subr.bf16.mxu0 0
        %6306 = vmatpush1.bf16.msra.mxu0 0
        %6307 = vmatprep.subr.bf16.mxu0 0
        %6308 = vmatpush1.bf16.msra.mxu0 0
        %6309 = vmatprep.subr.bf16.mxu0 0
        %6310 = vmatpush1.bf16.msra.mxu0 0
        %6311 = vmatprep.subr.bf16.mxu0 0
        %6312 = vmatpush1.bf16.msra.mxu0 0
        %6313 = vmatprep.mubr.bf16.mxu0 0
        %6314 = vmatmul.mubr.bf16.gmra.mrb[0].mxu0 %v6255
        %v6315 = vpop.f32.mrb[0].mxu0
        %v6316 = vadd.f32 0.0, %v6315
        %v6317 = vpop.f32.mrb[0].mxu0
        %v6318 = vadd.f32 0.0, %v6317
        %v6319 = vpop.f32.mrb[0].mxu0
        %v6320 = vpop.f32.mrb[0].mxu0
        %6321 = vdwg.mxu0
        %6322 = vmatprep.subr.bf16.mxu0 %v6267
        %6323 = vmatpush1.bf16.msra.mxu0 %v6264
        %6324 = vmatprep.subr.bf16.mxu0 0
        %6325 = vmatpush1.bf16.msra.mxu0 0
        %6326 = vmatprep.subr.bf16.mxu0 0
        %6327 = vmatpush1.bf16.msra.mxu0 0
        %6328 = vmatprep.subr.bf16.mxu0 0
        %6329 = vmatpush1.bf16.msra.mxu0 0
        %6330 = vmatprep.subr.bf16.mxu0 0
        %6331 = vmatpush1.bf16.msra.mxu0 0
        %6332 = vmatprep.subr.bf16.mxu0 0
        %6333 = vmatpush1.bf16.msra.mxu0 0
        %6334 = vmatprep.subr.bf16.mxu0 0
        %6335 = vmatpush1.bf16.msra.mxu0 0
        %6336 = vmatprep.subr.bf16.mxu0 0
        %6337 = vmatpush1.bf16.msra.mxu0 0
        %6338 = vmatprep.subr.bf16.mxu0 0
        %6339 = vmatpush1.bf16.msra.mxu0 0
        %6340 = vmatprep.subr.bf16.mxu0 0
        %6341 = vmatpush1.bf16.msra.mxu0 0
        %6342 = vmatprep.subr.bf16.mxu0 0
        %6343 = vmatpush1.bf16.msra.mxu0 0
        %6344 = vmatprep.subr.bf16.mxu0 0
        %6345 = vmatpush1.bf16.msra.mxu0 0
        %6346 = vmatprep.subr.bf16.mxu0 0
        %6347 = vmatpush1.bf16.msra.mxu0 0
        %6348 = vmatprep.subr.bf16.mxu0 0
        %6349 = vmatpush1.bf16.msra.mxu0 0
        %6350 = vmatprep.subr.bf16.mxu0 0
        %6351 = vmatpush1.bf16.msra.mxu0 0
        %6352 = vmatprep.subr.bf16.mxu0 0
        %6353 = vmatpush1.bf16.msra.mxu0 0
        %6354 = vmatprep.mubr.bf16.mxu0 0
        %6355 = vmatmul.mubr.bf16.gmra.mrb[0].mxu0 %v6255
        %v6356 = vpop.f32.mrb[0].mxu0
        %v6357 = vadd.f32 0.0, %v6356
        %v6358 = vpop.f32.mrb[0].mxu0
        %v6359 = vadd.f32 0.0, %v6358
        %v6360 = vpop.f32.mrb[0].mxu0
        %v6361 = vpop.f32.mrb[0].mxu0
        %6362 = vdwg.mxu0
        %6363 = vmatprep.subr.bf16.mxu0 %v6273
        %6364 = vmatpush1.bf16.msra.mxu0 %v6270
        %6365 = vmatprep.subr.bf16.mxu0 0
        %6366 = vmatpush1.bf16.msra.mxu0 0
        %6367 = vmatprep.subr.bf16.mxu0 0
        %6368 = vmatpush1.bf16.msra.mxu0 0
        %6369 = vmatprep.subr.bf16.mxu0 0
        %6370 = vmatpush1.bf16.msra.mxu0 0
        %6371 = vmatprep.subr.bf16.mxu0 0
        %6372 = vmatpush1.bf16.msra.mxu0 0
        %6373 = vmatprep.subr.bf16.mxu0 0
        %6374 = vmatpush1.bf16.msra.mxu0 0
        %6375 = vmatprep.subr.bf16.mxu0 0
        %6376 = vmatpush1.bf16.msra.mxu0 0
        %6377 = vmatprep.subr.bf16.mxu0 0
        %6378 = vmatpush1.bf16.msra.mxu0 0
        %6379 = vmatprep.subr.bf16.mxu0 0
        %6380 = vmatpush1.bf16.msra.mxu0 0
        %6381 = vmatprep.subr.bf16.mxu0 0
        %6382 = vmatpush1.bf16.msra.mxu0 0
        %6383 = vmatprep.subr.bf16.mxu0 0
        %6384 = vmatpush1.bf16.msra.mxu0 0
        %6385 = vmatprep.subr.bf16.mxu0 0
        %6386 = vmatpush1.bf16.msra.mxu0 0
        %6387 = vmatprep.subr.bf16.mxu0 0
        %6388 = vmatpush1.bf16.msra.mxu0 0
        %6389 = vmatprep.subr.bf16.mxu0 0
        %6390 = vmatpush1.bf16.msra.mxu0 0
        %6391 = vmatprep.subr.bf16.mxu0 0
        %6392 = vmatpush1.bf16.msra.mxu0 0
        %6393 = vmatprep.subr.bf16.mxu0 0
        %6394 = vmatpush1.bf16.msra.mxu0 0
        %6395 = vmatprep.mubr.bf16.mxu0 0
        %6396 = vmatmul.mubr.bf16.gmra.mrb[0].mxu0 %v6255
        %v6397 = vpop.f32.mrb[0].mxu0
        %v6398 = vadd.f32 0.0, %v6397
        %v6399 = vpop.f32.mrb[0].mxu0
        %v6400 = vadd.f32 0.0, %v6399
        %v6401 = vpop.f32.mrb[0].mxu0
        %v6402 = vpop.f32.mrb[0].mxu0
        %6403 = vdwg.mxu0
        %6404 = vmatprep.subr.bf16.mxu0 %v6279
        %6405 = vmatpush1.bf16.msra.mxu0 %v6276
        %6406 = vmatprep.subr.bf16.mxu0 0
        %6407 = vmatpush1.bf16.msra.mxu0 0
        %6408 = vmatprep.subr.bf16.mxu0 0
        %6409 = vmatpush1.bf16.msra.mxu0 0
        %6410 = vmatprep.subr.bf16.mxu0 0
        %6411 = vmatpush1.bf16.msra.mxu0 0
        %6412 = vmatprep.subr.bf16.mxu0 0
        %6413 = vmatpush1.bf16.msra.mxu0 0
        %6414 = vmatprep.subr.bf16.mxu0 0
        %6415 = vmatpush1.bf16.msra.mxu0 0
        %6416 = vmatprep.subr.bf16.mxu0 0
        %6417 = vmatpush1.bf16.msra.mxu0 0
        %6418 = vmatprep.subr.bf16.mxu0 0
        %6419 = vmatpush1.bf16.msra.mxu0 0
        %6420 = vmatprep.subr.bf16.mxu0 0
        %6421 = vmatpush1.bf16.msra.mxu0 0
        %6422 = vmatprep.subr.bf16.mxu0 0
        %6423 = vmatpush1.bf16.msra.mxu0 0
        %6424 = vmatprep.subr.bf16.mxu0 0
        %6425 = vmatpush1.bf16.msra.mxu0 0
        %6426 = vmatprep.subr.bf16.mxu0 0
        %6427 = vmatpush1.bf16.msra.mxu0 0
        %6428 = vmatprep.subr.bf16.mxu0 0
        %6429 = vmatpush1.bf16.msra.mxu0 0
        %6430 = vmatprep.subr.bf16.mxu0 0
        %6431 = vmatpush1.bf16.msra.mxu0 0
        %6432 = vmatprep.subr.bf16.mxu0 0
        %6433 = vmatpush1.bf16.msra.mxu0 0
        %6434 = vmatprep.subr.bf16.mxu0 0
        %6435 = vmatpush1.bf16.msra.mxu0 0
        %6436 = vmatprep.mubr.bf16.mxu0 0
        %6437 = vmatmul.mubr.bf16.gmra.mrb[0].mxu0 %v6255
        %v6438 = vpop.f32.mrb[0].mxu0
        %v6439 = vadd.f32 0.0, %v6438
        %v6440 = vpop.f32.mrb[0].mxu0
        %v6441 = vadd.f32 0.0, %v6440
        %v6442 = vpop.f32.mrb[0].mxu0
        %v6443 = vpop.f32.mrb[0].mxu0
        %6444 = vdwg.mxu0
        %v6445 = vadd.f32 %v6217, %v6316
        %v6446 = vadd.f32 %v6218, %v6318
        %v6447 = vadd.f32 %v6219, %v6357
        %v6448 = vadd.f32 %v6220, %v6359
        %v6449 = vadd.f32 %v6221, %v6398
        %v6450 = vadd.f32 %v6222, %v6400
        %v6451 = vadd.f32 %v6223, %v6439
        %v6452 = vadd.f32 %v6224, %v6441
        %v6453 = vld [vmem:[%s267] sm:$0xff]
        %v6455 = vlaneseq
        %v6456 = vshrl.u32 %v6455, 7
        %v6457 = vsub.s32 0, %v6456
        %v6458 = vrot.slane %v6453, %v6457
        %v6459 = vlaneseq
        %v6460 = vshrl.u32 %v6459, 7
        %v6461 = vsub.s32 1, %v6460
        %v6462 = vrot.slane %v6453, %v6461
        %v6463 = vlaneseq
        %v6464 = vshrl.u32 %v6463, 7
        %v6465 = vsub.s32 2, %v6464
        %v6466 = vrot.slane %v6453, %v6465
        %v6467 = vlaneseq
        %v6468 = vshrl.u32 %v6467, 7
        %v6469 = vsub.s32 3, %v6468
        %v6470 = vrot.slane %v6453, %v6469
        %v6471 = vlaneseq
        %v6472 = vshrl.u32 %v6471, 7
        %v6473 = vsub.s32 4, %v6472
        %v6474 = vrot.slane %v6453, %v6473
        %v6475 = vlaneseq
        %v6476 = vshrl.u32 %v6475, 7
        %v6477 = vsub.s32 5, %v6476
        %v6478 = vrot.slane %v6453, %v6477
        %v6479 = vlaneseq
        %v6480 = vshrl.u32 %v6479, 7
        %v6481 = vsub.s32 6, %v6480
        %v6482 = vrot.slane %v6453, %v6481
        %v6483 = vlaneseq
        %v6484 = vshrl.u32 %v6483, 7
        %v6485 = vsub.s32 7, %v6484
        %v6486 = vrot.slane %v6453, %v6485
        %v6495 = vmul.f32 %v6445, %v6458
        %v6496 = vmul.f32 %v6446, %v6462
        %v6497 = vmul.f32 %v6447, %v6466
        %v6498 = vmul.f32 %v6448, %v6470
        %v6499 = vmul.f32 %v6449, %v6474
        %v6500 = vmul.f32 %v6450, %v6478
        %v6501 = vmul.f32 %v6451, %v6482
        %v6502 = vmul.f32 %v6452, %v6486
        %v6503 = vpack.c.bf16 %v6495, %v6495
        %v6504 = vpack.c.bf16 %v6496, %v6496
        %v6505 = vpack.c.bf16 %v6497, %v6497
        %v6506 = vpack.c.bf16 %v6498, %v6498
        %v6507 = vpack.c.bf16 %v6499, %v6499
        %v6508 = vpack.c.bf16 %v6500, %v6500
        %v6509 = vpack.c.bf16 %v6501, %v6501
        %v6510 = vpack.c.bf16 %v6502, %v6502
        %v6519 = vcombine.low %v6503, %v6504
        %v6520 = vcombine.low %v6505, %v6506
        %v6522 = vunpack.c.l.s4 1983009808
        %v6523 = vunpack.c.0.s8 %v6522
        %v6524 = vlaneseq
        %v6525 = vshrl.u32 %v6524, 7
        %v6526 = vsub.s32 %v6523, %v6525
        %v6527 = vrot.slane %v6519, %v6526
        %v6529 = vunpack.c.l.s4 1983009808
        %v6530 = vunpack.c.0.s8 %v6529
        %v6531 = vlaneseq
        %v6532 = vshrl.u32 %v6531, 7
        %v6533 = vsub.s32 %v6530, %v6532
        %v6534 = vrot.slane %v6520, %v6533
        %v6535 = vcombine.low %v6527, %v6534
        %v6536 = vcombine.low %v6507, %v6508
        %v6537 = vcombine.low %v6509, %v6510
        %v6539 = vunpack.c.l.s4 1983009808
        %v6540 = vunpack.c.0.s8 %v6539
        %v6541 = vlaneseq
        %v6542 = vshrl.u32 %v6541, 7
        %v6543 = vsub.s32 %v6540, %v6542
        %v6544 = vrot.slane %v6536, %v6543
        %v6546 = vunpack.c.l.s4 1983009808
        %v6547 = vunpack.c.0.s8 %v6546
        %v6548 = vlaneseq
        %v6549 = vshrl.u32 %v6548, 7
        %v6550 = vsub.s32 %v6547, %v6549
        %v6551 = vrot.slane %v6537, %v6550
        %v6552 = vcombine.low %v6544, %v6551
        %6555 = vst [vmem:[%s246] sm:$0xff] %v6535
        %6556 = vst [vmem:[%s246 + $0x8] sm:$0xff] %v6552
        %v6557 = vld [vmem:[%s273] sm:$0xf]
        %vm6558 = vcmask 1043456
        %v6559 = vsel %vm6558, %v6495, 0.0
        %v6560 = vsel %vm6558, %v6496, 0.0
        %v6561 = vadd.f32 %v6559, %v6560
        %v6562 = vsel %vm6558, %v6497, 0.0
        %v6563 = vadd.f32 %v6561, %v6562
        %v6564 = vsel %vm6558, %v6498, 0.0
        %v6565 = vadd.f32 %v6563, %v6564
        %v6566 = vsel %vm6558, %v6499, 0.0
        %v6567 = vadd.f32 %v6565, %v6566
        %v6568 = vsel %vm6558, %v6500, 0.0
        %v6569 = vadd.f32 %v6567, %v6568
        %v6570 = vsel %vm6558, %v6501, 0.0
        %v6571 = vadd.f32 %v6569, %v6570
        %v6572 = vsel %vm6558, %v6502, 0.0
        %v6573 = vadd.f32 %v6571, %v6572
        %6574 = vadd.xlane.f32.xlu0 %v6573
        %v6575 = vpop.xlane.xlu0 %6574
        %v6576 = vadd.f32 %v6557, %v6575
        %vm6577 = vcmask 3072
        %6578 = vst.msk [vmem:[%s273] sm:$0xf] %vm6577, %v6576
        %v6579 = vld [vmem:[%s277] sm:$0xf]
        %v6580 = vmul.f32 %v6495, %v6495
        %v6581 = vmul.f32 %v6496, %v6496
        %v6582 = vmul.f32 %v6497, %v6497
        %v6583 = vmul.f32 %v6498, %v6498
        %v6584 = vmul.f32 %v6499, %v6499
        %v6585 = vmul.f32 %v6500, %v6500
        %v6586 = vmul.f32 %v6501, %v6501
        %v6587 = vmul.f32 %v6502, %v6502
        %v6588 = vsel %vm6558, %v6580, 0.0
        %v6589 = vsel %vm6558, %v6581, 0.0
        %v6590 = vadd.f32 %v6588, %v6589
        %v6591 = vsel %vm6558, %v6582, 0.0
        %v6592 = vadd.f32 %v6590, %v6591
        %v6593 = vsel %vm6558, %v6583, 0.0
        %v6594 = vadd.f32 %v6592, %v6593
        %v6595 = vsel %vm6558, %v6584, 0.0
        %v6596 = vadd.f32 %v6594, %v6595
        %v6597 = vsel %vm6558, %v6585, 0.0
        %v6598 = vadd.f32 %v6596, %v6597
        %v6599 = vsel %vm6558, %v6586, 0.0
        %v6600 = vadd.f32 %v6598, %v6599
        %v6601 = vsel %vm6558, %v6587, 0.0
        %v6602 = vadd.f32 %v6600, %v6601
        %6603 = vadd.xlane.f32.xlu0 %v6602
        %v6604 = vpop.xlane.xlu0 %6603
        %v6605 = vadd.f32 %v6579, %v6604
        %6606 = vst.msk [vmem:[%s277] sm:$0xf] %vm6577, %v6605
        %s6607 = sand.u32 %s115, 1
        %s6608 = scalar_lea.sflag [#allocation3], %s6607
        %s6609 = sand.u32 %s115, 1
        %s6610 = smul.addr %s6609, 16
        %s6611 = scalar_lea.vmem [#allocation2], %s6610
        %p6612 = scmp.lt.s32.totalorder %s24, 1
        %s6613 = scalar_select %p6612, %s24, 1
        %s6614 = smul.addr %s6613, 4
        %s6615 = scalar_lea.vmem %s4, %s6614
        %p6616 = scmp.lt.s32.totalorder %s24, 1
        %s6617 = scalar_select %p6616, %s24, 1
        %s6618 = smul.addr %s6617, 4
        %s6619 = scalar_lea.vmem %s5, %s6618
        // Predicated region
        $region37: #{tpu_custom_call.1} parent=31 // pred_check
          %p6620 = pneg %p125
        $region38: #{tpu_custom_call.1} parent=31 // pred_check_branch
          %6622 = sbr.rel (%p6620) target = $region40
        $region39: #{tpu_custom_call.1} parent=31 // pred_region
          %s6623 = smul.u32 8, %s25
          %s6625 = ssub.s32 256, 256
          %6626 = vsyncadd %s6608, %s6625
          %s6627 = smul.addr %s24, 8
          %s6628 = sadd.s32 %s6623, %s6627
          %s6629 = smul.addr %s6628, 32
          %s6630 = scalar_lea.hbm %s3, %s6629
          %s6632 = sshll.u32 %s6611, 4
          %s6633 = int_to_ptr.vmem [resolvable:$true] %s6632
          %6635 = dma.vmem_to_hbm [thread:$0]  %s6633, 256, %s6630, %s6608
        $region40: #{tpu_custom_call.1} parent=31 // pred_fallthru
          _
        // Predicated region
        $region41: #{tpu_custom_call.1} parent=31 // pred_check
          %p6636 = pneg %p151
        $region42: #{tpu_custom_call.1} parent=31 // pred_check_branch
          %6638 = sbr.rel (%p6636) target = $region44
        $region43: #{tpu_custom_call.1} parent=31 // pred_region
          _
        $region44: #{tpu_custom_call.1} parent=31 // pred_fallthru
          _
        // Predicated region
        $region45: #{tpu_custom_call.1} parent=31 // pred_check
          %p6639 = pneg %p177
        $region46: #{tpu_custom_call.1} parent=31 // pred_check_branch
          %6641 = sbr.rel (%p6639) target = $region48
        $region47: #{tpu_custom_call.1} parent=31 // pred_region
          _
        $region48: #{tpu_custom_call.1} parent=31 // pred_fallthru
          _
      $region32: #{tpu_custom_call.1} parent=5 // pred_fallthru
        _
      %p6642 = scmp.le.s32.totalorder 2, %s15
      // Predicated region
      $region49: #{tpu_custom_call.1} parent=5 // pred_check
        %p6643 = pneg %p6642
      $region50: #{tpu_custom_call.1} parent=5 // pred_check_branch
        %6645 = sbr.rel (%p6643) target = $region52
      $region51: #{tpu_custom_call.1} parent=5 // pred_region
        %s6646 = ssub.s32 %s15, 2
        // Predicated region
        $region53: #{tpu_custom_call.1} parent=51 // pred_check
          %p6647 = pneg %p131
        $region54: #{tpu_custom_call.1} parent=51 // pred_check_branch
          %6649 = sbr.rel (%p6647) target = $region56
        $region55: #{tpu_custom_call.1} parent=51 // pred_region
          %s6650 = sand.u32 %s116, 1
          %s6651 = scalar_lea.sflag [#allocation3], %s6650
          %s6652 = sand.u32 %s116, 1
          %s6653 = smul.addr %s6652, 16
          %s6654 = scalar_lea.vmem [#allocation2], %s6653
          %6655 = dma.done %s6651, 256
        $region56: #{tpu_custom_call.1} parent=51 // pred_fallthru
          _
        // Predicated region
        $region57: #{tpu_custom_call.1} parent=51 // pred_check
          %p6656 = pneg %p157
        $region58: #{tpu_custom_call.1} parent=51 // pred_check_branch
          %6658 = sbr.rel (%p6656) target = $region60
        $region59: #{tpu_custom_call.1} parent=51 // pred_region
          %p6659 = scmp.lt.s32.totalorder %s26, 1
          %s6660 = scalar_select %p6659, %s26, 1
          %s6661 = smul.addr %s6660, 4
          %s6662 = scalar_lea.vmem %s4, %s6661
        $region60: #{tpu_custom_call.1} parent=51 // pred_fallthru
          _
        // Predicated region
        $region61: #{tpu_custom_call.1} parent=51 // pred_check
          %p6663 = pneg %p183
        $region62: #{tpu_custom_call.1} parent=51 // pred_check_branch
          %6665 = sbr.rel (%p6663) target = $region64
        $region63: #{tpu_custom_call.1} parent=51 // pred_region
          %p6666 = scmp.lt.s32.totalorder %s26, 1
          %s6667 = scalar_select %p6666, %s26, 1
          %s6668 = smul.addr %s6667, 4
          %s6669 = scalar_lea.vmem %s5, %s6668
        $region64: #{tpu_custom_call.1} parent=51 // pred_fallthru
          _
      $region52: #{tpu_custom_call.1} parent=5 // pred_fallthru
        _
    $region6: #{tpu_custom_call.1} parent=1 // loop_footer
      %s19 = sadd.s32 1, %s15
    $region7: #{tpu_custom_call.1} parent=1 // loop_footer_branch
      %14 = sbr.rel target = $region3
    $region8: #{tpu_custom_call.1} parent=1 // loop_exit
      _
    %6670 = vsyncpa [#allocation3], 1
    %s6671 = scalar_lea.sflag [#allocation3], 1
    %6672 = vsyncpa %s6671, 1

</llo_original>
